<compile_context>
chip_gen: v7x
topology: tpu7x:2x2x1
jax: 0.10.0
libtpu: 0.0.40
codegen_flags: <defaults>
</compile_context>

<pallas_src>
import math

import jax
import jax.numpy as jnp
from jax import lax
from jax.experimental import pallas as pl
from jax.experimental.pallas import tpu as pltpu

_EPS = 1e-5                      # nn.BatchNorm2d default eps
_INV_SQRT2 = 1.0 / math.sqrt(2.0)


# --------------------------- in-kernel helpers ---------------------------
def _store_padded(pad_ref, img, H, W):
    """pad_ref: (H+4, W+4, C) scratch. Write img into the centre, zero only the
    2-wide border strips (the interior is overwritten, never double-written)."""
    C = pad_ref.shape[-1]
    Wp = W + 4
    z_tb = jnp.zeros((2, Wp, C), pad_ref.dtype)
    z_lr = jnp.zeros((H, 2, C), pad_ref.dtype)
    pad_ref[0:2, :, :] = z_tb
    pad_ref[H + 2:H + 4, :, :] = z_tb
    pad_ref[2:2 + H, 0:2, :] = z_lr
    pad_ref[2:2 + H, W + 2:W + 4, :] = z_lr
    pad_ref[2:2 + H, 2:2 + W, :] = img.astype(pad_ref.dtype)


def _conv3x3_accum(pad_ref, w_tap, dilation, H, W, acc=None):
    """Per-tap accumulation of a 3x3 conv with `dilation` from a pad=2 scratch.
    w_tap(t) -> (C_in_pad, C_out_pad) weight block for tap t = kh*3+kw.
    Returns / extends an f32 (H*W, C_out_pad) accumulator (no im2col patches)."""
    base = 2 - dilation            # dilation 1 -> offset 1, dilation 2 -> offset 0
    K = pad_ref.shape[-1]
    for kh in range(3):
        r0 = base + dilation * kh
        for kw in range(3):
            c0 = base + dilation * kw
            tap = pad_ref[r0:r0 + H, c0:c0 + W, :].reshape(H * W, K)
            contrib = jnp.dot(tap, w_tap(kh * 3 + kw),
                              preferred_element_type=jnp.float32)
            acc = contrib if acc is None else acc + contrib
    return acc


# ------------------------------- kernels ---------------------------------
def _stage1_kernel(x_ref, w1_ref, wres_ref,
                   y1_ref, res_ref, s1_ref, sr_ref, xpad_ref):
    """Per-image: shared-weight 3x3 conv (both dilations) + fused residual 1x1.
    Emits raw activations (compute dtype) + per-tile BN partial sums (f32)."""
    _, H, W, _ = x_ref.shape
    out_p = wres_ref.shape[-1] // 2

    x = x_ref[0]                                           # (H, W, cin_p), cdt
    _store_padded(xpad_ref, x, H, W)

    # residual 1x1: ONE fused matmul covering both output halves (lane-aligned split)
    res = jnp.dot(x.reshape(H * W, x.shape[-1]), wres_ref[...],
                  preferred_element_type=jnp.float32)      # (H*W, 2*out_p)
    for d in range(2):
        rd = res[:, d * out_p:(d + 1) * out_p]
        res_ref[d, 0] = rd.reshape(H, W, out_p).astype(res_ref.dtype)
        sr_ref[0, d:d + 1, :] = jnp.sum(rd, axis=0, keepdims=True)
        sr_ref[0, 2 + d:3 + d, :] = jnp.sum(rd * rd, axis=0, keepdims=True)

    # shared 3x3 weights, dilation 1 and 2, per-tap accumulation (no im2col)
    for d in range(2):
        acc = _conv3x3_accum(xpad_ref, lambda t: w1_ref[t], d + 1, H, W)
        y1_ref[d, 0] = acc.reshape(H, W, acc.shape[-1]).astype(y1_ref.dtype)
        s1_ref[0, d:d + 1, :] = jnp.sum(acc, axis=0, keepdims=True)
        s1_ref[0, 2 + d:3 + d, :] = jnp.sum(acc * acc, axis=0, keepdims=True)


def _stage2_kernel(y1_ref, sc1_ref, sh1_ref, w2_ref,
                   y2_ref, s2_ref, hpad0_ref, hpad1_ref):
    """Per-image: BN1+ReLU (precomputed scale/shift), second shared 3x3 conv."""
    _, _, H, W, _ = y1_ref.shape
    out_p = w2_ref.shape[-1]
    hpads = (hpad0_ref, hpad1_ref)

    for d_in in range(2):
        h = y1_ref[d_in, 0].astype(jnp.float32)
        h = jnp.maximum(h * sc1_ref[d_in:d_in + 1, :] + sh1_ref[d_in:d_in + 1, :], 0.0)
        _store_padded(hpads[d_in], h, H, W)

    for d_out in range(2):
        dil = d_out + 1
        acc = _conv3x3_accum(hpads[0], lambda t: w2_ref[0, t], dil, H, W)
        acc = _conv3x3_accum(hpads[1], lambda t: w2_ref[1, t], dil, H, W, acc=acc)
        y2_ref[d_out, 0] = acc.reshape(H, W, out_p).astype(y2_ref.dtype)
        s2_ref[0, d_out:d_out + 1, :] = jnp.sum(acc, axis=0, keepdims=True)
        s2_ref[0, 2 + d_out:3 + d_out, :] = jnp.sum(acc * acc, axis=0, keepdims=True)


def _stage3_kernel(y2_ref, r_ref, sc2_ref, sh2_ref, scr_ref, shr_ref, out_ref):
    """Elementwise tail: BN2 + BNres + add + /sqrt(2) + ReLU (lane-dense store)."""
    y2 = y2_ref[0].astype(jnp.float32) * sc2_ref[0] + sh2_ref[0]
    r = r_ref[0].astype(jnp.float32) * scr_ref[0] + shr_ref[0]
    out_ref[0] = jnp.maximum((y2 + r) * _INV_SQRT2, 0.0).astype(out_ref.dtype)


# ------------------------------- wrapper ----------------------------------
def shared_atrous_res_block(x_nchw, params, *, compute_dtype=jnp.bfloat16,
                            lane_multiple=128, out_dtype=jnp.float32):
    """SharedAtrousResBlock forward. NCHW in / NCHW out (PyTorch layout).

    compute_dtype: matmul-operand / inter-stage activation dtype (bf16 = MXU
    native on v6e/v7x; float32 gives a bit-accurate validation path).
    lane_multiple: channel padding target (use 256 on v6e/v7x production channel
    counts to fill the 256-wide MXU; 128 keeps lane-dense stores everywhere).
    """
    N, cin, H, W = x_nchw.shape
    cmid = params['g1'].shape[0]
    cout = params['g2'].shape[0]
    mid_half, out_half = cmid // 2, cout // 2
    nhw = N * H * W
    cdt = compute_dtype
    f32 = jnp.float32

    def _pad_c(c):
        return ((c + lane_multiple - 1) // lane_multiple) * lane_multiple

    cin_p, mid_p, out_p = _pad_c(cin), _pad_c(mid_half), _pad_c(out_half)

    # generation-aware VMEM budget: ~3/4 of physical (≈96 MiB v5e/v6e, ≈48 MiB v7x)
    try:
        vmem_limit = int(pltpu.get_tpu_info().vmem_capacity_bytes * 3 // 4)
    except Exception:  # pragma: no cover - conservative fallback, valid on all gens
        vmem_limit = 48 * 2 ** 20
    cp_batch = pltpu.CompilerParams(dimension_semantics=("parallel",),
                                    vmem_limit_bytes=vmem_limit)

    # ---- layout / dtype prep (plumbing only) ----
    x = jnp.transpose(x_nchw, (0, 2, 3, 1))
    x = jnp.pad(x, ((0, 0), (0, 0), (0, 0), (0, cin_p - cin))).astype(cdt)

    # conv1 weights per tap: (9, cin_p, mid_p), shared by both dilation branches
    w1 = jnp.transpose(params['w1'], (2, 3, 1, 0)).reshape(9, cin, mid_half)
    w1 = jnp.pad(w1, ((0, 0), (0, cin_p - cin), (0, mid_p - mid_half))).astype(cdt)

    # conv2 weights per input-half per tap: (2, 9, mid_p, out_p)
    w2 = jnp.transpose(params['w2'], (2, 3, 1, 0)).reshape(9, 2, mid_half, out_half)
    w2 = jnp.transpose(w2, (1, 0, 2, 3))
    w2 = jnp.pad(w2, ((0, 0), (0, 0), (0, mid_p - mid_half),
                      (0, out_p - out_half))).astype(cdt)

    # residual 1x1 weights as one fused matrix: (cin_p, 2*out_p), half-major columns
    wres = jnp.transpose(params['wres'][:, :, 0, 0], (1, 0)).reshape(cin, 2, out_half)
    wres = jnp.pad(wres, ((0, cin_p - cin), (0, 0), (0, out_p - out_half)))
    wres = wres.reshape(cin_p, 2 * out_p).astype(cdt)

    def _halves(v, half, cpad):
        return jnp.pad(v.reshape(2, half).astype(f32), ((0, 0), (0, cpad - half)))

    g1, b1 = _halves(params['g1'], mid_half, mid_p), _halves(params['b1'], mid_half, mid_p)
    g2, b2 = _halves(params['g2'], out_half, out_p), _halves(params['b2'], out_half, out_p)
    gr, br = _halves(params['gr'], out_half, out_p), _halves(params['br'], out_half, out_p)

    def _bn_scale_shift(stats, gamma, beta):
        # Finalize full-batch BN moments from per-tile partial sums (tiny glue op).
        s = jnp.sum(stats[:, 0:2], axis=0)                 # (2, C)
        ss = jnp.sum(stats[:, 2:4], axis=0)
        mean = s / nhw
        var = jnp.maximum(ss / nhw - mean * mean, 0.0)     # clamp (review concern)
        scale = gamma * lax.rsqrt(var + _EPS)
        return scale, beta - mean * scale

    # TODO(synk): for very large H*W, tile each image over rows with a 2-row halo
    # instead of whole-image blocks (per-image tiles are the natural unit here).

    # ---- stage 1: conv1 (both dilations) + fused residual, grid over images ----
    y1_raw, res_raw, s1, sr = pl.pallas_call(
        _stage1_kernel,
        grid=(N,),
        in_specs=[
            pl.BlockSpec((1, H, W, cin_p), lambda n: (n, 0, 0, 0)),
            pl.BlockSpec((9, cin_p, mid_p), lambda n: (0, 0, 0)),
            pl.BlockSpec((cin_p, 2 * out_p), lambda n: (0, 0)),
        ],
        out_specs=[
            pl.BlockSpec((2, 1, H, W, mid_p), lambda n: (0, n, 0, 0, 0)),
            pl.BlockSpec((2, 1, H, W, out_p), lambda n: (0, n, 0, 0, 0)),
            pl.BlockSpec((1, 4, mid_p), lambda n: (n, 0, 0)),
            pl.BlockSpec((1, 4, out_p), lambda n: (n, 0, 0)),
        ],
        out_shape=[
            jax.ShapeDtypeStruct((2, N, H, W, mid_p), cdt),   # raw conv1 per half
            jax.ShapeDtypeStruct((2, N, H, W, out_p), cdt),   # raw residual per half
            jax.ShapeDtypeStruct((N, 4, mid_p), f32),         # BN1 partial sums
            jax.ShapeDtypeStruct((N, 4, out_p), f32),         # BNres partial sums
        ],
        scratch_shapes=[pltpu.VMEM((H + 4, W + 4, cin_p), cdt)],
        compiler_params=cp_batch,
    )(x, w1, wres)

    sc1, sh1 = _bn_scale_shift(s1, g1, b1)
    scr, shr = _bn_scale_shift(sr, gr, br)

    # ---- stage 2: BN1 + ReLU + conv2 (both dilations), grid over images ----
    y2_raw, s2 = pl.pallas_call(
        _stage2_kernel,
        grid=(N,),
        in_specs=[
            pl.BlockSpec((2, 1, H, W, mid_p), lambda n: (0, n, 0, 0, 0)),
            pl.BlockSpec((2, mid_p), lambda n: (0, 0)),
            pl.BlockSpec((2, mid_p), lambda n: (0, 0)),
            pl.BlockSpec((2, 9, mid_p, out_p), lambda n: (0, 0, 0, 0)),
        ],
        out_specs=[
            pl.BlockSpec((2, 1, H, W, out_p), lambda n: (0, n, 0, 0, 0)),
            pl.BlockSpec((1, 4, out_p), lambda n: (n, 0, 0)),
        ],
        out_shape=[
            jax.ShapeDtypeStruct((2, N, H, W, out_p), cdt),   # raw conv2 per half
            jax.ShapeDtypeStruct((N, 4, out_p), f32),         # BN2 partial sums
        ],
        scratch_shapes=[pltpu.VMEM((H + 4, W + 4, mid_p), cdt),
                        pltpu.VMEM((H + 4, W + 4, mid_p), cdt)],
        compiler_params=cp_batch,
    )(y1_raw, sc1, sh1, w2)

    sc2, sh2 = _bn_scale_shift(s2, g2, b2)

    # ---- stage 3: BN2 + BNres + add + ReLU, grid over (half, row tile) ----
    tr = nhw
    for cand in (1024, 512, 256, 128, 64, 32, 16, 8):
        if nhw % cand == 0:
            tr = cand
            break
    y2_flat = y2_raw.reshape(2, nhw, out_p)      # free reshape (contiguous merge)
    res_flat = res_raw.reshape(2, nhw, out_p)
    scale_args = [v.reshape(2, 1, out_p) for v in (sc2, sh2, scr, shr)]

    row_spec = pl.BlockSpec((1, tr, out_p), lambda d, r: (d, r, 0))
    par_spec = pl.BlockSpec((1, 1, out_p), lambda d, r: (d, 0, 0))
    # TODO(synk): emit bf16 / keep the NHWC half-slab when the consumer allows it
    # (halves HBM writeback and removes the post-kernel transpose).
    out_slab = pl.pallas_call(
        _stage3_kernel,
        grid=(2, nhw // tr),
        in_specs=[row_spec, row_spec, par_spec, par_spec, par_spec, par_spec],
        out_specs=row_spec,
        out_shape=jax.ShapeDtypeStruct((2, nhw, out_p), out_dtype),
        compiler_params=pltpu.CompilerParams(
            dimension_semantics=("parallel", "parallel"),
            vmem_limit_bytes=vmem_limit),
    )(y2_flat, res_flat, *scale_args)

    # Recombine halves into PyTorch NCHW channel order (c = d*out_half + o).
    out = out_slab.reshape(2, N, H, W, out_p)[..., :out_half]
    return jnp.transpose(out, (1, 0, 4, 2, 3)).reshape(N, cout, H, W)


# ---------------------- pure-JAX reference (for validation) ----------------------
def _bn_train_nchw(x, gamma, beta):
    m = jnp.mean(x, axis=(0, 2, 3), keepdims=True)
    v = jnp.mean((x - m) ** 2, axis=(0, 2, 3), keepdims=True)
    return (x - m) * lax.rsqrt(v + _EPS) * gamma.reshape(1, -1, 1, 1) + beta.reshape(1, -1, 1, 1)


def _shared_atrous_conv_ref(x, w_oihw):
    dn = ('NCHW', 'OIHW', 'NCHW')
    d1 = lax.conv_general_dilated(x, w_oihw, (1, 1), ((1, 1), (1, 1)),
                                  dimension_numbers=dn)
    d2 = lax.conv_general_dilated(x, w_oihw, (1, 1), ((2, 2), (2, 2)),
                                  rhs_dilation=(2, 2), dimension_numbers=dn)
    return jnp.concatenate([d1, d2], axis=1)


def reference_forward(x, p):
    dn = ('NCHW', 'OIHW', 'NCHW')
    res = lax.conv_general_dilated(x, p['wres'], (1, 1), ((0, 0), (0, 0)),
                                   dimension_numbers=dn)
    res = _bn_train_nchw(res, p['gr'], p['br'])
    h = _shared_atrous_conv_ref(x, p['w1'])
    h = jnp.maximum(_bn_train_nchw(h, p['g1'], p['b1']), 0.0)
    h = _shared_atrous_conv_ref(h, p['w2'])
    h = _bn_train_nchw(h, p['g2'], p['b2'])
    return jnp.maximum((h + res) * _INV_SQRT2, 0.0)


if __name__ == "__main__":
    key = jax.random.PRNGKey(0)
    N, cin, cmid, cout, H, W = 2, 4, 8, 8, 16, 16
    kx, kw1, kw2, kwr, k3, k4, k5, k6, k7, k8 = jax.random.split(key, 10)

    x = jax.random.normal(kx, (N, cin, H, W), jnp.float32)

    params = {
        'w1': jax.random.normal(kw1, (cmid // 2, cin, 3, 3), jnp.float32)
              * math.sqrt(2.0 / ((cmid // 2) * 9)),
        'w2': jax.random.normal(kw2, (cout // 2, cmid, 3, 3), jnp.float32)
              * math.sqrt(2.0 / ((cout // 2) * 9)),
        'wres': jax.random.normal(kwr, (cout, cin, 1, 1), jnp.float32)
                * math.sqrt(1.0 / cin),
        'g1': 1.0 + 0.1 * jax.random.normal(k3, (cmid,), jnp.float32),
        'b1': 0.1 * jax.random.normal(k4, (cmid,), jnp.float32),
        'g2': 1.0 + 0.1 * jax.random.normal(k5, (cout,), jnp.float32),
        'b2': 0.1 * jax.random.normal(k6, (cout,), jnp.float32),
        'gr': 1.0 + 0.1 * jax.random.normal(k7, (cout,), jnp.float32),
        'br': 0.1 * jax.random.normal(k8, (cout,), jnp.float32),
    }

    ref = jax.block_until_ready(reference_forward(x, params))

    # 1) correctness gate: f32 compute path must match the reference tightly.
    out_f32 = jax.block_until_ready(
        shared_atrous_res_block(x, params, compute_dtype=jnp.float32))
    assert out_f32.shape == (N, cout, H, W), out_f32.shape
    err_f32 = float(jnp.max(jnp.abs(out_f32 - ref)))
    assert err_f32 < 2e-3, f"f32 max abs error {err_f32}"

    # 2) default (performance) path: bf16 operands/intermediates, f32 accumulation.
    out_bf16 = jax.block_until_ready(shared_atrous_res_block(x, params))
    assert out_bf16.shape == (N, cout, H, W), out_bf16.shape
    err_bf16 = float(jnp.max(jnp.abs(out_bf16 - ref)))
    assert err_bf16 < 1e-1, f"bf16 max abs error {err_bf16}"

    print("KERNEL_OK")
</pallas_src>

<mosaic_0001>
module attributes {stable_mosaic.version = 11 : i64} {
  func.func @_stage1_kernel(%arg0: i32, %arg1: memref<1x16x16x128xf32, #tpu.memory_space<vmem>>, %arg2: memref<9x128x128xf32, #tpu.memory_space<vmem>>, %arg3: memref<128x256xf32, #tpu.memory_space<vmem>>, %arg4: memref<2x1x16x16x128xf32, #tpu.memory_space<vmem>>, %arg5: memref<2x1x16x16x128xf32, #tpu.memory_space<vmem>>, %arg6: memref<1x4x128xf32, #tpu.memory_space<vmem>>, %arg7: memref<1x4x128xf32, #tpu.memory_space<vmem>>, %arg8: memref<20x20x128xf32, #tpu.memory_space<vmem>>) attributes {dimension_semantics = [#tpu.dimension_semantics<parallel>], iteration_bounds = array<i64: 2>, scalar_prefetch = 0 : i64, scratch_operands = 1 : i64, tpu.core_type = #tpu.core_type<tc>, window_params = [{transform_indices = @transform_0, window_bounds = array<i64: 1, 16, 16, 128>}, {pipeline_mode = #tpu.pipeline_mode<synchronous>, transform_indices = @transform_1, window_bounds = array<i64: 9, 128, 128>}, {pipeline_mode = #tpu.pipeline_mode<synchronous>, transform_indices = @transform_2, window_bounds = array<i64: 128, 256>}, {transform_indices = @transform_3, window_bounds = array<i64: 2, 1, 16, 16, 128>}, {transform_indices = @transform_4, window_bounds = array<i64: 2, 1, 16, 16, 128>}, {transform_indices = @transform_5, window_bounds = array<i64: 1, 4, 128>}, {transform_indices = @transform_6, window_bounds = array<i64: 1, 4, 128>}]} {
    %c0 = arith.constant 0 : index
    %c0_0 = arith.constant 0 : index
    %c0_1 = arith.constant 0 : index
    %c0_2 = arith.constant 0 : index
    %0 = vector.load %arg1[%c0, %c0_0, %c0_1, %c0_2] : memref<1x16x16x128xf32, #tpu.memory_space<vmem>>, vector<1x16x16x128xf32>
    %1 = vector.shape_cast %0 : vector<1x16x16x128xf32> to vector<16x16x128xf32>
    %cst = arith.constant 0.000000e+00 : f32
    %2 = vector.broadcast %cst : f32 to vector<2x20x128xf32>
    %cst_3 = arith.constant 0.000000e+00 : f32
    %3 = vector.broadcast %cst_3 : f32 to vector<16x2x128xf32>
    %c0_4 = arith.constant 0 : index
    %c0_5 = arith.constant 0 : index
    %c0_6 = arith.constant 0 : index
    %4 = vector.load %arg8[%c0_4, %c0_5, %c0_6] : memref<20x20x128xf32, #tpu.memory_space<vmem>>, vector<2x20x128xf32>
    tpu.vector_store %arg8[%c0_4, %c0_5, %c0_6], %2 {strides = array<i32>} : memref<20x20x128xf32, #tpu.memory_space<vmem>>, vector<2x20x128xf32>,
    %c18 = arith.constant 18 : index
    %c0_7 = arith.constant 0 : index
    %c0_8 = arith.constant 0 : index
    %5 = vector.load %arg8[%c18, %c0_7, %c0_8] : memref<20x20x128xf32, #tpu.memory_space<vmem>>, vector<2x20x128xf32>
    tpu.vector_store %arg8[%c18, %c0_7, %c0_8], %2 {strides = array<i32>} : memref<20x20x128xf32, #tpu.memory_space<vmem>>, vector<2x20x128xf32>,
    %c2 = arith.constant 2 : index
    %c0_9 = arith.constant 0 : index
    %c0_10 = arith.constant 0 : index
    %6 = vector.load %arg8[%c2, %c0_9, %c0_10] : memref<20x20x128xf32, #tpu.memory_space<vmem>>, vector<16x2x128xf32>
    tpu.vector_store %arg8[%c2, %c0_9, %c0_10], %3 {strides = array<i32>} : memref<20x20x128xf32, #tpu.memory_space<vmem>>, vector<16x2x128xf32>,
    %c2_11 = arith.constant 2 : index
    %c18_12 = arith.constant 18 : index
    %c0_13 = arith.constant 0 : index
    %7 = vector.load %arg8[%c2_11, %c18_12, %c0_13] : memref<20x20x128xf32, #tpu.memory_space<vmem>>, vector<16x2x128xf32>
    tpu.vector_store %arg8[%c2_11, %c18_12, %c0_13], %3 {strides = array<i32>} : memref<20x20x128xf32, #tpu.memory_space<vmem>>, vector<16x2x128xf32>,
    %c2_14 = arith.constant 2 : index
    %c2_15 = arith.constant 2 : index
    %c0_16 = arith.constant 0 : index
    %8 = vector.load %arg8[%c2_14, %c2_15, %c0_16] : memref<20x20x128xf32, #tpu.memory_space<vmem>>, vector<16x16x128xf32>
    tpu.vector_store %arg8[%c2_14, %c2_15, %c0_16], %1 {strides = array<i32>} : memref<20x20x128xf32, #tpu.memory_space<vmem>>, vector<16x16x128xf32>,
    %9 = vector.shape_cast %1 : vector<16x16x128xf32> to vector<256x128xf32>
    %c0_17 = arith.constant 0 : index
    %c0_18 = arith.constant 0 : index
    %10 = vector.load %arg3[%c0_17, %c0_18] : memref<128x256xf32, #tpu.memory_space<vmem>>, vector<128x256xf32>
    %cst_19 = arith.constant dense<0.000000e+00> : vector<256x256xf32>
    %11 = tpu.matmul %9, %10, %cst_19 {dimension_numbers = #tpu.dot_dimension_numbers<[1], [0], [0], [1], [0, 0, 1, 1], [], []>} : vector<256x128xf32>, vector<128x256xf32>, vector<256x256xf32> -> vector<256x256xf32>
    %12 = vector.extract_strided_slice %11 {offsets = [0, 0], sizes = [256, 128], strides = [1, 1]} : vector<256x256xf32> to vector<256x128xf32>
    %13 = vector.shape_cast %12 : vector<256x128xf32> to vector<16x16x128xf32>
    %c0_20 = arith.constant 0 : index
    %c0_21 = arith.constant 0 : index
    %c0_22 = arith.constant 0 : index
    %c0_23 = arith.constant 0 : index
    %c0_24 = arith.constant 0 : index
    %14 = vector.load %arg5[%c0_20, %c0_21, %c0_22, %c0_23, %c0_24] : memref<2x1x16x16x128xf32, #tpu.memory_space<vmem>>, vector<1x1x16x16x128xf32>
    %15 = vector.shape_cast %14 : vector<1x1x16x16x128xf32> to vector<16x16x128xf32>
    %16 = vector.shape_cast %13 : vector<16x16x128xf32> to vector<1x1x16x16x128xf32>
    tpu.vector_store %arg5[%c0_20, %c0_21, %c0_22, %c0_23, %c0_24], %16 {strides = array<i32>} : memref<2x1x16x16x128xf32, #tpu.memory_space<vmem>>, vector<1x1x16x16x128xf32>,
    %cst_25 = arith.constant dense<0.000000e+00> : vector<128xf32>
    %17 = vector.multi_reduction <add>, %12, %cst_25 [0] : vector<256x128xf32> to vector<128xf32>
    %18 = vector.shape_cast %17 : vector<128xf32> to vector<1x128xf32>
    %c0_26 = arith.constant 0 : index
    %c0_27 = arith.constant 0 : index
    %c0_28 = arith.constant 0 : index
    %19 = vector.load %arg7[%c0_26, %c0_27, %c0_28] : memref<1x4x128xf32, #tpu.memory_space<vmem>>, vector<1x1x128xf32>
    %20 = vector.shape_cast %19 : vector<1x1x128xf32> to vector<1x128xf32>
    %21 = vector.shape_cast %18 : vector<1x128xf32> to vector<1x1x128xf32>
    tpu.vector_store %arg7[%c0_26, %c0_27, %c0_28], %21 {strides = array<i32>} : memref<1x4x128xf32, #tpu.memory_space<vmem>>, vector<1x1x128xf32>,
    %22 = arith.mulf %12, %12 : vector<256x128xf32>
    %cst_29 = arith.constant dense<0.000000e+00> : vector<128xf32>
    %23 = vector.multi_reduction <add>, %22, %cst_29 [0] : vector<256x128xf32> to vector<128xf32>
    %24 = vector.shape_cast %23 : vector<128xf32> to vector<1x128xf32>
    %c0_30 = arith.constant 0 : index
    %c2_31 = arith.constant 2 : index
    %c0_32 = arith.constant 0 : index
    %25 = vector.load %arg7[%c0_30, %c2_31, %c0_32] : memref<1x4x128xf32, #tpu.memory_space<vmem>>, vector<1x1x128xf32>
    %26 = vector.shape_cast %25 : vector<1x1x128xf32> to vector<1x128xf32>
    %27 = vector.shape_cast %24 : vector<1x128xf32> to vector<1x1x128xf32>
    tpu.vector_store %arg7[%c0_30, %c2_31, %c0_32], %27 {strides = array<i32>} : memref<1x4x128xf32, #tpu.memory_space<vmem>>, vector<1x1x128xf32>,
    %28 = vector.extract_strided_slice %11 {offsets = [0, 128], sizes = [256, 128], strides = [1, 1]} : vector<256x256xf32> to vector<256x128xf32>
    %29 = vector.shape_cast %28 : vector<256x128xf32> to vector<16x16x128xf32>
    %c1 = arith.constant 1 : index
    %c0_33 = arith.constant 0 : index
    %c0_34 = arith.constant 0 : index
    %c0_35 = arith.constant 0 : index
    %c0_36 = arith.constant 0 : index
    %30 = vector.load %arg5[%c1, %c0_33, %c0_34, %c0_35, %c0_36] : memref<2x1x16x16x128xf32, #tpu.memory_space<vmem>>, vector<1x1x16x16x128xf32>
    %31 = vector.shape_cast %30 : vector<1x1x16x16x128xf32> to vector<16x16x128xf32>
    %32 = vector.shape_cast %29 : vector<16x16x128xf32> to vector<1x1x16x16x128xf32>
    tpu.vector_store %arg5[%c1, %c0_33, %c0_34, %c0_35, %c0_36], %32 {strides = array<i32>} : memref<2x1x16x16x128xf32, #tpu.memory_space<vmem>>, vector<1x1x16x16x128xf32>,
    %cst_37 = arith.constant dense<0.000000e+00> : vector<128xf32>
    %33 = vector.multi_reduction <add>, %28, %cst_37 [0] : vector<256x128xf32> to vector<128xf32>
    %34 = vector.shape_cast %33 : vector<128xf32> to vector<1x128xf32>
    %c0_38 = arith.constant 0 : index
    %c1_39 = arith.constant 1 : index
    %c0_40 = arith.constant 0 : index
    %35 = vector.load %arg7[%c0_38, %c1_39, %c0_40] : memref<1x4x128xf32, #tpu.memory_space<vmem>>, vector<1x1x128xf32>
    %36 = vector.shape_cast %35 : vector<1x1x128xf32> to vector<1x128xf32>
    %37 = vector.shape_cast %34 : vector<1x128xf32> to vector<1x1x128xf32>
    tpu.vector_store %arg7[%c0_38, %c1_39, %c0_40], %37 {strides = array<i32>} : memref<1x4x128xf32, #tpu.memory_space<vmem>>, vector<1x1x128xf32>,
    %38 = arith.mulf %28, %28 : vector<256x128xf32>
    %cst_41 = arith.constant dense<0.000000e+00> : vector<128xf32>
    %39 = vector.multi_reduction <add>, %38, %cst_41 [0] : vector<256x128xf32> to vector<128xf32>
    %40 = vector.shape_cast %39 : vector<128xf32> to vector<1x128xf32>
    %c0_42 = arith.constant 0 : index
    %c3 = arith.constant 3 : index
    %c0_43 = arith.constant 0 : index
    %41 = vector.load %arg7[%c0_42, %c3, %c0_43] : memref<1x4x128xf32, #tpu.memory_space<vmem>>, vector<1x1x128xf32>
    %42 = vector.shape_cast %41 : vector<1x1x128xf32> to vector<1x128xf32>
    %43 = vector.shape_cast %40 : vector<1x128xf32> to vector<1x1x128xf32>
    tpu.vector_store %arg7[%c0_42, %c3, %c0_43], %43 {strides = array<i32>} : memref<1x4x128xf32, #tpu.memory_space<vmem>>, vector<1x1x128xf32>,
    %c1_44 = arith.constant 1 : index
    %c1_45 = arith.constant 1 : index
    %c0_46 = arith.constant 0 : index
    %44 = vector.load %arg8[%c1_44, %c1_45, %c0_46] : memref<20x20x128xf32, #tpu.memory_space<vmem>>, vector<16x16x128xf32>
    %45 = vector.shape_cast %44 : vector<16x16x128xf32> to vector<256x128xf32>
    %c0_47 = arith.constant 0 : index
    %c0_48 = arith.constant 0 : index
    %c0_49 = arith.constant 0 : index
    %46 = vector.load %arg2[%c0_47, %c0_48, %c0_49] : memref<9x128x128xf32, #tpu.memory_space<vmem>>, vector<1x128x128xf32>
    %47 = vector.shape_cast %46 : vector<1x128x128xf32> to vector<128x128xf32>
    %cst_50 = arith.constant dense<0.000000e+00> : vector<256x128xf32>
    %48 = tpu.matmul %45, %47, %cst_50 {dimension_numbers = #tpu.dot_dimension_numbers<[1], [0], [0], [1], [0, 0, 1, 1], [], []>} : vector<256x128xf32>, vector<128x128xf32>, vector<256x128xf32> -> vector<256x128xf32>
    %c1_51 = arith.constant 1 : index
    %c2_52 = arith.constant 2 : index
    %c0_53 = arith.constant 0 : index
    %49 = vector.load %arg8[%c1_51, %c2_52, %c0_53] : memref<20x20x128xf32, #tpu.memory_space<vmem>>, vector<16x16x128xf32>
    %50 = vector.shape_cast %49 : vector<16x16x128xf32> to vector<256x128xf32>
    %c1_54 = arith.constant 1 : index
    %c0_55 = arith.constant 0 : index
    %c0_56 = arith.constant 0 : index
    %51 = vector.load %arg2[%c1_54, %c0_55, %c0_56] : memref<9x128x128xf32, #tpu.memory_space<vmem>>, vector<1x128x128xf32>
    %52 = vector.shape_cast %51 : vector<1x128x128xf32> to vector<128x128xf32>
    %cst_57 = arith.constant dense<0.000000e+00> : vector<256x128xf32>
    %53 = tpu.matmul %50, %52, %cst_57 {dimension_numbers = #tpu.dot_dimension_numbers<[1], [0], [0], [1], [0, 0, 1, 1], [], []>} : vector<256x128xf32>, vector<128x128xf32>, vector<256x128xf32> -> vector<256x128xf32>
    %54 = arith.addf %48, %53 : vector<256x128xf32>
    %c1_58 = arith.constant 1 : index
    %c3_59 = arith.constant 3 : index
    %c0_60 = arith.constant 0 : index
    %55 = vector.load %arg8[%c1_58, %c3_59, %c0_60] : memref<20x20x128xf32, #tpu.memory_space<vmem>>, vector<16x16x128xf32>
    %56 = vector.shape_cast %55 : vector<16x16x128xf32> to vector<256x128xf32>
    %c2_61 = arith.constant 2 : index
    %c0_62 = arith.constant 0 : index
    %c0_63 = arith.constant 0 : index
    %57 = vector.load %arg2[%c2_61, %c0_62, %c0_63] : memref<9x128x128xf32, #tpu.memory_space<vmem>>, vector<1x128x128xf32>
    %58 = vector.shape_cast %57 : vector<1x128x128xf32> to vector<128x128xf32>
    %cst_64 = arith.constant dense<0.000000e+00> : vector<256x128xf32>
    %59 = tpu.matmul %56, %58, %cst_64 {dimension_numbers = #tpu.dot_dimension_numbers<[1], [0], [0], [1], [0, 0, 1, 1], [], []>} : vector<256x128xf32>, vector<128x128xf32>, vector<256x128xf32> -> vector<256x128xf32>
    %60 = arith.addf %54, %59 : vector<256x128xf32>
    %c2_65 = arith.constant 2 : index
    %c1_66 = arith.constant 1 : index
    %c0_67 = arith.constant 0 : index
    %61 = vector.load %arg8[%c2_65, %c1_66, %c0_67] : memref<20x20x128xf32, #tpu.memory_space<vmem>>, vector<16x16x128xf32>
    %62 = vector.shape_cast %61 : vector<16x16x128xf32> to vector<256x128xf32>
    %c3_68 = arith.constant 3 : index
    %c0_69 = arith.constant 0 : index
    %c0_70 = arith.constant 0 : index
    %63 = vector.load %arg2[%c3_68, %c0_69, %c0_70] : memref<9x128x128xf32, #tpu.memory_space<vmem>>, vector<1x128x128xf32>
    %64 = vector.shape_cast %63 : vector<1x128x128xf32> to vector<128x128xf32>
    %cst_71 = arith.constant dense<0.000000e+00> : vector<256x128xf32>
    %65 = tpu.matmul %62, %64, %cst_71 {dimension_numbers = #tpu.dot_dimension_numbers<[1], [0], [0], [1], [0, 0, 1, 1], [], []>} : vector<256x128xf32>, vector<128x128xf32>, vector<256x128xf32> -> vector<256x128xf32>
    %66 = arith.addf %60, %65 : vector<256x128xf32>
    %c2_72 = arith.constant 2 : index
    %c2_73 = arith.constant 2 : index
    %c0_74 = arith.constant 0 : index
    %67 = vector.load %arg8[%c2_72, %c2_73, %c0_74] : memref<20x20x128xf32, #tpu.memory_space<vmem>>, vector<16x16x128xf32>
    %68 = vector.shape_cast %67 : vector<16x16x128xf32> to vector<256x128xf32>
    %c4 = arith.constant 4 : index
    %c0_75 = arith.constant 0 : index
    %c0_76 = arith.constant 0 : index
    %69 = vector.load %arg2[%c4, %c0_75, %c0_76] : memref<9x128x128xf32, #tpu.memory_space<vmem>>, vector<1x128x128xf32>
    %70 = vector.shape_cast %69 : vector<1x128x128xf32> to vector<128x128xf32>
    %cst_77 = arith.constant dense<0.000000e+00> : vector<256x128xf32>
    %71 = tpu.matmul %68, %70, %cst_77 {dimension_numbers = #tpu.dot_dimension_numbers<[1], [0], [0], [1], [0, 0, 1, 1], [], []>} : vector<256x128xf32>, vector<128x128xf32>, vector<256x128xf32> -> vector<256x128xf32>
    %72 = arith.addf %66, %71 : vector<256x128xf32>
    %c2_78 = arith.constant 2 : index
    %c3_79 = arith.constant 3 : index
    %c0_80 = arith.constant 0 : index
    %73 = vector.load %arg8[%c2_78, %c3_79, %c0_80] : memref<20x20x128xf32, #tpu.memory_space<vmem>>, vector<16x16x128xf32>
    %74 = vector.shape_cast %73 : vector<16x16x128xf32> to vector<256x128xf32>
    %c5 = arith.constant 5 : index
    %c0_81 = arith.constant 0 : index
    %c0_82 = arith.constant 0 : index
    %75 = vector.load %arg2[%c5, %c0_81, %c0_82] : memref<9x128x128xf32, #tpu.memory_space<vmem>>, vector<1x128x128xf32>
    %76 = vector.shape_cast %75 : vector<1x128x128xf32> to vector<128x128xf32>
    %cst_83 = arith.constant dense<0.000000e+00> : vector<256x128xf32>
    %77 = tpu.matmul %74, %76, %cst_83 {dimension_numbers = #tpu.dot_dimension_numbers<[1], [0], [0], [1], [0, 0, 1, 1], [], []>} : vector<256x128xf32>, vector<128x128xf32>, vector<256x128xf32> -> vector<256x128xf32>
    %78 = arith.addf %72, %77 : vector<256x128xf32>
    %c3_84 = arith.constant 3 : index
    %c1_85 = arith.constant 1 : index
    %c0_86 = arith.constant 0 : index
    %79 = vector.load %arg8[%c3_84, %c1_85, %c0_86] : memref<20x20x128xf32, #tpu.memory_space<vmem>>, vector<16x16x128xf32>
    %80 = vector.shape_cast %79 : vector<16x16x128xf32> to vector<256x128xf32>
    %c6 = arith.constant 6 : index
    %c0_87 = arith.constant 0 : index
    %c0_88 = arith.constant 0 : index
    %81 = vector.load %arg2[%c6, %c0_87, %c0_88] : memref<9x128x128xf32, #tpu.memory_space<vmem>>, vector<1x128x128xf32>
    %82 = vector.shape_cast %81 : vector<1x128x128xf32> to vector<128x128xf32>
    %cst_89 = arith.constant dense<0.000000e+00> : vector<256x128xf32>
    %83 = tpu.matmul %80, %82, %cst_89 {dimension_numbers = #tpu.dot_dimension_numbers<[1], [0], [0], [1], [0, 0, 1, 1], [], []>} : vector<256x128xf32>, vector<128x128xf32>, vector<256x128xf32> -> vector<256x128xf32>
    %84 = arith.addf %78, %83 : vector<256x128xf32>
    %c3_90 = arith.constant 3 : index
    %c2_91 = arith.constant 2 : index
    %c0_92 = arith.constant 0 : index
    %85 = vector.load %arg8[%c3_90, %c2_91, %c0_92] : memref<20x20x128xf32, #tpu.memory_space<vmem>>, vector<16x16x128xf32>
    %86 = vector.shape_cast %85 : vector<16x16x128xf32> to vector<256x128xf32>
    %c7 = arith.constant 7 : index
    %c0_93 = arith.constant 0 : index
    %c0_94 = arith.constant 0 : index
    %87 = vector.load %arg2[%c7, %c0_93, %c0_94] : memref<9x128x128xf32, #tpu.memory_space<vmem>>, vector<1x128x128xf32>
    %88 = vector.shape_cast %87 : vector<1x128x128xf32> to vector<128x128xf32>
    %cst_95 = arith.constant dense<0.000000e+00> : vector<256x128xf32>
    %89 = tpu.matmul %86, %88, %cst_95 {dimension_numbers = #tpu.dot_dimension_numbers<[1], [0], [0], [1], [0, 0, 1, 1], [], []>} : vector<256x128xf32>, vector<128x128xf32>, vector<256x128xf32> -> vector<256x128xf32>
    %90 = arith.addf %84, %89 : vector<256x128xf32>
    %c3_96 = arith.constant 3 : index
    %c3_97 = arith.constant 3 : index
    %c0_98 = arith.constant 0 : index
    %91 = vector.load %arg8[%c3_96, %c3_97, %c0_98] : memref<20x20x128xf32, #tpu.memory_space<vmem>>, vector<16x16x128xf32>
    %92 = vector.shape_cast %91 : vector<16x16x128xf32> to vector<256x128xf32>
    %c8 = arith.constant 8 : index
    %c0_99 = arith.constant 0 : index
    %c0_100 = arith.constant 0 : index
    %93 = vector.load %arg2[%c8, %c0_99, %c0_100] : memref<9x128x128xf32, #tpu.memory_space<vmem>>, vector<1x128x128xf32>
    %94 = vector.shape_cast %93 : vector<1x128x128xf32> to vector<128x128xf32>
    %cst_101 = arith.constant dense<0.000000e+00> : vector<256x128xf32>
    %95 = tpu.matmul %92, %94, %cst_101 {dimension_numbers = #tpu.dot_dimension_numbers<[1], [0], [0], [1], [0, 0, 1, 1], [], []>} : vector<256x128xf32>, vector<128x128xf32>, vector<256x128xf32> -> vector<256x128xf32>
    %96 = arith.addf %90, %95 : vector<256x128xf32>
    %97 = vector.shape_cast %96 : vector<256x128xf32> to vector<16x16x128xf32>
    %c0_102 = arith.constant 0 : index
    %c0_103 = arith.constant 0 : index
    %c0_104 = arith.constant 0 : index
    %c0_105 = arith.constant 0 : index
    %c0_106 = arith.constant 0 : index
    %98 = vector.load %arg4[%c0_102, %c0_103, %c0_104, %c0_105, %c0_106] : memref<2x1x16x16x128xf32, #tpu.memory_space<vmem>>, vector<1x1x16x16x128xf32>
    %99 = vector.shape_cast %98 : vector<1x1x16x16x128xf32> to vector<16x16x128xf32>
    %100 = vector.shape_cast %97 : vector<16x16x128xf32> to vector<1x1x16x16x128xf32>
    tpu.vector_store %arg4[%c0_102, %c0_103, %c0_104, %c0_105, %c0_106], %100 {strides = array<i32>} : memref<2x1x16x16x128xf32, #tpu.memory_space<vmem>>, vector<1x1x16x16x128xf32>,
    %cst_107 = arith.constant dense<0.000000e+00> : vector<128xf32>
    %101 = vector.multi_reduction <add>, %96, %cst_107 [0] : vector<256x128xf32> to vector<128xf32>
    %102 = vector.shape_cast %101 : vector<128xf32> to vector<1x128xf32>
    %c0_108 = arith.constant 0 : index
    %c0_109 = arith.constant 0 : index
    %c0_110 = arith.constant 0 : index
    %103 = vector.load %arg6[%c0_108, %c0_109, %c0_110] : memref<1x4x128xf32, #tpu.memory_space<vmem>>, vector<1x1x128xf32>
    %104 = vector.shape_cast %103 : vector<1x1x128xf32> to vector<1x128xf32>
    %105 = vector.shape_cast %102 : vector<1x128xf32> to vector<1x1x128xf32>
    tpu.vector_store %arg6[%c0_108, %c0_109, %c0_110], %105 {strides = array<i32>} : memref<1x4x128xf32, #tpu.memory_space<vmem>>, vector<1x1x128xf32>,
    %106 = arith.mulf %96, %96 : vector<256x128xf32>
    %cst_111 = arith.constant dense<0.000000e+00> : vector<128xf32>
    %107 = vector.multi_reduction <add>, %106, %cst_111 [0] : vector<256x128xf32> to vector<128xf32>
    %108 = vector.shape_cast %107 : vector<128xf32> to vector<1x128xf32>
    %c0_112 = arith.constant 0 : index
    %c2_113 = arith.constant 2 : index
    %c0_114 = arith.constant 0 : index
    %109 = vector.load %arg6[%c0_112, %c2_113, %c0_114] : memref<1x4x128xf32, #tpu.memory_space<vmem>>, vector<1x1x128xf32>
    %110 = vector.shape_cast %109 : vector<1x1x128xf32> to vector<1x128xf32>
    %111 = vector.shape_cast %108 : vector<1x128xf32> to vector<1x1x128xf32>
    tpu.vector_store %arg6[%c0_112, %c2_113, %c0_114], %111 {strides = array<i32>} : memref<1x4x128xf32, #tpu.memory_space<vmem>>, vector<1x1x128xf32>,
    %c0_115 = arith.constant 0 : index
    %c0_116 = arith.constant 0 : index
    %c0_117 = arith.constant 0 : index
    %112 = vector.load %arg8[%c0_115, %c0_116, %c0_117] : memref<20x20x128xf32, #tpu.memory_space<vmem>>, vector<16x16x128xf32>
    %113 = vector.shape_cast %112 : vector<16x16x128xf32> to vector<256x128xf32>
    %c0_118 = arith.constant 0 : index
    %c0_119 = arith.constant 0 : index
    %c0_120 = arith.constant 0 : index
    %114 = vector.load %arg2[%c0_118, %c0_119, %c0_120] : memref<9x128x128xf32, #tpu.memory_space<vmem>>, vector<1x128x128xf32>
    %115 = vector.shape_cast %114 : vector<1x128x128xf32> to vector<128x128xf32>
    %cst_121 = arith.constant dense<0.000000e+00> : vector<256x128xf32>
    %116 = tpu.matmul %113, %115, %cst_121 {dimension_numbers = #tpu.dot_dimension_numbers<[1], [0], [0], [1], [0, 0, 1, 1], [], []>} : vector<256x128xf32>, vector<128x128xf32>, vector<256x128xf32> -> vector<256x128xf32>
    %c0_122 = arith.constant 0 : index
    %c2_123 = arith.constant 2 : index
    %c0_124 = arith.constant 0 : index
    %117 = vector.load %arg8[%c0_122, %c2_123, %c0_124] : memref<20x20x128xf32, #tpu.memory_space<vmem>>, vector<16x16x128xf32>
    %118 = vector.shape_cast %117 : vector<16x16x128xf32> to vector<256x128xf32>
    %c1_125 = arith.constant 1 : index
    %c0_126 = arith.constant 0 : index
    %c0_127 = arith.constant 0 : index
    %119 = vector.load %arg2[%c1_125, %c0_126, %c0_127] : memref<9x128x128xf32, #tpu.memory_space<vmem>>, vector<1x128x128xf32>
    %120 = vector.shape_cast %119 : vector<1x128x128xf32> to vector<128x128xf32>
    %cst_128 = arith.constant dense<0.000000e+00> : vector<256x128xf32>
    %121 = tpu.matmul %118, %120, %cst_128 {dimension_numbers = #tpu.dot_dimension_numbers<[1], [0], [0], [1], [0, 0, 1, 1], [], []>} : vector<256x128xf32>, vector<128x128xf32>, vector<256x128xf32> -> vector<256x128xf32>
    %122 = arith.addf %116, %121 : vector<256x128xf32>
    %c0_129 = arith.constant 0 : index
    %c4_130 = arith.constant 4 : index
    %c0_131 = arith.constant 0 : index
    %123 = vector.load %arg8[%c0_129, %c4_130, %c0_131] : memref<20x20x128xf32, #tpu.memory_space<vmem>>, vector<16x16x128xf32>
    %124 = vector.shape_cast %123 : vector<16x16x128xf32> to vector<256x128xf32>
    %c2_132 = arith.constant 2 : index
    %c0_133 = arith.constant 0 : index
    %c0_134 = arith.constant 0 : index
    %125 = vector.load %arg2[%c2_132, %c0_133, %c0_134] : memref<9x128x128xf32, #tpu.memory_space<vmem>>, vector<1x128x128xf32>
    %126 = vector.shape_cast %125 : vector<1x128x128xf32> to vector<128x128xf32>
    %cst_135 = arith.constant dense<0.000000e+00> : vector<256x128xf32>
    %127 = tpu.matmul %124, %126, %cst_135 {dimension_numbers = #tpu.dot_dimension_numbers<[1], [0], [0], [1], [0, 0, 1, 1], [], []>} : vector<256x128xf32>, vector<128x128xf32>, vector<256x128xf32> -> vector<256x128xf32>
    %128 = arith.addf %122, %127 : vector<256x128xf32>
    %c2_136 = arith.constant 2 : index
    %c0_137 = arith.constant 0 : index
    %c0_138 = arith.constant 0 : index
    %129 = vector.load %arg8[%c2_136, %c0_137, %c0_138] : memref<20x20x128xf32, #tpu.memory_space<vmem>>, vector<16x16x128xf32>
    %130 = vector.shape_cast %129 : vector<16x16x128xf32> to vector<256x128xf32>
    %c3_139 = arith.constant 3 : index
    %c0_140 = arith.constant 0 : index
    %c0_141 = arith.constant 0 : index
    %131 = vector.load %arg2[%c3_139, %c0_140, %c0_141] : memref<9x128x128xf32, #tpu.memory_space<vmem>>, vector<1x128x128xf32>
    %132 = vector.shape_cast %131 : vector<1x128x128xf32> to vector<128x128xf32>
    %cst_142 = arith.constant dense<0.000000e+00> : vector<256x128xf32>
    %133 = tpu.matmul %130, %132, %cst_142 {dimension_numbers = #tpu.dot_dimension_numbers<[1], [0], [0], [1], [0, 0, 1, 1], [], []>} : vector<256x128xf32>, vector<128x128xf32>, vector<256x128xf32> -> vector<256x128xf32>
    %134 = arith.addf %128, %133 : vector<256x128xf32>
    %c2_143 = arith.constant 2 : index
    %c2_144 = arith.constant 2 : index
    %c0_145 = arith.constant 0 : index
    %135 = vector.load %arg8[%c2_143, %c2_144, %c0_145] : memref<20x20x128xf32, #tpu.memory_space<vmem>>, vector<16x16x128xf32>
    %136 = vector.shape_cast %135 : vector<16x16x128xf32> to vector<256x128xf32>
    %c4_146 = arith.constant 4 : index
    %c0_147 = arith.constant 0 : index
    %c0_148 = arith.constant 0 : index
    %137 = vector.load %arg2[%c4_146, %c0_147, %c0_148] : memref<9x128x128xf32, #tpu.memory_space<vmem>>, vector<1x128x128xf32>
    %138 = vector.shape_cast %137 : vector<1x128x128xf32> to vector<128x128xf32>
    %cst_149 = arith.constant dense<0.000000e+00> : vector<256x128xf32>
    %139 = tpu.matmul %136, %138, %cst_149 {dimension_numbers = #tpu.dot_dimension_numbers<[1], [0], [0], [1], [0, 0, 1, 1], [], []>} : vector<256x128xf32>, vector<128x128xf32>, vector<256x128xf32> -> vector<256x128xf32>
    %140 = arith.addf %134, %139 : vector<256x128xf32>
    %c2_150 = arith.constant 2 : index
    %c4_151 = arith.constant 4 : index
    %c0_152 = arith.constant 0 : index
    %141 = vector.load %arg8[%c2_150, %c4_151, %c0_152] : memref<20x20x128xf32, #tpu.memory_space<vmem>>, vector<16x16x128xf32>
    %142 = vector.shape_cast %141 : vector<16x16x128xf32> to vector<256x128xf32>
    %c5_153 = arith.constant 5 : index
    %c0_154 = arith.constant 0 : index
    %c0_155 = arith.constant 0 : index
    %143 = vector.load %arg2[%c5_153, %c0_154, %c0_155] : memref<9x128x128xf32, #tpu.memory_space<vmem>>, vector<1x128x128xf32>
    %144 = vector.shape_cast %143 : vector<1x128x128xf32> to vector<128x128xf32>
    %cst_156 = arith.constant dense<0.000000e+00> : vector<256x128xf32>
    %145 = tpu.matmul %142, %144, %cst_156 {dimension_numbers = #tpu.dot_dimension_numbers<[1], [0], [0], [1], [0, 0, 1, 1], [], []>} : vector<256x128xf32>, vector<128x128xf32>, vector<256x128xf32> -> vector<256x128xf32>
    %146 = arith.addf %140, %145 : vector<256x128xf32>
    %c4_157 = arith.constant 4 : index
    %c0_158 = arith.constant 0 : index
    %c0_159 = arith.constant 0 : index
    %147 = vector.load %arg8[%c4_157, %c0_158, %c0_159] : memref<20x20x128xf32, #tpu.memory_space<vmem>>, vector<16x16x128xf32>
    %148 = vector.shape_cast %147 : vector<16x16x128xf32> to vector<256x128xf32>
    %c6_160 = arith.constant 6 : index
    %c0_161 = arith.constant 0 : index
    %c0_162 = arith.constant 0 : index
    %149 = vector.load %arg2[%c6_160, %c0_161, %c0_162] : memref<9x128x128xf32, #tpu.memory_space<vmem>>, vector<1x128x128xf32>
    %150 = vector.shape_cast %149 : vector<1x128x128xf32> to vector<128x128xf32>
    %cst_163 = arith.constant dense<0.000000e+00> : vector<256x128xf32>
    %151 = tpu.matmul %148, %150, %cst_163 {dimension_numbers = #tpu.dot_dimension_numbers<[1], [0], [0], [1], [0, 0, 1, 1], [], []>} : vector<256x128xf32>, vector<128x128xf32>, vector<256x128xf32> -> vector<256x128xf32>
    %152 = arith.addf %146, %151 : vector<256x128xf32>
    %c4_164 = arith.constant 4 : index
    %c2_165 = arith.constant 2 : index
    %c0_166 = arith.constant 0 : index
    %153 = vector.load %arg8[%c4_164, %c2_165, %c0_166] : memref<20x20x128xf32, #tpu.memory_space<vmem>>, vector<16x16x128xf32>
    %154 = vector.shape_cast %153 : vector<16x16x128xf32> to vector<256x128xf32>
    %c7_167 = arith.constant 7 : index
    %c0_168 = arith.constant 0 : index
    %c0_169 = arith.constant 0 : index
    %155 = vector.load %arg2[%c7_167, %c0_168, %c0_169] : memref<9x128x128xf32, #tpu.memory_space<vmem>>, vector<1x128x128xf32>
    %156 = vector.shape_cast %155 : vector<1x128x128xf32> to vector<128x128xf32>
    %cst_170 = arith.constant dense<0.000000e+00> : vector<256x128xf32>
    %157 = tpu.matmul %154, %156, %cst_170 {dimension_numbers = #tpu.dot_dimension_numbers<[1], [0], [0], [1], [0, 0, 1, 1], [], []>} : vector<256x128xf32>, vector<128x128xf32>, vector<256x128xf32> -> vector<256x128xf32>
    %158 = arith.addf %152, %157 : vector<256x128xf32>
    %c4_171 = arith.constant 4 : index
    %c4_172 = arith.constant 4 : index
    %c0_173 = arith.constant 0 : index
    %159 = vector.load %arg8[%c4_171, %c4_172, %c0_173] : memref<20x20x128xf32, #tpu.memory_space<vmem>>, vector<16x16x128xf32>
    %160 = vector.shape_cast %159 : vector<16x16x128xf32> to vector<256x128xf32>
    %c8_174 = arith.constant 8 : index
    %c0_175 = arith.constant 0 : index
    %c0_176 = arith.constant 0 : index
    %161 = vector.load %arg2[%c8_174, %c0_175, %c0_176] : memref<9x128x128xf32, #tpu.memory_space<vmem>>, vector<1x128x128xf32>
    %162 = vector.shape_cast %161 : vector<1x128x128xf32> to vector<128x128xf32>
    %cst_177 = arith.constant dense<0.000000e+00> : vector<256x128xf32>
    %163 = tpu.matmul %160, %162, %cst_177 {dimension_numbers = #tpu.dot_dimension_numbers<[1], [0], [0], [1], [0, 0, 1, 1], [], []>} : vector<256x128xf32>, vector<128x128xf32>, vector<256x128xf32> -> vector<256x128xf32>
    %164 = arith.addf %158, %163 : vector<256x128xf32>
    %165 = vector.shape_cast %164 : vector<256x128xf32> to vector<16x16x128xf32>
    %c1_178 = arith.constant 1 : index
    %c0_179 = arith.constant 0 : index
    %c0_180 = arith.constant 0 : index
    %c0_181 = arith.constant 0 : index
    %c0_182 = arith.constant 0 : index
    %166 = vector.load %arg4[%c1_178, %c0_179, %c0_180, %c0_181, %c0_182] : memref<2x1x16x16x128xf32, #tpu.memory_space<vmem>>, vector<1x1x16x16x128xf32>
    %167 = vector.shape_cast %166 : vector<1x1x16x16x128xf32> to vector<16x16x128xf32>
    %168 = vector.shape_cast %165 : vector<16x16x128xf32> to vector<1x1x16x16x128xf32>
    tpu.vector_store %arg4[%c1_178, %c0_179, %c0_180, %c0_181, %c0_182], %168 {strides = array<i32>} : memref<2x1x16x16x128xf32, #tpu.memory_space<vmem>>, vector<1x1x16x16x128xf32>,
    %cst_183 = arith.constant dense<0.000000e+00> : vector<128xf32>
    %169 = vector.multi_reduction <add>, %164, %cst_183 [0] : vector<256x128xf32> to vector<128xf32>
    %170 = vector.shape_cast %169 : vector<128xf32> to vector<1x128xf32>
    %c0_184 = arith.constant 0 : index
    %c1_185 = arith.constant 1 : index
    %c0_186 = arith.constant 0 : index
    %171 = vector.load %arg6[%c0_184, %c1_185, %c0_186] : memref<1x4x128xf32, #tpu.memory_space<vmem>>, vector<1x1x128xf32>
    %172 = vector.shape_cast %171 : vector<1x1x128xf32> to vector<1x128xf32>
    %173 = vector.shape_cast %170 : vector<1x128xf32> to vector<1x1x128xf32>
    tpu.vector_store %arg6[%c0_184, %c1_185, %c0_186], %173 {strides = array<i32>} : memref<1x4x128xf32, #tpu.memory_space<vmem>>, vector<1x1x128xf32>,
    %174 = arith.mulf %164, %164 : vector<256x128xf32>
    %cst_187 = arith.constant dense<0.000000e+00> : vector<128xf32>
    %175 = vector.multi_reduction <add>, %174, %cst_187 [0] : vector<256x128xf32> to vector<128xf32>
    %176 = vector.shape_cast %175 : vector<128xf32> to vector<1x128xf32>
    %c0_188 = arith.constant 0 : index
    %c3_189 = arith.constant 3 : index
    %c0_190 = arith.constant 0 : index
    %177 = vector.load %arg6[%c0_188, %c3_189, %c0_190] : memref<1x4x128xf32, #tpu.memory_space<vmem>>, vector<1x1x128xf32>
    %178 = vector.shape_cast %177 : vector<1x1x128xf32> to vector<1x128xf32>
    %179 = vector.shape_cast %176 : vector<1x128xf32> to vector<1x1x128xf32>
    tpu.vector_store %arg6[%c0_188, %c3_189, %c0_190], %179 {strides = array<i32>} : memref<1x4x128xf32, #tpu.memory_space<vmem>>, vector<1x1x128xf32>,
    return
  }
  func.func @transform_0(%arg0: i32) -> (i32, i32, i32, i32) {
    %c0_i32 = arith.constant 0 : i32
    %c0_i32_0 = arith.constant 0 : i32
    %c0_i32_1 = arith.constant 0 : i32
    %c0_i32_2 = arith.constant 0 : i32
    return %arg0, %c0_i32, %c0_i32_0, %c0_i32_1 : i32, i32, i32, i32
  }
  func.func @transform_1(%arg0: i32) -> (i32, i32, i32) {
    %c0_i32 = arith.constant 0 : i32
    %c0_i32_0 = arith.constant 0 : i32
    %c0_i32_1 = arith.constant 0 : i32
    %c0_i32_2 = arith.constant 0 : i32
    return %c0_i32, %c0_i32_0, %c0_i32_1 : i32, i32, i32
  }
  func.func @transform_2(%arg0: i32) -> (i32, i32) {
    %c0_i32 = arith.constant 0 : i32
    %c0_i32_0 = arith.constant 0 : i32
    %c0_i32_1 = arith.constant 0 : i32
    return %c0_i32, %c0_i32_0 : i32, i32
  }
  func.func @transform_3(%arg0: i32) -> (i32, i32, i32, i32, i32) {
    %c0_i32 = arith.constant 0 : i32
    %c0_i32_0 = arith.constant 0 : i32
    %c0_i32_1 = arith.constant 0 : i32
    %c0_i32_2 = arith.constant 0 : i32
    %c0_i32_3 = arith.constant 0 : i32
    return %c0_i32, %arg0, %c0_i32_0, %c0_i32_1, %c0_i32_2 : i32, i32, i32, i32, i32
  }
  func.func @transform_4(%arg0: i32) -> (i32, i32, i32, i32, i32) {
    %c0_i32 = arith.constant 0 : i32
    %c0_i32_0 = arith.constant 0 : i32
    %c0_i32_1 = arith.constant 0 : i32
    %c0_i32_2 = arith.constant 0 : i32
    %c0_i32_3 = arith.constant 0 : i32
    return %c0_i32, %arg0, %c0_i32_0, %c0_i32_1, %c0_i32_2 : i32, i32, i32, i32, i32
  }
  func.func @transform_5(%arg0: i32) -> (i32, i32, i32) {
    %c0_i32 = arith.constant 0 : i32
    %c0_i32_0 = arith.constant 0 : i32
    %c0_i32_1 = arith.constant 0 : i32
    return %arg0, %c0_i32, %c0_i32_0 : i32, i32, i32
  }
  func.func @transform_6(%arg0: i32) -> (i32, i32, i32) {
    %c0_i32 = arith.constant 0 : i32
    %c0_i32_0 = arith.constant 0 : i32
    %c0_i32_1 = arith.constant 0 : i32
    return %arg0, %c0_i32, %c0_i32_0 : i32, i32, i32
  }
}

</mosaic_0001>

<llo_original>
// kernel: tpu_custom_call.1
$region0: #{tpu_custom_call.1}
  #allocation0 [shape = 'u32[]', space=smem, size = 0x4, offset = 0x4, fixed_abs, tag = 'smem constant byte address 0x4 - core index']
  #allocation1 [shape = 'u32[144,128]{1,0:T(1,128)}', space=vmem, size = 0x12000, scoped, tag = 'internal scratch']
  #allocation2 [shape = 'f32[20,20,128]{2,1,0:T(8,128)}', space=vmem, size = 0x3c000, scoped, tag = 'scratch operand']
  #allocation15 [shape = 's32[]', space=sflag, size = 0x4, offset = 0, fixed_abs, tag = 'sflag constant byte address 0x0 - dummy sync flag']
  #allocation17 [shape = 's32[]', space=sflag, size = 0x4, offset = 0, fixed_abs, tag = 'sflag constant byte address 0x0 - dummy sync flag']
  %s0 = inlined_call_operand.hbm [shape: f32[2,16,16,128], index: 0, kind: input, shape index: {}]
  %s1 = inlined_call_operand.hbm [shape: f32[9,128,128], index: 1, kind: input, shape index: {}]
  %s2 = inlined_call_operand.hbm [shape: f32[128,256], index: 2, kind: input, shape index: {}]
  %s3 = inlined_call_operand.hbm [shape: f32[2,2,16,16,128], index: 3, kind: output, shape index: {0}]
  %s4 = inlined_call_operand.hbm [shape: f32[2,2,16,16,128], index: 4, kind: output, shape index: {1}]
  %s5 = inlined_call_operand.hbm [shape: f32[2,4,128], index: 5, kind: output, shape index: {2}]
  %s6 = inlined_call_operand.hbm [shape: f32[2,4,128], index: 6, kind: output, shape index: {3}]
  %7 = xla_tuple %s3, %s4, %s5, %s6
  %s8 = sld [smem:[#allocation0]]
  $region81: #{tpu_custom_call.1} parent=0
    _
  %s10 = ssub.s32 1, %s8
  %s11 = scalar_select 0, %s10, %s8
  $region1: #{tpu_custom_call.1} parent=0
    #allocation3 [shape = 'u8[262144]{0}', space=vmem, size = 0x40000, scoped, tag = 'input window, operand 0']
    #allocation4 [shape = 's32[2]{0}', space=sflag, size = 0x8, scoped, tag = 'scoped memory for tpu_custom_call.1']
    #allocation5 [shape = 's32[2]{0}', space=sflag, size = 0x8, scoped, tag = 'scoped memory for tpu_custom_call.1']
    #allocation6 [shape = 'u8[589824]{0}', space=vmem, size = 0x90000, scoped, tag = 'input window, operand 1, single buffered']
    #allocation7 [shape = 's32[1]{0}', space=sflag, size = 0x4, scoped, tag = 'scoped memory for tpu_custom_call.1']
    #allocation8 [shape = 'u8[131072]{0}', space=vmem, size = 0x20000, scoped, tag = 'input window, operand 2, single buffered']
    #allocation9 [shape = 'u8[524288]{0}', space=vmem, size = 0x80000, scoped, tag = 'output window, operand 0']
    #allocation10 [shape = 'u8[524288]{0}', space=vmem, size = 0x80000, scoped, tag = 'output window, operand 1']
    #allocation11 [shape = 's32[2]{0}', space=sflag, size = 0x8, scoped, tag = 'scoped memory for tpu_custom_call.1']
    #allocation12 [shape = 'u8[4096]{0}', space=vmem, size = 0x1000, scoped, tag = 'output window, operand 2']
    #allocation13 [shape = 'u8[4096]{0}', space=vmem, size = 0x1000, scoped, tag = 'output window, operand 3']
    #allocation14 [shape = 's32[2]{0}', space=sflag, size = 0x8, scoped, tag = 'scoped memory for tpu_custom_call.1']
    %12 = vsyncpa [#allocation4], 0
    %s13 = scalar_lea.sflag [#allocation4], 1
    %14 = vsyncpa %s13, 0
    %15 = vsyncpa [#allocation7], 0
    %16 = vsyncpa [#allocation5], 0
    %s17 = scalar_lea.sflag [#allocation5], 1
    %18 = vsyncpa %s17, 0
    %19 = vsyncpa [#allocation11], 0
    %s20 = scalar_lea.sflag [#allocation11], 1
    %21 = vsyncpa %s20, 0
    %22 = vsyncpa [#allocation14], 0
    %s23 = scalar_lea.sflag [#allocation14], 1
    %24 = vsyncpa %s23, 0
    loop: start=0, step=1, limit=4
    $region2: #{tpu_custom_call.1} parent=1 // loop_pre_header
      _
    $region3: #{tpu_custom_call.1} parent=1 // loop_header
      %s26 = sphi 0, %s30
      %p27 = scmp.ge.s32.totalorder %s26, 4
      %s36 = sphi 0, %s38
      %s39 = sphi 0, %s36
      %s40 = sphi 0, %s39
      %s56 = sphi 0, %s40
      %s60 = sphi 0, %s60
      %s62 = sphi 0, %s60
      %s63 = sphi 0, %s62
      %s77 = sphi 0, %s63
      %s81 = sphi 0, %s81
      %s83 = sphi 0, %s81
      %s84 = sphi 0, %s83
      %s98 = sphi 0, %s84
      %s104 = sphi 0, %s106
      %s107 = sphi 0, %s104
      %s108 = sphi 0, %s107
      %s124 = sphi 0, %s108
      %s130 = sphi 0, %s132
      %s133 = sphi 0, %s130
      %s134 = sphi 0, %s133
      %s150 = sphi 0, %s134
      %s156 = sphi 0, %s158
      %s159 = sphi 0, %s156
      %s160 = sphi 0, %s159
      %s176 = sphi 0, %s160
      %s182 = sphi 0, %s184
      %s185 = sphi 0, %s182
      %s186 = sphi 0, %s185
      %s202 = sphi 0, %s186
    $region4: #{tpu_custom_call.1} parent=1 // loop_header_branch
      %29 = sbr.rel (%p27) target = $region8
    $region5: #{tpu_custom_call.1} parent=1 // loop_body
      %s31 = ssub.s32 %s26, 1
      %s32 = ssub.s32 %s26, 2
      %s33 = sadd.s32 %s26, 1
      %s34 = ssub.s32 %s26, %s33
      %p35 = scmp.eq.s32.totalorder %s34, 0
      %s37 = sadd.s32 %s36, 1
      %s38 = scalar_select %p35, %s36, %s37
      %p41 = pneg %p35
      %p42 = scmp.eq.s32.totalorder %s26, 1
      %p43 = por %p41, %p42
      %p44 = scmp.ne.s32.totalorder %s36, %s39
      %p45 = scmp.eq.s32.totalorder %s26, 0
      %p46 = por %p44, %p45
      %p47 = scmp.ne.s32.totalorder %s36, %s39
      %p48 = scmp.eq.s32.totalorder %s31, 1
      %p49 = por %p47, %p48
      %p50 = scmp.ne.s32.totalorder %s39, %s40
      %p51 = scmp.eq.s32.totalorder %s31, 0
      %p52 = por %p50, %p51
      %p53 = scmp.ne.s32.totalorder %s39, %s40
      %p54 = scmp.eq.s32.totalorder %s32, 1
      %p55 = por %p53, %p54
      %p57 = scmp.ne.s32.totalorder %s40, %s56
      %p58 = scmp.eq.s32.totalorder %s32, 0
      %p59 = por %p57, %p58
      %s61 = sadd.s32 %s60, 1
      %p64 = scmp.eq.s32.totalorder %s26, 1
      %p65 = scmp.ne.s32.totalorder %s60, %s62
      %p66 = scmp.eq.s32.totalorder %s26, 0
      %p67 = por %p65, %p66
      %p68 = scmp.ne.s32.totalorder %s60, %s62
      %p69 = scmp.eq.s32.totalorder %s31, 1
      %p70 = por %p68, %p69
      %p71 = scmp.ne.s32.totalorder %s62, %s63
      %p72 = scmp.eq.s32.totalorder %s31, 0
      %p73 = por %p71, %p72
      %p74 = scmp.ne.s32.totalorder %s62, %s63
      %p75 = scmp.eq.s32.totalorder %s32, 1
      %p76 = por %p74, %p75
      %p78 = scmp.ne.s32.totalorder %s63, %s77
      %p79 = scmp.eq.s32.totalorder %s32, 0
      %p80 = por %p78, %p79
      %s82 = sadd.s32 %s81, 1
      %p85 = scmp.eq.s32.totalorder %s26, 1
      %p86 = scmp.ne.s32.totalorder %s81, %s83
      %p87 = scmp.eq.s32.totalorder %s26, 0
      %p88 = por %p86, %p87
      %p89 = scmp.ne.s32.totalorder %s81, %s83
      %p90 = scmp.eq.s32.totalorder %s31, 1
      %p91 = por %p89, %p90
      %p92 = scmp.ne.s32.totalorder %s83, %s84
      %p93 = scmp.eq.s32.totalorder %s31, 0
      %p94 = por %p92, %p93
      %p95 = scmp.ne.s32.totalorder %s83, %s84
      %p96 = scmp.eq.s32.totalorder %s32, 1
      %p97 = por %p95, %p96
      %p99 = scmp.ne.s32.totalorder %s84, %s98
      %p100 = scmp.eq.s32.totalorder %s32, 0
      %p101 = por %p99, %p100
      %s102 = ssub.s32 %s26, %s33
      %p103 = scmp.eq.s32.totalorder %s102, 0
      %s105 = sadd.s32 %s104, 1
      %s106 = scalar_select %p103, %s104, %s105
      %p109 = pneg %p103
      %p110 = scmp.eq.s32.totalorder %s26, 1
      %p111 = por %p109, %p110
      %p112 = scmp.ne.s32.totalorder %s104, %s107
      %p113 = scmp.eq.s32.totalorder %s26, 0
      %p114 = por %p112, %p113
      %p115 = scmp.ne.s32.totalorder %s104, %s107
      %p116 = scmp.eq.s32.totalorder %s31, 1
      %p117 = por %p115, %p116
      %p118 = scmp.ne.s32.totalorder %s107, %s108
      %p119 = scmp.eq.s32.totalorder %s31, 0
      %p120 = por %p118, %p119
      %p121 = scmp.ne.s32.totalorder %s107, %s108
      %p122 = scmp.eq.s32.totalorder %s32, 1
      %p123 = por %p121, %p122
      %p125 = scmp.ne.s32.totalorder %s108, %s124
      %p126 = scmp.eq.s32.totalorder %s32, 0
      %p127 = por %p125, %p126
      %s128 = ssub.s32 %s26, %s33
      %p129 = scmp.eq.s32.totalorder %s128, 0
      %s131 = sadd.s32 %s130, 1
      %s132 = scalar_select %p129, %s130, %s131
      %p135 = pneg %p129
      %p136 = scmp.eq.s32.totalorder %s26, 1
      %p137 = por %p135, %p136
      %p138 = scmp.ne.s32.totalorder %s130, %s133
      %p139 = scmp.eq.s32.totalorder %s26, 0
      %p140 = por %p138, %p139
      %p141 = scmp.ne.s32.totalorder %s130, %s133
      %p142 = scmp.eq.s32.totalorder %s31, 1
      %p143 = por %p141, %p142
      %p144 = scmp.ne.s32.totalorder %s133, %s134
      %p145 = scmp.eq.s32.totalorder %s31, 0
      %p146 = por %p144, %p145
      %p147 = scmp.ne.s32.totalorder %s133, %s134
      %p148 = scmp.eq.s32.totalorder %s32, 1
      %p149 = por %p147, %p148
      %p151 = scmp.ne.s32.totalorder %s134, %s150
      %p152 = scmp.eq.s32.totalorder %s32, 0
      %p153 = por %p151, %p152
      %s154 = ssub.s32 %s26, %s33
      %p155 = scmp.eq.s32.totalorder %s154, 0
      %s157 = sadd.s32 %s156, 1
      %s158 = scalar_select %p155, %s156, %s157
      %p161 = pneg %p155
      %p162 = scmp.eq.s32.totalorder %s26, 1
      %p163 = por %p161, %p162
      %p164 = scmp.ne.s32.totalorder %s156, %s159
      %p165 = scmp.eq.s32.totalorder %s26, 0
      %p166 = por %p164, %p165
      %p167 = scmp.ne.s32.totalorder %s156, %s159
      %p168 = scmp.eq.s32.totalorder %s31, 1
      %p169 = por %p167, %p168
      %p170 = scmp.ne.s32.totalorder %s159, %s160
      %p171 = scmp.eq.s32.totalorder %s31, 0
      %p172 = por %p170, %p171
      %p173 = scmp.ne.s32.totalorder %s159, %s160
      %p174 = scmp.eq.s32.totalorder %s32, 1
      %p175 = por %p173, %p174
      %p177 = scmp.ne.s32.totalorder %s160, %s176
      %p178 = scmp.eq.s32.totalorder %s32, 0
      %p179 = por %p177, %p178
      %s180 = ssub.s32 %s26, %s33
      %p181 = scmp.eq.s32.totalorder %s180, 0
      %s183 = sadd.s32 %s182, 1
      %s184 = scalar_select %p181, %s182, %s183
      %p187 = pneg %p181
      %p188 = scmp.eq.s32.totalorder %s26, 1
      %p189 = por %p187, %p188
      %p190 = scmp.ne.s32.totalorder %s182, %s185
      %p191 = scmp.eq.s32.totalorder %s26, 0
      %p192 = por %p190, %p191
      %p193 = scmp.ne.s32.totalorder %s182, %s185
      %p194 = scmp.eq.s32.totalorder %s31, 1
      %p195 = por %p193, %p194
      %p196 = scmp.ne.s32.totalorder %s185, %s186
      %p197 = scmp.eq.s32.totalorder %s31, 0
      %p198 = por %p196, %p197
      %p199 = scmp.ne.s32.totalorder %s185, %s186
      %p200 = scmp.eq.s32.totalorder %s32, 1
      %p201 = por %p199, %p200
      %p203 = scmp.ne.s32.totalorder %s186, %s202
      %p204 = scmp.eq.s32.totalorder %s32, 0
      %p205 = por %p203, %p204
      %p206 = scmp.le.s32.totalorder 1, %s26
      %p207 = scmp.lt.s32.totalorder %s26, 3
      %p208 = pnand %p206, %p207
      %p209 = pneg %p208
      // Predicated region
      $region9: #{tpu_custom_call.1} parent=5 // pred_check
        _
      $region10: #{tpu_custom_call.1} parent=5 // pred_check_branch
        %211 = sbr.rel (%p208) target = $region12
      $region11: #{tpu_custom_call.1} parent=5 // pred_region
        %s212 = ssub.s32 %s26, 1
        // Predicated region
        $region13: #{tpu_custom_call.1} parent=11 // pred_check
          %p213 = pneg %p73
        $region14: #{tpu_custom_call.1} parent=11 // pred_check_branch
          %215 = sbr.rel (%p213) target = $region16
        $region15: #{tpu_custom_call.1} parent=11 // pred_region
          %s217 = ssub.s32 18432, 18432
          %218 = vsyncadd [#allocation7], %s217
          %s219 = sshll.u32 [#allocation6], 4
          %s220 = int_to_ptr.vmem [resolvable:$true] %s219
          %225 = dma.hbm_to_vmem [thread:$0]  %s1, 18432, %s220, [#allocation7], 128, 128, 8
        $region16: #{tpu_custom_call.1} parent=11 // pred_fallthru
          _
        // Predicated region
        $region17: #{tpu_custom_call.1} parent=11 // pred_check
          %p226 = pneg %p94
        $region18: #{tpu_custom_call.1} parent=11 // pred_check_branch
          %228 = sbr.rel (%p226) target = $region20
        $region19: #{tpu_custom_call.1} parent=11 // pred_region
          %s230 = ssub.s32 4096, 4096
          %231 = vsyncadd [#allocation7], %s230
          %s232 = sshll.u32 [#allocation8], 4
          %s233 = int_to_ptr.vmem [resolvable:$true] %s232
          %238 = dma.hbm_to_vmem [thread:$0]  %s2, 4096, %s233, [#allocation7], 256, 256, 16
        $region20: #{tpu_custom_call.1} parent=11 // pred_fallthru
          _
      $region12: #{tpu_custom_call.1} parent=5 // pred_fallthru
        _
      %p239 = scmp.lt.s32.totalorder %s26, 2
      // Predicated region
      $region21: #{tpu_custom_call.1} parent=5 // pred_check
        %p240 = pneg %p239
      $region22: #{tpu_custom_call.1} parent=5 // pred_check_branch
        %242 = sbr.rel (%p240) target = $region24
      $region23: #{tpu_custom_call.1} parent=5 // pred_region
        // Predicated region
        $region25: #{tpu_custom_call.1} parent=23 // pred_check
          %p243 = pneg %p46
        $region26: #{tpu_custom_call.1} parent=23 // pred_check_branch
          %245 = sbr.rel (%p243) target = $region28
        $region27: #{tpu_custom_call.1} parent=23 // pred_region
          %s246 = sand.u32 %s36, 1
          %s247 = scalar_lea.sflag [#allocation4], %s246
          %s248 = sand.u32 %s36, 1
          %s249 = smul.addr %s248, 256
          %s250 = scalar_lea.vmem [#allocation3], %s249
          %s252 = ssub.s32 4096, 4096
          %253 = vsyncadd %s247, %s252
          %s254 = smul.addr %s26, 32
          %s255 = smul.addr %s254, 128
          %s256 = scalar_lea.hbm %s0, %s255
          %s257 = sshll.u32 %s250, 4
          %s258 = int_to_ptr.vmem [resolvable:$true] %s257
          %263 = dma.hbm_to_vmem [thread:$0]  %s256, 4096, %s258, %s247, 128, 128, 8
        $region28: #{tpu_custom_call.1} parent=23 // pred_fallthru
          _
      $region24: #{tpu_custom_call.1} parent=5 // pred_fallthru
        _
      %p264 = scmp.le.s32.totalorder 1, %s26
      %p265 = scmp.lt.s32.totalorder %s26, 3
      %p266 = pnand %p264, %p265
      %p267 = pneg %p266
      // Predicated region
      $region29: #{tpu_custom_call.1} parent=5 // pred_check
        _
      $region30: #{tpu_custom_call.1} parent=5 // pred_check_branch
        %269 = sbr.rel (%p266) target = $region32
      $region31: #{tpu_custom_call.1} parent=5 // pred_region
        %s270 = ssub.s32 %s26, 1
        %s271 = sand.u32 %s39, 1
        %s272 = scalar_lea.sflag [#allocation4], %s271
        %s273 = sand.u32 %s39, 1
        %s274 = smul.addr %s273, 256
        %s275 = scalar_lea.vmem [#allocation3], %s274
        // Predicated region
        $region33: #{tpu_custom_call.1} parent=31 // pred_check
          %p276 = pneg %p52
        $region34: #{tpu_custom_call.1} parent=31 // pred_check_branch
          %278 = sbr.rel (%p276) target = $region36
        $region35: #{tpu_custom_call.1} parent=31 // pred_region
          %279 = dma.done %s272, 4096
        $region36: #{tpu_custom_call.1} parent=31 // pred_fallthru
          _
        // Predicated region
        $region37: #{tpu_custom_call.1} parent=31 // pred_check
          %p280 = pneg %p73
        $region38: #{tpu_custom_call.1} parent=31 // pred_check_branch
          %282 = sbr.rel (%p280) target = $region40
        $region39: #{tpu_custom_call.1} parent=31 // pred_region
          %283 = dma.done [#allocation7], 18432
        $region40: #{tpu_custom_call.1} parent=31 // pred_fallthru
          _
        // Predicated region
        $region41: #{tpu_custom_call.1} parent=31 // pred_check
          %p284 = pneg %p94
        $region42: #{tpu_custom_call.1} parent=31 // pred_check_branch
          %286 = sbr.rel (%p284) target = $region44
        $region43: #{tpu_custom_call.1} parent=31 // pred_region
          %287 = dma.done [#allocation7], 4096
        $region44: #{tpu_custom_call.1} parent=31 // pred_fallthru
          _
        %s288 = sand.u32 %s39, 1
        %s289 = scalar_lea.sflag [#allocation4], %s288
        %s290 = sand.u32 %s39, 1
        %s291 = smul.addr %s290, 256
        %s292 = scalar_lea.vmem [#allocation3], %s291
        %p293 = pneg %p52
        %p294 = pneg %p49
        %p295 = pneg %p73
        %p296 = pneg %p70
        %p297 = pneg %p94
        %p298 = pneg %p91
        %p299 = pneg %p120
        %p300 = pneg %p117
        %s301 = sand.u32 %s107, 1
        %s302 = scalar_lea.sflag [#allocation5], %s301
        %s303 = sand.u32 %s107, 1
        %s304 = smul.addr %s303, 512
        %s305 = scalar_lea.vmem [#allocation9], %s304
        %p306 = pneg %p146
        %p307 = pneg %p143
        %s308 = sand.u32 %s31, 1
        %s309 = scalar_lea.sflag [#allocation11], %s308
        %s310 = sand.u32 %s133, 1
        %s311 = smul.addr %s310, 512
        %s312 = scalar_lea.vmem [#allocation10], %s311
        %p313 = pneg %p172
        %p314 = pneg %p169
        %s315 = sand.u32 %s31, 1
        %s316 = scalar_lea.sflag [#allocation11], %s315
        %s317 = sand.u32 %s159, 1
        %s318 = smul.addr %s317, 4
        %s319 = scalar_lea.vmem [#allocation12], %s318
        %p320 = pneg %p198
        %p321 = pneg %p195
        %s322 = sand.u32 %s185, 1
        %s323 = scalar_lea.sflag [#allocation14], %s322
        %s324 = sand.u32 %s185, 1
        %s325 = smul.addr %s324, 4
        %s326 = scalar_lea.vmem [#allocation13], %s325
        %v327 = vld [vmem:[%s275] sm:$0xff]
        %v328 = vld [vmem:[%s275 + $0x8] sm:$0xff]
        %v329 = vld [vmem:[%s275 + $0x10] sm:$0xff]
        %v330 = vld [vmem:[%s275 + $0x18] sm:$0xff]
        %v331 = vld [vmem:[%s275 + $0x20] sm:$0xff]
        %v332 = vld [vmem:[%s275 + $0x28] sm:$0xff]
        %v333 = vld [vmem:[%s275 + $0x30] sm:$0xff]
        %v334 = vld [vmem:[%s275 + $0x38] sm:$0xff]
        %v335 = vld [vmem:[%s275 + $0x40] sm:$0xff]
        %v336 = vld [vmem:[%s275 + $0x48] sm:$0xff]
        %v337 = vld [vmem:[%s275 + $0x50] sm:$0xff]
        %v338 = vld [vmem:[%s275 + $0x58] sm:$0xff]
        %v339 = vld [vmem:[%s275 + $0x60] sm:$0xff]
        %v340 = vld [vmem:[%s275 + $0x68] sm:$0xff]
        %v341 = vld [vmem:[%s275 + $0x70] sm:$0xff]
        %v342 = vld [vmem:[%s275 + $0x78] sm:$0xff]
        %v343 = vld [vmem:[%s275 + $0x80] sm:$0xff]
        %v344 = vld [vmem:[%s275 + $0x88] sm:$0xff]
        %v345 = vld [vmem:[%s275 + $0x90] sm:$0xff]
        %v346 = vld [vmem:[%s275 + $0x98] sm:$0xff]
        %v347 = vld [vmem:[%s275 + $0xa0] sm:$0xff]
        %v348 = vld [vmem:[%s275 + $0xa8] sm:$0xff]
        %v349 = vld [vmem:[%s275 + $0xb0] sm:$0xff]
        %v350 = vld [vmem:[%s275 + $0xb8] sm:$0xff]
        %v351 = vld [vmem:[%s275 + $0xc0] sm:$0xff]
        %v352 = vld [vmem:[%s275 + $0xc8] sm:$0xff]
        %v353 = vld [vmem:[%s275 + $0xd0] sm:$0xff]
        %v354 = vld [vmem:[%s275 + $0xd8] sm:$0xff]
        %v355 = vld [vmem:[%s275 + $0xe0] sm:$0xff]
        %v356 = vld [vmem:[%s275 + $0xe8] sm:$0xff]
        %v357 = vld [vmem:[%s275 + $0xf0] sm:$0xff]
        %v358 = vld [vmem:[%s275 + $0xf8] sm:$0xff]
        %359 = vst [vmem:[#allocation2] sm:$0xff] 0.0
        %360 = vst [vmem:[#allocation2 + $0x8] sm:$0xff] 0.0
        %361 = vst [vmem:[#allocation2 + $0x10] sm:$0xf] 0.0
        %362 = vst [vmem:[#allocation2 + $0x18] sm:$0xff] 0.0
        %363 = vst [vmem:[#allocation2 + $0x20] sm:$0xff] 0.0
        %364 = vst [vmem:[#allocation2 + $0x28] sm:$0xf] 0.0
        %s365 = scalar_lea.vmem [#allocation2], 432
        %366 = vst [vmem:[%s365] sm:$0xff] 0.0
        %367 = vst [vmem:[%s365 + $0x8] sm:$0xff] 0.0
        %368 = vst [vmem:[%s365 + $0x10] sm:$0xf] 0.0
        %369 = vst [vmem:[%s365 + $0x18] sm:$0xff] 0.0
        %370 = vst [vmem:[%s365 + $0x20] sm:$0xff] 0.0
        %371 = vst [vmem:[%s365 + $0x28] sm:$0xf] 0.0
        %s372 = scalar_lea.vmem [#allocation2], 48
        %373 = vst [vmem:[%s372] sm:$0x3] 0.0
        %374 = vst [vmem:[%s372 + $0x18] sm:$0x3] 0.0
        %375 = vst [vmem:[%s372 + $0x30] sm:$0x3] 0.0
        %376 = vst [vmem:[%s372 + $0x48] sm:$0x3] 0.0
        %377 = vst [vmem:[%s372 + $0x60] sm:$0x3] 0.0
        %378 = vst [vmem:[%s372 + $0x78] sm:$0x3] 0.0
        %379 = vst [vmem:[%s372 + $0x90] sm:$0x3] 0.0
        %380 = vst [vmem:[%s372 + $0xa8] sm:$0x3] 0.0
        %381 = vst [vmem:[%s372 + $0xc0] sm:$0x3] 0.0
        %382 = vst [vmem:[%s372 + $0xd8] sm:$0x3] 0.0
        %383 = vst [vmem:[%s372 + $0xf0] sm:$0x3] 0.0
        %384 = vst [vmem:[%s372 + $0x108] sm:$0x3] 0.0
        %385 = vst [vmem:[%s372 + $0x120] sm:$0x3] 0.0
        %386 = vst [vmem:[%s372 + $0x138] sm:$0x3] 0.0
        %387 = vst [vmem:[%s372 + $0x150] sm:$0x3] 0.0
        %388 = vst [vmem:[%s372 + $0x168] sm:$0x3] 0.0
        %389 = vst [vmem:[%s372 + $0x12] sm:$0x3] 0.0
        %390 = vst [vmem:[%s372 + $0x2a] sm:$0x3] 0.0
        %391 = vst [vmem:[%s372 + $0x42] sm:$0x3] 0.0
        %392 = vst [vmem:[%s372 + $0x5a] sm:$0x3] 0.0
        %393 = vst [vmem:[%s372 + $0x72] sm:$0x3] 0.0
        %394 = vst [vmem:[%s372 + $0x8a] sm:$0x3] 0.0
        %395 = vst [vmem:[%s372 + $0xa2] sm:$0x3] 0.0
        %396 = vst [vmem:[%s372 + $0xba] sm:$0x3] 0.0
        %397 = vst [vmem:[%s372 + $0xd2] sm:$0x3] 0.0
        %398 = vst [vmem:[%s372 + $0xea] sm:$0x3] 0.0
        %399 = vst [vmem:[%s372 + $0x102] sm:$0x3] 0.0
        %400 = vst [vmem:[%s372 + $0x11a] sm:$0x3] 0.0
        %401 = vst [vmem:[%s372 + $0x132] sm:$0x3] 0.0
        %402 = vst [vmem:[%s372 + $0x14a] sm:$0x3] 0.0
        %403 = vst [vmem:[%s372 + $0x162] sm:$0x3] 0.0
        %404 = vst [vmem:[%s372 + $0x17a] sm:$0x3] 0.0
        %405 = vst [vmem:[%s372 + $0x2] sm:$0xff] %v327
        %406 = vst [vmem:[%s372 + $0xa] sm:$0xff] %v328
        %407 = vst [vmem:[%s372 + $0x1a] sm:$0xff] %v329
        %408 = vst [vmem:[%s372 + $0x22] sm:$0xff] %v330
        %409 = vst [vmem:[%s372 + $0x32] sm:$0xff] %v331
        %410 = vst [vmem:[%s372 + $0x3a] sm:$0xff] %v332
        %411 = vst [vmem:[%s372 + $0x4a] sm:$0xff] %v333
        %412 = vst [vmem:[%s372 + $0x52] sm:$0xff] %v334
        %413 = vst [vmem:[%s372 + $0x62] sm:$0xff] %v335
        %414 = vst [vmem:[%s372 + $0x6a] sm:$0xff] %v336
        %415 = vst [vmem:[%s372 + $0x7a] sm:$0xff] %v337
        %416 = vst [vmem:[%s372 + $0x82] sm:$0xff] %v338
        %417 = vst [vmem:[%s372 + $0x92] sm:$0xff] %v339
        %418 = vst [vmem:[%s372 + $0x9a] sm:$0xff] %v340
        %419 = vst [vmem:[%s372 + $0xaa] sm:$0xff] %v341
        %420 = vst [vmem:[%s372 + $0xb2] sm:$0xff] %v342
        %421 = vst [vmem:[%s372 + $0xc2] sm:$0xff] %v343
        %422 = vst [vmem:[%s372 + $0xca] sm:$0xff] %v344
        %423 = vst [vmem:[%s372 + $0xda] sm:$0xff] %v345
        %424 = vst [vmem:[%s372 + $0xe2] sm:$0xff] %v346
        %425 = vst [vmem:[%s372 + $0xf2] sm:$0xff] %v347
        %426 = vst [vmem:[%s372 + $0xfa] sm:$0xff] %v348
        %427 = vst [vmem:[%s372 + $0x10a] sm:$0xff] %v349
        %428 = vst [vmem:[%s372 + $0x112] sm:$0xff] %v350
        %429 = vst [vmem:[%s372 + $0x122] sm:$0xff] %v351
        %430 = vst [vmem:[%s372 + $0x12a] sm:$0xff] %v352
        %431 = vst [vmem:[%s372 + $0x13a] sm:$0xff] %v353
        %432 = vst [vmem:[%s372 + $0x142] sm:$0xff] %v354
        %433 = vst [vmem:[%s372 + $0x152] sm:$0xff] %v355
        %434 = vst [vmem:[%s372 + $0x15a] sm:$0xff] %v356
        %435 = vst [vmem:[%s372 + $0x16a] sm:$0xff] %v357
        %436 = vst [vmem:[%s372 + $0x172] sm:$0xff] %v358
        %v437 = vld [vmem:[#allocation8] sm:$0xff]
        %v438 = vld [vmem:[#allocation8 + $0x8] sm:$0xff]
        %v439 = vld [vmem:[#allocation8 + $0x10] sm:$0xff]
        %v440 = vld [vmem:[#allocation8 + $0x18] sm:$0xff]
        %v441 = vld [vmem:[#allocation8 + $0x20] sm:$0xff]
        %v442 = vld [vmem:[#allocation8 + $0x28] sm:$0xff]
        %v443 = vld [vmem:[#allocation8 + $0x30] sm:$0xff]
        %v444 = vld [vmem:[#allocation8 + $0x38] sm:$0xff]
        %v445 = vld [vmem:[#allocation8 + $0x40] sm:$0xff]
        %v446 = vld [vmem:[#allocation8 + $0x48] sm:$0xff]
        %v447 = vld [vmem:[#allocation8 + $0x50] sm:$0xff]
        %v448 = vld [vmem:[#allocation8 + $0x58] sm:$0xff]
        %v449 = vld [vmem:[#allocation8 + $0x60] sm:$0xff]
        %v450 = vld [vmem:[#allocation8 + $0x68] sm:$0xff]
        %v451 = vld [vmem:[#allocation8 + $0x70] sm:$0xff]
        %v452 = vld [vmem:[#allocation8 + $0x78] sm:$0xff]
        %v453 = vld [vmem:[#allocation8 + $0x80] sm:$0xff]
        %v454 = vld [vmem:[#allocation8 + $0x88] sm:$0xff]
        %v455 = vld [vmem:[#allocation8 + $0x90] sm:$0xff]
        %v456 = vld [vmem:[#allocation8 + $0x98] sm:$0xff]
        %v457 = vld [vmem:[#allocation8 + $0xa0] sm:$0xff]
        %v458 = vld [vmem:[#allocation8 + $0xa8] sm:$0xff]
        %v459 = vld [vmem:[#allocation8 + $0xb0] sm:$0xff]
        %v460 = vld [vmem:[#allocation8 + $0xb8] sm:$0xff]
        %v461 = vld [vmem:[#allocation8 + $0xc0] sm:$0xff]
        %v462 = vld [vmem:[#allocation8 + $0xc8] sm:$0xff]
        %v463 = vld [vmem:[#allocation8 + $0xd0] sm:$0xff]
        %v464 = vld [vmem:[#allocation8 + $0xd8] sm:$0xff]
        %v465 = vld [vmem:[#allocation8 + $0xe0] sm:$0xff]
        %v466 = vld [vmem:[#allocation8 + $0xe8] sm:$0xff]
        %v467 = vld [vmem:[#allocation8 + $0xf0] sm:$0xff]
        %v468 = vld [vmem:[#allocation8 + $0xf8] sm:$0xff]
        %469 = vmatprep.subr.mxu0 %v438
        %470 = vmatpush1.msra.mxu0 %v437
        %471 = vmatprep.subr.mxu0 %v440
        %472 = vmatpush1.msra.mxu0 %v439
        %473 = vmatprep.subr.mxu0 %v442
        %474 = vmatpush1.msra.mxu0 %v441
        %475 = vmatprep.subr.mxu0 %v444
        %476 = vmatpush1.msra.mxu0 %v443
        %477 = vmatprep.subr.mxu0 %v446
        %478 = vmatpush1.msra.mxu0 %v445
        %479 = vmatprep.subr.mxu0 %v448
        %480 = vmatpush1.msra.mxu0 %v447
        %481 = vmatprep.subr.mxu0 %v450
        %482 = vmatpush1.msra.mxu0 %v449
        %483 = vmatprep.subr.mxu0 %v452
        %484 = vmatpush1.msra.mxu0 %v451
        %485 = vmatprep.subr.mxu0 %v454
        %486 = vmatpush1.msra.mxu0 %v453
        %487 = vmatprep.subr.mxu0 %v456
        %488 = vmatpush1.msra.mxu0 %v455
        %489 = vmatprep.subr.mxu0 %v458
        %490 = vmatpush1.msra.mxu0 %v457
        %491 = vmatprep.subr.mxu0 %v460
        %492 = vmatpush1.msra.mxu0 %v459
        %493 = vmatprep.subr.mxu0 %v462
        %494 = vmatpush1.msra.mxu0 %v461
        %495 = vmatprep.subr.mxu0 %v464
        %496 = vmatpush1.msra.mxu0 %v463
        %497 = vmatprep.subr.mxu0 %v466
        %498 = vmatpush1.msra.mxu0 %v465
        %499 = vmatprep.subr.mxu0 %v468
        %500 = vmatpush1.msra.mxu0 %v467
        %501 = vmatprep.subr.mxu0 0.0
        %502 = vmatpush1.msra.mxu0 0.0
        %503 = vmatprep.subr.mxu0 0.0
        %504 = vmatpush1.msra.mxu0 0.0
        %505 = vmatprep.subr.mxu0 0.0
        %506 = vmatpush1.msra.mxu0 0.0
        %507 = vmatprep.subr.mxu0 0.0
        %508 = vmatpush1.msra.mxu0 0.0
        %509 = vmatprep.subr.mxu0 0.0
        %510 = vmatpush1.msra.mxu0 0.0
        %511 = vmatprep.subr.mxu0 0.0
        %512 = vmatpush1.msra.mxu0 0.0
        %513 = vmatprep.subr.mxu0 0.0
        %514 = vmatpush1.msra.mxu0 0.0
        %515 = vmatprep.subr.mxu0 0.0
        %516 = vmatpush1.msra.mxu0 0.0
        %517 = vmatprep.subr.mxu0 0.0
        %518 = vmatpush1.msra.mxu0 0.0
        %519 = vmatprep.subr.mxu0 0.0
        %520 = vmatpush1.msra.mxu0 0.0
        %521 = vmatprep.subr.mxu0 0.0
        %522 = vmatpush1.msra.mxu0 0.0
        %523 = vmatprep.subr.mxu0 0.0
        %524 = vmatpush1.msra.mxu0 0.0
        %525 = vmatprep.subr.mxu0 0.0
        %526 = vmatpush1.msra.mxu0 0.0
        %527 = vmatprep.subr.mxu0 0.0
        %528 = vmatpush1.msra.mxu0 0.0
        %529 = vmatprep.subr.mxu0 0.0
        %530 = vmatpush1.msra.mxu0 0.0
        %531 = vmatprep.subr.mxu0 0.0
        %532 = vmatpush1.msra.mxu0 0.0
        %533 = vmatprep.mubr.f32.mxu0 0.0
        %534 = vmatmul.mubr.f32.gmra.mrb[0].mxu0 %v327
        %v535 = vpop.f32.mrb[0].mxu0
        %v536 = vadd.f32 0.0, %v535
        %v537 = vpop.f32.mrb[0].mxu0
        %v538 = vadd.f32 0.0, %v537
        %539 = vmatprep.mubr.f32.mxu0 0.0
        %540 = vmatmul.mubr.f32.gmra.mrb[0].mxu0 %v328
        %v541 = vpop.f32.mrb[0].mxu0
        %v542 = vadd.f32 0.0, %v541
        %v543 = vpop.f32.mrb[0].mxu0
        %v544 = vadd.f32 0.0, %v543
        %545 = vmatprep.mubr.f32.mxu0 0.0
        %546 = vmatmul.mubr.f32.gmra.mrb[0].mxu0 %v329
        %v547 = vpop.f32.mrb[0].mxu0
        %v548 = vadd.f32 0.0, %v547
        %v549 = vpop.f32.mrb[0].mxu0
        %v550 = vadd.f32 0.0, %v549
        %551 = vmatprep.mubr.f32.mxu0 0.0
        %552 = vmatmul.mubr.f32.gmra.mrb[0].mxu0 %v330
        %v553 = vpop.f32.mrb[0].mxu0
        %v554 = vadd.f32 0.0, %v553
        %v555 = vpop.f32.mrb[0].mxu0
        %v556 = vadd.f32 0.0, %v555
        %557 = vmatprep.mubr.f32.mxu0 0.0
        %558 = vmatmul.mubr.f32.gmra.mrb[0].mxu0 %v331
        %v559 = vpop.f32.mrb[0].mxu0
        %v560 = vadd.f32 0.0, %v559
        %v561 = vpop.f32.mrb[0].mxu0
        %v562 = vadd.f32 0.0, %v561
        %563 = vmatprep.mubr.f32.mxu0 0.0
        %564 = vmatmul.mubr.f32.gmra.mrb[0].mxu0 %v332
        %v565 = vpop.f32.mrb[0].mxu0
        %v566 = vadd.f32 0.0, %v565
        %v567 = vpop.f32.mrb[0].mxu0
        %v568 = vadd.f32 0.0, %v567
        %569 = vmatprep.mubr.f32.mxu0 0.0
        %570 = vmatmul.mubr.f32.gmra.mrb[0].mxu0 %v333
        %v571 = vpop.f32.mrb[0].mxu0
        %v572 = vadd.f32 0.0, %v571
        %v573 = vpop.f32.mrb[0].mxu0
        %v574 = vadd.f32 0.0, %v573
        %575 = vmatprep.mubr.f32.mxu0 0.0
        %576 = vmatmul.mubr.f32.gmra.mrb[0].mxu0 %v334
        %v577 = vpop.f32.mrb[0].mxu0
        %v578 = vadd.f32 0.0, %v577
        %v579 = vpop.f32.mrb[0].mxu0
        %v580 = vadd.f32 0.0, %v579
        %581 = vmatprep.mubr.f32.mxu0 0.0
        %582 = vmatmul.mubr.f32.gmra.mrb[0].mxu0 %v335
        %v583 = vpop.f32.mrb[0].mxu0
        %v584 = vadd.f32 0.0, %v583
        %v585 = vpop.f32.mrb[0].mxu0
        %v586 = vadd.f32 0.0, %v585
        %587 = vmatprep.mubr.f32.mxu0 0.0
        %588 = vmatmul.mubr.f32.gmra.mrb[0].mxu0 %v336
        %v589 = vpop.f32.mrb[0].mxu0
        %v590 = vadd.f32 0.0, %v589
        %v591 = vpop.f32.mrb[0].mxu0
        %v592 = vadd.f32 0.0, %v591
        %593 = vmatprep.mubr.f32.mxu0 0.0
        %594 = vmatmul.mubr.f32.gmra.mrb[0].mxu0 %v337
        %v595 = vpop.f32.mrb[0].mxu0
        %v596 = vadd.f32 0.0, %v595
        %v597 = vpop.f32.mrb[0].mxu0
        %v598 = vadd.f32 0.0, %v597
        %599 = vmatprep.mubr.f32.mxu0 0.0
        %600 = vmatmul.mubr.f32.gmra.mrb[0].mxu0 %v338
        %v601 = vpop.f32.mrb[0].mxu0
        %v602 = vadd.f32 0.0, %v601
        %v603 = vpop.f32.mrb[0].mxu0
        %v604 = vadd.f32 0.0, %v603
        %605 = vmatprep.mubr.f32.mxu0 0.0
        %606 = vmatmul.mubr.f32.gmra.mrb[0].mxu0 %v339
        %v607 = vpop.f32.mrb[0].mxu0
        %v608 = vadd.f32 0.0, %v607
        %v609 = vpop.f32.mrb[0].mxu0
        %v610 = vadd.f32 0.0, %v609
        %611 = vmatprep.mubr.f32.mxu0 0.0
        %612 = vmatmul.mubr.f32.gmra.mrb[0].mxu0 %v340
        %v613 = vpop.f32.mrb[0].mxu0
        %v614 = vadd.f32 0.0, %v613
        %v615 = vpop.f32.mrb[0].mxu0
        %v616 = vadd.f32 0.0, %v615
        %617 = vmatprep.mubr.f32.mxu0 0.0
        %618 = vmatmul.mubr.f32.gmra.mrb[0].mxu0 %v341
        %v619 = vpop.f32.mrb[0].mxu0
        %v620 = vadd.f32 0.0, %v619
        %v621 = vpop.f32.mrb[0].mxu0
        %v622 = vadd.f32 0.0, %v621
        %623 = vmatprep.mubr.f32.mxu0 0.0
        %624 = vmatmul.mubr.f32.gmra.mrb[0].mxu0 %v342
        %v625 = vpop.f32.mrb[0].mxu0
        %v626 = vadd.f32 0.0, %v625
        %v627 = vpop.f32.mrb[0].mxu0
        %v628 = vadd.f32 0.0, %v627
        %629 = vmatprep.mubr.f32.mxu0 0.0
        %630 = vmatmul.mubr.f32.gmra.mrb[0].mxu0 %v343
        %v631 = vpop.f32.mrb[0].mxu0
        %v632 = vadd.f32 0.0, %v631
        %v633 = vpop.f32.mrb[0].mxu0
        %v634 = vadd.f32 0.0, %v633
        %635 = vmatprep.mubr.f32.mxu0 0.0
        %636 = vmatmul.mubr.f32.gmra.mrb[0].mxu0 %v344
        %v637 = vpop.f32.mrb[0].mxu0
        %v638 = vadd.f32 0.0, %v637
        %v639 = vpop.f32.mrb[0].mxu0
        %v640 = vadd.f32 0.0, %v639
        %641 = vmatprep.mubr.f32.mxu0 0.0
        %642 = vmatmul.mubr.f32.gmra.mrb[0].mxu0 %v345
        %v643 = vpop.f32.mrb[0].mxu0
        %v644 = vadd.f32 0.0, %v643
        %v645 = vpop.f32.mrb[0].mxu0
        %v646 = vadd.f32 0.0, %v645
        %647 = vmatprep.mubr.f32.mxu0 0.0
        %648 = vmatmul.mubr.f32.gmra.mrb[0].mxu0 %v346
        %v649 = vpop.f32.mrb[0].mxu0
        %v650 = vadd.f32 0.0, %v649
        %v651 = vpop.f32.mrb[0].mxu0
        %v652 = vadd.f32 0.0, %v651
        %653 = vmatprep.mubr.f32.mxu0 0.0
        %654 = vmatmul.mubr.f32.gmra.mrb[0].mxu0 %v347
        %v655 = vpop.f32.mrb[0].mxu0
        %v656 = vadd.f32 0.0, %v655
        %v657 = vpop.f32.mrb[0].mxu0
        %v658 = vadd.f32 0.0, %v657
        %659 = vmatprep.mubr.f32.mxu0 0.0
        %660 = vmatmul.mubr.f32.gmra.mrb[0].mxu0 %v348
        %v661 = vpop.f32.mrb[0].mxu0
        %v662 = vadd.f32 0.0, %v661
        %v663 = vpop.f32.mrb[0].mxu0
        %v664 = vadd.f32 0.0, %v663
        %665 = vmatprep.mubr.f32.mxu0 0.0
        %666 = vmatmul.mubr.f32.gmra.mrb[0].mxu0 %v349
        %v667 = vpop.f32.mrb[0].mxu0
        %v668 = vadd.f32 0.0, %v667
        %v669 = vpop.f32.mrb[0].mxu0
        %v670 = vadd.f32 0.0, %v669
        %671 = vmatprep.mubr.f32.mxu0 0.0
        %672 = vmatmul.mubr.f32.gmra.mrb[0].mxu0 %v350
        %v673 = vpop.f32.mrb[0].mxu0
        %v674 = vadd.f32 0.0, %v673
        %v675 = vpop.f32.mrb[0].mxu0
        %v676 = vadd.f32 0.0, %v675
        %677 = vmatprep.mubr.f32.mxu0 0.0
        %678 = vmatmul.mubr.f32.gmra.mrb[0].mxu0 %v351
        %v679 = vpop.f32.mrb[0].mxu0
        %v680 = vadd.f32 0.0, %v679
        %v681 = vpop.f32.mrb[0].mxu0
        %v682 = vadd.f32 0.0, %v681
        %683 = vmatprep.mubr.f32.mxu0 0.0
        %684 = vmatmul.mubr.f32.gmra.mrb[0].mxu0 %v352
        %v685 = vpop.f32.mrb[0].mxu0
        %v686 = vadd.f32 0.0, %v685
        %v687 = vpop.f32.mrb[0].mxu0
        %v688 = vadd.f32 0.0, %v687
        %689 = vmatprep.mubr.f32.mxu0 0.0
        %690 = vmatmul.mubr.f32.gmra.mrb[0].mxu0 %v353
        %v691 = vpop.f32.mrb[0].mxu0
        %v692 = vadd.f32 0.0, %v691
        %v693 = vpop.f32.mrb[0].mxu0
        %v694 = vadd.f32 0.0, %v693
        %695 = vmatprep.mubr.f32.mxu0 0.0
        %696 = vmatmul.mubr.f32.gmra.mrb[0].mxu0 %v354
        %v697 = vpop.f32.mrb[0].mxu0
        %v698 = vadd.f32 0.0, %v697
        %v699 = vpop.f32.mrb[0].mxu0
        %v700 = vadd.f32 0.0, %v699
        %701 = vmatprep.mubr.f32.mxu0 0.0
        %702 = vmatmul.mubr.f32.gmra.mrb[0].mxu0 %v355
        %v703 = vpop.f32.mrb[0].mxu0
        %v704 = vadd.f32 0.0, %v703
        %v705 = vpop.f32.mrb[0].mxu0
        %v706 = vadd.f32 0.0, %v705
        %707 = vmatprep.mubr.f32.mxu0 0.0
        %708 = vmatmul.mubr.f32.gmra.mrb[0].mxu0 %v356
        %v709 = vpop.f32.mrb[0].mxu0
        %v710 = vadd.f32 0.0, %v709
        %v711 = vpop.f32.mrb[0].mxu0
        %v712 = vadd.f32 0.0, %v711
        %713 = vmatprep.mubr.f32.mxu0 0.0
        %714 = vmatmul.mubr.f32.gmra.mrb[0].mxu0 %v357
        %v715 = vpop.f32.mrb[0].mxu0
        %v716 = vadd.f32 0.0, %v715
        %v717 = vpop.f32.mrb[0].mxu0
        %v718 = vadd.f32 0.0, %v717
        %719 = vmatprep.mubr.f32.mxu0 0.0
        %720 = vmatmul.mubr.f32.gmra.mrb[0].mxu0 %v358
        %v721 = vpop.f32.mrb[0].mxu0
        %v722 = vadd.f32 0.0, %v721
        %v723 = vpop.f32.mrb[0].mxu0
        %v724 = vadd.f32 0.0, %v723
        %725 = vdwg.mxu0
        %726 = vst [vmem:[%s312] sm:$0xff] %v536
        %727 = vst [vmem:[%s312 + $0x8] sm:$0xff] %v542
        %728 = vst [vmem:[%s312 + $0x10] sm:$0xff] %v548
        %729 = vst [vmem:[%s312 + $0x18] sm:$0xff] %v554
        %730 = vst [vmem:[%s312 + $0x20] sm:$0xff] %v560
        %731 = vst [vmem:[%s312 + $0x28] sm:$0xff] %v566
        %732 = vst [vmem:[%s312 + $0x30] sm:$0xff] %v572
        %733 = vst [vmem:[%s312 + $0x38] sm:$0xff] %v578
        %734 = vst [vmem:[%s312 + $0x40] sm:$0xff] %v584
        %735 = vst [vmem:[%s312 + $0x48] sm:$0xff] %v590
        %736 = vst [vmem:[%s312 + $0x50] sm:$0xff] %v596
        %737 = vst [vmem:[%s312 + $0x58] sm:$0xff] %v602
        %738 = vst [vmem:[%s312 + $0x60] sm:$0xff] %v608
        %739 = vst [vmem:[%s312 + $0x68] sm:$0xff] %v614
        %740 = vst [vmem:[%s312 + $0x70] sm:$0xff] %v620
        %741 = vst [vmem:[%s312 + $0x78] sm:$0xff] %v626
        %742 = vst [vmem:[%s312 + $0x80] sm:$0xff] %v632
        %743 = vst [vmem:[%s312 + $0x88] sm:$0xff] %v638
        %744 = vst [vmem:[%s312 + $0x90] sm:$0xff] %v644
        %745 = vst [vmem:[%s312 + $0x98] sm:$0xff] %v650
        %746 = vst [vmem:[%s312 + $0xa0] sm:$0xff] %v656
        %747 = vst [vmem:[%s312 + $0xa8] sm:$0xff] %v662
        %748 = vst [vmem:[%s312 + $0xb0] sm:$0xff] %v668
        %749 = vst [vmem:[%s312 + $0xb8] sm:$0xff] %v674
        %750 = vst [vmem:[%s312 + $0xc0] sm:$0xff] %v680
        %751 = vst [vmem:[%s312 + $0xc8] sm:$0xff] %v686
        %752 = vst [vmem:[%s312 + $0xd0] sm:$0xff] %v692
        %753 = vst [vmem:[%s312 + $0xd8] sm:$0xff] %v698
        %754 = vst [vmem:[%s312 + $0xe0] sm:$0xff] %v704
        %755 = vst [vmem:[%s312 + $0xe8] sm:$0xff] %v710
        %756 = vst [vmem:[%s312 + $0xf0] sm:$0xff] %v716
        %757 = vst [vmem:[%s312 + $0xf8] sm:$0xff] %v722
        %v758 = vadd.f32 %v536, %v542
        %v759 = vadd.f32 %v758, %v548
        %v760 = vadd.f32 %v759, %v554
        %v761 = vadd.f32 %v760, %v560
        %v762 = vadd.f32 %v761, %v566
        %v763 = vadd.f32 %v762, %v572
        %v764 = vadd.f32 %v763, %v578
        %v765 = vadd.f32 %v764, %v584
        %v766 = vadd.f32 %v765, %v590
        %v767 = vadd.f32 %v766, %v596
        %v768 = vadd.f32 %v767, %v602
        %v769 = vadd.f32 %v768, %v608
        %v770 = vadd.f32 %v769, %v614
        %v771 = vadd.f32 %v770, %v620
        %v772 = vadd.f32 %v771, %v626
        %v773 = vadd.f32 %v772, %v632
        %v774 = vadd.f32 %v773, %v638
        %v775 = vadd.f32 %v774, %v644
        %v776 = vadd.f32 %v775, %v650
        %v777 = vadd.f32 %v776, %v656
        %v778 = vadd.f32 %v777, %v662
        %v779 = vadd.f32 %v778, %v668
        %v780 = vadd.f32 %v779, %v674
        %v781 = vadd.f32 %v780, %v680
        %v782 = vadd.f32 %v781, %v686
        %v783 = vadd.f32 %v782, %v692
        %v784 = vadd.f32 %v783, %v698
        %v785 = vadd.f32 %v784, %v704
        %v786 = vadd.f32 %v785, %v710
        %v787 = vadd.f32 %v786, %v716
        %v788 = vadd.f32 %v787, %v722
        %v789 = vrot.slane %v788, 4
        %v790 = vadd.f32 %v788, %v789
        %v791 = vrot.slane %v790, 2
        %v792 = vadd.f32 %v790, %v791
        %v793 = vrot.slane %v792, 1
        %v794 = vadd.f32 %v792, %v793
        %795 = vst [vmem:[%s326] sm:$0x1] %v794
        %v796 = vmul.f32 %v536, %v536
        %v797 = vmul.f32 %v542, %v542
        %v798 = vmul.f32 %v548, %v548
        %v799 = vmul.f32 %v554, %v554
        %v800 = vmul.f32 %v560, %v560
        %v801 = vmul.f32 %v566, %v566
        %v802 = vmul.f32 %v572, %v572
        %v803 = vmul.f32 %v578, %v578
        %v804 = vmul.f32 %v584, %v584
        %v805 = vmul.f32 %v590, %v590
        %v806 = vmul.f32 %v596, %v596
        %v807 = vmul.f32 %v602, %v602
        %v808 = vmul.f32 %v608, %v608
        %v809 = vmul.f32 %v614, %v614
        %v810 = vmul.f32 %v620, %v620
        %v811 = vmul.f32 %v626, %v626
        %v812 = vmul.f32 %v632, %v632
        %v813 = vmul.f32 %v638, %v638
        %v814 = vmul.f32 %v644, %v644
        %v815 = vmul.f32 %v650, %v650
        %v816 = vmul.f32 %v656, %v656
        %v817 = vmul.f32 %v662, %v662
        %v818 = vmul.f32 %v668, %v668
        %v819 = vmul.f32 %v674, %v674
        %v820 = vmul.f32 %v680, %v680
        %v821 = vmul.f32 %v686, %v686
        %v822 = vmul.f32 %v692, %v692
        %v823 = vmul.f32 %v698, %v698
        %v824 = vmul.f32 %v704, %v704
        %v825 = vmul.f32 %v710, %v710
        %v826 = vmul.f32 %v716, %v716
        %v827 = vmul.f32 %v722, %v722
        %v828 = vadd.f32 %v796, %v797
        %v829 = vadd.f32 %v828, %v798
        %v830 = vadd.f32 %v829, %v799
        %v831 = vadd.f32 %v830, %v800
        %v832 = vadd.f32 %v831, %v801
        %v833 = vadd.f32 %v832, %v802
        %v834 = vadd.f32 %v833, %v803
        %v835 = vadd.f32 %v834, %v804
        %v836 = vadd.f32 %v835, %v805
        %v837 = vadd.f32 %v836, %v806
        %v838 = vadd.f32 %v837, %v807
        %v839 = vadd.f32 %v838, %v808
        %v840 = vadd.f32 %v839, %v809
        %v841 = vadd.f32 %v840, %v810
        %v842 = vadd.f32 %v841, %v811
        %v843 = vadd.f32 %v842, %v812
        %v844 = vadd.f32 %v843, %v813
        %v845 = vadd.f32 %v844, %v814
        %v846 = vadd.f32 %v845, %v815
        %v847 = vadd.f32 %v846, %v816
        %v848 = vadd.f32 %v847, %v817
        %v849 = vadd.f32 %v848, %v818
        %v850 = vadd.f32 %v849, %v819
        %v851 = vadd.f32 %v850, %v820
        %v852 = vadd.f32 %v851, %v821
        %v853 = vadd.f32 %v852, %v822
        %v854 = vadd.f32 %v853, %v823
        %v855 = vadd.f32 %v854, %v824
        %v856 = vadd.f32 %v855, %v825
        %v857 = vadd.f32 %v856, %v826
        %v858 = vadd.f32 %v857, %v827
        %v859 = vrot.slane %v858, 4
        %v860 = vadd.f32 %v858, %v859
        %v861 = vrot.slane %v860, 2
        %v862 = vadd.f32 %v860, %v861
        %v863 = vrot.slane %v862, 1
        %v864 = vadd.f32 %v862, %v863
        %865 = vst [vmem:[%s326 + $0x2] sm:$0x1] %v864
        %s866 = scalar_lea.vmem %s312, 256 [#allocation10]
        %867 = vst [vmem:[%s866] sm:$0xff] %v538
        %868 = vst [vmem:[%s866 + $0x8] sm:$0xff] %v544
        %869 = vst [vmem:[%s866 + $0x10] sm:$0xff] %v550
        %870 = vst [vmem:[%s866 + $0x18] sm:$0xff] %v556
        %871 = vst [vmem:[%s866 + $0x20] sm:$0xff] %v562
        %872 = vst [vmem:[%s866 + $0x28] sm:$0xff] %v568
        %873 = vst [vmem:[%s866 + $0x30] sm:$0xff] %v574
        %874 = vst [vmem:[%s866 + $0x38] sm:$0xff] %v580
        %875 = vst [vmem:[%s866 + $0x40] sm:$0xff] %v586
        %876 = vst [vmem:[%s866 + $0x48] sm:$0xff] %v592
        %877 = vst [vmem:[%s866 + $0x50] sm:$0xff] %v598
        %878 = vst [vmem:[%s866 + $0x58] sm:$0xff] %v604
        %879 = vst [vmem:[%s866 + $0x60] sm:$0xff] %v610
        %880 = vst [vmem:[%s866 + $0x68] sm:$0xff] %v616
        %881 = vst [vmem:[%s866 + $0x70] sm:$0xff] %v622
        %882 = vst [vmem:[%s866 + $0x78] sm:$0xff] %v628
        %883 = vst [vmem:[%s866 + $0x80] sm:$0xff] %v634
        %884 = vst [vmem:[%s866 + $0x88] sm:$0xff] %v640
        %885 = vst [vmem:[%s866 + $0x90] sm:$0xff] %v646
        %886 = vst [vmem:[%s866 + $0x98] sm:$0xff] %v652
        %887 = vst [vmem:[%s866 + $0xa0] sm:$0xff] %v658
        %888 = vst [vmem:[%s866 + $0xa8] sm:$0xff] %v664
        %889 = vst [vmem:[%s866 + $0xb0] sm:$0xff] %v670
        %890 = vst [vmem:[%s866 + $0xb8] sm:$0xff] %v676
        %891 = vst [vmem:[%s866 + $0xc0] sm:$0xff] %v682
        %892 = vst [vmem:[%s866 + $0xc8] sm:$0xff] %v688
        %893 = vst [vmem:[%s866 + $0xd0] sm:$0xff] %v694
        %894 = vst [vmem:[%s866 + $0xd8] sm:$0xff] %v700
        %895 = vst [vmem:[%s866 + $0xe0] sm:$0xff] %v706
        %896 = vst [vmem:[%s866 + $0xe8] sm:$0xff] %v712
        %897 = vst [vmem:[%s866 + $0xf0] sm:$0xff] %v718
        %898 = vst [vmem:[%s866 + $0xf8] sm:$0xff] %v724
        %v899 = vadd.f32 %v538, %v544
        %v900 = vadd.f32 %v899, %v550
        %v901 = vadd.f32 %v900, %v556
        %v902 = vadd.f32 %v901, %v562
        %v903 = vadd.f32 %v902, %v568
        %v904 = vadd.f32 %v903, %v574
        %v905 = vadd.f32 %v904, %v580
        %v906 = vadd.f32 %v905, %v586
        %v907 = vadd.f32 %v906, %v592
        %v908 = vadd.f32 %v907, %v598
        %v909 = vadd.f32 %v908, %v604
        %v910 = vadd.f32 %v909, %v610
        %v911 = vadd.f32 %v910, %v616
        %v912 = vadd.f32 %v911, %v622
        %v913 = vadd.f32 %v912, %v628
        %v914 = vadd.f32 %v913, %v634
        %v915 = vadd.f32 %v914, %v640
        %v916 = vadd.f32 %v915, %v646
        %v917 = vadd.f32 %v916, %v652
        %v918 = vadd.f32 %v917, %v658
        %v919 = vadd.f32 %v918, %v664
        %v920 = vadd.f32 %v919, %v670
        %v921 = vadd.f32 %v920, %v676
        %v922 = vadd.f32 %v921, %v682
        %v923 = vadd.f32 %v922, %v688
        %v924 = vadd.f32 %v923, %v694
        %v925 = vadd.f32 %v924, %v700
        %v926 = vadd.f32 %v925, %v706
        %v927 = vadd.f32 %v926, %v712
        %v928 = vadd.f32 %v927, %v718
        %v929 = vadd.f32 %v928, %v724
        %v930 = vrot.slane %v929, 4
        %v931 = vadd.f32 %v929, %v930
        %v932 = vrot.slane %v931, 2
        %v933 = vadd.f32 %v931, %v932
        %v934 = vrot.slane %v933, 1
        %v935 = vadd.f32 %v933, %v934
        %936 = vst [vmem:[%s326 + $0x1] sm:$0x1] %v935
        %v937 = vmul.f32 %v538, %v538
        %v938 = vmul.f32 %v544, %v544
        %v939 = vmul.f32 %v550, %v550
        %v940 = vmul.f32 %v556, %v556
        %v941 = vmul.f32 %v562, %v562
        %v942 = vmul.f32 %v568, %v568
        %v943 = vmul.f32 %v574, %v574
        %v944 = vmul.f32 %v580, %v580
        %v945 = vmul.f32 %v586, %v586
        %v946 = vmul.f32 %v592, %v592
        %v947 = vmul.f32 %v598, %v598
        %v948 = vmul.f32 %v604, %v604
        %v949 = vmul.f32 %v610, %v610
        %v950 = vmul.f32 %v616, %v616
        %v951 = vmul.f32 %v622, %v622
        %v952 = vmul.f32 %v628, %v628
        %v953 = vmul.f32 %v634, %v634
        %v954 = vmul.f32 %v640, %v640
        %v955 = vmul.f32 %v646, %v646
        %v956 = vmul.f32 %v652, %v652
        %v957 = vmul.f32 %v658, %v658
        %v958 = vmul.f32 %v664, %v664
        %v959 = vmul.f32 %v670, %v670
        %v960 = vmul.f32 %v676, %v676
        %v961 = vmul.f32 %v682, %v682
        %v962 = vmul.f32 %v688, %v688
        %v963 = vmul.f32 %v694, %v694
        %v964 = vmul.f32 %v700, %v700
        %v965 = vmul.f32 %v706, %v706
        %v966 = vmul.f32 %v712, %v712
        %v967 = vmul.f32 %v718, %v718
        %v968 = vmul.f32 %v724, %v724
        %v969 = vadd.f32 %v937, %v938
        %v970 = vadd.f32 %v969, %v939
        %v971 = vadd.f32 %v970, %v940
        %v972 = vadd.f32 %v971, %v941
        %v973 = vadd.f32 %v972, %v942
        %v974 = vadd.f32 %v973, %v943
        %v975 = vadd.f32 %v974, %v944
        %v976 = vadd.f32 %v975, %v945
        %v977 = vadd.f32 %v976, %v946
        %v978 = vadd.f32 %v977, %v947
        %v979 = vadd.f32 %v978, %v948
        %v980 = vadd.f32 %v979, %v949
        %v981 = vadd.f32 %v980, %v950
        %v982 = vadd.f32 %v981, %v951
        %v983 = vadd.f32 %v982, %v952
        %v984 = vadd.f32 %v983, %v953
        %v985 = vadd.f32 %v984, %v954
        %v986 = vadd.f32 %v985, %v955
        %v987 = vadd.f32 %v986, %v956
        %v988 = vadd.f32 %v987, %v957
        %v989 = vadd.f32 %v988, %v958
        %v990 = vadd.f32 %v989, %v959
        %v991 = vadd.f32 %v990, %v960
        %v992 = vadd.f32 %v991, %v961
        %v993 = vadd.f32 %v992, %v962
        %v994 = vadd.f32 %v993, %v963
        %v995 = vadd.f32 %v994, %v964
        %v996 = vadd.f32 %v995, %v965
        %v997 = vadd.f32 %v996, %v966
        %v998 = vadd.f32 %v997, %v967
        %v999 = vadd.f32 %v998, %v968
        %v1000 = vrot.slane %v999, 4
        %v1001 = vadd.f32 %v999, %v1000
        %v1002 = vrot.slane %v1001, 2
        %v1003 = vadd.f32 %v1001, %v1002
        %v1004 = vrot.slane %v1003, 1
        %v1005 = vadd.f32 %v1003, %v1004
        %1006 = vst [vmem:[%s326 + $0x3] sm:$0x1] %v1005
        %s1007 = scalar_lea.vmem [#allocation2], 24
        %v1008 = vld [vmem:[%s1007 + $0x1] sm:$0xff]
        %v1009 = vld [vmem:[%s1007 + $0x9] sm:$0xff]
        %v1010 = vld [vmem:[%s1007 + $0x19] sm:$0xff]
        %v1011 = vld [vmem:[%s1007 + $0x21] sm:$0xff]
        %v1012 = vld [vmem:[%s1007 + $0x31] sm:$0xff]
        %v1013 = vld [vmem:[%s1007 + $0x39] sm:$0xff]
        %v1014 = vld [vmem:[%s1007 + $0x49] sm:$0xff]
        %v1015 = vld [vmem:[%s1007 + $0x51] sm:$0xff]
        %v1016 = vld [vmem:[%s1007 + $0x61] sm:$0xff]
        %v1017 = vld [vmem:[%s1007 + $0x69] sm:$0xff]
        %v1018 = vld [vmem:[%s1007 + $0x79] sm:$0xff]
        %v1019 = vld [vmem:[%s1007 + $0x81] sm:$0xff]
        %v1020 = vld [vmem:[%s1007 + $0x91] sm:$0xff]
        %v1021 = vld [vmem:[%s1007 + $0x99] sm:$0xff]
        %v1022 = vld [vmem:[%s1007 + $0xa9] sm:$0xff]
        %v1023 = vld [vmem:[%s1007 + $0xb1] sm:$0xff]
        %v1024 = vld [vmem:[%s1007 + $0xc1] sm:$0xff]
        %v1025 = vld [vmem:[%s1007 + $0xc9] sm:$0xff]
        %v1026 = vld [vmem:[%s1007 + $0xd9] sm:$0xff]
        %v1027 = vld [vmem:[%s1007 + $0xe1] sm:$0xff]
        %v1028 = vld [vmem:[%s1007 + $0xf1] sm:$0xff]
        %v1029 = vld [vmem:[%s1007 + $0xf9] sm:$0xff]
        %v1030 = vld [vmem:[%s1007 + $0x109] sm:$0xff]
        %v1031 = vld [vmem:[%s1007 + $0x111] sm:$0xff]
        %v1032 = vld [vmem:[%s1007 + $0x121] sm:$0xff]
        %v1033 = vld [vmem:[%s1007 + $0x129] sm:$0xff]
        %v1034 = vld [vmem:[%s1007 + $0x139] sm:$0xff]
        %v1035 = vld [vmem:[%s1007 + $0x141] sm:$0xff]
        %v1036 = vld [vmem:[%s1007 + $0x151] sm:$0xff]
        %v1037 = vld [vmem:[%s1007 + $0x159] sm:$0xff]
        %v1038 = vld [vmem:[%s1007 + $0x169] sm:$0xff]
        %v1039 = vld [vmem:[%s1007 + $0x171] sm:$0xff]
        %v1040 = vld [vmem:[#allocation6] sm:$0xff]
        %v1041 = vld [vmem:[#allocation6 + $0x8] sm:$0xff]
        %v1042 = vld [vmem:[#allocation6 + $0x10] sm:$0xff]
        %v1043 = vld [vmem:[#allocation6 + $0x18] sm:$0xff]
        %v1044 = vld [vmem:[#allocation6 + $0x20] sm:$0xff]
        %v1045 = vld [vmem:[#allocation6 + $0x28] sm:$0xff]
        %v1046 = vld [vmem:[#allocation6 + $0x30] sm:$0xff]
        %v1047 = vld [vmem:[#allocation6 + $0x38] sm:$0xff]
        %v1048 = vld [vmem:[#allocation6 + $0x40] sm:$0xff]
        %v1049 = vld [vmem:[#allocation6 + $0x48] sm:$0xff]
        %v1050 = vld [vmem:[#allocation6 + $0x50] sm:$0xff]
        %v1051 = vld [vmem:[#allocation6 + $0x58] sm:$0xff]
        %v1052 = vld [vmem:[#allocation6 + $0x60] sm:$0xff]
        %v1053 = vld [vmem:[#allocation6 + $0x68] sm:$0xff]
        %v1054 = vld [vmem:[#allocation6 + $0x70] sm:$0xff]
        %v1055 = vld [vmem:[#allocation6 + $0x78] sm:$0xff]
        %v1056 = vld [vmem:[%s1007 + $0x2] sm:$0xff]
        %v1057 = vld [vmem:[%s1007 + $0xa] sm:$0xff]
        %v1058 = vld [vmem:[%s1007 + $0x1a] sm:$0xff]
        %v1059 = vld [vmem:[%s1007 + $0x22] sm:$0xff]
        %v1060 = vld [vmem:[%s1007 + $0x32] sm:$0xff]
        %v1061 = vld [vmem:[%s1007 + $0x3a] sm:$0xff]
        %v1062 = vld [vmem:[%s1007 + $0x4a] sm:$0xff]
        %v1063 = vld [vmem:[%s1007 + $0x52] sm:$0xff]
        %v1064 = vld [vmem:[%s1007 + $0x62] sm:$0xff]
        %v1065 = vld [vmem:[%s1007 + $0x6a] sm:$0xff]
        %v1066 = vld [vmem:[%s1007 + $0x7a] sm:$0xff]
        %v1067 = vld [vmem:[%s1007 + $0x82] sm:$0xff]
        %v1068 = vld [vmem:[%s1007 + $0x92] sm:$0xff]
        %v1069 = vld [vmem:[%s1007 + $0x9a] sm:$0xff]
        %v1070 = vld [vmem:[%s1007 + $0xaa] sm:$0xff]
        %v1071 = vld [vmem:[%s1007 + $0xb2] sm:$0xff]
        %v1072 = vld [vmem:[%s1007 + $0xc2] sm:$0xff]
        %v1073 = vld [vmem:[%s1007 + $0xca] sm:$0xff]
        %v1074 = vld [vmem:[%s1007 + $0xda] sm:$0xff]
        %v1075 = vld [vmem:[%s1007 + $0xe2] sm:$0xff]
        %v1076 = vld [vmem:[%s1007 + $0xf2] sm:$0xff]
        %v1077 = vld [vmem:[%s1007 + $0xfa] sm:$0xff]
        %v1078 = vld [vmem:[%s1007 + $0x10a] sm:$0xff]
        %v1079 = vld [vmem:[%s1007 + $0x112] sm:$0xff]
        %v1080 = vld [vmem:[%s1007 + $0x122] sm:$0xff]
        %v1081 = vld [vmem:[%s1007 + $0x12a] sm:$0xff]
        %v1082 = vld [vmem:[%s1007 + $0x13a] sm:$0xff]
        %v1083 = vld [vmem:[%s1007 + $0x142] sm:$0xff]
        %v1084 = vld [vmem:[%s1007 + $0x152] sm:$0xff]
        %v1085 = vld [vmem:[%s1007 + $0x15a] sm:$0xff]
        %v1086 = vld [vmem:[%s1007 + $0x16a] sm:$0xff]
        %v1087 = vld [vmem:[%s1007 + $0x172] sm:$0xff]
        %s1088 = scalar_lea.vmem [#allocation6], 128
        %v1089 = vld [vmem:[%s1088] sm:$0xff]
        %v1090 = vld [vmem:[%s1088 + $0x8] sm:$0xff]
        %v1091 = vld [vmem:[%s1088 + $0x10] sm:$0xff]
        %v1092 = vld [vmem:[%s1088 + $0x18] sm:$0xff]
        %v1093 = vld [vmem:[%s1088 + $0x20] sm:$0xff]
        %v1094 = vld [vmem:[%s1088 + $0x28] sm:$0xff]
        %v1095 = vld [vmem:[%s1088 + $0x30] sm:$0xff]
        %v1096 = vld [vmem:[%s1088 + $0x38] sm:$0xff]
        %v1097 = vld [vmem:[%s1088 + $0x40] sm:$0xff]
        %v1098 = vld [vmem:[%s1088 + $0x48] sm:$0xff]
        %v1099 = vld [vmem:[%s1088 + $0x50] sm:$0xff]
        %v1100 = vld [vmem:[%s1088 + $0x58] sm:$0xff]
        %v1101 = vld [vmem:[%s1088 + $0x60] sm:$0xff]
        %v1102 = vld [vmem:[%s1088 + $0x68] sm:$0xff]
        %v1103 = vld [vmem:[%s1088 + $0x70] sm:$0xff]
        %v1104 = vld [vmem:[%s1088 + $0x78] sm:$0xff]
        %1105 = vmatprep.subr.mxu0 0.0
        %1106 = vmatpush1.msra.mxu0 %v1089
        %1107 = vmatprep.subr.mxu0 0.0
        %1108 = vmatpush1.msra.mxu0 %v1090
        %1109 = vmatprep.subr.mxu0 0.0
        %1110 = vmatpush1.msra.mxu0 %v1091
        %1111 = vmatprep.subr.mxu0 0.0
        %1112 = vmatpush1.msra.mxu0 %v1092
        %1113 = vmatprep.subr.mxu0 0.0
        %1114 = vmatpush1.msra.mxu0 %v1093
        %1115 = vmatprep.subr.mxu0 0.0
        %1116 = vmatpush1.msra.mxu0 %v1094
        %1117 = vmatprep.subr.mxu0 0.0
        %1118 = vmatpush1.msra.mxu0 %v1095
        %1119 = vmatprep.subr.mxu0 0.0
        %1120 = vmatpush1.msra.mxu0 %v1096
        %1121 = vmatprep.subr.mxu0 0.0
        %1122 = vmatpush1.msra.mxu0 %v1097
        %1123 = vmatprep.subr.mxu0 0.0
        %1124 = vmatpush1.msra.mxu0 %v1098
        %1125 = vmatprep.subr.mxu0 0.0
        %1126 = vmatpush1.msra.mxu0 %v1099
        %1127 = vmatprep.subr.mxu0 0.0
        %1128 = vmatpush1.msra.mxu0 %v1100
        %1129 = vmatprep.subr.mxu0 0.0
        %1130 = vmatpush1.msra.mxu0 %v1101
        %1131 = vmatprep.subr.mxu0 0.0
        %1132 = vmatpush1.msra.mxu0 %v1102
        %1133 = vmatprep.subr.mxu0 0.0
        %1134 = vmatpush1.msra.mxu0 %v1103
        %1135 = vmatprep.subr.mxu0 0.0
        %1136 = vmatpush1.msra.mxu0 %v1104
        %1137 = vmatprep.subr.mxu0 0.0
        %1138 = vmatpush1.msra.mxu0 0.0
        %1139 = vmatprep.subr.mxu0 0.0
        %1140 = vmatpush1.msra.mxu0 0.0
        %1141 = vmatprep.subr.mxu0 0.0
        %1142 = vmatpush1.msra.mxu0 0.0
        %1143 = vmatprep.subr.mxu0 0.0
        %1144 = vmatpush1.msra.mxu0 0.0
        %1145 = vmatprep.subr.mxu0 0.0
        %1146 = vmatpush1.msra.mxu0 0.0
        %1147 = vmatprep.subr.mxu0 0.0
        %1148 = vmatpush1.msra.mxu0 0.0
        %1149 = vmatprep.subr.mxu0 0.0
        %1150 = vmatpush1.msra.mxu0 0.0
        %1151 = vmatprep.subr.mxu0 0.0
        %1152 = vmatpush1.msra.mxu0 0.0
        %1153 = vmatprep.subr.mxu0 0.0
        %1154 = vmatpush1.msra.mxu0 0.0
        %1155 = vmatprep.subr.mxu0 0.0
        %1156 = vmatpush1.msra.mxu0 0.0
        %1157 = vmatprep.subr.mxu0 0.0
        %1158 = vmatpush1.msra.mxu0 0.0
        %1159 = vmatprep.subr.mxu0 0.0
        %1160 = vmatpush1.msra.mxu0 0.0
        %1161 = vmatprep.subr.mxu0 0.0
        %1162 = vmatpush1.msra.mxu0 0.0
        %1163 = vmatprep.subr.mxu0 0.0
        %1164 = vmatpush1.msra.mxu0 0.0
        %1165 = vmatprep.subr.mxu0 0.0
        %1166 = vmatpush1.msra.mxu0 0.0
        %1167 = vmatprep.subr.mxu0 0.0
        %1168 = vmatpush1.msra.mxu0 0.0
        %1169 = vmatprep.mubr.f32.mxu0 0.0
        %1170 = vmatmul.mubr.f32.gmra.mrb[0].mxu0 %v1056
        %v1171 = vpop.f32.mrb[0].mxu0
        %v1172 = vadd.f32 0.0, %v1171
        %v1173 = vpop.f32.mrb[0].mxu0
        %1174 = vmatprep.mubr.f32.mxu0 0.0
        %1175 = vmatmul.mubr.f32.gmra.mrb[0].mxu0 %v1057
        %v1176 = vpop.f32.mrb[0].mxu0
        %v1177 = vadd.f32 0.0, %v1176
        %v1178 = vpop.f32.mrb[0].mxu0
        %1179 = vmatprep.mubr.f32.mxu0 0.0
        %1180 = vmatmul.mubr.f32.gmra.mrb[0].mxu0 %v1058
        %v1181 = vpop.f32.mrb[0].mxu0
        %v1182 = vadd.f32 0.0, %v1181
        %v1183 = vpop.f32.mrb[0].mxu0
        %1184 = vmatprep.mubr.f32.mxu0 0.0
        %1185 = vmatmul.mubr.f32.gmra.mrb[0].mxu0 %v1059
        %v1186 = vpop.f32.mrb[0].mxu0
        %v1187 = vadd.f32 0.0, %v1186
        %v1188 = vpop.f32.mrb[0].mxu0
        %1189 = vmatprep.mubr.f32.mxu0 0.0
        %1190 = vmatmul.mubr.f32.gmra.mrb[0].mxu0 %v1060
        %v1191 = vpop.f32.mrb[0].mxu0
        %v1192 = vadd.f32 0.0, %v1191
        %v1193 = vpop.f32.mrb[0].mxu0
        %1194 = vmatprep.mubr.f32.mxu0 0.0
        %1195 = vmatmul.mubr.f32.gmra.mrb[0].mxu0 %v1061
        %v1196 = vpop.f32.mrb[0].mxu0
        %v1197 = vadd.f32 0.0, %v1196
        %v1198 = vpop.f32.mrb[0].mxu0
        %1199 = vmatprep.mubr.f32.mxu0 0.0
        %1200 = vmatmul.mubr.f32.gmra.mrb[0].mxu0 %v1062
        %v1201 = vpop.f32.mrb[0].mxu0
        %v1202 = vadd.f32 0.0, %v1201
        %v1203 = vpop.f32.mrb[0].mxu0
        %1204 = vmatprep.mubr.f32.mxu0 0.0
        %1205 = vmatmul.mubr.f32.gmra.mrb[0].mxu0 %v1063
        %v1206 = vpop.f32.mrb[0].mxu0
        %v1207 = vadd.f32 0.0, %v1206
        %v1208 = vpop.f32.mrb[0].mxu0
        %1209 = vmatprep.mubr.f32.mxu0 0.0
        %1210 = vmatmul.mubr.f32.gmra.mrb[0].mxu0 %v1064
        %v1211 = vpop.f32.mrb[0].mxu0
        %v1212 = vadd.f32 0.0, %v1211
        %v1213 = vpop.f32.mrb[0].mxu0
        %1214 = vmatprep.mubr.f32.mxu0 0.0
        %1215 = vmatmul.mubr.f32.gmra.mrb[0].mxu0 %v1065
        %v1216 = vpop.f32.mrb[0].mxu0
        %v1217 = vadd.f32 0.0, %v1216
        %v1218 = vpop.f32.mrb[0].mxu0
        %1219 = vmatprep.mubr.f32.mxu0 0.0
        %1220 = vmatmul.mubr.f32.gmra.mrb[0].mxu0 %v1066
        %v1221 = vpop.f32.mrb[0].mxu0
        %v1222 = vadd.f32 0.0, %v1221
        %v1223 = vpop.f32.mrb[0].mxu0
        %1224 = vmatprep.mubr.f32.mxu0 0.0
        %1225 = vmatmul.mubr.f32.gmra.mrb[0].mxu0 %v1067
        %v1226 = vpop.f32.mrb[0].mxu0
        %v1227 = vadd.f32 0.0, %v1226
        %v1228 = vpop.f32.mrb[0].mxu0
        %1229 = vmatprep.mubr.f32.mxu0 0.0
        %1230 = vmatmul.mubr.f32.gmra.mrb[0].mxu0 %v1068
        %v1231 = vpop.f32.mrb[0].mxu0
        %v1232 = vadd.f32 0.0, %v1231
        %v1233 = vpop.f32.mrb[0].mxu0
        %1234 = vmatprep.mubr.f32.mxu0 0.0
        %1235 = vmatmul.mubr.f32.gmra.mrb[0].mxu0 %v1069
        %v1236 = vpop.f32.mrb[0].mxu0
        %v1237 = vadd.f32 0.0, %v1236
        %v1238 = vpop.f32.mrb[0].mxu0
        %1239 = vmatprep.mubr.f32.mxu0 0.0
        %1240 = vmatmul.mubr.f32.gmra.mrb[0].mxu0 %v1070
        %v1241 = vpop.f32.mrb[0].mxu0
        %v1242 = vadd.f32 0.0, %v1241
        %v1243 = vpop.f32.mrb[0].mxu0
        %1244 = vmatprep.mubr.f32.mxu0 0.0
        %1245 = vmatmul.mubr.f32.gmra.mrb[0].mxu0 %v1071
        %v1246 = vpop.f32.mrb[0].mxu0
        %v1247 = vadd.f32 0.0, %v1246
        %v1248 = vpop.f32.mrb[0].mxu0
        %1249 = vmatprep.mubr.f32.mxu0 0.0
        %1250 = vmatmul.mubr.f32.gmra.mrb[0].mxu0 %v1072
        %v1251 = vpop.f32.mrb[0].mxu0
        %v1252 = vadd.f32 0.0, %v1251
        %v1253 = vpop.f32.mrb[0].mxu0
        %1254 = vmatprep.mubr.f32.mxu0 0.0
        %1255 = vmatmul.mubr.f32.gmra.mrb[0].mxu0 %v1073
        %v1256 = vpop.f32.mrb[0].mxu0
        %v1257 = vadd.f32 0.0, %v1256
        %v1258 = vpop.f32.mrb[0].mxu0
        %1259 = vmatprep.mubr.f32.mxu0 0.0
        %1260 = vmatmul.mubr.f32.gmra.mrb[0].mxu0 %v1074
        %v1261 = vpop.f32.mrb[0].mxu0
        %v1262 = vadd.f32 0.0, %v1261
        %v1263 = vpop.f32.mrb[0].mxu0
        %1264 = vmatprep.mubr.f32.mxu0 0.0
        %1265 = vmatmul.mubr.f32.gmra.mrb[0].mxu0 %v1075
        %v1266 = vpop.f32.mrb[0].mxu0
        %v1267 = vadd.f32 0.0, %v1266
        %v1268 = vpop.f32.mrb[0].mxu0
        %1269 = vmatprep.mubr.f32.mxu0 0.0
        %1270 = vmatmul.mubr.f32.gmra.mrb[0].mxu0 %v1076
        %v1271 = vpop.f32.mrb[0].mxu0
        %v1272 = vadd.f32 0.0, %v1271
        %v1273 = vpop.f32.mrb[0].mxu0
        %1274 = vmatprep.mubr.f32.mxu0 0.0
        %1275 = vmatmul.mubr.f32.gmra.mrb[0].mxu0 %v1077
        %v1276 = vpop.f32.mrb[0].mxu0
        %v1277 = vadd.f32 0.0, %v1276
        %v1278 = vpop.f32.mrb[0].mxu0
        %1279 = vmatprep.mubr.f32.mxu0 0.0
        %1280 = vmatmul.mubr.f32.gmra.mrb[0].mxu0 %v1078
        %v1281 = vpop.f32.mrb[0].mxu0
        %v1282 = vadd.f32 0.0, %v1281
        %v1283 = vpop.f32.mrb[0].mxu0
        %1284 = vmatprep.mubr.f32.mxu0 0.0
        %1285 = vmatmul.mubr.f32.gmra.mrb[0].mxu0 %v1079
        %v1286 = vpop.f32.mrb[0].mxu0
        %v1287 = vadd.f32 0.0, %v1286
        %v1288 = vpop.f32.mrb[0].mxu0
        %1289 = vmatprep.mubr.f32.mxu0 0.0
        %1290 = vmatmul.mubr.f32.gmra.mrb[0].mxu0 %v1080
        %v1291 = vpop.f32.mrb[0].mxu0
        %v1292 = vadd.f32 0.0, %v1291
        %v1293 = vpop.f32.mrb[0].mxu0
        %1294 = vmatprep.mubr.f32.mxu0 0.0
        %1295 = vmatmul.mubr.f32.gmra.mrb[0].mxu0 %v1081
        %v1296 = vpop.f32.mrb[0].mxu0
        %v1297 = vadd.f32 0.0, %v1296
        %v1298 = vpop.f32.mrb[0].mxu0
        %1299 = vmatprep.mubr.f32.mxu0 0.0
        %1300 = vmatmul.mubr.f32.gmra.mrb[0].mxu0 %v1082
        %v1301 = vpop.f32.mrb[0].mxu0
        %v1302 = vadd.f32 0.0, %v1301
        %v1303 = vpop.f32.mrb[0].mxu0
        %1304 = vmatprep.mubr.f32.mxu0 0.0
        %1305 = vmatmul.mubr.f32.gmra.mrb[0].mxu0 %v1083
        %v1306 = vpop.f32.mrb[0].mxu0
        %v1307 = vadd.f32 0.0, %v1306
        %v1308 = vpop.f32.mrb[0].mxu0
        %1309 = vmatprep.mubr.f32.mxu0 0.0
        %1310 = vmatmul.mubr.f32.gmra.mrb[0].mxu0 %v1084
        %v1311 = vpop.f32.mrb[0].mxu0
        %v1312 = vadd.f32 0.0, %v1311
        %v1313 = vpop.f32.mrb[0].mxu0
        %1314 = vmatprep.mubr.f32.mxu0 0.0
        %1315 = vmatmul.mubr.f32.gmra.mrb[0].mxu0 %v1085
        %v1316 = vpop.f32.mrb[0].mxu0
        %v1317 = vadd.f32 0.0, %v1316
        %v1318 = vpop.f32.mrb[0].mxu0
        %1319 = vmatprep.mubr.f32.mxu0 0.0
        %1320 = vmatmul.mubr.f32.gmra.mrb[0].mxu0 %v1086
        %v1321 = vpop.f32.mrb[0].mxu0
        %v1322 = vadd.f32 0.0, %v1321
        %v1323 = vpop.f32.mrb[0].mxu0
        %1324 = vmatprep.mubr.f32.mxu0 0.0
        %1325 = vmatmul.mubr.f32.gmra.mrb[0].mxu0 %v1087
        %v1326 = vpop.f32.mrb[0].mxu0
        %v1327 = vadd.f32 0.0, %v1326
        %v1328 = vpop.f32.mrb[0].mxu0
        %1329 = vdwg.mxu0
        %1330 = vmatprep.subr.mxu0 0.0
        %1331 = vmatpush1.msra.mxu0 %v1040
        %1332 = vmatprep.subr.mxu0 0.0
        %1333 = vmatpush1.msra.mxu0 %v1041
        %1334 = vmatprep.subr.mxu0 0.0
        %1335 = vmatpush1.msra.mxu0 %v1042
        %1336 = vmatprep.subr.mxu0 0.0
        %1337 = vmatpush1.msra.mxu0 %v1043
        %1338 = vmatprep.subr.mxu0 0.0
        %1339 = vmatpush1.msra.mxu0 %v1044
        %1340 = vmatprep.subr.mxu0 0.0
        %1341 = vmatpush1.msra.mxu0 %v1045
        %1342 = vmatprep.subr.mxu0 0.0
        %1343 = vmatpush1.msra.mxu0 %v1046
        %1344 = vmatprep.subr.mxu0 0.0
        %1345 = vmatpush1.msra.mxu0 %v1047
        %1346 = vmatprep.subr.mxu0 0.0
        %1347 = vmatpush1.msra.mxu0 %v1048
        %1348 = vmatprep.subr.mxu0 0.0
        %1349 = vmatpush1.msra.mxu0 %v1049
        %1350 = vmatprep.subr.mxu0 0.0
        %1351 = vmatpush1.msra.mxu0 %v1050
        %1352 = vmatprep.subr.mxu0 0.0
        %1353 = vmatpush1.msra.mxu0 %v1051
        %1354 = vmatprep.subr.mxu0 0.0
        %1355 = vmatpush1.msra.mxu0 %v1052
        %1356 = vmatprep.subr.mxu0 0.0
        %1357 = vmatpush1.msra.mxu0 %v1053
        %1358 = vmatprep.subr.mxu0 0.0
        %1359 = vmatpush1.msra.mxu0 %v1054
        %1360 = vmatprep.subr.mxu0 0.0
        %1361 = vmatpush1.msra.mxu0 %v1055
        %1362 = vmatprep.subr.mxu0 0.0
        %1363 = vmatpush1.msra.mxu0 0.0
        %1364 = vmatprep.subr.mxu0 0.0
        %1365 = vmatpush1.msra.mxu0 0.0
        %1366 = vmatprep.subr.mxu0 0.0
        %1367 = vmatpush1.msra.mxu0 0.0
        %1368 = vmatprep.subr.mxu0 0.0
        %1369 = vmatpush1.msra.mxu0 0.0
        %1370 = vmatprep.subr.mxu0 0.0
        %1371 = vmatpush1.msra.mxu0 0.0
        %1372 = vmatprep.subr.mxu0 0.0
        %1373 = vmatpush1.msra.mxu0 0.0
        %1374 = vmatprep.subr.mxu0 0.0
        %1375 = vmatpush1.msra.mxu0 0.0
        %1376 = vmatprep.subr.mxu0 0.0
        %1377 = vmatpush1.msra.mxu0 0.0
        %1378 = vmatprep.subr.mxu0 0.0
        %1379 = vmatpush1.msra.mxu0 0.0
        %1380 = vmatprep.subr.mxu0 0.0
        %1381 = vmatpush1.msra.mxu0 0.0
        %1382 = vmatprep.subr.mxu0 0.0
        %1383 = vmatpush1.msra.mxu0 0.0
        %1384 = vmatprep.subr.mxu0 0.0
        %1385 = vmatpush1.msra.mxu0 0.0
        %1386 = vmatprep.subr.mxu0 0.0
        %1387 = vmatpush1.msra.mxu0 0.0
        %1388 = vmatprep.subr.mxu0 0.0
        %1389 = vmatpush1.msra.mxu0 0.0
        %1390 = vmatprep.subr.mxu0 0.0
        %1391 = vmatpush1.msra.mxu0 0.0
        %1392 = vmatprep.subr.mxu0 0.0
        %1393 = vmatpush1.msra.mxu0 0.0
        %1394 = vmatprep.mubr.f32.mxu0 0.0
        %1395 = vmatmul.mubr.f32.gmra.mrb[0].mxu0 %v1008
        %v1396 = vpop.f32.mrb[0].mxu0
        %v1397 = vadd.f32 %v1172, %v1396
        %v1398 = vpop.f32.mrb[0].mxu0
        %1399 = vmatprep.mubr.f32.mxu0 0.0
        %1400 = vmatmul.mubr.f32.gmra.mrb[0].mxu0 %v1009
        %v1401 = vpop.f32.mrb[0].mxu0
        %v1402 = vadd.f32 %v1177, %v1401
        %v1403 = vpop.f32.mrb[0].mxu0
        %1404 = vmatprep.mubr.f32.mxu0 0.0
        %1405 = vmatmul.mubr.f32.gmra.mrb[0].mxu0 %v1010
        %v1406 = vpop.f32.mrb[0].mxu0
        %v1407 = vadd.f32 %v1182, %v1406
        %v1408 = vpop.f32.mrb[0].mxu0
        %1409 = vmatprep.mubr.f32.mxu0 0.0
        %1410 = vmatmul.mubr.f32.gmra.mrb[0].mxu0 %v1011
        %v1411 = vpop.f32.mrb[0].mxu0
        %v1412 = vadd.f32 %v1187, %v1411
        %v1413 = vpop.f32.mrb[0].mxu0
        %1414 = vmatprep.mubr.f32.mxu0 0.0
        %1415 = vmatmul.mubr.f32.gmra.mrb[0].mxu0 %v1012
        %v1416 = vpop.f32.mrb[0].mxu0
        %v1417 = vadd.f32 %v1192, %v1416
        %v1418 = vpop.f32.mrb[0].mxu0
        %1419 = vmatprep.mubr.f32.mxu0 0.0
        %1420 = vmatmul.mubr.f32.gmra.mrb[0].mxu0 %v1013
        %v1421 = vpop.f32.mrb[0].mxu0
        %v1422 = vadd.f32 %v1197, %v1421
        %v1423 = vpop.f32.mrb[0].mxu0
        %1424 = vmatprep.mubr.f32.mxu0 0.0
        %1425 = vmatmul.mubr.f32.gmra.mrb[0].mxu0 %v1014
        %v1426 = vpop.f32.mrb[0].mxu0
        %v1427 = vadd.f32 %v1202, %v1426
        %v1428 = vpop.f32.mrb[0].mxu0
        %1429 = vmatprep.mubr.f32.mxu0 0.0
        %1430 = vmatmul.mubr.f32.gmra.mrb[0].mxu0 %v1015
        %v1431 = vpop.f32.mrb[0].mxu0
        %v1432 = vadd.f32 %v1207, %v1431
        %v1433 = vpop.f32.mrb[0].mxu0
        %1434 = vmatprep.mubr.f32.mxu0 0.0
        %1435 = vmatmul.mubr.f32.gmra.mrb[0].mxu0 %v1016
        %v1436 = vpop.f32.mrb[0].mxu0
        %v1437 = vadd.f32 %v1212, %v1436
        %v1438 = vpop.f32.mrb[0].mxu0
        %1439 = vmatprep.mubr.f32.mxu0 0.0
        %1440 = vmatmul.mubr.f32.gmra.mrb[0].mxu0 %v1017
        %v1441 = vpop.f32.mrb[0].mxu0
        %v1442 = vadd.f32 %v1217, %v1441
        %v1443 = vpop.f32.mrb[0].mxu0
        %1444 = vmatprep.mubr.f32.mxu0 0.0
        %1445 = vmatmul.mubr.f32.gmra.mrb[0].mxu0 %v1018
        %v1446 = vpop.f32.mrb[0].mxu0
        %v1447 = vadd.f32 %v1222, %v1446
        %v1448 = vpop.f32.mrb[0].mxu0
        %1449 = vmatprep.mubr.f32.mxu0 0.0
        %1450 = vmatmul.mubr.f32.gmra.mrb[0].mxu0 %v1019
        %v1451 = vpop.f32.mrb[0].mxu0
        %v1452 = vadd.f32 %v1227, %v1451
        %v1453 = vpop.f32.mrb[0].mxu0
        %1454 = vmatprep.mubr.f32.mxu0 0.0
        %1455 = vmatmul.mubr.f32.gmra.mrb[0].mxu0 %v1020
        %v1456 = vpop.f32.mrb[0].mxu0
        %v1457 = vadd.f32 %v1232, %v1456
        %v1458 = vpop.f32.mrb[0].mxu0
        %1459 = vmatprep.mubr.f32.mxu0 0.0
        %1460 = vmatmul.mubr.f32.gmra.mrb[0].mxu0 %v1021
        %v1461 = vpop.f32.mrb[0].mxu0
        %v1462 = vadd.f32 %v1237, %v1461
        %v1463 = vpop.f32.mrb[0].mxu0
        %1464 = vmatprep.mubr.f32.mxu0 0.0
        %1465 = vmatmul.mubr.f32.gmra.mrb[0].mxu0 %v1022
        %v1466 = vpop.f32.mrb[0].mxu0
        %v1467 = vadd.f32 %v1242, %v1466
        %v1468 = vpop.f32.mrb[0].mxu0
        %1469 = vmatprep.mubr.f32.mxu0 0.0
        %1470 = vmatmul.mubr.f32.gmra.mrb[0].mxu0 %v1023
        %v1471 = vpop.f32.mrb[0].mxu0
        %v1472 = vadd.f32 %v1247, %v1471
        %v1473 = vpop.f32.mrb[0].mxu0
        %1474 = vmatprep.mubr.f32.mxu0 0.0
        %1475 = vmatmul.mubr.f32.gmra.mrb[0].mxu0 %v1024
        %v1476 = vpop.f32.mrb[0].mxu0
        %v1477 = vadd.f32 %v1252, %v1476
        %v1478 = vpop.f32.mrb[0].mxu0
        %1479 = vmatprep.mubr.f32.mxu0 0.0
        %1480 = vmatmul.mubr.f32.gmra.mrb[0].mxu0 %v1025
        %v1481 = vpop.f32.mrb[0].mxu0
        %v1482 = vadd.f32 %v1257, %v1481
        %v1483 = vpop.f32.mrb[0].mxu0
        %1484 = vmatprep.mubr.f32.mxu0 0.0
        %1485 = vmatmul.mubr.f32.gmra.mrb[0].mxu0 %v1026
        %v1486 = vpop.f32.mrb[0].mxu0
        %v1487 = vadd.f32 %v1262, %v1486
        %v1488 = vpop.f32.mrb[0].mxu0
        %1489 = vmatprep.mubr.f32.mxu0 0.0
        %1490 = vmatmul.mubr.f32.gmra.mrb[0].mxu0 %v1027
        %v1491 = vpop.f32.mrb[0].mxu0
        %v1492 = vadd.f32 %v1267, %v1491
        %v1493 = vpop.f32.mrb[0].mxu0
        %1494 = vmatprep.mubr.f32.mxu0 0.0
        %1495 = vmatmul.mubr.f32.gmra.mrb[0].mxu0 %v1028
        %v1496 = vpop.f32.mrb[0].mxu0
        %v1497 = vadd.f32 %v1272, %v1496
        %v1498 = vpop.f32.mrb[0].mxu0
        %1499 = vmatprep.mubr.f32.mxu0 0.0
        %1500 = vmatmul.mubr.f32.gmra.mrb[0].mxu0 %v1029
        %v1501 = vpop.f32.mrb[0].mxu0
        %v1502 = vadd.f32 %v1277, %v1501
        %v1503 = vpop.f32.mrb[0].mxu0
        %1504 = vmatprep.mubr.f32.mxu0 0.0
        %1505 = vmatmul.mubr.f32.gmra.mrb[0].mxu0 %v1030
        %v1506 = vpop.f32.mrb[0].mxu0
        %v1507 = vadd.f32 %v1282, %v1506
        %v1508 = vpop.f32.mrb[0].mxu0
        %1509 = vmatprep.mubr.f32.mxu0 0.0
        %1510 = vmatmul.mubr.f32.gmra.mrb[0].mxu0 %v1031
        %v1511 = vpop.f32.mrb[0].mxu0
        %v1512 = vadd.f32 %v1287, %v1511
        %v1513 = vpop.f32.mrb[0].mxu0
        %1514 = vmatprep.mubr.f32.mxu0 0.0
        %1515 = vmatmul.mubr.f32.gmra.mrb[0].mxu0 %v1032
        %v1516 = vpop.f32.mrb[0].mxu0
        %v1517 = vadd.f32 %v1292, %v1516
        %v1518 = vpop.f32.mrb[0].mxu0
        %1519 = vmatprep.mubr.f32.mxu0 0.0
        %1520 = vmatmul.mubr.f32.gmra.mrb[0].mxu0 %v1033
        %v1521 = vpop.f32.mrb[0].mxu0
        %v1522 = vadd.f32 %v1297, %v1521
        %v1523 = vpop.f32.mrb[0].mxu0
        %1524 = vmatprep.mubr.f32.mxu0 0.0
        %1525 = vmatmul.mubr.f32.gmra.mrb[0].mxu0 %v1034
        %v1526 = vpop.f32.mrb[0].mxu0
        %v1527 = vadd.f32 %v1302, %v1526
        %v1528 = vpop.f32.mrb[0].mxu0
        %1529 = vmatprep.mubr.f32.mxu0 0.0
        %1530 = vmatmul.mubr.f32.gmra.mrb[0].mxu0 %v1035
        %v1531 = vpop.f32.mrb[0].mxu0
        %v1532 = vadd.f32 %v1307, %v1531
        %v1533 = vpop.f32.mrb[0].mxu0
        %1534 = vmatprep.mubr.f32.mxu0 0.0
        %1535 = vmatmul.mubr.f32.gmra.mrb[0].mxu0 %v1036
        %v1536 = vpop.f32.mrb[0].mxu0
        %v1537 = vadd.f32 %v1312, %v1536
        %v1538 = vpop.f32.mrb[0].mxu0
        %1539 = vmatprep.mubr.f32.mxu0 0.0
        %1540 = vmatmul.mubr.f32.gmra.mrb[0].mxu0 %v1037
        %v1541 = vpop.f32.mrb[0].mxu0
        %v1542 = vadd.f32 %v1317, %v1541
        %v1543 = vpop.f32.mrb[0].mxu0
        %1544 = vmatprep.mubr.f32.mxu0 0.0
        %1545 = vmatmul.mubr.f32.gmra.mrb[0].mxu0 %v1038
        %v1546 = vpop.f32.mrb[0].mxu0
        %v1547 = vadd.f32 %v1322, %v1546
        %v1548 = vpop.f32.mrb[0].mxu0
        %1549 = vmatprep.mubr.f32.mxu0 0.0
        %1550 = vmatmul.mubr.f32.gmra.mrb[0].mxu0 %v1039
        %v1551 = vpop.f32.mrb[0].mxu0
        %v1552 = vadd.f32 %v1327, %v1551
        %v1553 = vpop.f32.mrb[0].mxu0
        %1554 = vdwg.mxu0
        %v1555 = vld [vmem:[%s1007 + $0x3] sm:$0xff]
        %v1556 = vld [vmem:[%s1007 + $0xb] sm:$0xff]
        %v1557 = vld [vmem:[%s1007 + $0x1b] sm:$0xff]
        %v1558 = vld [vmem:[%s1007 + $0x23] sm:$0xff]
        %v1559 = vld [vmem:[%s1007 + $0x33] sm:$0xff]
        %v1560 = vld [vmem:[%s1007 + $0x3b] sm:$0xff]
        %v1561 = vld [vmem:[%s1007 + $0x4b] sm:$0xff]
        %v1562 = vld [vmem:[%s1007 + $0x53] sm:$0xff]
        %v1563 = vld [vmem:[%s1007 + $0x63] sm:$0xff]
        %v1564 = vld [vmem:[%s1007 + $0x6b] sm:$0xff]
        %v1565 = vld [vmem:[%s1007 + $0x7b] sm:$0xff]
        %v1566 = vld [vmem:[%s1007 + $0x83] sm:$0xff]
        %v1567 = vld [vmem:[%s1007 + $0x93] sm:$0xff]
        %v1568 = vld [vmem:[%s1007 + $0x9b] sm:$0xff]
        %v1569 = vld [vmem:[%s1007 + $0xab] sm:$0xff]
        %v1570 = vld [vmem:[%s1007 + $0xb3] sm:$0xff]
        %v1571 = vld [vmem:[%s1007 + $0xc3] sm:$0xff]
        %v1572 = vld [vmem:[%s1007 + $0xcb] sm:$0xff]
        %v1573 = vld [vmem:[%s1007 + $0xdb] sm:$0xff]
        %v1574 = vld [vmem:[%s1007 + $0xe3] sm:$0xff]
        %v1575 = vld [vmem:[%s1007 + $0xf3] sm:$0xff]
        %v1576 = vld [vmem:[%s1007 + $0xfb] sm:$0xff]
        %v1577 = vld [vmem:[%s1007 + $0x10b] sm:$0xff]
        %v1578 = vld [vmem:[%s1007 + $0x113] sm:$0xff]
        %v1579 = vld [vmem:[%s1007 + $0x123] sm:$0xff]
        %v1580 = vld [vmem:[%s1007 + $0x12b] sm:$0xff]
        %v1581 = vld [vmem:[%s1007 + $0x13b] sm:$0xff]
        %v1582 = vld [vmem:[%s1007 + $0x143] sm:$0xff]
        %v1583 = vld [vmem:[%s1007 + $0x153] sm:$0xff]
        %v1584 = vld [vmem:[%s1007 + $0x15b] sm:$0xff]
        %v1585 = vld [vmem:[%s1007 + $0x16b] sm:$0xff]
        %v1586 = vld [vmem:[%s1007 + $0x173] sm:$0xff]
        %s1587 = scalar_lea.vmem [#allocation6], 256
        %v1588 = vld [vmem:[%s1587] sm:$0xff]
        %v1589 = vld [vmem:[%s1587 + $0x8] sm:$0xff]
        %v1590 = vld [vmem:[%s1587 + $0x10] sm:$0xff]
        %v1591 = vld [vmem:[%s1587 + $0x18] sm:$0xff]
        %v1592 = vld [vmem:[%s1587 + $0x20] sm:$0xff]
        %v1593 = vld [vmem:[%s1587 + $0x28] sm:$0xff]
        %v1594 = vld [vmem:[%s1587 + $0x30] sm:$0xff]
        %v1595 = vld [vmem:[%s1587 + $0x38] sm:$0xff]
        %v1596 = vld [vmem:[%s1587 + $0x40] sm:$0xff]
        %v1597 = vld [vmem:[%s1587 + $0x48] sm:$0xff]
        %v1598 = vld [vmem:[%s1587 + $0x50] sm:$0xff]
        %v1599 = vld [vmem:[%s1587 + $0x58] sm:$0xff]
        %v1600 = vld [vmem:[%s1587 + $0x60] sm:$0xff]
        %v1601 = vld [vmem:[%s1587 + $0x68] sm:$0xff]
        %v1602 = vld [vmem:[%s1587 + $0x70] sm:$0xff]
        %v1603 = vld [vmem:[%s1587 + $0x78] sm:$0xff]
        %1604 = vmatprep.subr.mxu0 0.0
        %1605 = vmatpush1.msra.mxu0 %v1588
        %1606 = vmatprep.subr.mxu0 0.0
        %1607 = vmatpush1.msra.mxu0 %v1589
        %1608 = vmatprep.subr.mxu0 0.0
        %1609 = vmatpush1.msra.mxu0 %v1590
        %1610 = vmatprep.subr.mxu0 0.0
        %1611 = vmatpush1.msra.mxu0 %v1591
        %1612 = vmatprep.subr.mxu0 0.0
        %1613 = vmatpush1.msra.mxu0 %v1592
        %1614 = vmatprep.subr.mxu0 0.0
        %1615 = vmatpush1.msra.mxu0 %v1593
        %1616 = vmatprep.subr.mxu0 0.0
        %1617 = vmatpush1.msra.mxu0 %v1594
        %1618 = vmatprep.subr.mxu0 0.0
        %1619 = vmatpush1.msra.mxu0 %v1595
        %1620 = vmatprep.subr.mxu0 0.0
        %1621 = vmatpush1.msra.mxu0 %v1596
        %1622 = vmatprep.subr.mxu0 0.0
        %1623 = vmatpush1.msra.mxu0 %v1597
        %1624 = vmatprep.subr.mxu0 0.0
        %1625 = vmatpush1.msra.mxu0 %v1598
        %1626 = vmatprep.subr.mxu0 0.0
        %1627 = vmatpush1.msra.mxu0 %v1599
        %1628 = vmatprep.subr.mxu0 0.0
        %1629 = vmatpush1.msra.mxu0 %v1600
        %1630 = vmatprep.subr.mxu0 0.0
        %1631 = vmatpush1.msra.mxu0 %v1601
        %1632 = vmatprep.subr.mxu0 0.0
        %1633 = vmatpush1.msra.mxu0 %v1602
        %1634 = vmatprep.subr.mxu0 0.0
        %1635 = vmatpush1.msra.mxu0 %v1603
        %1636 = vmatprep.subr.mxu0 0.0
        %1637 = vmatpush1.msra.mxu0 0.0
        %1638 = vmatprep.subr.mxu0 0.0
        %1639 = vmatpush1.msra.mxu0 0.0
        %1640 = vmatprep.subr.mxu0 0.0
        %1641 = vmatpush1.msra.mxu0 0.0
        %1642 = vmatprep.subr.mxu0 0.0
        %1643 = vmatpush1.msra.mxu0 0.0
        %1644 = vmatprep.subr.mxu0 0.0
        %1645 = vmatpush1.msra.mxu0 0.0
        %1646 = vmatprep.subr.mxu0 0.0
        %1647 = vmatpush1.msra.mxu0 0.0
        %1648 = vmatprep.subr.mxu0 0.0
        %1649 = vmatpush1.msra.mxu0 0.0
        %1650 = vmatprep.subr.mxu0 0.0
        %1651 = vmatpush1.msra.mxu0 0.0
        %1652 = vmatprep.subr.mxu0 0.0
        %1653 = vmatpush1.msra.mxu0 0.0
        %1654 = vmatprep.subr.mxu0 0.0
        %1655 = vmatpush1.msra.mxu0 0.0
        %1656 = vmatprep.subr.mxu0 0.0
        %1657 = vmatpush1.msra.mxu0 0.0
        %1658 = vmatprep.subr.mxu0 0.0
        %1659 = vmatpush1.msra.mxu0 0.0
        %1660 = vmatprep.subr.mxu0 0.0
        %1661 = vmatpush1.msra.mxu0 0.0
        %1662 = vmatprep.subr.mxu0 0.0
        %1663 = vmatpush1.msra.mxu0 0.0
        %1664 = vmatprep.subr.mxu0 0.0
        %1665 = vmatpush1.msra.mxu0 0.0
        %1666 = vmatprep.subr.mxu0 0.0
        %1667 = vmatpush1.msra.mxu0 0.0
        %1668 = vmatprep.mubr.f32.mxu0 0.0
        %1669 = vmatmul.mubr.f32.gmra.mrb[0].mxu0 %v1555
        %v1670 = vpop.f32.mrb[0].mxu0
        %v1671 = vadd.f32 0.0, %v1670
        %v1672 = vpop.f32.mrb[0].mxu0
        %1673 = vmatprep.mubr.f32.mxu0 0.0
        %1674 = vmatmul.mubr.f32.gmra.mrb[0].mxu0 %v1556
        %v1675 = vpop.f32.mrb[0].mxu0
        %v1676 = vadd.f32 0.0, %v1675
        %v1677 = vpop.f32.mrb[0].mxu0
        %1678 = vmatprep.mubr.f32.mxu0 0.0
        %1679 = vmatmul.mubr.f32.gmra.mrb[0].mxu0 %v1557
        %v1680 = vpop.f32.mrb[0].mxu0
        %v1681 = vadd.f32 0.0, %v1680
        %v1682 = vpop.f32.mrb[0].mxu0
        %1683 = vmatprep.mubr.f32.mxu0 0.0
        %1684 = vmatmul.mubr.f32.gmra.mrb[0].mxu0 %v1558
        %v1685 = vpop.f32.mrb[0].mxu0
        %v1686 = vadd.f32 0.0, %v1685
        %v1687 = vpop.f32.mrb[0].mxu0
        %1688 = vmatprep.mubr.f32.mxu0 0.0
        %1689 = vmatmul.mubr.f32.gmra.mrb[0].mxu0 %v1559
        %v1690 = vpop.f32.mrb[0].mxu0
        %v1691 = vadd.f32 0.0, %v1690
        %v1692 = vpop.f32.mrb[0].mxu0
        %1693 = vmatprep.mubr.f32.mxu0 0.0
        %1694 = vmatmul.mubr.f32.gmra.mrb[0].mxu0 %v1560
        %v1695 = vpop.f32.mrb[0].mxu0
        %v1696 = vadd.f32 0.0, %v1695
        %v1697 = vpop.f32.mrb[0].mxu0
        %1698 = vmatprep.mubr.f32.mxu0 0.0
        %1699 = vmatmul.mubr.f32.gmra.mrb[0].mxu0 %v1561
        %v1700 = vpop.f32.mrb[0].mxu0
        %v1701 = vadd.f32 0.0, %v1700
        %v1702 = vpop.f32.mrb[0].mxu0
        %1703 = vmatprep.mubr.f32.mxu0 0.0
        %1704 = vmatmul.mubr.f32.gmra.mrb[0].mxu0 %v1562
        %v1705 = vpop.f32.mrb[0].mxu0
        %v1706 = vadd.f32 0.0, %v1705
        %v1707 = vpop.f32.mrb[0].mxu0
        %1708 = vmatprep.mubr.f32.mxu0 0.0
        %1709 = vmatmul.mubr.f32.gmra.mrb[0].mxu0 %v1563
        %v1710 = vpop.f32.mrb[0].mxu0
        %v1711 = vadd.f32 0.0, %v1710
        %v1712 = vpop.f32.mrb[0].mxu0
        %1713 = vmatprep.mubr.f32.mxu0 0.0
        %1714 = vmatmul.mubr.f32.gmra.mrb[0].mxu0 %v1564
        %v1715 = vpop.f32.mrb[0].mxu0
        %v1716 = vadd.f32 0.0, %v1715
        %v1717 = vpop.f32.mrb[0].mxu0
        %1718 = vmatprep.mubr.f32.mxu0 0.0
        %1719 = vmatmul.mubr.f32.gmra.mrb[0].mxu0 %v1565
        %v1720 = vpop.f32.mrb[0].mxu0
        %v1721 = vadd.f32 0.0, %v1720
        %v1722 = vpop.f32.mrb[0].mxu0
        %1723 = vmatprep.mubr.f32.mxu0 0.0
        %1724 = vmatmul.mubr.f32.gmra.mrb[0].mxu0 %v1566
        %v1725 = vpop.f32.mrb[0].mxu0
        %v1726 = vadd.f32 0.0, %v1725
        %v1727 = vpop.f32.mrb[0].mxu0
        %1728 = vmatprep.mubr.f32.mxu0 0.0
        %1729 = vmatmul.mubr.f32.gmra.mrb[0].mxu0 %v1567
        %v1730 = vpop.f32.mrb[0].mxu0
        %v1731 = vadd.f32 0.0, %v1730
        %v1732 = vpop.f32.mrb[0].mxu0
        %1733 = vmatprep.mubr.f32.mxu0 0.0
        %1734 = vmatmul.mubr.f32.gmra.mrb[0].mxu0 %v1568
        %v1735 = vpop.f32.mrb[0].mxu0
        %v1736 = vadd.f32 0.0, %v1735
        %v1737 = vpop.f32.mrb[0].mxu0
        %1738 = vmatprep.mubr.f32.mxu0 0.0
        %1739 = vmatmul.mubr.f32.gmra.mrb[0].mxu0 %v1569
        %v1740 = vpop.f32.mrb[0].mxu0
        %v1741 = vadd.f32 0.0, %v1740
        %v1742 = vpop.f32.mrb[0].mxu0
        %1743 = vmatprep.mubr.f32.mxu0 0.0
        %1744 = vmatmul.mubr.f32.gmra.mrb[0].mxu0 %v1570
        %v1745 = vpop.f32.mrb[0].mxu0
        %v1746 = vadd.f32 0.0, %v1745
        %v1747 = vpop.f32.mrb[0].mxu0
        %1748 = vmatprep.mubr.f32.mxu0 0.0
        %1749 = vmatmul.mubr.f32.gmra.mrb[0].mxu0 %v1571
        %v1750 = vpop.f32.mrb[0].mxu0
        %v1751 = vadd.f32 0.0, %v1750
        %v1752 = vpop.f32.mrb[0].mxu0
        %1753 = vmatprep.mubr.f32.mxu0 0.0
        %1754 = vmatmul.mubr.f32.gmra.mrb[0].mxu0 %v1572
        %v1755 = vpop.f32.mrb[0].mxu0
        %v1756 = vadd.f32 0.0, %v1755
        %v1757 = vpop.f32.mrb[0].mxu0
        %1758 = vmatprep.mubr.f32.mxu0 0.0
        %1759 = vmatmul.mubr.f32.gmra.mrb[0].mxu0 %v1573
        %v1760 = vpop.f32.mrb[0].mxu0
        %v1761 = vadd.f32 0.0, %v1760
        %v1762 = vpop.f32.mrb[0].mxu0
        %1763 = vmatprep.mubr.f32.mxu0 0.0
        %1764 = vmatmul.mubr.f32.gmra.mrb[0].mxu0 %v1574
        %v1765 = vpop.f32.mrb[0].mxu0
        %v1766 = vadd.f32 0.0, %v1765
        %v1767 = vpop.f32.mrb[0].mxu0
        %1768 = vmatprep.mubr.f32.mxu0 0.0
        %1769 = vmatmul.mubr.f32.gmra.mrb[0].mxu0 %v1575
        %v1770 = vpop.f32.mrb[0].mxu0
        %v1771 = vadd.f32 0.0, %v1770
        %v1772 = vpop.f32.mrb[0].mxu0
        %1773 = vmatprep.mubr.f32.mxu0 0.0
        %1774 = vmatmul.mubr.f32.gmra.mrb[0].mxu0 %v1576
        %v1775 = vpop.f32.mrb[0].mxu0
        %v1776 = vadd.f32 0.0, %v1775
        %v1777 = vpop.f32.mrb[0].mxu0
        %1778 = vmatprep.mubr.f32.mxu0 0.0
        %1779 = vmatmul.mubr.f32.gmra.mrb[0].mxu0 %v1577
        %v1780 = vpop.f32.mrb[0].mxu0
        %v1781 = vadd.f32 0.0, %v1780
        %v1782 = vpop.f32.mrb[0].mxu0
        %1783 = vmatprep.mubr.f32.mxu0 0.0
        %1784 = vmatmul.mubr.f32.gmra.mrb[0].mxu0 %v1578
        %v1785 = vpop.f32.mrb[0].mxu0
        %v1786 = vadd.f32 0.0, %v1785
        %v1787 = vpop.f32.mrb[0].mxu0
        %1788 = vmatprep.mubr.f32.mxu0 0.0
        %1789 = vmatmul.mubr.f32.gmra.mrb[0].mxu0 %v1579
        %v1790 = vpop.f32.mrb[0].mxu0
        %v1791 = vadd.f32 0.0, %v1790
        %v1792 = vpop.f32.mrb[0].mxu0
        %1793 = vmatprep.mubr.f32.mxu0 0.0
        %1794 = vmatmul.mubr.f32.gmra.mrb[0].mxu0 %v1580
        %v1795 = vpop.f32.mrb[0].mxu0
        %v1796 = vadd.f32 0.0, %v1795
        %v1797 = vpop.f32.mrb[0].mxu0
        %1798 = vmatprep.mubr.f32.mxu0 0.0
        %1799 = vmatmul.mubr.f32.gmra.mrb[0].mxu0 %v1581
        %v1800 = vpop.f32.mrb[0].mxu0
        %v1801 = vadd.f32 0.0, %v1800
        %v1802 = vpop.f32.mrb[0].mxu0
        %1803 = vmatprep.mubr.f32.mxu0 0.0
        %1804 = vmatmul.mubr.f32.gmra.mrb[0].mxu0 %v1582
        %v1805 = vpop.f32.mrb[0].mxu0
        %v1806 = vadd.f32 0.0, %v1805
        %v1807 = vpop.f32.mrb[0].mxu0
        %1808 = vmatprep.mubr.f32.mxu0 0.0
        %1809 = vmatmul.mubr.f32.gmra.mrb[0].mxu0 %v1583
        %v1810 = vpop.f32.mrb[0].mxu0
        %v1811 = vadd.f32 0.0, %v1810
        %v1812 = vpop.f32.mrb[0].mxu0
        %1813 = vmatprep.mubr.f32.mxu0 0.0
        %1814 = vmatmul.mubr.f32.gmra.mrb[0].mxu0 %v1584
        %v1815 = vpop.f32.mrb[0].mxu0
        %v1816 = vadd.f32 0.0, %v1815
        %v1817 = vpop.f32.mrb[0].mxu0
        %1818 = vmatprep.mubr.f32.mxu0 0.0
        %1819 = vmatmul.mubr.f32.gmra.mrb[0].mxu0 %v1585
        %v1820 = vpop.f32.mrb[0].mxu0
        %v1821 = vadd.f32 0.0, %v1820
        %v1822 = vpop.f32.mrb[0].mxu0
        %1823 = vmatprep.mubr.f32.mxu0 0.0
        %1824 = vmatmul.mubr.f32.gmra.mrb[0].mxu0 %v1586
        %v1825 = vpop.f32.mrb[0].mxu0
        %v1826 = vadd.f32 0.0, %v1825
        %v1827 = vpop.f32.mrb[0].mxu0
        %1828 = vdwg.mxu0
        %v1829 = vadd.f32 %v1397, %v1671
        %v1830 = vadd.f32 %v1402, %v1676
        %v1831 = vadd.f32 %v1407, %v1681
        %v1832 = vadd.f32 %v1412, %v1686
        %v1833 = vadd.f32 %v1417, %v1691
        %v1834 = vadd.f32 %v1422, %v1696
        %v1835 = vadd.f32 %v1427, %v1701
        %v1836 = vadd.f32 %v1432, %v1706
        %v1837 = vadd.f32 %v1437, %v1711
        %v1838 = vadd.f32 %v1442, %v1716
        %v1839 = vadd.f32 %v1447, %v1721
        %v1840 = vadd.f32 %v1452, %v1726
        %v1841 = vadd.f32 %v1457, %v1731
        %v1842 = vadd.f32 %v1462, %v1736
        %v1843 = vadd.f32 %v1467, %v1741
        %v1844 = vadd.f32 %v1472, %v1746
        %v1845 = vadd.f32 %v1477, %v1751
        %v1846 = vadd.f32 %v1482, %v1756
        %v1847 = vadd.f32 %v1487, %v1761
        %v1848 = vadd.f32 %v1492, %v1766
        %v1849 = vadd.f32 %v1497, %v1771
        %v1850 = vadd.f32 %v1502, %v1776
        %v1851 = vadd.f32 %v1507, %v1781
        %v1852 = vadd.f32 %v1512, %v1786
        %v1853 = vadd.f32 %v1517, %v1791
        %v1854 = vadd.f32 %v1522, %v1796
        %v1855 = vadd.f32 %v1527, %v1801
        %v1856 = vadd.f32 %v1532, %v1806
        %v1857 = vadd.f32 %v1537, %v1811
        %v1858 = vadd.f32 %v1542, %v1816
        %v1859 = vadd.f32 %v1547, %v1821
        %v1860 = vadd.f32 %v1552, %v1826
        %v1861 = vld [vmem:[%s372 + $0x1] sm:$0xff]
        %v1862 = vld [vmem:[%s372 + $0x9] sm:$0xff]
        %v1863 = vld [vmem:[%s372 + $0x19] sm:$0xff]
        %v1864 = vld [vmem:[%s372 + $0x21] sm:$0xff]
        %v1865 = vld [vmem:[%s372 + $0x31] sm:$0xff]
        %v1866 = vld [vmem:[%s372 + $0x39] sm:$0xff]
        %v1867 = vld [vmem:[%s372 + $0x49] sm:$0xff]
        %v1868 = vld [vmem:[%s372 + $0x51] sm:$0xff]
        %v1869 = vld [vmem:[%s372 + $0x61] sm:$0xff]
        %v1870 = vld [vmem:[%s372 + $0x69] sm:$0xff]
        %v1871 = vld [vmem:[%s372 + $0x79] sm:$0xff]
        %v1872 = vld [vmem:[%s372 + $0x81] sm:$0xff]
        %v1873 = vld [vmem:[%s372 + $0x91] sm:$0xff]
        %v1874 = vld [vmem:[%s372 + $0x99] sm:$0xff]
        %v1875 = vld [vmem:[%s372 + $0xa9] sm:$0xff]
        %v1876 = vld [vmem:[%s372 + $0xb1] sm:$0xff]
        %v1877 = vld [vmem:[%s372 + $0xc1] sm:$0xff]
        %v1878 = vld [vmem:[%s372 + $0xc9] sm:$0xff]
        %v1879 = vld [vmem:[%s372 + $0xd9] sm:$0xff]
        %v1880 = vld [vmem:[%s372 + $0xe1] sm:$0xff]
        %v1881 = vld [vmem:[%s372 + $0xf1] sm:$0xff]
        %v1882 = vld [vmem:[%s372 + $0xf9] sm:$0xff]
        %v1883 = vld [vmem:[%s372 + $0x109] sm:$0xff]
        %v1884 = vld [vmem:[%s372 + $0x111] sm:$0xff]
        %v1885 = vld [vmem:[%s372 + $0x121] sm:$0xff]
        %v1886 = vld [vmem:[%s372 + $0x129] sm:$0xff]
        %v1887 = vld [vmem:[%s372 + $0x139] sm:$0xff]
        %v1888 = vld [vmem:[%s372 + $0x141] sm:$0xff]
        %v1889 = vld [vmem:[%s372 + $0x151] sm:$0xff]
        %v1890 = vld [vmem:[%s372 + $0x159] sm:$0xff]
        %v1891 = vld [vmem:[%s372 + $0x169] sm:$0xff]
        %v1892 = vld [vmem:[%s372 + $0x171] sm:$0xff]
        %s1893 = scalar_lea.vmem [#allocation6], 384
        %v1894 = vld [vmem:[%s1893] sm:$0xff]
        %v1895 = vld [vmem:[%s1893 + $0x8] sm:$0xff]
        %v1896 = vld [vmem:[%s1893 + $0x10] sm:$0xff]
        %v1897 = vld [vmem:[%s1893 + $0x18] sm:$0xff]
        %v1898 = vld [vmem:[%s1893 + $0x20] sm:$0xff]
        %v1899 = vld [vmem:[%s1893 + $0x28] sm:$0xff]
        %v1900 = vld [vmem:[%s1893 + $0x30] sm:$0xff]
        %v1901 = vld [vmem:[%s1893 + $0x38] sm:$0xff]
        %v1902 = vld [vmem:[%s1893 + $0x40] sm:$0xff]
        %v1903 = vld [vmem:[%s1893 + $0x48] sm:$0xff]
        %v1904 = vld [vmem:[%s1893 + $0x50] sm:$0xff]
        %v1905 = vld [vmem:[%s1893 + $0x58] sm:$0xff]
        %v1906 = vld [vmem:[%s1893 + $0x60] sm:$0xff]
        %v1907 = vld [vmem:[%s1893 + $0x68] sm:$0xff]
        %v1908 = vld [vmem:[%s1893 + $0x70] sm:$0xff]
        %v1909 = vld [vmem:[%s1893 + $0x78] sm:$0xff]
        %1910 = vmatprep.subr.mxu0 0.0
        %1911 = vmatpush1.msra.mxu0 %v1894
        %1912 = vmatprep.subr.mxu0 0.0
        %1913 = vmatpush1.msra.mxu0 %v1895
        %1914 = vmatprep.subr.mxu0 0.0
        %1915 = vmatpush1.msra.mxu0 %v1896
        %1916 = vmatprep.subr.mxu0 0.0
        %1917 = vmatpush1.msra.mxu0 %v1897
        %1918 = vmatprep.subr.mxu0 0.0
        %1919 = vmatpush1.msra.mxu0 %v1898
        %1920 = vmatprep.subr.mxu0 0.0
        %1921 = vmatpush1.msra.mxu0 %v1899
        %1922 = vmatprep.subr.mxu0 0.0
        %1923 = vmatpush1.msra.mxu0 %v1900
        %1924 = vmatprep.subr.mxu0 0.0
        %1925 = vmatpush1.msra.mxu0 %v1901
        %1926 = vmatprep.subr.mxu0 0.0
        %1927 = vmatpush1.msra.mxu0 %v1902
        %1928 = vmatprep.subr.mxu0 0.0
        %1929 = vmatpush1.msra.mxu0 %v1903
        %1930 = vmatprep.subr.mxu0 0.0
        %1931 = vmatpush1.msra.mxu0 %v1904
        %1932 = vmatprep.subr.mxu0 0.0
        %1933 = vmatpush1.msra.mxu0 %v1905
        %1934 = vmatprep.subr.mxu0 0.0
        %1935 = vmatpush1.msra.mxu0 %v1906
        %1936 = vmatprep.subr.mxu0 0.0
        %1937 = vmatpush1.msra.mxu0 %v1907
        %1938 = vmatprep.subr.mxu0 0.0
        %1939 = vmatpush1.msra.mxu0 %v1908
        %1940 = vmatprep.subr.mxu0 0.0
        %1941 = vmatpush1.msra.mxu0 %v1909
        %1942 = vmatprep.subr.mxu0 0.0
        %1943 = vmatpush1.msra.mxu0 0.0
        %1944 = vmatprep.subr.mxu0 0.0
        %1945 = vmatpush1.msra.mxu0 0.0
        %1946 = vmatprep.subr.mxu0 0.0
        %1947 = vmatpush1.msra.mxu0 0.0
        %1948 = vmatprep.subr.mxu0 0.0
        %1949 = vmatpush1.msra.mxu0 0.0
        %1950 = vmatprep.subr.mxu0 0.0
        %1951 = vmatpush1.msra.mxu0 0.0
        %1952 = vmatprep.subr.mxu0 0.0
        %1953 = vmatpush1.msra.mxu0 0.0
        %1954 = vmatprep.subr.mxu0 0.0
        %1955 = vmatpush1.msra.mxu0 0.0
        %1956 = vmatprep.subr.mxu0 0.0
        %1957 = vmatpush1.msra.mxu0 0.0
        %1958 = vmatprep.subr.mxu0 0.0
        %1959 = vmatpush1.msra.mxu0 0.0
        %1960 = vmatprep.subr.mxu0 0.0
        %1961 = vmatpush1.msra.mxu0 0.0
        %1962 = vmatprep.subr.mxu0 0.0
        %1963 = vmatpush1.msra.mxu0 0.0
        %1964 = vmatprep.subr.mxu0 0.0
        %1965 = vmatpush1.msra.mxu0 0.0
        %1966 = vmatprep.subr.mxu0 0.0
        %1967 = vmatpush1.msra.mxu0 0.0
        %1968 = vmatprep.subr.mxu0 0.0
        %1969 = vmatpush1.msra.mxu0 0.0
        %1970 = vmatprep.subr.mxu0 0.0
        %1971 = vmatpush1.msra.mxu0 0.0
        %1972 = vmatprep.subr.mxu0 0.0
        %1973 = vmatpush1.msra.mxu0 0.0
        %1974 = vmatprep.mubr.f32.mxu0 0.0
        %1975 = vmatmul.mubr.f32.gmra.mrb[0].mxu0 %v1861
        %v1976 = vpop.f32.mrb[0].mxu0
        %v1977 = vadd.f32 0.0, %v1976
        %v1978 = vpop.f32.mrb[0].mxu0
        %1979 = vmatprep.mubr.f32.mxu0 0.0
        %1980 = vmatmul.mubr.f32.gmra.mrb[0].mxu0 %v1862
        %v1981 = vpop.f32.mrb[0].mxu0
        %v1982 = vadd.f32 0.0, %v1981
        %v1983 = vpop.f32.mrb[0].mxu0
        %1984 = vmatprep.mubr.f32.mxu0 0.0
        %1985 = vmatmul.mubr.f32.gmra.mrb[0].mxu0 %v1863
        %v1986 = vpop.f32.mrb[0].mxu0
        %v1987 = vadd.f32 0.0, %v1986
        %v1988 = vpop.f32.mrb[0].mxu0
        %1989 = vmatprep.mubr.f32.mxu0 0.0
        %1990 = vmatmul.mubr.f32.gmra.mrb[0].mxu0 %v1864
        %v1991 = vpop.f32.mrb[0].mxu0
        %v1992 = vadd.f32 0.0, %v1991
        %v1993 = vpop.f32.mrb[0].mxu0
        %1994 = vmatprep.mubr.f32.mxu0 0.0
        %1995 = vmatmul.mubr.f32.gmra.mrb[0].mxu0 %v1865
        %v1996 = vpop.f32.mrb[0].mxu0
        %v1997 = vadd.f32 0.0, %v1996
        %v1998 = vpop.f32.mrb[0].mxu0
        %1999 = vmatprep.mubr.f32.mxu0 0.0
        %2000 = vmatmul.mubr.f32.gmra.mrb[0].mxu0 %v1866
        %v2001 = vpop.f32.mrb[0].mxu0
        %v2002 = vadd.f32 0.0, %v2001
        %v2003 = vpop.f32.mrb[0].mxu0
        %2004 = vmatprep.mubr.f32.mxu0 0.0
        %2005 = vmatmul.mubr.f32.gmra.mrb[0].mxu0 %v1867
        %v2006 = vpop.f32.mrb[0].mxu0
        %v2007 = vadd.f32 0.0, %v2006
        %v2008 = vpop.f32.mrb[0].mxu0
        %2009 = vmatprep.mubr.f32.mxu0 0.0
        %2010 = vmatmul.mubr.f32.gmra.mrb[0].mxu0 %v1868
        %v2011 = vpop.f32.mrb[0].mxu0
        %v2012 = vadd.f32 0.0, %v2011
        %v2013 = vpop.f32.mrb[0].mxu0
        %2014 = vmatprep.mubr.f32.mxu0 0.0
        %2015 = vmatmul.mubr.f32.gmra.mrb[0].mxu0 %v1869
        %v2016 = vpop.f32.mrb[0].mxu0
        %v2017 = vadd.f32 0.0, %v2016
        %v2018 = vpop.f32.mrb[0].mxu0
        %2019 = vmatprep.mubr.f32.mxu0 0.0
        %2020 = vmatmul.mubr.f32.gmra.mrb[0].mxu0 %v1870
        %v2021 = vpop.f32.mrb[0].mxu0
        %v2022 = vadd.f32 0.0, %v2021
        %v2023 = vpop.f32.mrb[0].mxu0
        %2024 = vmatprep.mubr.f32.mxu0 0.0
        %2025 = vmatmul.mubr.f32.gmra.mrb[0].mxu0 %v1871
        %v2026 = vpop.f32.mrb[0].mxu0
        %v2027 = vadd.f32 0.0, %v2026
        %v2028 = vpop.f32.mrb[0].mxu0
        %2029 = vmatprep.mubr.f32.mxu0 0.0
        %2030 = vmatmul.mubr.f32.gmra.mrb[0].mxu0 %v1872
        %v2031 = vpop.f32.mrb[0].mxu0
        %v2032 = vadd.f32 0.0, %v2031
        %v2033 = vpop.f32.mrb[0].mxu0
        %2034 = vmatprep.mubr.f32.mxu0 0.0
        %2035 = vmatmul.mubr.f32.gmra.mrb[0].mxu0 %v1873
        %v2036 = vpop.f32.mrb[0].mxu0
        %v2037 = vadd.f32 0.0, %v2036
        %v2038 = vpop.f32.mrb[0].mxu0
        %2039 = vmatprep.mubr.f32.mxu0 0.0
        %2040 = vmatmul.mubr.f32.gmra.mrb[0].mxu0 %v1874
        %v2041 = vpop.f32.mrb[0].mxu0
        %v2042 = vadd.f32 0.0, %v2041
        %v2043 = vpop.f32.mrb[0].mxu0
        %2044 = vmatprep.mubr.f32.mxu0 0.0
        %2045 = vmatmul.mubr.f32.gmra.mrb[0].mxu0 %v1875
        %v2046 = vpop.f32.mrb[0].mxu0
        %v2047 = vadd.f32 0.0, %v2046
        %v2048 = vpop.f32.mrb[0].mxu0
        %2049 = vmatprep.mubr.f32.mxu0 0.0
        %2050 = vmatmul.mubr.f32.gmra.mrb[0].mxu0 %v1876
        %v2051 = vpop.f32.mrb[0].mxu0
        %v2052 = vadd.f32 0.0, %v2051
        %v2053 = vpop.f32.mrb[0].mxu0
        %2054 = vmatprep.mubr.f32.mxu0 0.0
        %2055 = vmatmul.mubr.f32.gmra.mrb[0].mxu0 %v1877
        %v2056 = vpop.f32.mrb[0].mxu0
        %v2057 = vadd.f32 0.0, %v2056
        %v2058 = vpop.f32.mrb[0].mxu0
        %2059 = vmatprep.mubr.f32.mxu0 0.0
        %2060 = vmatmul.mubr.f32.gmra.mrb[0].mxu0 %v1878
        %v2061 = vpop.f32.mrb[0].mxu0
        %v2062 = vadd.f32 0.0, %v2061
        %v2063 = vpop.f32.mrb[0].mxu0
        %2064 = vmatprep.mubr.f32.mxu0 0.0
        %2065 = vmatmul.mubr.f32.gmra.mrb[0].mxu0 %v1879
        %v2066 = vpop.f32.mrb[0].mxu0
        %v2067 = vadd.f32 0.0, %v2066
        %v2068 = vpop.f32.mrb[0].mxu0
        %2069 = vmatprep.mubr.f32.mxu0 0.0
        %2070 = vmatmul.mubr.f32.gmra.mrb[0].mxu0 %v1880
        %v2071 = vpop.f32.mrb[0].mxu0
        %v2072 = vadd.f32 0.0, %v2071
        %v2073 = vpop.f32.mrb[0].mxu0
        %2074 = vmatprep.mubr.f32.mxu0 0.0
        %2075 = vmatmul.mubr.f32.gmra.mrb[0].mxu0 %v1881
        %v2076 = vpop.f32.mrb[0].mxu0
        %v2077 = vadd.f32 0.0, %v2076
        %v2078 = vpop.f32.mrb[0].mxu0
        %2079 = vmatprep.mubr.f32.mxu0 0.0
        %2080 = vmatmul.mubr.f32.gmra.mrb[0].mxu0 %v1882
        %v2081 = vpop.f32.mrb[0].mxu0
        %v2082 = vadd.f32 0.0, %v2081
        %v2083 = vpop.f32.mrb[0].mxu0
        %2084 = vmatprep.mubr.f32.mxu0 0.0
        %2085 = vmatmul.mubr.f32.gmra.mrb[0].mxu0 %v1883
        %v2086 = vpop.f32.mrb[0].mxu0
        %v2087 = vadd.f32 0.0, %v2086
        %v2088 = vpop.f32.mrb[0].mxu0
        %2089 = vmatprep.mubr.f32.mxu0 0.0
        %2090 = vmatmul.mubr.f32.gmra.mrb[0].mxu0 %v1884
        %v2091 = vpop.f32.mrb[0].mxu0
        %v2092 = vadd.f32 0.0, %v2091
        %v2093 = vpop.f32.mrb[0].mxu0
        %2094 = vmatprep.mubr.f32.mxu0 0.0
        %2095 = vmatmul.mubr.f32.gmra.mrb[0].mxu0 %v1885
        %v2096 = vpop.f32.mrb[0].mxu0
        %v2097 = vadd.f32 0.0, %v2096
        %v2098 = vpop.f32.mrb[0].mxu0
        %2099 = vmatprep.mubr.f32.mxu0 0.0
        %2100 = vmatmul.mubr.f32.gmra.mrb[0].mxu0 %v1886
        %v2101 = vpop.f32.mrb[0].mxu0
        %v2102 = vadd.f32 0.0, %v2101
        %v2103 = vpop.f32.mrb[0].mxu0
        %2104 = vmatprep.mubr.f32.mxu0 0.0
        %2105 = vmatmul.mubr.f32.gmra.mrb[0].mxu0 %v1887
        %v2106 = vpop.f32.mrb[0].mxu0
        %v2107 = vadd.f32 0.0, %v2106
        %v2108 = vpop.f32.mrb[0].mxu0
        %2109 = vmatprep.mubr.f32.mxu0 0.0
        %2110 = vmatmul.mubr.f32.gmra.mrb[0].mxu0 %v1888
        %v2111 = vpop.f32.mrb[0].mxu0
        %v2112 = vadd.f32 0.0, %v2111
        %v2113 = vpop.f32.mrb[0].mxu0
        %2114 = vmatprep.mubr.f32.mxu0 0.0
        %2115 = vmatmul.mubr.f32.gmra.mrb[0].mxu0 %v1889
        %v2116 = vpop.f32.mrb[0].mxu0
        %v2117 = vadd.f32 0.0, %v2116
        %v2118 = vpop.f32.mrb[0].mxu0
        %2119 = vmatprep.mubr.f32.mxu0 0.0
        %2120 = vmatmul.mubr.f32.gmra.mrb[0].mxu0 %v1890
        %v2121 = vpop.f32.mrb[0].mxu0
        %v2122 = vadd.f32 0.0, %v2121
        %v2123 = vpop.f32.mrb[0].mxu0
        %2124 = vmatprep.mubr.f32.mxu0 0.0
        %2125 = vmatmul.mubr.f32.gmra.mrb[0].mxu0 %v1891
        %v2126 = vpop.f32.mrb[0].mxu0
        %v2127 = vadd.f32 0.0, %v2126
        %v2128 = vpop.f32.mrb[0].mxu0
        %2129 = vmatprep.mubr.f32.mxu0 0.0
        %2130 = vmatmul.mubr.f32.gmra.mrb[0].mxu0 %v1892
        %v2131 = vpop.f32.mrb[0].mxu0
        %v2132 = vadd.f32 0.0, %v2131
        %v2133 = vpop.f32.mrb[0].mxu0
        %2134 = vdwg.mxu0
        %v2135 = vadd.f32 %v1829, %v1977
        %v2136 = vadd.f32 %v1830, %v1982
        %v2137 = vadd.f32 %v1831, %v1987
        %v2138 = vadd.f32 %v1832, %v1992
        %v2139 = vadd.f32 %v1833, %v1997
        %v2140 = vadd.f32 %v1834, %v2002
        %v2141 = vadd.f32 %v1835, %v2007
        %v2142 = vadd.f32 %v1836, %v2012
        %v2143 = vadd.f32 %v1837, %v2017
        %v2144 = vadd.f32 %v1838, %v2022
        %v2145 = vadd.f32 %v1839, %v2027
        %v2146 = vadd.f32 %v1840, %v2032
        %v2147 = vadd.f32 %v1841, %v2037
        %v2148 = vadd.f32 %v1842, %v2042
        %v2149 = vadd.f32 %v1843, %v2047
        %v2150 = vadd.f32 %v1844, %v2052
        %v2151 = vadd.f32 %v1845, %v2057
        %v2152 = vadd.f32 %v1846, %v2062
        %v2153 = vadd.f32 %v1847, %v2067
        %v2154 = vadd.f32 %v1848, %v2072
        %v2155 = vadd.f32 %v1849, %v2077
        %v2156 = vadd.f32 %v1850, %v2082
        %v2157 = vadd.f32 %v1851, %v2087
        %v2158 = vadd.f32 %v1852, %v2092
        %v2159 = vadd.f32 %v1853, %v2097
        %v2160 = vadd.f32 %v1854, %v2102
        %v2161 = vadd.f32 %v1855, %v2107
        %v2162 = vadd.f32 %v1856, %v2112
        %v2163 = vadd.f32 %v1857, %v2117
        %v2164 = vadd.f32 %v1858, %v2122
        %v2165 = vadd.f32 %v1859, %v2127
        %v2166 = vadd.f32 %v1860, %v2132
        %v2167 = vld [vmem:[%s372 + $0x2] sm:$0xff]
        %v2168 = vld [vmem:[%s372 + $0xa] sm:$0xff]
        %v2169 = vld [vmem:[%s372 + $0x1a] sm:$0xff]
        %v2170 = vld [vmem:[%s372 + $0x22] sm:$0xff]
        %v2171 = vld [vmem:[%s372 + $0x32] sm:$0xff]
        %v2172 = vld [vmem:[%s372 + $0x3a] sm:$0xff]
        %v2173 = vld [vmem:[%s372 + $0x4a] sm:$0xff]
        %v2174 = vld [vmem:[%s372 + $0x52] sm:$0xff]
        %v2175 = vld [vmem:[%s372 + $0x62] sm:$0xff]
        %v2176 = vld [vmem:[%s372 + $0x6a] sm:$0xff]
        %v2177 = vld [vmem:[%s372 + $0x7a] sm:$0xff]
        %v2178 = vld [vmem:[%s372 + $0x82] sm:$0xff]
        %v2179 = vld [vmem:[%s372 + $0x92] sm:$0xff]
        %v2180 = vld [vmem:[%s372 + $0x9a] sm:$0xff]
        %v2181 = vld [vmem:[%s372 + $0xaa] sm:$0xff]
        %v2182 = vld [vmem:[%s372 + $0xb2] sm:$0xff]
        %v2183 = vld [vmem:[%s372 + $0xc2] sm:$0xff]
        %v2184 = vld [vmem:[%s372 + $0xca] sm:$0xff]
        %v2185 = vld [vmem:[%s372 + $0xda] sm:$0xff]
        %v2186 = vld [vmem:[%s372 + $0xe2] sm:$0xff]
        %v2187 = vld [vmem:[%s372 + $0xf2] sm:$0xff]
        %v2188 = vld [vmem:[%s372 + $0xfa] sm:$0xff]
        %v2189 = vld [vmem:[%s372 + $0x10a] sm:$0xff]
        %v2190 = vld [vmem:[%s372 + $0x112] sm:$0xff]
        %v2191 = vld [vmem:[%s372 + $0x122] sm:$0xff]
        %v2192 = vld [vmem:[%s372 + $0x12a] sm:$0xff]
        %v2193 = vld [vmem:[%s372 + $0x13a] sm:$0xff]
        %v2194 = vld [vmem:[%s372 + $0x142] sm:$0xff]
        %v2195 = vld [vmem:[%s372 + $0x152] sm:$0xff]
        %v2196 = vld [vmem:[%s372 + $0x15a] sm:$0xff]
        %v2197 = vld [vmem:[%s372 + $0x16a] sm:$0xff]
        %v2198 = vld [vmem:[%s372 + $0x172] sm:$0xff]
        %s2199 = scalar_lea.vmem [#allocation6], 512
        %v2200 = vld [vmem:[%s2199] sm:$0xff]
        %v2201 = vld [vmem:[%s2199 + $0x8] sm:$0xff]
        %v2202 = vld [vmem:[%s2199 + $0x10] sm:$0xff]
        %v2203 = vld [vmem:[%s2199 + $0x18] sm:$0xff]
        %v2204 = vld [vmem:[%s2199 + $0x20] sm:$0xff]
        %v2205 = vld [vmem:[%s2199 + $0x28] sm:$0xff]
        %v2206 = vld [vmem:[%s2199 + $0x30] sm:$0xff]
        %v2207 = vld [vmem:[%s2199 + $0x38] sm:$0xff]
        %v2208 = vld [vmem:[%s2199 + $0x40] sm:$0xff]
        %v2209 = vld [vmem:[%s2199 + $0x48] sm:$0xff]
        %v2210 = vld [vmem:[%s2199 + $0x50] sm:$0xff]
        %v2211 = vld [vmem:[%s2199 + $0x58] sm:$0xff]
        %v2212 = vld [vmem:[%s2199 + $0x60] sm:$0xff]
        %v2213 = vld [vmem:[%s2199 + $0x68] sm:$0xff]
        %v2214 = vld [vmem:[%s2199 + $0x70] sm:$0xff]
        %v2215 = vld [vmem:[%s2199 + $0x78] sm:$0xff]
        %2216 = vmatprep.subr.mxu0 0.0
        %2217 = vmatpush1.msra.mxu0 %v2200
        %2218 = vmatprep.subr.mxu0 0.0
        %2219 = vmatpush1.msra.mxu0 %v2201
        %2220 = vmatprep.subr.mxu0 0.0
        %2221 = vmatpush1.msra.mxu0 %v2202
        %2222 = vmatprep.subr.mxu0 0.0
        %2223 = vmatpush1.msra.mxu0 %v2203
        %2224 = vmatprep.subr.mxu0 0.0
        %2225 = vmatpush1.msra.mxu0 %v2204
        %2226 = vmatprep.subr.mxu0 0.0
        %2227 = vmatpush1.msra.mxu0 %v2205
        %2228 = vmatprep.subr.mxu0 0.0
        %2229 = vmatpush1.msra.mxu0 %v2206
        %2230 = vmatprep.subr.mxu0 0.0
        %2231 = vmatpush1.msra.mxu0 %v2207
        %2232 = vmatprep.subr.mxu0 0.0
        %2233 = vmatpush1.msra.mxu0 %v2208
        %2234 = vmatprep.subr.mxu0 0.0
        %2235 = vmatpush1.msra.mxu0 %v2209
        %2236 = vmatprep.subr.mxu0 0.0
        %2237 = vmatpush1.msra.mxu0 %v2210
        %2238 = vmatprep.subr.mxu0 0.0
        %2239 = vmatpush1.msra.mxu0 %v2211
        %2240 = vmatprep.subr.mxu0 0.0
        %2241 = vmatpush1.msra.mxu0 %v2212
        %2242 = vmatprep.subr.mxu0 0.0
        %2243 = vmatpush1.msra.mxu0 %v2213
        %2244 = vmatprep.subr.mxu0 0.0
        %2245 = vmatpush1.msra.mxu0 %v2214
        %2246 = vmatprep.subr.mxu0 0.0
        %2247 = vmatpush1.msra.mxu0 %v2215
        %2248 = vmatprep.subr.mxu0 0.0
        %2249 = vmatpush1.msra.mxu0 0.0
        %2250 = vmatprep.subr.mxu0 0.0
        %2251 = vmatpush1.msra.mxu0 0.0
        %2252 = vmatprep.subr.mxu0 0.0
        %2253 = vmatpush1.msra.mxu0 0.0
        %2254 = vmatprep.subr.mxu0 0.0
        %2255 = vmatpush1.msra.mxu0 0.0
        %2256 = vmatprep.subr.mxu0 0.0
        %2257 = vmatpush1.msra.mxu0 0.0
        %2258 = vmatprep.subr.mxu0 0.0
        %2259 = vmatpush1.msra.mxu0 0.0
        %2260 = vmatprep.subr.mxu0 0.0
        %2261 = vmatpush1.msra.mxu0 0.0
        %2262 = vmatprep.subr.mxu0 0.0
        %2263 = vmatpush1.msra.mxu0 0.0
        %2264 = vmatprep.subr.mxu0 0.0
        %2265 = vmatpush1.msra.mxu0 0.0
        %2266 = vmatprep.subr.mxu0 0.0
        %2267 = vmatpush1.msra.mxu0 0.0
        %2268 = vmatprep.subr.mxu0 0.0
        %2269 = vmatpush1.msra.mxu0 0.0
        %2270 = vmatprep.subr.mxu0 0.0
        %2271 = vmatpush1.msra.mxu0 0.0
        %2272 = vmatprep.subr.mxu0 0.0
        %2273 = vmatpush1.msra.mxu0 0.0
        %2274 = vmatprep.subr.mxu0 0.0
        %2275 = vmatpush1.msra.mxu0 0.0
        %2276 = vmatprep.subr.mxu0 0.0
        %2277 = vmatpush1.msra.mxu0 0.0
        %2278 = vmatprep.subr.mxu0 0.0
        %2279 = vmatpush1.msra.mxu0 0.0
        %2280 = vmatprep.mubr.f32.mxu0 0.0
        %2281 = vmatmul.mubr.f32.gmra.mrb[0].mxu0 %v2167
        %v2282 = vpop.f32.mrb[0].mxu0
        %v2283 = vadd.f32 0.0, %v2282
        %v2284 = vpop.f32.mrb[0].mxu0
        %2285 = vmatprep.mubr.f32.mxu0 0.0
        %2286 = vmatmul.mubr.f32.gmra.mrb[0].mxu0 %v2168
        %v2287 = vpop.f32.mrb[0].mxu0
        %v2288 = vadd.f32 0.0, %v2287
        %v2289 = vpop.f32.mrb[0].mxu0
        %2290 = vmatprep.mubr.f32.mxu0 0.0
        %2291 = vmatmul.mubr.f32.gmra.mrb[0].mxu0 %v2169
        %v2292 = vpop.f32.mrb[0].mxu0
        %v2293 = vadd.f32 0.0, %v2292
        %v2294 = vpop.f32.mrb[0].mxu0
        %2295 = vmatprep.mubr.f32.mxu0 0.0
        %2296 = vmatmul.mubr.f32.gmra.mrb[0].mxu0 %v2170
        %v2297 = vpop.f32.mrb[0].mxu0
        %v2298 = vadd.f32 0.0, %v2297
        %v2299 = vpop.f32.mrb[0].mxu0
        %2300 = vmatprep.mubr.f32.mxu0 0.0
        %2301 = vmatmul.mubr.f32.gmra.mrb[0].mxu0 %v2171
        %v2302 = vpop.f32.mrb[0].mxu0
        %v2303 = vadd.f32 0.0, %v2302
        %v2304 = vpop.f32.mrb[0].mxu0
        %2305 = vmatprep.mubr.f32.mxu0 0.0
        %2306 = vmatmul.mubr.f32.gmra.mrb[0].mxu0 %v2172
        %v2307 = vpop.f32.mrb[0].mxu0
        %v2308 = vadd.f32 0.0, %v2307
        %v2309 = vpop.f32.mrb[0].mxu0
        %2310 = vmatprep.mubr.f32.mxu0 0.0
        %2311 = vmatmul.mubr.f32.gmra.mrb[0].mxu0 %v2173
        %v2312 = vpop.f32.mrb[0].mxu0
        %v2313 = vadd.f32 0.0, %v2312
        %v2314 = vpop.f32.mrb[0].mxu0
        %2315 = vmatprep.mubr.f32.mxu0 0.0
        %2316 = vmatmul.mubr.f32.gmra.mrb[0].mxu0 %v2174
        %v2317 = vpop.f32.mrb[0].mxu0
        %v2318 = vadd.f32 0.0, %v2317
        %v2319 = vpop.f32.mrb[0].mxu0
        %2320 = vmatprep.mubr.f32.mxu0 0.0
        %2321 = vmatmul.mubr.f32.gmra.mrb[0].mxu0 %v2175
        %v2322 = vpop.f32.mrb[0].mxu0
        %v2323 = vadd.f32 0.0, %v2322
        %v2324 = vpop.f32.mrb[0].mxu0
        %2325 = vmatprep.mubr.f32.mxu0 0.0
        %2326 = vmatmul.mubr.f32.gmra.mrb[0].mxu0 %v2176
        %v2327 = vpop.f32.mrb[0].mxu0
        %v2328 = vadd.f32 0.0, %v2327
        %v2329 = vpop.f32.mrb[0].mxu0
        %2330 = vmatprep.mubr.f32.mxu0 0.0
        %2331 = vmatmul.mubr.f32.gmra.mrb[0].mxu0 %v2177
        %v2332 = vpop.f32.mrb[0].mxu0
        %v2333 = vadd.f32 0.0, %v2332
        %v2334 = vpop.f32.mrb[0].mxu0
        %2335 = vmatprep.mubr.f32.mxu0 0.0
        %2336 = vmatmul.mubr.f32.gmra.mrb[0].mxu0 %v2178
        %v2337 = vpop.f32.mrb[0].mxu0
        %v2338 = vadd.f32 0.0, %v2337
        %v2339 = vpop.f32.mrb[0].mxu0
        %2340 = vmatprep.mubr.f32.mxu0 0.0
        %2341 = vmatmul.mubr.f32.gmra.mrb[0].mxu0 %v2179
        %v2342 = vpop.f32.mrb[0].mxu0
        %v2343 = vadd.f32 0.0, %v2342
        %v2344 = vpop.f32.mrb[0].mxu0
        %2345 = vmatprep.mubr.f32.mxu0 0.0
        %2346 = vmatmul.mubr.f32.gmra.mrb[0].mxu0 %v2180
        %v2347 = vpop.f32.mrb[0].mxu0
        %v2348 = vadd.f32 0.0, %v2347
        %v2349 = vpop.f32.mrb[0].mxu0
        %2350 = vmatprep.mubr.f32.mxu0 0.0
        %2351 = vmatmul.mubr.f32.gmra.mrb[0].mxu0 %v2181
        %v2352 = vpop.f32.mrb[0].mxu0
        %v2353 = vadd.f32 0.0, %v2352
        %v2354 = vpop.f32.mrb[0].mxu0
        %2355 = vmatprep.mubr.f32.mxu0 0.0
        %2356 = vmatmul.mubr.f32.gmra.mrb[0].mxu0 %v2182
        %v2357 = vpop.f32.mrb[0].mxu0
        %v2358 = vadd.f32 0.0, %v2357
        %v2359 = vpop.f32.mrb[0].mxu0
        %2360 = vmatprep.mubr.f32.mxu0 0.0
        %2361 = vmatmul.mubr.f32.gmra.mrb[0].mxu0 %v2183
        %v2362 = vpop.f32.mrb[0].mxu0
        %v2363 = vadd.f32 0.0, %v2362
        %v2364 = vpop.f32.mrb[0].mxu0
        %2365 = vmatprep.mubr.f32.mxu0 0.0
        %2366 = vmatmul.mubr.f32.gmra.mrb[0].mxu0 %v2184
        %v2367 = vpop.f32.mrb[0].mxu0
        %v2368 = vadd.f32 0.0, %v2367
        %v2369 = vpop.f32.mrb[0].mxu0
        %2370 = vmatprep.mubr.f32.mxu0 0.0
        %2371 = vmatmul.mubr.f32.gmra.mrb[0].mxu0 %v2185
        %v2372 = vpop.f32.mrb[0].mxu0
        %v2373 = vadd.f32 0.0, %v2372
        %v2374 = vpop.f32.mrb[0].mxu0
        %2375 = vmatprep.mubr.f32.mxu0 0.0
        %2376 = vmatmul.mubr.f32.gmra.mrb[0].mxu0 %v2186
        %v2377 = vpop.f32.mrb[0].mxu0
        %v2378 = vadd.f32 0.0, %v2377
        %v2379 = vpop.f32.mrb[0].mxu0
        %2380 = vmatprep.mubr.f32.mxu0 0.0
        %2381 = vmatmul.mubr.f32.gmra.mrb[0].mxu0 %v2187
        %v2382 = vpop.f32.mrb[0].mxu0
        %v2383 = vadd.f32 0.0, %v2382
        %v2384 = vpop.f32.mrb[0].mxu0
        %2385 = vmatprep.mubr.f32.mxu0 0.0
        %2386 = vmatmul.mubr.f32.gmra.mrb[0].mxu0 %v2188
        %v2387 = vpop.f32.mrb[0].mxu0
        %v2388 = vadd.f32 0.0, %v2387
        %v2389 = vpop.f32.mrb[0].mxu0
        %2390 = vmatprep.mubr.f32.mxu0 0.0
        %2391 = vmatmul.mubr.f32.gmra.mrb[0].mxu0 %v2189
        %v2392 = vpop.f32.mrb[0].mxu0
        %v2393 = vadd.f32 0.0, %v2392
        %v2394 = vpop.f32.mrb[0].mxu0
        %2395 = vmatprep.mubr.f32.mxu0 0.0
        %2396 = vmatmul.mubr.f32.gmra.mrb[0].mxu0 %v2190
        %v2397 = vpop.f32.mrb[0].mxu0
        %v2398 = vadd.f32 0.0, %v2397
        %v2399 = vpop.f32.mrb[0].mxu0
        %2400 = vmatprep.mubr.f32.mxu0 0.0
        %2401 = vmatmul.mubr.f32.gmra.mrb[0].mxu0 %v2191
        %v2402 = vpop.f32.mrb[0].mxu0
        %v2403 = vadd.f32 0.0, %v2402
        %v2404 = vpop.f32.mrb[0].mxu0
        %2405 = vmatprep.mubr.f32.mxu0 0.0
        %2406 = vmatmul.mubr.f32.gmra.mrb[0].mxu0 %v2192
        %v2407 = vpop.f32.mrb[0].mxu0
        %v2408 = vadd.f32 0.0, %v2407
        %v2409 = vpop.f32.mrb[0].mxu0
        %2410 = vmatprep.mubr.f32.mxu0 0.0
        %2411 = vmatmul.mubr.f32.gmra.mrb[0].mxu0 %v2193
        %v2412 = vpop.f32.mrb[0].mxu0
        %v2413 = vadd.f32 0.0, %v2412
        %v2414 = vpop.f32.mrb[0].mxu0
        %2415 = vmatprep.mubr.f32.mxu0 0.0
        %2416 = vmatmul.mubr.f32.gmra.mrb[0].mxu0 %v2194
        %v2417 = vpop.f32.mrb[0].mxu0
        %v2418 = vadd.f32 0.0, %v2417
        %v2419 = vpop.f32.mrb[0].mxu0
        %2420 = vmatprep.mubr.f32.mxu0 0.0
        %2421 = vmatmul.mubr.f32.gmra.mrb[0].mxu0 %v2195
        %v2422 = vpop.f32.mrb[0].mxu0
        %v2423 = vadd.f32 0.0, %v2422
        %v2424 = vpop.f32.mrb[0].mxu0
        %2425 = vmatprep.mubr.f32.mxu0 0.0
        %2426 = vmatmul.mubr.f32.gmra.mrb[0].mxu0 %v2196
        %v2427 = vpop.f32.mrb[0].mxu0
        %v2428 = vadd.f32 0.0, %v2427
        %v2429 = vpop.f32.mrb[0].mxu0
        %2430 = vmatprep.mubr.f32.mxu0 0.0
        %2431 = vmatmul.mubr.f32.gmra.mrb[0].mxu0 %v2197
        %v2432 = vpop.f32.mrb[0].mxu0
        %v2433 = vadd.f32 0.0, %v2432
        %v2434 = vpop.f32.mrb[0].mxu0
        %2435 = vmatprep.mubr.f32.mxu0 0.0
        %2436 = vmatmul.mubr.f32.gmra.mrb[0].mxu0 %v2198
        %v2437 = vpop.f32.mrb[0].mxu0
        %v2438 = vadd.f32 0.0, %v2437
        %v2439 = vpop.f32.mrb[0].mxu0
        %2440 = vdwg.mxu0
        %v2441 = vadd.f32 %v2135, %v2283
        %v2442 = vadd.f32 %v2136, %v2288
        %v2443 = vadd.f32 %v2137, %v2293
        %v2444 = vadd.f32 %v2138, %v2298
        %v2445 = vadd.f32 %v2139, %v2303
        %v2446 = vadd.f32 %v2140, %v2308
        %v2447 = vadd.f32 %v2141, %v2313
        %v2448 = vadd.f32 %v2142, %v2318
        %v2449 = vadd.f32 %v2143, %v2323
        %v2450 = vadd.f32 %v2144, %v2328
        %v2451 = vadd.f32 %v2145, %v2333
        %v2452 = vadd.f32 %v2146, %v2338
        %v2453 = vadd.f32 %v2147, %v2343
        %v2454 = vadd.f32 %v2148, %v2348
        %v2455 = vadd.f32 %v2149, %v2353
        %v2456 = vadd.f32 %v2150, %v2358
        %v2457 = vadd.f32 %v2151, %v2363
        %v2458 = vadd.f32 %v2152, %v2368
        %v2459 = vadd.f32 %v2153, %v2373
        %v2460 = vadd.f32 %v2154, %v2378
        %v2461 = vadd.f32 %v2155, %v2383
        %v2462 = vadd.f32 %v2156, %v2388
        %v2463 = vadd.f32 %v2157, %v2393
        %v2464 = vadd.f32 %v2158, %v2398
        %v2465 = vadd.f32 %v2159, %v2403
        %v2466 = vadd.f32 %v2160, %v2408
        %v2467 = vadd.f32 %v2161, %v2413
        %v2468 = vadd.f32 %v2162, %v2418
        %v2469 = vadd.f32 %v2163, %v2423
        %v2470 = vadd.f32 %v2164, %v2428
        %v2471 = vadd.f32 %v2165, %v2433
        %v2472 = vadd.f32 %v2166, %v2438
        %v2473 = vld [vmem:[%s372 + $0x3] sm:$0xff]
        %v2474 = vld [vmem:[%s372 + $0xb] sm:$0xff]
        %v2475 = vld [vmem:[%s372 + $0x1b] sm:$0xff]
        %v2476 = vld [vmem:[%s372 + $0x23] sm:$0xff]
        %v2477 = vld [vmem:[%s372 + $0x33] sm:$0xff]
        %v2478 = vld [vmem:[%s372 + $0x3b] sm:$0xff]
        %v2479 = vld [vmem:[%s372 + $0x4b] sm:$0xff]
        %v2480 = vld [vmem:[%s372 + $0x53] sm:$0xff]
        %v2481 = vld [vmem:[%s372 + $0x63] sm:$0xff]
        %v2482 = vld [vmem:[%s372 + $0x6b] sm:$0xff]
        %v2483 = vld [vmem:[%s372 + $0x7b] sm:$0xff]
        %v2484 = vld [vmem:[%s372 + $0x83] sm:$0xff]
        %v2485 = vld [vmem:[%s372 + $0x93] sm:$0xff]
        %v2486 = vld [vmem:[%s372 + $0x9b] sm:$0xff]
        %v2487 = vld [vmem:[%s372 + $0xab] sm:$0xff]
        %v2488 = vld [vmem:[%s372 + $0xb3] sm:$0xff]
        %v2489 = vld [vmem:[%s372 + $0xc3] sm:$0xff]
        %v2490 = vld [vmem:[%s372 + $0xcb] sm:$0xff]
        %v2491 = vld [vmem:[%s372 + $0xdb] sm:$0xff]
        %v2492 = vld [vmem:[%s372 + $0xe3] sm:$0xff]
        %v2493 = vld [vmem:[%s372 + $0xf3] sm:$0xff]
        %v2494 = vld [vmem:[%s372 + $0xfb] sm:$0xff]
        %v2495 = vld [vmem:[%s372 + $0x10b] sm:$0xff]
        %v2496 = vld [vmem:[%s372 + $0x113] sm:$0xff]
        %v2497 = vld [vmem:[%s372 + $0x123] sm:$0xff]
        %v2498 = vld [vmem:[%s372 + $0x12b] sm:$0xff]
        %v2499 = vld [vmem:[%s372 + $0x13b] sm:$0xff]
        %v2500 = vld [vmem:[%s372 + $0x143] sm:$0xff]
        %v2501 = vld [vmem:[%s372 + $0x153] sm:$0xff]
        %v2502 = vld [vmem:[%s372 + $0x15b] sm:$0xff]
        %v2503 = vld [vmem:[%s372 + $0x16b] sm:$0xff]
        %v2504 = vld [vmem:[%s372 + $0x173] sm:$0xff]
        %s2505 = scalar_lea.vmem [#allocation6], 640
        %v2506 = vld [vmem:[%s2505] sm:$0xff]
        %v2507 = vld [vmem:[%s2505 + $0x8] sm:$0xff]
        %v2508 = vld [vmem:[%s2505 + $0x10] sm:$0xff]
        %v2509 = vld [vmem:[%s2505 + $0x18] sm:$0xff]
        %v2510 = vld [vmem:[%s2505 + $0x20] sm:$0xff]
        %v2511 = vld [vmem:[%s2505 + $0x28] sm:$0xff]
        %v2512 = vld [vmem:[%s2505 + $0x30] sm:$0xff]
        %v2513 = vld [vmem:[%s2505 + $0x38] sm:$0xff]
        %v2514 = vld [vmem:[%s2505 + $0x40] sm:$0xff]
        %v2515 = vld [vmem:[%s2505 + $0x48] sm:$0xff]
        %v2516 = vld [vmem:[%s2505 + $0x50] sm:$0xff]
        %v2517 = vld [vmem:[%s2505 + $0x58] sm:$0xff]
        %v2518 = vld [vmem:[%s2505 + $0x60] sm:$0xff]
        %v2519 = vld [vmem:[%s2505 + $0x68] sm:$0xff]
        %v2520 = vld [vmem:[%s2505 + $0x70] sm:$0xff]
        %v2521 = vld [vmem:[%s2505 + $0x78] sm:$0xff]
        %2522 = vmatprep.subr.mxu0 0.0
        %2523 = vmatpush1.msra.mxu0 %v2506
        %2524 = vmatprep.subr.mxu0 0.0
        %2525 = vmatpush1.msra.mxu0 %v2507
        %2526 = vmatprep.subr.mxu0 0.0
        %2527 = vmatpush1.msra.mxu0 %v2508
        %2528 = vmatprep.subr.mxu0 0.0
        %2529 = vmatpush1.msra.mxu0 %v2509
        %2530 = vmatprep.subr.mxu0 0.0
        %2531 = vmatpush1.msra.mxu0 %v2510
        %2532 = vmatprep.subr.mxu0 0.0
        %2533 = vmatpush1.msra.mxu0 %v2511
        %2534 = vmatprep.subr.mxu0 0.0
        %2535 = vmatpush1.msra.mxu0 %v2512
        %2536 = vmatprep.subr.mxu0 0.0
        %2537 = vmatpush1.msra.mxu0 %v2513
        %2538 = vmatprep.subr.mxu0 0.0
        %2539 = vmatpush1.msra.mxu0 %v2514
        %2540 = vmatprep.subr.mxu0 0.0
        %2541 = vmatpush1.msra.mxu0 %v2515
        %2542 = vmatprep.subr.mxu0 0.0
        %2543 = vmatpush1.msra.mxu0 %v2516
        %2544 = vmatprep.subr.mxu0 0.0
        %2545 = vmatpush1.msra.mxu0 %v2517
        %2546 = vmatprep.subr.mxu0 0.0
        %2547 = vmatpush1.msra.mxu0 %v2518
        %2548 = vmatprep.subr.mxu0 0.0
        %2549 = vmatpush1.msra.mxu0 %v2519
        %2550 = vmatprep.subr.mxu0 0.0
        %2551 = vmatpush1.msra.mxu0 %v2520
        %2552 = vmatprep.subr.mxu0 0.0
        %2553 = vmatpush1.msra.mxu0 %v2521
        %2554 = vmatprep.subr.mxu0 0.0
        %2555 = vmatpush1.msra.mxu0 0.0
        %2556 = vmatprep.subr.mxu0 0.0
        %2557 = vmatpush1.msra.mxu0 0.0
        %2558 = vmatprep.subr.mxu0 0.0
        %2559 = vmatpush1.msra.mxu0 0.0
        %2560 = vmatprep.subr.mxu0 0.0
        %2561 = vmatpush1.msra.mxu0 0.0
        %2562 = vmatprep.subr.mxu0 0.0
        %2563 = vmatpush1.msra.mxu0 0.0
        %2564 = vmatprep.subr.mxu0 0.0
        %2565 = vmatpush1.msra.mxu0 0.0
        %2566 = vmatprep.subr.mxu0 0.0
        %2567 = vmatpush1.msra.mxu0 0.0
        %2568 = vmatprep.subr.mxu0 0.0
        %2569 = vmatpush1.msra.mxu0 0.0
        %2570 = vmatprep.subr.mxu0 0.0
        %2571 = vmatpush1.msra.mxu0 0.0
        %2572 = vmatprep.subr.mxu0 0.0
        %2573 = vmatpush1.msra.mxu0 0.0
        %2574 = vmatprep.subr.mxu0 0.0
        %2575 = vmatpush1.msra.mxu0 0.0
        %2576 = vmatprep.subr.mxu0 0.0
        %2577 = vmatpush1.msra.mxu0 0.0
        %2578 = vmatprep.subr.mxu0 0.0
        %2579 = vmatpush1.msra.mxu0 0.0
        %2580 = vmatprep.subr.mxu0 0.0
        %2581 = vmatpush1.msra.mxu0 0.0
        %2582 = vmatprep.subr.mxu0 0.0
        %2583 = vmatpush1.msra.mxu0 0.0
        %2584 = vmatprep.subr.mxu0 0.0
        %2585 = vmatpush1.msra.mxu0 0.0
        %2586 = vmatprep.mubr.f32.mxu0 0.0
        %2587 = vmatmul.mubr.f32.gmra.mrb[0].mxu0 %v2473
        %v2588 = vpop.f32.mrb[0].mxu0
        %v2589 = vadd.f32 0.0, %v2588
        %v2590 = vpop.f32.mrb[0].mxu0
        %2591 = vmatprep.mubr.f32.mxu0 0.0
        %2592 = vmatmul.mubr.f32.gmra.mrb[0].mxu0 %v2474
        %v2593 = vpop.f32.mrb[0].mxu0
        %v2594 = vadd.f32 0.0, %v2593
        %v2595 = vpop.f32.mrb[0].mxu0
        %2596 = vmatprep.mubr.f32.mxu0 0.0
        %2597 = vmatmul.mubr.f32.gmra.mrb[0].mxu0 %v2475
        %v2598 = vpop.f32.mrb[0].mxu0
        %v2599 = vadd.f32 0.0, %v2598
        %v2600 = vpop.f32.mrb[0].mxu0
        %2601 = vmatprep.mubr.f32.mxu0 0.0
        %2602 = vmatmul.mubr.f32.gmra.mrb[0].mxu0 %v2476
        %v2603 = vpop.f32.mrb[0].mxu0
        %v2604 = vadd.f32 0.0, %v2603
        %v2605 = vpop.f32.mrb[0].mxu0
        %2606 = vmatprep.mubr.f32.mxu0 0.0
        %2607 = vmatmul.mubr.f32.gmra.mrb[0].mxu0 %v2477
        %v2608 = vpop.f32.mrb[0].mxu0
        %v2609 = vadd.f32 0.0, %v2608
        %v2610 = vpop.f32.mrb[0].mxu0
        %2611 = vmatprep.mubr.f32.mxu0 0.0
        %2612 = vmatmul.mubr.f32.gmra.mrb[0].mxu0 %v2478
        %v2613 = vpop.f32.mrb[0].mxu0
        %v2614 = vadd.f32 0.0, %v2613
        %v2615 = vpop.f32.mrb[0].mxu0
        %2616 = vmatprep.mubr.f32.mxu0 0.0
        %2617 = vmatmul.mubr.f32.gmra.mrb[0].mxu0 %v2479
        %v2618 = vpop.f32.mrb[0].mxu0
        %v2619 = vadd.f32 0.0, %v2618
        %v2620 = vpop.f32.mrb[0].mxu0
        %2621 = vmatprep.mubr.f32.mxu0 0.0
        %2622 = vmatmul.mubr.f32.gmra.mrb[0].mxu0 %v2480
        %v2623 = vpop.f32.mrb[0].mxu0
        %v2624 = vadd.f32 0.0, %v2623
        %v2625 = vpop.f32.mrb[0].mxu0
        %2626 = vmatprep.mubr.f32.mxu0 0.0
        %2627 = vmatmul.mubr.f32.gmra.mrb[0].mxu0 %v2481
        %v2628 = vpop.f32.mrb[0].mxu0
        %v2629 = vadd.f32 0.0, %v2628
        %v2630 = vpop.f32.mrb[0].mxu0
        %2631 = vmatprep.mubr.f32.mxu0 0.0
        %2632 = vmatmul.mubr.f32.gmra.mrb[0].mxu0 %v2482
        %v2633 = vpop.f32.mrb[0].mxu0
        %v2634 = vadd.f32 0.0, %v2633
        %v2635 = vpop.f32.mrb[0].mxu0
        %2636 = vmatprep.mubr.f32.mxu0 0.0
        %2637 = vmatmul.mubr.f32.gmra.mrb[0].mxu0 %v2483
        %v2638 = vpop.f32.mrb[0].mxu0
        %v2639 = vadd.f32 0.0, %v2638
        %v2640 = vpop.f32.mrb[0].mxu0
        %2641 = vmatprep.mubr.f32.mxu0 0.0
        %2642 = vmatmul.mubr.f32.gmra.mrb[0].mxu0 %v2484
        %v2643 = vpop.f32.mrb[0].mxu0
        %v2644 = vadd.f32 0.0, %v2643
        %v2645 = vpop.f32.mrb[0].mxu0
        %2646 = vmatprep.mubr.f32.mxu0 0.0
        %2647 = vmatmul.mubr.f32.gmra.mrb[0].mxu0 %v2485
        %v2648 = vpop.f32.mrb[0].mxu0
        %v2649 = vadd.f32 0.0, %v2648
        %v2650 = vpop.f32.mrb[0].mxu0
        %2651 = vmatprep.mubr.f32.mxu0 0.0
        %2652 = vmatmul.mubr.f32.gmra.mrb[0].mxu0 %v2486
        %v2653 = vpop.f32.mrb[0].mxu0
        %v2654 = vadd.f32 0.0, %v2653
        %v2655 = vpop.f32.mrb[0].mxu0
        %2656 = vmatprep.mubr.f32.mxu0 0.0
        %2657 = vmatmul.mubr.f32.gmra.mrb[0].mxu0 %v2487
        %v2658 = vpop.f32.mrb[0].mxu0
        %v2659 = vadd.f32 0.0, %v2658
        %v2660 = vpop.f32.mrb[0].mxu0
        %2661 = vmatprep.mubr.f32.mxu0 0.0
        %2662 = vmatmul.mubr.f32.gmra.mrb[0].mxu0 %v2488
        %v2663 = vpop.f32.mrb[0].mxu0
        %v2664 = vadd.f32 0.0, %v2663
        %v2665 = vpop.f32.mrb[0].mxu0
        %2666 = vmatprep.mubr.f32.mxu0 0.0
        %2667 = vmatmul.mubr.f32.gmra.mrb[0].mxu0 %v2489
        %v2668 = vpop.f32.mrb[0].mxu0
        %v2669 = vadd.f32 0.0, %v2668
        %v2670 = vpop.f32.mrb[0].mxu0
        %2671 = vmatprep.mubr.f32.mxu0 0.0
        %2672 = vmatmul.mubr.f32.gmra.mrb[0].mxu0 %v2490
        %v2673 = vpop.f32.mrb[0].mxu0
        %v2674 = vadd.f32 0.0, %v2673
        %v2675 = vpop.f32.mrb[0].mxu0
        %2676 = vmatprep.mubr.f32.mxu0 0.0
        %2677 = vmatmul.mubr.f32.gmra.mrb[0].mxu0 %v2491
        %v2678 = vpop.f32.mrb[0].mxu0
        %v2679 = vadd.f32 0.0, %v2678
        %v2680 = vpop.f32.mrb[0].mxu0
        %2681 = vmatprep.mubr.f32.mxu0 0.0
        %2682 = vmatmul.mubr.f32.gmra.mrb[0].mxu0 %v2492
        %v2683 = vpop.f32.mrb[0].mxu0
        %v2684 = vadd.f32 0.0, %v2683
        %v2685 = vpop.f32.mrb[0].mxu0
        %2686 = vmatprep.mubr.f32.mxu0 0.0
        %2687 = vmatmul.mubr.f32.gmra.mrb[0].mxu0 %v2493
        %v2688 = vpop.f32.mrb[0].mxu0
        %v2689 = vadd.f32 0.0, %v2688
        %v2690 = vpop.f32.mrb[0].mxu0
        %2691 = vmatprep.mubr.f32.mxu0 0.0
        %2692 = vmatmul.mubr.f32.gmra.mrb[0].mxu0 %v2494
        %v2693 = vpop.f32.mrb[0].mxu0
        %v2694 = vadd.f32 0.0, %v2693
        %v2695 = vpop.f32.mrb[0].mxu0
        %2696 = vmatprep.mubr.f32.mxu0 0.0
        %2697 = vmatmul.mubr.f32.gmra.mrb[0].mxu0 %v2495
        %v2698 = vpop.f32.mrb[0].mxu0
        %v2699 = vadd.f32 0.0, %v2698
        %v2700 = vpop.f32.mrb[0].mxu0
        %2701 = vmatprep.mubr.f32.mxu0 0.0
        %2702 = vmatmul.mubr.f32.gmra.mrb[0].mxu0 %v2496
        %v2703 = vpop.f32.mrb[0].mxu0
        %v2704 = vadd.f32 0.0, %v2703
        %v2705 = vpop.f32.mrb[0].mxu0
        %2706 = vmatprep.mubr.f32.mxu0 0.0
        %2707 = vmatmul.mubr.f32.gmra.mrb[0].mxu0 %v2497
        %v2708 = vpop.f32.mrb[0].mxu0
        %v2709 = vadd.f32 0.0, %v2708
        %v2710 = vpop.f32.mrb[0].mxu0
        %2711 = vmatprep.mubr.f32.mxu0 0.0
        %2712 = vmatmul.mubr.f32.gmra.mrb[0].mxu0 %v2498
        %v2713 = vpop.f32.mrb[0].mxu0
        %v2714 = vadd.f32 0.0, %v2713
        %v2715 = vpop.f32.mrb[0].mxu0
        %2716 = vmatprep.mubr.f32.mxu0 0.0
        %2717 = vmatmul.mubr.f32.gmra.mrb[0].mxu0 %v2499
        %v2718 = vpop.f32.mrb[0].mxu0
        %v2719 = vadd.f32 0.0, %v2718
        %v2720 = vpop.f32.mrb[0].mxu0
        %2721 = vmatprep.mubr.f32.mxu0 0.0
        %2722 = vmatmul.mubr.f32.gmra.mrb[0].mxu0 %v2500
        %v2723 = vpop.f32.mrb[0].mxu0
        %v2724 = vadd.f32 0.0, %v2723
        %v2725 = vpop.f32.mrb[0].mxu0
        %2726 = vmatprep.mubr.f32.mxu0 0.0
        %2727 = vmatmul.mubr.f32.gmra.mrb[0].mxu0 %v2501
        %v2728 = vpop.f32.mrb[0].mxu0
        %v2729 = vadd.f32 0.0, %v2728
        %v2730 = vpop.f32.mrb[0].mxu0
        %2731 = vmatprep.mubr.f32.mxu0 0.0
        %2732 = vmatmul.mubr.f32.gmra.mrb[0].mxu0 %v2502
        %v2733 = vpop.f32.mrb[0].mxu0
        %v2734 = vadd.f32 0.0, %v2733
        %v2735 = vpop.f32.mrb[0].mxu0
        %2736 = vmatprep.mubr.f32.mxu0 0.0
        %2737 = vmatmul.mubr.f32.gmra.mrb[0].mxu0 %v2503
        %v2738 = vpop.f32.mrb[0].mxu0
        %v2739 = vadd.f32 0.0, %v2738
        %v2740 = vpop.f32.mrb[0].mxu0
        %2741 = vmatprep.mubr.f32.mxu0 0.0
        %2742 = vmatmul.mubr.f32.gmra.mrb[0].mxu0 %v2504
        %v2743 = vpop.f32.mrb[0].mxu0
        %v2744 = vadd.f32 0.0, %v2743
        %v2745 = vpop.f32.mrb[0].mxu0
        %2746 = vdwg.mxu0
        %v2747 = vadd.f32 %v2441, %v2589
        %v2748 = vadd.f32 %v2442, %v2594
        %v2749 = vadd.f32 %v2443, %v2599
        %v2750 = vadd.f32 %v2444, %v2604
        %v2751 = vadd.f32 %v2445, %v2609
        %v2752 = vadd.f32 %v2446, %v2614
        %v2753 = vadd.f32 %v2447, %v2619
        %v2754 = vadd.f32 %v2448, %v2624
        %v2755 = vadd.f32 %v2449, %v2629
        %v2756 = vadd.f32 %v2450, %v2634
        %v2757 = vadd.f32 %v2451, %v2639
        %v2758 = vadd.f32 %v2452, %v2644
        %v2759 = vadd.f32 %v2453, %v2649
        %v2760 = vadd.f32 %v2454, %v2654
        %v2761 = vadd.f32 %v2455, %v2659
        %v2762 = vadd.f32 %v2456, %v2664
        %v2763 = vadd.f32 %v2457, %v2669
        %v2764 = vadd.f32 %v2458, %v2674
        %v2765 = vadd.f32 %v2459, %v2679
        %v2766 = vadd.f32 %v2460, %v2684
        %v2767 = vadd.f32 %v2461, %v2689
        %v2768 = vadd.f32 %v2462, %v2694
        %v2769 = vadd.f32 %v2463, %v2699
        %v2770 = vadd.f32 %v2464, %v2704
        %v2771 = vadd.f32 %v2465, %v2709
        %v2772 = vadd.f32 %v2466, %v2714
        %v2773 = vadd.f32 %v2467, %v2719
        %v2774 = vadd.f32 %v2468, %v2724
        %v2775 = vadd.f32 %v2469, %v2729
        %v2776 = vadd.f32 %v2470, %v2734
        %v2777 = vadd.f32 %v2471, %v2739
        %v2778 = vadd.f32 %v2472, %v2744
        %s2779 = scalar_lea.vmem [#allocation2], 72
        %v2780 = vld [vmem:[%s2779 + $0x1] sm:$0xff]
        %v2781 = vld [vmem:[%s2779 + $0x9] sm:$0xff]
        %v2782 = vld [vmem:[%s2779 + $0x19] sm:$0xff]
        %v2783 = vld [vmem:[%s2779 + $0x21] sm:$0xff]
        %v2784 = vld [vmem:[%s2779 + $0x31] sm:$0xff]
        %v2785 = vld [vmem:[%s2779 + $0x39] sm:$0xff]
        %v2786 = vld [vmem:[%s2779 + $0x49] sm:$0xff]
        %v2787 = vld [vmem:[%s2779 + $0x51] sm:$0xff]
        %v2788 = vld [vmem:[%s2779 + $0x61] sm:$0xff]
        %v2789 = vld [vmem:[%s2779 + $0x69] sm:$0xff]
        %v2790 = vld [vmem:[%s2779 + $0x79] sm:$0xff]
        %v2791 = vld [vmem:[%s2779 + $0x81] sm:$0xff]
        %v2792 = vld [vmem:[%s2779 + $0x91] sm:$0xff]
        %v2793 = vld [vmem:[%s2779 + $0x99] sm:$0xff]
        %v2794 = vld [vmem:[%s2779 + $0xa9] sm:$0xff]
        %v2795 = vld [vmem:[%s2779 + $0xb1] sm:$0xff]
        %v2796 = vld [vmem:[%s2779 + $0xc1] sm:$0xff]
        %v2797 = vld [vmem:[%s2779 + $0xc9] sm:$0xff]
        %v2798 = vld [vmem:[%s2779 + $0xd9] sm:$0xff]
        %v2799 = vld [vmem:[%s2779 + $0xe1] sm:$0xff]
        %v2800 = vld [vmem:[%s2779 + $0xf1] sm:$0xff]
        %v2801 = vld [vmem:[%s2779 + $0xf9] sm:$0xff]
        %v2802 = vld [vmem:[%s2779 + $0x109] sm:$0xff]
        %v2803 = vld [vmem:[%s2779 + $0x111] sm:$0xff]
        %v2804 = vld [vmem:[%s2779 + $0x121] sm:$0xff]
        %v2805 = vld [vmem:[%s2779 + $0x129] sm:$0xff]
        %v2806 = vld [vmem:[%s2779 + $0x139] sm:$0xff]
        %v2807 = vld [vmem:[%s2779 + $0x141] sm:$0xff]
        %v2808 = vld [vmem:[%s2779 + $0x151] sm:$0xff]
        %v2809 = vld [vmem:[%s2779 + $0x159] sm:$0xff]
        %v2810 = vld [vmem:[%s2779 + $0x169] sm:$0xff]
        %v2811 = vld [vmem:[%s2779 + $0x171] sm:$0xff]
        %s2812 = scalar_lea.vmem [#allocation6], 768
        %v2813 = vld [vmem:[%s2812] sm:$0xff]
        %v2814 = vld [vmem:[%s2812 + $0x8] sm:$0xff]
        %v2815 = vld [vmem:[%s2812 + $0x10] sm:$0xff]
        %v2816 = vld [vmem:[%s2812 + $0x18] sm:$0xff]
        %v2817 = vld [vmem:[%s2812 + $0x20] sm:$0xff]
        %v2818 = vld [vmem:[%s2812 + $0x28] sm:$0xff]
        %v2819 = vld [vmem:[%s2812 + $0x30] sm:$0xff]
        %v2820 = vld [vmem:[%s2812 + $0x38] sm:$0xff]
        %v2821 = vld [vmem:[%s2812 + $0x40] sm:$0xff]
        %v2822 = vld [vmem:[%s2812 + $0x48] sm:$0xff]
        %v2823 = vld [vmem:[%s2812 + $0x50] sm:$0xff]
        %v2824 = vld [vmem:[%s2812 + $0x58] sm:$0xff]
        %v2825 = vld [vmem:[%s2812 + $0x60] sm:$0xff]
        %v2826 = vld [vmem:[%s2812 + $0x68] sm:$0xff]
        %v2827 = vld [vmem:[%s2812 + $0x70] sm:$0xff]
        %v2828 = vld [vmem:[%s2812 + $0x78] sm:$0xff]
        %2829 = vmatprep.subr.mxu0 0.0
        %2830 = vmatpush1.msra.mxu0 %v2813
        %2831 = vmatprep.subr.mxu0 0.0
        %2832 = vmatpush1.msra.mxu0 %v2814
        %2833 = vmatprep.subr.mxu0 0.0
        %2834 = vmatpush1.msra.mxu0 %v2815
        %2835 = vmatprep.subr.mxu0 0.0
        %2836 = vmatpush1.msra.mxu0 %v2816
        %2837 = vmatprep.subr.mxu0 0.0
        %2838 = vmatpush1.msra.mxu0 %v2817
        %2839 = vmatprep.subr.mxu0 0.0
        %2840 = vmatpush1.msra.mxu0 %v2818
        %2841 = vmatprep.subr.mxu0 0.0
        %2842 = vmatpush1.msra.mxu0 %v2819
        %2843 = vmatprep.subr.mxu0 0.0
        %2844 = vmatpush1.msra.mxu0 %v2820
        %2845 = vmatprep.subr.mxu0 0.0
        %2846 = vmatpush1.msra.mxu0 %v2821
        %2847 = vmatprep.subr.mxu0 0.0
        %2848 = vmatpush1.msra.mxu0 %v2822
        %2849 = vmatprep.subr.mxu0 0.0
        %2850 = vmatpush1.msra.mxu0 %v2823
        %2851 = vmatprep.subr.mxu0 0.0
        %2852 = vmatpush1.msra.mxu0 %v2824
        %2853 = vmatprep.subr.mxu0 0.0
        %2854 = vmatpush1.msra.mxu0 %v2825
        %2855 = vmatprep.subr.mxu0 0.0
        %2856 = vmatpush1.msra.mxu0 %v2826
        %2857 = vmatprep.subr.mxu0 0.0
        %2858 = vmatpush1.msra.mxu0 %v2827
        %2859 = vmatprep.subr.mxu0 0.0
        %2860 = vmatpush1.msra.mxu0 %v2828
        %2861 = vmatprep.subr.mxu0 0.0
        %2862 = vmatpush1.msra.mxu0 0.0
        %2863 = vmatprep.subr.mxu0 0.0
        %2864 = vmatpush1.msra.mxu0 0.0
        %2865 = vmatprep.subr.mxu0 0.0
        %2866 = vmatpush1.msra.mxu0 0.0
        %2867 = vmatprep.subr.mxu0 0.0
        %2868 = vmatpush1.msra.mxu0 0.0
        %2869 = vmatprep.subr.mxu0 0.0
        %2870 = vmatpush1.msra.mxu0 0.0
        %2871 = vmatprep.subr.mxu0 0.0
        %2872 = vmatpush1.msra.mxu0 0.0
        %2873 = vmatprep.subr.mxu0 0.0
        %2874 = vmatpush1.msra.mxu0 0.0
        %2875 = vmatprep.subr.mxu0 0.0
        %2876 = vmatpush1.msra.mxu0 0.0
        %2877 = vmatprep.subr.mxu0 0.0
        %2878 = vmatpush1.msra.mxu0 0.0
        %2879 = vmatprep.subr.mxu0 0.0
        %2880 = vmatpush1.msra.mxu0 0.0
        %2881 = vmatprep.subr.mxu0 0.0
        %2882 = vmatpush1.msra.mxu0 0.0
        %2883 = vmatprep.subr.mxu0 0.0
        %2884 = vmatpush1.msra.mxu0 0.0
        %2885 = vmatprep.subr.mxu0 0.0
        %2886 = vmatpush1.msra.mxu0 0.0
        %2887 = vmatprep.subr.mxu0 0.0
        %2888 = vmatpush1.msra.mxu0 0.0
        %2889 = vmatprep.subr.mxu0 0.0
        %2890 = vmatpush1.msra.mxu0 0.0
        %2891 = vmatprep.subr.mxu0 0.0
        %2892 = vmatpush1.msra.mxu0 0.0
        %2893 = vmatprep.mubr.f32.mxu0 0.0
        %2894 = vmatmul.mubr.f32.gmra.mrb[0].mxu0 %v2780
        %v2895 = vpop.f32.mrb[0].mxu0
        %v2896 = vadd.f32 0.0, %v2895
        %v2897 = vpop.f32.mrb[0].mxu0
        %2898 = vmatprep.mubr.f32.mxu0 0.0
        %2899 = vmatmul.mubr.f32.gmra.mrb[0].mxu0 %v2781
        %v2900 = vpop.f32.mrb[0].mxu0
        %v2901 = vadd.f32 0.0, %v2900
        %v2902 = vpop.f32.mrb[0].mxu0
        %2903 = vmatprep.mubr.f32.mxu0 0.0
        %2904 = vmatmul.mubr.f32.gmra.mrb[0].mxu0 %v2782
        %v2905 = vpop.f32.mrb[0].mxu0
        %v2906 = vadd.f32 0.0, %v2905
        %v2907 = vpop.f32.mrb[0].mxu0
        %2908 = vmatprep.mubr.f32.mxu0 0.0
        %2909 = vmatmul.mubr.f32.gmra.mrb[0].mxu0 %v2783
        %v2910 = vpop.f32.mrb[0].mxu0
        %v2911 = vadd.f32 0.0, %v2910
        %v2912 = vpop.f32.mrb[0].mxu0
        %2913 = vmatprep.mubr.f32.mxu0 0.0
        %2914 = vmatmul.mubr.f32.gmra.mrb[0].mxu0 %v2784
        %v2915 = vpop.f32.mrb[0].mxu0
        %v2916 = vadd.f32 0.0, %v2915
        %v2917 = vpop.f32.mrb[0].mxu0
        %2918 = vmatprep.mubr.f32.mxu0 0.0
        %2919 = vmatmul.mubr.f32.gmra.mrb[0].mxu0 %v2785
        %v2920 = vpop.f32.mrb[0].mxu0
        %v2921 = vadd.f32 0.0, %v2920
        %v2922 = vpop.f32.mrb[0].mxu0
        %2923 = vmatprep.mubr.f32.mxu0 0.0
        %2924 = vmatmul.mubr.f32.gmra.mrb[0].mxu0 %v2786
        %v2925 = vpop.f32.mrb[0].mxu0
        %v2926 = vadd.f32 0.0, %v2925
        %v2927 = vpop.f32.mrb[0].mxu0
        %2928 = vmatprep.mubr.f32.mxu0 0.0
        %2929 = vmatmul.mubr.f32.gmra.mrb[0].mxu0 %v2787
        %v2930 = vpop.f32.mrb[0].mxu0
        %v2931 = vadd.f32 0.0, %v2930
        %v2932 = vpop.f32.mrb[0].mxu0
        %2933 = vmatprep.mubr.f32.mxu0 0.0
        %2934 = vmatmul.mubr.f32.gmra.mrb[0].mxu0 %v2788
        %v2935 = vpop.f32.mrb[0].mxu0
        %v2936 = vadd.f32 0.0, %v2935
        %v2937 = vpop.f32.mrb[0].mxu0
        %2938 = vmatprep.mubr.f32.mxu0 0.0
        %2939 = vmatmul.mubr.f32.gmra.mrb[0].mxu0 %v2789
        %v2940 = vpop.f32.mrb[0].mxu0
        %v2941 = vadd.f32 0.0, %v2940
        %v2942 = vpop.f32.mrb[0].mxu0
        %2943 = vmatprep.mubr.f32.mxu0 0.0
        %2944 = vmatmul.mubr.f32.gmra.mrb[0].mxu0 %v2790
        %v2945 = vpop.f32.mrb[0].mxu0
        %v2946 = vadd.f32 0.0, %v2945
        %v2947 = vpop.f32.mrb[0].mxu0
        %2948 = vmatprep.mubr.f32.mxu0 0.0
        %2949 = vmatmul.mubr.f32.gmra.mrb[0].mxu0 %v2791
        %v2950 = vpop.f32.mrb[0].mxu0
        %v2951 = vadd.f32 0.0, %v2950
        %v2952 = vpop.f32.mrb[0].mxu0
        %2953 = vmatprep.mubr.f32.mxu0 0.0
        %2954 = vmatmul.mubr.f32.gmra.mrb[0].mxu0 %v2792
        %v2955 = vpop.f32.mrb[0].mxu0
        %v2956 = vadd.f32 0.0, %v2955
        %v2957 = vpop.f32.mrb[0].mxu0
        %2958 = vmatprep.mubr.f32.mxu0 0.0
        %2959 = vmatmul.mubr.f32.gmra.mrb[0].mxu0 %v2793
        %v2960 = vpop.f32.mrb[0].mxu0
        %v2961 = vadd.f32 0.0, %v2960
        %v2962 = vpop.f32.mrb[0].mxu0
        %2963 = vmatprep.mubr.f32.mxu0 0.0
        %2964 = vmatmul.mubr.f32.gmra.mrb[0].mxu0 %v2794
        %v2965 = vpop.f32.mrb[0].mxu0
        %v2966 = vadd.f32 0.0, %v2965
        %v2967 = vpop.f32.mrb[0].mxu0
        %2968 = vmatprep.mubr.f32.mxu0 0.0
        %2969 = vmatmul.mubr.f32.gmra.mrb[0].mxu0 %v2795
        %v2970 = vpop.f32.mrb[0].mxu0
        %v2971 = vadd.f32 0.0, %v2970
        %v2972 = vpop.f32.mrb[0].mxu0
        %2973 = vmatprep.mubr.f32.mxu0 0.0
        %2974 = vmatmul.mubr.f32.gmra.mrb[0].mxu0 %v2796
        %v2975 = vpop.f32.mrb[0].mxu0
        %v2976 = vadd.f32 0.0, %v2975
        %v2977 = vpop.f32.mrb[0].mxu0
        %2978 = vmatprep.mubr.f32.mxu0 0.0
        %2979 = vmatmul.mubr.f32.gmra.mrb[0].mxu0 %v2797
        %v2980 = vpop.f32.mrb[0].mxu0
        %v2981 = vadd.f32 0.0, %v2980
        %v2982 = vpop.f32.mrb[0].mxu0
        %2983 = vmatprep.mubr.f32.mxu0 0.0
        %2984 = vmatmul.mubr.f32.gmra.mrb[0].mxu0 %v2798
        %v2985 = vpop.f32.mrb[0].mxu0
        %v2986 = vadd.f32 0.0, %v2985
        %v2987 = vpop.f32.mrb[0].mxu0
        %2988 = vmatprep.mubr.f32.mxu0 0.0
        %2989 = vmatmul.mubr.f32.gmra.mrb[0].mxu0 %v2799
        %v2990 = vpop.f32.mrb[0].mxu0
        %v2991 = vadd.f32 0.0, %v2990
        %v2992 = vpop.f32.mrb[0].mxu0
        %2993 = vmatprep.mubr.f32.mxu0 0.0
        %2994 = vmatmul.mubr.f32.gmra.mrb[0].mxu0 %v2800
        %v2995 = vpop.f32.mrb[0].mxu0
        %v2996 = vadd.f32 0.0, %v2995
        %v2997 = vpop.f32.mrb[0].mxu0
        %2998 = vmatprep.mubr.f32.mxu0 0.0
        %2999 = vmatmul.mubr.f32.gmra.mrb[0].mxu0 %v2801
        %v3000 = vpop.f32.mrb[0].mxu0
        %v3001 = vadd.f32 0.0, %v3000
        %v3002 = vpop.f32.mrb[0].mxu0
        %3003 = vmatprep.mubr.f32.mxu0 0.0
        %3004 = vmatmul.mubr.f32.gmra.mrb[0].mxu0 %v2802
        %v3005 = vpop.f32.mrb[0].mxu0
        %v3006 = vadd.f32 0.0, %v3005
        %v3007 = vpop.f32.mrb[0].mxu0
        %3008 = vmatprep.mubr.f32.mxu0 0.0
        %3009 = vmatmul.mubr.f32.gmra.mrb[0].mxu0 %v2803
        %v3010 = vpop.f32.mrb[0].mxu0
        %v3011 = vadd.f32 0.0, %v3010
        %v3012 = vpop.f32.mrb[0].mxu0
        %3013 = vmatprep.mubr.f32.mxu0 0.0
        %3014 = vmatmul.mubr.f32.gmra.mrb[0].mxu0 %v2804
        %v3015 = vpop.f32.mrb[0].mxu0
        %v3016 = vadd.f32 0.0, %v3015
        %v3017 = vpop.f32.mrb[0].mxu0
        %3018 = vmatprep.mubr.f32.mxu0 0.0
        %3019 = vmatmul.mubr.f32.gmra.mrb[0].mxu0 %v2805
        %v3020 = vpop.f32.mrb[0].mxu0
        %v3021 = vadd.f32 0.0, %v3020
        %v3022 = vpop.f32.mrb[0].mxu0
        %3023 = vmatprep.mubr.f32.mxu0 0.0
        %3024 = vmatmul.mubr.f32.gmra.mrb[0].mxu0 %v2806
        %v3025 = vpop.f32.mrb[0].mxu0
        %v3026 = vadd.f32 0.0, %v3025
        %v3027 = vpop.f32.mrb[0].mxu0
        %3028 = vmatprep.mubr.f32.mxu0 0.0
        %3029 = vmatmul.mubr.f32.gmra.mrb[0].mxu0 %v2807
        %v3030 = vpop.f32.mrb[0].mxu0
        %v3031 = vadd.f32 0.0, %v3030
        %v3032 = vpop.f32.mrb[0].mxu0
        %3033 = vmatprep.mubr.f32.mxu0 0.0
        %3034 = vmatmul.mubr.f32.gmra.mrb[0].mxu0 %v2808
        %v3035 = vpop.f32.mrb[0].mxu0
        %v3036 = vadd.f32 0.0, %v3035
        %v3037 = vpop.f32.mrb[0].mxu0
        %3038 = vmatprep.mubr.f32.mxu0 0.0
        %3039 = vmatmul.mubr.f32.gmra.mrb[0].mxu0 %v2809
        %v3040 = vpop.f32.mrb[0].mxu0
        %v3041 = vadd.f32 0.0, %v3040
        %v3042 = vpop.f32.mrb[0].mxu0
        %3043 = vmatprep.mubr.f32.mxu0 0.0
        %3044 = vmatmul.mubr.f32.gmra.mrb[0].mxu0 %v2810
        %v3045 = vpop.f32.mrb[0].mxu0
        %v3046 = vadd.f32 0.0, %v3045
        %v3047 = vpop.f32.mrb[0].mxu0
        %3048 = vmatprep.mubr.f32.mxu0 0.0
        %3049 = vmatmul.mubr.f32.gmra.mrb[0].mxu0 %v2811
        %v3050 = vpop.f32.mrb[0].mxu0
        %v3051 = vadd.f32 0.0, %v3050
        %v3052 = vpop.f32.mrb[0].mxu0
        %3053 = vdwg.mxu0
        %v3054 = vadd.f32 %v2747, %v2896
        %v3055 = vadd.f32 %v2748, %v2901
        %v3056 = vadd.f32 %v2749, %v2906
        %v3057 = vadd.f32 %v2750, %v2911
        %v3058 = vadd.f32 %v2751, %v2916
        %v3059 = vadd.f32 %v2752, %v2921
        %v3060 = vadd.f32 %v2753, %v2926
        %v3061 = vadd.f32 %v2754, %v2931
        %v3062 = vadd.f32 %v2755, %v2936
        %v3063 = vadd.f32 %v2756, %v2941
        %v3064 = vadd.f32 %v2757, %v2946
        %v3065 = vadd.f32 %v2758, %v2951
        %v3066 = vadd.f32 %v2759, %v2956
        %v3067 = vadd.f32 %v2760, %v2961
        %v3068 = vadd.f32 %v2761, %v2966
        %v3069 = vadd.f32 %v2762, %v2971
        %v3070 = vadd.f32 %v2763, %v2976
        %v3071 = vadd.f32 %v2764, %v2981
        %v3072 = vadd.f32 %v2765, %v2986
        %v3073 = vadd.f32 %v2766, %v2991
        %v3074 = vadd.f32 %v2767, %v2996
        %v3075 = vadd.f32 %v2768, %v3001
        %v3076 = vadd.f32 %v2769, %v3006
        %v3077 = vadd.f32 %v2770, %v3011
        %v3078 = vadd.f32 %v2771, %v3016
        %v3079 = vadd.f32 %v2772, %v3021
        %v3080 = vadd.f32 %v2773, %v3026
        %v3081 = vadd.f32 %v2774, %v3031
        %v3082 = vadd.f32 %v2775, %v3036
        %v3083 = vadd.f32 %v2776, %v3041
        %v3084 = vadd.f32 %v2777, %v3046
        %v3085 = vadd.f32 %v2778, %v3051
        %v3086 = vld [vmem:[%s2779 + $0x2] sm:$0xff]
        %v3087 = vld [vmem:[%s2779 + $0xa] sm:$0xff]
        %v3088 = vld [vmem:[%s2779 + $0x1a] sm:$0xff]
        %v3089 = vld [vmem:[%s2779 + $0x22] sm:$0xff]
        %v3090 = vld [vmem:[%s2779 + $0x32] sm:$0xff]
        %v3091 = vld [vmem:[%s2779 + $0x3a] sm:$0xff]
        %v3092 = vld [vmem:[%s2779 + $0x4a] sm:$0xff]
        %v3093 = vld [vmem:[%s2779 + $0x52] sm:$0xff]
        %v3094 = vld [vmem:[%s2779 + $0x62] sm:$0xff]
        %v3095 = vld [vmem:[%s2779 + $0x6a] sm:$0xff]
        %v3096 = vld [vmem:[%s2779 + $0x7a] sm:$0xff]
        %v3097 = vld [vmem:[%s2779 + $0x82] sm:$0xff]
        %v3098 = vld [vmem:[%s2779 + $0x92] sm:$0xff]
        %v3099 = vld [vmem:[%s2779 + $0x9a] sm:$0xff]
        %v3100 = vld [vmem:[%s2779 + $0xaa] sm:$0xff]
        %v3101 = vld [vmem:[%s2779 + $0xb2] sm:$0xff]
        %v3102 = vld [vmem:[%s2779 + $0xc2] sm:$0xff]
        %v3103 = vld [vmem:[%s2779 + $0xca] sm:$0xff]
        %v3104 = vld [vmem:[%s2779 + $0xda] sm:$0xff]
        %v3105 = vld [vmem:[%s2779 + $0xe2] sm:$0xff]
        %v3106 = vld [vmem:[%s2779 + $0xf2] sm:$0xff]
        %v3107 = vld [vmem:[%s2779 + $0xfa] sm:$0xff]
        %v3108 = vld [vmem:[%s2779 + $0x10a] sm:$0xff]
        %v3109 = vld [vmem:[%s2779 + $0x112] sm:$0xff]
        %v3110 = vld [vmem:[%s2779 + $0x122] sm:$0xff]
        %v3111 = vld [vmem:[%s2779 + $0x12a] sm:$0xff]
        %v3112 = vld [vmem:[%s2779 + $0x13a] sm:$0xff]
        %v3113 = vld [vmem:[%s2779 + $0x142] sm:$0xff]
        %v3114 = vld [vmem:[%s2779 + $0x152] sm:$0xff]
        %v3115 = vld [vmem:[%s2779 + $0x15a] sm:$0xff]
        %v3116 = vld [vmem:[%s2779 + $0x16a] sm:$0xff]
        %v3117 = vld [vmem:[%s2779 + $0x172] sm:$0xff]
        %s3118 = scalar_lea.vmem [#allocation6], 896
        %v3119 = vld [vmem:[%s3118] sm:$0xff]
        %v3120 = vld [vmem:[%s3118 + $0x8] sm:$0xff]
        %v3121 = vld [vmem:[%s3118 + $0x10] sm:$0xff]
        %v3122 = vld [vmem:[%s3118 + $0x18] sm:$0xff]
        %v3123 = vld [vmem:[%s3118 + $0x20] sm:$0xff]
        %v3124 = vld [vmem:[%s3118 + $0x28] sm:$0xff]
        %v3125 = vld [vmem:[%s3118 + $0x30] sm:$0xff]
        %v3126 = vld [vmem:[%s3118 + $0x38] sm:$0xff]
        %v3127 = vld [vmem:[%s3118 + $0x40] sm:$0xff]
        %v3128 = vld [vmem:[%s3118 + $0x48] sm:$0xff]
        %v3129 = vld [vmem:[%s3118 + $0x50] sm:$0xff]
        %v3130 = vld [vmem:[%s3118 + $0x58] sm:$0xff]
        %v3131 = vld [vmem:[%s3118 + $0x60] sm:$0xff]
        %v3132 = vld [vmem:[%s3118 + $0x68] sm:$0xff]
        %v3133 = vld [vmem:[%s3118 + $0x70] sm:$0xff]
        %v3134 = vld [vmem:[%s3118 + $0x78] sm:$0xff]
        %3135 = vmatprep.subr.mxu0 0.0
        %3136 = vmatpush1.msra.mxu0 %v3119
        %3137 = vmatprep.subr.mxu0 0.0
        %3138 = vmatpush1.msra.mxu0 %v3120
        %3139 = vmatprep.subr.mxu0 0.0
        %3140 = vmatpush1.msra.mxu0 %v3121
        %3141 = vmatprep.subr.mxu0 0.0
        %3142 = vmatpush1.msra.mxu0 %v3122
        %3143 = vmatprep.subr.mxu0 0.0
        %3144 = vmatpush1.msra.mxu0 %v3123
        %3145 = vmatprep.subr.mxu0 0.0
        %3146 = vmatpush1.msra.mxu0 %v3124
        %3147 = vmatprep.subr.mxu0 0.0
        %3148 = vmatpush1.msra.mxu0 %v3125
        %3149 = vmatprep.subr.mxu0 0.0
        %3150 = vmatpush1.msra.mxu0 %v3126
        %3151 = vmatprep.subr.mxu0 0.0
        %3152 = vmatpush1.msra.mxu0 %v3127
        %3153 = vmatprep.subr.mxu0 0.0
        %3154 = vmatpush1.msra.mxu0 %v3128
        %3155 = vmatprep.subr.mxu0 0.0
        %3156 = vmatpush1.msra.mxu0 %v3129
        %3157 = vmatprep.subr.mxu0 0.0
        %3158 = vmatpush1.msra.mxu0 %v3130
        %3159 = vmatprep.subr.mxu0 0.0
        %3160 = vmatpush1.msra.mxu0 %v3131
        %3161 = vmatprep.subr.mxu0 0.0
        %3162 = vmatpush1.msra.mxu0 %v3132
        %3163 = vmatprep.subr.mxu0 0.0
        %3164 = vmatpush1.msra.mxu0 %v3133
        %3165 = vmatprep.subr.mxu0 0.0
        %3166 = vmatpush1.msra.mxu0 %v3134
        %3167 = vmatprep.subr.mxu0 0.0
        %3168 = vmatpush1.msra.mxu0 0.0
        %3169 = vmatprep.subr.mxu0 0.0
        %3170 = vmatpush1.msra.mxu0 0.0
        %3171 = vmatprep.subr.mxu0 0.0
        %3172 = vmatpush1.msra.mxu0 0.0
        %3173 = vmatprep.subr.mxu0 0.0
        %3174 = vmatpush1.msra.mxu0 0.0
        %3175 = vmatprep.subr.mxu0 0.0
        %3176 = vmatpush1.msra.mxu0 0.0
        %3177 = vmatprep.subr.mxu0 0.0
        %3178 = vmatpush1.msra.mxu0 0.0
        %3179 = vmatprep.subr.mxu0 0.0
        %3180 = vmatpush1.msra.mxu0 0.0
        %3181 = vmatprep.subr.mxu0 0.0
        %3182 = vmatpush1.msra.mxu0 0.0
        %3183 = vmatprep.subr.mxu0 0.0
        %3184 = vmatpush1.msra.mxu0 0.0
        %3185 = vmatprep.subr.mxu0 0.0
        %3186 = vmatpush1.msra.mxu0 0.0
        %3187 = vmatprep.subr.mxu0 0.0
        %3188 = vmatpush1.msra.mxu0 0.0
        %3189 = vmatprep.subr.mxu0 0.0
        %3190 = vmatpush1.msra.mxu0 0.0
        %3191 = vmatprep.subr.mxu0 0.0
        %3192 = vmatpush1.msra.mxu0 0.0
        %3193 = vmatprep.subr.mxu0 0.0
        %3194 = vmatpush1.msra.mxu0 0.0
        %3195 = vmatprep.subr.mxu0 0.0
        %3196 = vmatpush1.msra.mxu0 0.0
        %3197 = vmatprep.subr.mxu0 0.0
        %3198 = vmatpush1.msra.mxu0 0.0
        %3199 = vmatprep.mubr.f32.mxu0 0.0
        %3200 = vmatmul.mubr.f32.gmra.mrb[0].mxu0 %v3086
        %v3201 = vpop.f32.mrb[0].mxu0
        %v3202 = vadd.f32 0.0, %v3201
        %v3203 = vpop.f32.mrb[0].mxu0
        %3204 = vmatprep.mubr.f32.mxu0 0.0
        %3205 = vmatmul.mubr.f32.gmra.mrb[0].mxu0 %v3087
        %v3206 = vpop.f32.mrb[0].mxu0
        %v3207 = vadd.f32 0.0, %v3206
        %v3208 = vpop.f32.mrb[0].mxu0
        %3209 = vmatprep.mubr.f32.mxu0 0.0
        %3210 = vmatmul.mubr.f32.gmra.mrb[0].mxu0 %v3088
        %v3211 = vpop.f32.mrb[0].mxu0
        %v3212 = vadd.f32 0.0, %v3211
        %v3213 = vpop.f32.mrb[0].mxu0
        %3214 = vmatprep.mubr.f32.mxu0 0.0
        %3215 = vmatmul.mubr.f32.gmra.mrb[0].mxu0 %v3089
        %v3216 = vpop.f32.mrb[0].mxu0
        %v3217 = vadd.f32 0.0, %v3216
        %v3218 = vpop.f32.mrb[0].mxu0
        %3219 = vmatprep.mubr.f32.mxu0 0.0
        %3220 = vmatmul.mubr.f32.gmra.mrb[0].mxu0 %v3090
        %v3221 = vpop.f32.mrb[0].mxu0
        %v3222 = vadd.f32 0.0, %v3221
        %v3223 = vpop.f32.mrb[0].mxu0
        %3224 = vmatprep.mubr.f32.mxu0 0.0
        %3225 = vmatmul.mubr.f32.gmra.mrb[0].mxu0 %v3091
        %v3226 = vpop.f32.mrb[0].mxu0
        %v3227 = vadd.f32 0.0, %v3226
        %v3228 = vpop.f32.mrb[0].mxu0
        %3229 = vmatprep.mubr.f32.mxu0 0.0
        %3230 = vmatmul.mubr.f32.gmra.mrb[0].mxu0 %v3092
        %v3231 = vpop.f32.mrb[0].mxu0
        %v3232 = vadd.f32 0.0, %v3231
        %v3233 = vpop.f32.mrb[0].mxu0
        %3234 = vmatprep.mubr.f32.mxu0 0.0
        %3235 = vmatmul.mubr.f32.gmra.mrb[0].mxu0 %v3093
        %v3236 = vpop.f32.mrb[0].mxu0
        %v3237 = vadd.f32 0.0, %v3236
        %v3238 = vpop.f32.mrb[0].mxu0
        %3239 = vmatprep.mubr.f32.mxu0 0.0
        %3240 = vmatmul.mubr.f32.gmra.mrb[0].mxu0 %v3094
        %v3241 = vpop.f32.mrb[0].mxu0
        %v3242 = vadd.f32 0.0, %v3241
        %v3243 = vpop.f32.mrb[0].mxu0
        %3244 = vmatprep.mubr.f32.mxu0 0.0
        %3245 = vmatmul.mubr.f32.gmra.mrb[0].mxu0 %v3095
        %v3246 = vpop.f32.mrb[0].mxu0
        %v3247 = vadd.f32 0.0, %v3246
        %v3248 = vpop.f32.mrb[0].mxu0
        %3249 = vmatprep.mubr.f32.mxu0 0.0
        %3250 = vmatmul.mubr.f32.gmra.mrb[0].mxu0 %v3096
        %v3251 = vpop.f32.mrb[0].mxu0
        %v3252 = vadd.f32 0.0, %v3251
        %v3253 = vpop.f32.mrb[0].mxu0
        %3254 = vmatprep.mubr.f32.mxu0 0.0
        %3255 = vmatmul.mubr.f32.gmra.mrb[0].mxu0 %v3097
        %v3256 = vpop.f32.mrb[0].mxu0
        %v3257 = vadd.f32 0.0, %v3256
        %v3258 = vpop.f32.mrb[0].mxu0
        %3259 = vmatprep.mubr.f32.mxu0 0.0
        %3260 = vmatmul.mubr.f32.gmra.mrb[0].mxu0 %v3098
        %v3261 = vpop.f32.mrb[0].mxu0
        %v3262 = vadd.f32 0.0, %v3261
        %v3263 = vpop.f32.mrb[0].mxu0
        %3264 = vmatprep.mubr.f32.mxu0 0.0
        %3265 = vmatmul.mubr.f32.gmra.mrb[0].mxu0 %v3099
        %v3266 = vpop.f32.mrb[0].mxu0
        %v3267 = vadd.f32 0.0, %v3266
        %v3268 = vpop.f32.mrb[0].mxu0
        %3269 = vmatprep.mubr.f32.mxu0 0.0
        %3270 = vmatmul.mubr.f32.gmra.mrb[0].mxu0 %v3100
        %v3271 = vpop.f32.mrb[0].mxu0
        %v3272 = vadd.f32 0.0, %v3271
        %v3273 = vpop.f32.mrb[0].mxu0
        %3274 = vmatprep.mubr.f32.mxu0 0.0
        %3275 = vmatmul.mubr.f32.gmra.mrb[0].mxu0 %v3101
        %v3276 = vpop.f32.mrb[0].mxu0
        %v3277 = vadd.f32 0.0, %v3276
        %v3278 = vpop.f32.mrb[0].mxu0
        %3279 = vmatprep.mubr.f32.mxu0 0.0
        %3280 = vmatmul.mubr.f32.gmra.mrb[0].mxu0 %v3102
        %v3281 = vpop.f32.mrb[0].mxu0
        %v3282 = vadd.f32 0.0, %v3281
        %v3283 = vpop.f32.mrb[0].mxu0
        %3284 = vmatprep.mubr.f32.mxu0 0.0
        %3285 = vmatmul.mubr.f32.gmra.mrb[0].mxu0 %v3103
        %v3286 = vpop.f32.mrb[0].mxu0
        %v3287 = vadd.f32 0.0, %v3286
        %v3288 = vpop.f32.mrb[0].mxu0
        %3289 = vmatprep.mubr.f32.mxu0 0.0
        %3290 = vmatmul.mubr.f32.gmra.mrb[0].mxu0 %v3104
        %v3291 = vpop.f32.mrb[0].mxu0
        %v3292 = vadd.f32 0.0, %v3291
        %v3293 = vpop.f32.mrb[0].mxu0
        %3294 = vmatprep.mubr.f32.mxu0 0.0
        %3295 = vmatmul.mubr.f32.gmra.mrb[0].mxu0 %v3105
        %v3296 = vpop.f32.mrb[0].mxu0
        %v3297 = vadd.f32 0.0, %v3296
        %v3298 = vpop.f32.mrb[0].mxu0
        %3299 = vmatprep.mubr.f32.mxu0 0.0
        %3300 = vmatmul.mubr.f32.gmra.mrb[0].mxu0 %v3106
        %v3301 = vpop.f32.mrb[0].mxu0
        %v3302 = vadd.f32 0.0, %v3301
        %v3303 = vpop.f32.mrb[0].mxu0
        %3304 = vmatprep.mubr.f32.mxu0 0.0
        %3305 = vmatmul.mubr.f32.gmra.mrb[0].mxu0 %v3107
        %v3306 = vpop.f32.mrb[0].mxu0
        %v3307 = vadd.f32 0.0, %v3306
        %v3308 = vpop.f32.mrb[0].mxu0
        %3309 = vmatprep.mubr.f32.mxu0 0.0
        %3310 = vmatmul.mubr.f32.gmra.mrb[0].mxu0 %v3108
        %v3311 = vpop.f32.mrb[0].mxu0
        %v3312 = vadd.f32 0.0, %v3311
        %v3313 = vpop.f32.mrb[0].mxu0
        %3314 = vmatprep.mubr.f32.mxu0 0.0
        %3315 = vmatmul.mubr.f32.gmra.mrb[0].mxu0 %v3109
        %v3316 = vpop.f32.mrb[0].mxu0
        %v3317 = vadd.f32 0.0, %v3316
        %v3318 = vpop.f32.mrb[0].mxu0
        %3319 = vmatprep.mubr.f32.mxu0 0.0
        %3320 = vmatmul.mubr.f32.gmra.mrb[0].mxu0 %v3110
        %v3321 = vpop.f32.mrb[0].mxu0
        %v3322 = vadd.f32 0.0, %v3321
        %v3323 = vpop.f32.mrb[0].mxu0
        %3324 = vmatprep.mubr.f32.mxu0 0.0
        %3325 = vmatmul.mubr.f32.gmra.mrb[0].mxu0 %v3111
        %v3326 = vpop.f32.mrb[0].mxu0
        %v3327 = vadd.f32 0.0, %v3326
        %v3328 = vpop.f32.mrb[0].mxu0
        %3329 = vmatprep.mubr.f32.mxu0 0.0
        %3330 = vmatmul.mubr.f32.gmra.mrb[0].mxu0 %v3112
        %v3331 = vpop.f32.mrb[0].mxu0
        %v3332 = vadd.f32 0.0, %v3331
        %v3333 = vpop.f32.mrb[0].mxu0
        %3334 = vmatprep.mubr.f32.mxu0 0.0
        %3335 = vmatmul.mubr.f32.gmra.mrb[0].mxu0 %v3113
        %v3336 = vpop.f32.mrb[0].mxu0
        %v3337 = vadd.f32 0.0, %v3336
        %v3338 = vpop.f32.mrb[0].mxu0
        %3339 = vmatprep.mubr.f32.mxu0 0.0
        %3340 = vmatmul.mubr.f32.gmra.mrb[0].mxu0 %v3114
        %v3341 = vpop.f32.mrb[0].mxu0
        %v3342 = vadd.f32 0.0, %v3341
        %v3343 = vpop.f32.mrb[0].mxu0
        %3344 = vmatprep.mubr.f32.mxu0 0.0
        %3345 = vmatmul.mubr.f32.gmra.mrb[0].mxu0 %v3115
        %v3346 = vpop.f32.mrb[0].mxu0
        %v3347 = vadd.f32 0.0, %v3346
        %v3348 = vpop.f32.mrb[0].mxu0
        %3349 = vmatprep.mubr.f32.mxu0 0.0
        %3350 = vmatmul.mubr.f32.gmra.mrb[0].mxu0 %v3116
        %v3351 = vpop.f32.mrb[0].mxu0
        %v3352 = vadd.f32 0.0, %v3351
        %v3353 = vpop.f32.mrb[0].mxu0
        %3354 = vmatprep.mubr.f32.mxu0 0.0
        %3355 = vmatmul.mubr.f32.gmra.mrb[0].mxu0 %v3117
        %v3356 = vpop.f32.mrb[0].mxu0
        %v3357 = vadd.f32 0.0, %v3356
        %v3358 = vpop.f32.mrb[0].mxu0
        %3359 = vdwg.mxu0
        %v3360 = vadd.f32 %v3054, %v3202
        %v3361 = vadd.f32 %v3055, %v3207
        %v3362 = vadd.f32 %v3056, %v3212
        %v3363 = vadd.f32 %v3057, %v3217
        %v3364 = vadd.f32 %v3058, %v3222
        %v3365 = vadd.f32 %v3059, %v3227
        %v3366 = vadd.f32 %v3060, %v3232
        %v3367 = vadd.f32 %v3061, %v3237
        %v3368 = vadd.f32 %v3062, %v3242
        %v3369 = vadd.f32 %v3063, %v3247
        %v3370 = vadd.f32 %v3064, %v3252
        %v3371 = vadd.f32 %v3065, %v3257
        %v3372 = vadd.f32 %v3066, %v3262
        %v3373 = vadd.f32 %v3067, %v3267
        %v3374 = vadd.f32 %v3068, %v3272
        %v3375 = vadd.f32 %v3069, %v3277
        %v3376 = vadd.f32 %v3070, %v3282
        %v3377 = vadd.f32 %v3071, %v3287
        %v3378 = vadd.f32 %v3072, %v3292
        %v3379 = vadd.f32 %v3073, %v3297
        %v3380 = vadd.f32 %v3074, %v3302
        %v3381 = vadd.f32 %v3075, %v3307
        %v3382 = vadd.f32 %v3076, %v3312
        %v3383 = vadd.f32 %v3077, %v3317
        %v3384 = vadd.f32 %v3078, %v3322
        %v3385 = vadd.f32 %v3079, %v3327
        %v3386 = vadd.f32 %v3080, %v3332
        %v3387 = vadd.f32 %v3081, %v3337
        %v3388 = vadd.f32 %v3082, %v3342
        %v3389 = vadd.f32 %v3083, %v3347
        %v3390 = vadd.f32 %v3084, %v3352
        %v3391 = vadd.f32 %v3085, %v3357
        %v3392 = vld [vmem:[%s2779 + $0x3] sm:$0xff]
        %v3393 = vld [vmem:[%s2779 + $0xb] sm:$0xff]
        %v3394 = vld [vmem:[%s2779 + $0x1b] sm:$0xff]
        %v3395 = vld [vmem:[%s2779 + $0x23] sm:$0xff]
        %v3396 = vld [vmem:[%s2779 + $0x33] sm:$0xff]
        %v3397 = vld [vmem:[%s2779 + $0x3b] sm:$0xff]
        %v3398 = vld [vmem:[%s2779 + $0x4b] sm:$0xff]
        %v3399 = vld [vmem:[%s2779 + $0x53] sm:$0xff]
        %v3400 = vld [vmem:[%s2779 + $0x63] sm:$0xff]
        %v3401 = vld [vmem:[%s2779 + $0x6b] sm:$0xff]
        %v3402 = vld [vmem:[%s2779 + $0x7b] sm:$0xff]
        %v3403 = vld [vmem:[%s2779 + $0x83] sm:$0xff]
        %v3404 = vld [vmem:[%s2779 + $0x93] sm:$0xff]
        %v3405 = vld [vmem:[%s2779 + $0x9b] sm:$0xff]
        %v3406 = vld [vmem:[%s2779 + $0xab] sm:$0xff]
        %v3407 = vld [vmem:[%s2779 + $0xb3] sm:$0xff]
        %v3408 = vld [vmem:[%s2779 + $0xc3] sm:$0xff]
        %v3409 = vld [vmem:[%s2779 + $0xcb] sm:$0xff]
        %v3410 = vld [vmem:[%s2779 + $0xdb] sm:$0xff]
        %v3411 = vld [vmem:[%s2779 + $0xe3] sm:$0xff]
        %v3412 = vld [vmem:[%s2779 + $0xf3] sm:$0xff]
        %v3413 = vld [vmem:[%s2779 + $0xfb] sm:$0xff]
        %v3414 = vld [vmem:[%s2779 + $0x10b] sm:$0xff]
        %v3415 = vld [vmem:[%s2779 + $0x113] sm:$0xff]
        %v3416 = vld [vmem:[%s2779 + $0x123] sm:$0xff]
        %v3417 = vld [vmem:[%s2779 + $0x12b] sm:$0xff]
        %v3418 = vld [vmem:[%s2779 + $0x13b] sm:$0xff]
        %v3419 = vld [vmem:[%s2779 + $0x143] sm:$0xff]
        %v3420 = vld [vmem:[%s2779 + $0x153] sm:$0xff]
        %v3421 = vld [vmem:[%s2779 + $0x15b] sm:$0xff]
        %v3422 = vld [vmem:[%s2779 + $0x16b] sm:$0xff]
        %v3423 = vld [vmem:[%s2779 + $0x173] sm:$0xff]
        %s3424 = scalar_lea.vmem [#allocation6], 1024
        %v3425 = vld [vmem:[%s3424] sm:$0xff]
        %v3426 = vld [vmem:[%s3424 + $0x8] sm:$0xff]
        %v3427 = vld [vmem:[%s3424 + $0x10] sm:$0xff]
        %v3428 = vld [vmem:[%s3424 + $0x18] sm:$0xff]
        %v3429 = vld [vmem:[%s3424 + $0x20] sm:$0xff]
        %v3430 = vld [vmem:[%s3424 + $0x28] sm:$0xff]
        %v3431 = vld [vmem:[%s3424 + $0x30] sm:$0xff]
        %v3432 = vld [vmem:[%s3424 + $0x38] sm:$0xff]
        %v3433 = vld [vmem:[%s3424 + $0x40] sm:$0xff]
        %v3434 = vld [vmem:[%s3424 + $0x48] sm:$0xff]
        %v3435 = vld [vmem:[%s3424 + $0x50] sm:$0xff]
        %v3436 = vld [vmem:[%s3424 + $0x58] sm:$0xff]
        %v3437 = vld [vmem:[%s3424 + $0x60] sm:$0xff]
        %v3438 = vld [vmem:[%s3424 + $0x68] sm:$0xff]
        %v3439 = vld [vmem:[%s3424 + $0x70] sm:$0xff]
        %v3440 = vld [vmem:[%s3424 + $0x78] sm:$0xff]
        %3441 = vmatprep.subr.mxu0 0.0
        %3442 = vmatpush1.msra.mxu0 %v3425
        %3443 = vmatprep.subr.mxu0 0.0
        %3444 = vmatpush1.msra.mxu0 %v3426
        %3445 = vmatprep.subr.mxu0 0.0
        %3446 = vmatpush1.msra.mxu0 %v3427
        %3447 = vmatprep.subr.mxu0 0.0
        %3448 = vmatpush1.msra.mxu0 %v3428
        %3449 = vmatprep.subr.mxu0 0.0
        %3450 = vmatpush1.msra.mxu0 %v3429
        %3451 = vmatprep.subr.mxu0 0.0
        %3452 = vmatpush1.msra.mxu0 %v3430
        %3453 = vmatprep.subr.mxu0 0.0
        %3454 = vmatpush1.msra.mxu0 %v3431
        %3455 = vmatprep.subr.mxu0 0.0
        %3456 = vmatpush1.msra.mxu0 %v3432
        %3457 = vmatprep.subr.mxu0 0.0
        %3458 = vmatpush1.msra.mxu0 %v3433
        %3459 = vmatprep.subr.mxu0 0.0
        %3460 = vmatpush1.msra.mxu0 %v3434
        %3461 = vmatprep.subr.mxu0 0.0
        %3462 = vmatpush1.msra.mxu0 %v3435
        %3463 = vmatprep.subr.mxu0 0.0
        %3464 = vmatpush1.msra.mxu0 %v3436
        %3465 = vmatprep.subr.mxu0 0.0
        %3466 = vmatpush1.msra.mxu0 %v3437
        %3467 = vmatprep.subr.mxu0 0.0
        %3468 = vmatpush1.msra.mxu0 %v3438
        %3469 = vmatprep.subr.mxu0 0.0
        %3470 = vmatpush1.msra.mxu0 %v3439
        %3471 = vmatprep.subr.mxu0 0.0
        %3472 = vmatpush1.msra.mxu0 %v3440
        %3473 = vmatprep.subr.mxu0 0.0
        %3474 = vmatpush1.msra.mxu0 0.0
        %3475 = vmatprep.subr.mxu0 0.0
        %3476 = vmatpush1.msra.mxu0 0.0
        %3477 = vmatprep.subr.mxu0 0.0
        %3478 = vmatpush1.msra.mxu0 0.0
        %3479 = vmatprep.subr.mxu0 0.0
        %3480 = vmatpush1.msra.mxu0 0.0
        %3481 = vmatprep.subr.mxu0 0.0
        %3482 = vmatpush1.msra.mxu0 0.0
        %3483 = vmatprep.subr.mxu0 0.0
        %3484 = vmatpush1.msra.mxu0 0.0
        %3485 = vmatprep.subr.mxu0 0.0
        %3486 = vmatpush1.msra.mxu0 0.0
        %3487 = vmatprep.subr.mxu0 0.0
        %3488 = vmatpush1.msra.mxu0 0.0
        %3489 = vmatprep.subr.mxu0 0.0
        %3490 = vmatpush1.msra.mxu0 0.0
        %3491 = vmatprep.subr.mxu0 0.0
        %3492 = vmatpush1.msra.mxu0 0.0
        %3493 = vmatprep.subr.mxu0 0.0
        %3494 = vmatpush1.msra.mxu0 0.0
        %3495 = vmatprep.subr.mxu0 0.0
        %3496 = vmatpush1.msra.mxu0 0.0
        %3497 = vmatprep.subr.mxu0 0.0
        %3498 = vmatpush1.msra.mxu0 0.0
        %3499 = vmatprep.subr.mxu0 0.0
        %3500 = vmatpush1.msra.mxu0 0.0
        %3501 = vmatprep.subr.mxu0 0.0
        %3502 = vmatpush1.msra.mxu0 0.0
        %3503 = vmatprep.subr.mxu0 0.0
        %3504 = vmatpush1.msra.mxu0 0.0
        %3505 = vmatprep.mubr.f32.mxu0 0.0
        %3506 = vmatmul.mubr.f32.gmra.mrb[0].mxu0 %v3392
        %v3507 = vpop.f32.mrb[0].mxu0
        %v3508 = vadd.f32 0.0, %v3507
        %v3509 = vpop.f32.mrb[0].mxu0
        %3510 = vmatprep.mubr.f32.mxu0 0.0
        %3511 = vmatmul.mubr.f32.gmra.mrb[0].mxu0 %v3393
        %v3512 = vpop.f32.mrb[0].mxu0
        %v3513 = vadd.f32 0.0, %v3512
        %v3514 = vpop.f32.mrb[0].mxu0
        %3515 = vmatprep.mubr.f32.mxu0 0.0
        %3516 = vmatmul.mubr.f32.gmra.mrb[0].mxu0 %v3394
        %v3517 = vpop.f32.mrb[0].mxu0
        %v3518 = vadd.f32 0.0, %v3517
        %v3519 = vpop.f32.mrb[0].mxu0
        %3520 = vmatprep.mubr.f32.mxu0 0.0
        %3521 = vmatmul.mubr.f32.gmra.mrb[0].mxu0 %v3395
        %v3522 = vpop.f32.mrb[0].mxu0
        %v3523 = vadd.f32 0.0, %v3522
        %v3524 = vpop.f32.mrb[0].mxu0
        %3525 = vmatprep.mubr.f32.mxu0 0.0
        %3526 = vmatmul.mubr.f32.gmra.mrb[0].mxu0 %v3396
        %v3527 = vpop.f32.mrb[0].mxu0
        %v3528 = vadd.f32 0.0, %v3527
        %v3529 = vpop.f32.mrb[0].mxu0
        %3530 = vmatprep.mubr.f32.mxu0 0.0
        %3531 = vmatmul.mubr.f32.gmra.mrb[0].mxu0 %v3397
        %v3532 = vpop.f32.mrb[0].mxu0
        %v3533 = vadd.f32 0.0, %v3532
        %v3534 = vpop.f32.mrb[0].mxu0
        %3535 = vmatprep.mubr.f32.mxu0 0.0
        %3536 = vmatmul.mubr.f32.gmra.mrb[0].mxu0 %v3398
        %v3537 = vpop.f32.mrb[0].mxu0
        %v3538 = vadd.f32 0.0, %v3537
        %v3539 = vpop.f32.mrb[0].mxu0
        %3540 = vmatprep.mubr.f32.mxu0 0.0
        %3541 = vmatmul.mubr.f32.gmra.mrb[0].mxu0 %v3399
        %v3542 = vpop.f32.mrb[0].mxu0
        %v3543 = vadd.f32 0.0, %v3542
        %v3544 = vpop.f32.mrb[0].mxu0
        %3545 = vmatprep.mubr.f32.mxu0 0.0
        %3546 = vmatmul.mubr.f32.gmra.mrb[0].mxu0 %v3400
        %v3547 = vpop.f32.mrb[0].mxu0
        %v3548 = vadd.f32 0.0, %v3547
        %v3549 = vpop.f32.mrb[0].mxu0
        %3550 = vmatprep.mubr.f32.mxu0 0.0
        %3551 = vmatmul.mubr.f32.gmra.mrb[0].mxu0 %v3401
        %v3552 = vpop.f32.mrb[0].mxu0
        %v3553 = vadd.f32 0.0, %v3552
        %v3554 = vpop.f32.mrb[0].mxu0
        %3555 = vmatprep.mubr.f32.mxu0 0.0
        %3556 = vmatmul.mubr.f32.gmra.mrb[0].mxu0 %v3402
        %v3557 = vpop.f32.mrb[0].mxu0
        %v3558 = vadd.f32 0.0, %v3557
        %v3559 = vpop.f32.mrb[0].mxu0
        %3560 = vmatprep.mubr.f32.mxu0 0.0
        %3561 = vmatmul.mubr.f32.gmra.mrb[0].mxu0 %v3403
        %v3562 = vpop.f32.mrb[0].mxu0
        %v3563 = vadd.f32 0.0, %v3562
        %v3564 = vpop.f32.mrb[0].mxu0
        %3565 = vmatprep.mubr.f32.mxu0 0.0
        %3566 = vmatmul.mubr.f32.gmra.mrb[0].mxu0 %v3404
        %v3567 = vpop.f32.mrb[0].mxu0
        %v3568 = vadd.f32 0.0, %v3567
        %v3569 = vpop.f32.mrb[0].mxu0
        %3570 = vmatprep.mubr.f32.mxu0 0.0
        %3571 = vmatmul.mubr.f32.gmra.mrb[0].mxu0 %v3405
        %v3572 = vpop.f32.mrb[0].mxu0
        %v3573 = vadd.f32 0.0, %v3572
        %v3574 = vpop.f32.mrb[0].mxu0
        %3575 = vmatprep.mubr.f32.mxu0 0.0
        %3576 = vmatmul.mubr.f32.gmra.mrb[0].mxu0 %v3406
        %v3577 = vpop.f32.mrb[0].mxu0
        %v3578 = vadd.f32 0.0, %v3577
        %v3579 = vpop.f32.mrb[0].mxu0
        %3580 = vmatprep.mubr.f32.mxu0 0.0
        %3581 = vmatmul.mubr.f32.gmra.mrb[0].mxu0 %v3407
        %v3582 = vpop.f32.mrb[0].mxu0
        %v3583 = vadd.f32 0.0, %v3582
        %v3584 = vpop.f32.mrb[0].mxu0
        %3585 = vmatprep.mubr.f32.mxu0 0.0
        %3586 = vmatmul.mubr.f32.gmra.mrb[0].mxu0 %v3408
        %v3587 = vpop.f32.mrb[0].mxu0
        %v3588 = vadd.f32 0.0, %v3587
        %v3589 = vpop.f32.mrb[0].mxu0
        %3590 = vmatprep.mubr.f32.mxu0 0.0
        %3591 = vmatmul.mubr.f32.gmra.mrb[0].mxu0 %v3409
        %v3592 = vpop.f32.mrb[0].mxu0
        %v3593 = vadd.f32 0.0, %v3592
        %v3594 = vpop.f32.mrb[0].mxu0
        %3595 = vmatprep.mubr.f32.mxu0 0.0
        %3596 = vmatmul.mubr.f32.gmra.mrb[0].mxu0 %v3410
        %v3597 = vpop.f32.mrb[0].mxu0
        %v3598 = vadd.f32 0.0, %v3597
        %v3599 = vpop.f32.mrb[0].mxu0
        %3600 = vmatprep.mubr.f32.mxu0 0.0
        %3601 = vmatmul.mubr.f32.gmra.mrb[0].mxu0 %v3411
        %v3602 = vpop.f32.mrb[0].mxu0
        %v3603 = vadd.f32 0.0, %v3602
        %v3604 = vpop.f32.mrb[0].mxu0
        %3605 = vmatprep.mubr.f32.mxu0 0.0
        %3606 = vmatmul.mubr.f32.gmra.mrb[0].mxu0 %v3412
        %v3607 = vpop.f32.mrb[0].mxu0
        %v3608 = vadd.f32 0.0, %v3607
        %v3609 = vpop.f32.mrb[0].mxu0
        %3610 = vmatprep.mubr.f32.mxu0 0.0
        %3611 = vmatmul.mubr.f32.gmra.mrb[0].mxu0 %v3413
        %v3612 = vpop.f32.mrb[0].mxu0
        %v3613 = vadd.f32 0.0, %v3612
        %v3614 = vpop.f32.mrb[0].mxu0
        %3615 = vmatprep.mubr.f32.mxu0 0.0
        %3616 = vmatmul.mubr.f32.gmra.mrb[0].mxu0 %v3414
        %v3617 = vpop.f32.mrb[0].mxu0
        %v3618 = vadd.f32 0.0, %v3617
        %v3619 = vpop.f32.mrb[0].mxu0
        %3620 = vmatprep.mubr.f32.mxu0 0.0
        %3621 = vmatmul.mubr.f32.gmra.mrb[0].mxu0 %v3415
        %v3622 = vpop.f32.mrb[0].mxu0
        %v3623 = vadd.f32 0.0, %v3622
        %v3624 = vpop.f32.mrb[0].mxu0
        %3625 = vmatprep.mubr.f32.mxu0 0.0
        %3626 = vmatmul.mubr.f32.gmra.mrb[0].mxu0 %v3416
        %v3627 = vpop.f32.mrb[0].mxu0
        %v3628 = vadd.f32 0.0, %v3627
        %v3629 = vpop.f32.mrb[0].mxu0
        %3630 = vmatprep.mubr.f32.mxu0 0.0
        %3631 = vmatmul.mubr.f32.gmra.mrb[0].mxu0 %v3417
        %v3632 = vpop.f32.mrb[0].mxu0
        %v3633 = vadd.f32 0.0, %v3632
        %v3634 = vpop.f32.mrb[0].mxu0
        %3635 = vmatprep.mubr.f32.mxu0 0.0
        %3636 = vmatmul.mubr.f32.gmra.mrb[0].mxu0 %v3418
        %v3637 = vpop.f32.mrb[0].mxu0
        %v3638 = vadd.f32 0.0, %v3637
        %v3639 = vpop.f32.mrb[0].mxu0
        %3640 = vmatprep.mubr.f32.mxu0 0.0
        %3641 = vmatmul.mubr.f32.gmra.mrb[0].mxu0 %v3419
        %v3642 = vpop.f32.mrb[0].mxu0
        %v3643 = vadd.f32 0.0, %v3642
        %v3644 = vpop.f32.mrb[0].mxu0
        %3645 = vmatprep.mubr.f32.mxu0 0.0
        %3646 = vmatmul.mubr.f32.gmra.mrb[0].mxu0 %v3420
        %v3647 = vpop.f32.mrb[0].mxu0
        %v3648 = vadd.f32 0.0, %v3647
        %v3649 = vpop.f32.mrb[0].mxu0
        %3650 = vmatprep.mubr.f32.mxu0 0.0
        %3651 = vmatmul.mubr.f32.gmra.mrb[0].mxu0 %v3421
        %v3652 = vpop.f32.mrb[0].mxu0
        %v3653 = vadd.f32 0.0, %v3652
        %v3654 = vpop.f32.mrb[0].mxu0
        %3655 = vmatprep.mubr.f32.mxu0 0.0
        %3656 = vmatmul.mubr.f32.gmra.mrb[0].mxu0 %v3422
        %v3657 = vpop.f32.mrb[0].mxu0
        %v3658 = vadd.f32 0.0, %v3657
        %v3659 = vpop.f32.mrb[0].mxu0
        %3660 = vmatprep.mubr.f32.mxu0 0.0
        %3661 = vmatmul.mubr.f32.gmra.mrb[0].mxu0 %v3423
        %v3662 = vpop.f32.mrb[0].mxu0
        %v3663 = vadd.f32 0.0, %v3662
        %v3664 = vpop.f32.mrb[0].mxu0
        %3665 = vdwg.mxu0
        %v3666 = vadd.f32 %v3360, %v3508
        %v3667 = vadd.f32 %v3361, %v3513
        %v3668 = vadd.f32 %v3362, %v3518
        %v3669 = vadd.f32 %v3363, %v3523
        %v3670 = vadd.f32 %v3364, %v3528
        %v3671 = vadd.f32 %v3365, %v3533
        %v3672 = vadd.f32 %v3366, %v3538
        %v3673 = vadd.f32 %v3367, %v3543
        %v3674 = vadd.f32 %v3368, %v3548
        %v3675 = vadd.f32 %v3369, %v3553
        %v3676 = vadd.f32 %v3370, %v3558
        %v3677 = vadd.f32 %v3371, %v3563
        %v3678 = vadd.f32 %v3372, %v3568
        %v3679 = vadd.f32 %v3373, %v3573
        %v3680 = vadd.f32 %v3374, %v3578
        %v3681 = vadd.f32 %v3375, %v3583
        %v3682 = vadd.f32 %v3376, %v3588
        %v3683 = vadd.f32 %v3377, %v3593
        %v3684 = vadd.f32 %v3378, %v3598
        %v3685 = vadd.f32 %v3379, %v3603
        %v3686 = vadd.f32 %v3380, %v3608
        %v3687 = vadd.f32 %v3381, %v3613
        %v3688 = vadd.f32 %v3382, %v3618
        %v3689 = vadd.f32 %v3383, %v3623
        %v3690 = vadd.f32 %v3384, %v3628
        %v3691 = vadd.f32 %v3385, %v3633
        %v3692 = vadd.f32 %v3386, %v3638
        %v3693 = vadd.f32 %v3387, %v3643
        %v3694 = vadd.f32 %v3388, %v3648
        %v3695 = vadd.f32 %v3389, %v3653
        %v3696 = vadd.f32 %v3390, %v3658
        %v3697 = vadd.f32 %v3391, %v3663
        %3698 = vst [vmem:[%s305] sm:$0xff] %v3666
        %3699 = vst [vmem:[%s305 + $0x8] sm:$0xff] %v3667
        %3700 = vst [vmem:[%s305 + $0x10] sm:$0xff] %v3668
        %3701 = vst [vmem:[%s305 + $0x18] sm:$0xff] %v3669
        %3702 = vst [vmem:[%s305 + $0x20] sm:$0xff] %v3670
        %3703 = vst [vmem:[%s305 + $0x28] sm:$0xff] %v3671
        %3704 = vst [vmem:[%s305 + $0x30] sm:$0xff] %v3672
        %3705 = vst [vmem:[%s305 + $0x38] sm:$0xff] %v3673
        %3706 = vst [vmem:[%s305 + $0x40] sm:$0xff] %v3674
        %3707 = vst [vmem:[%s305 + $0x48] sm:$0xff] %v3675
        %3708 = vst [vmem:[%s305 + $0x50] sm:$0xff] %v3676
        %3709 = vst [vmem:[%s305 + $0x58] sm:$0xff] %v3677
        %3710 = vst [vmem:[%s305 + $0x60] sm:$0xff] %v3678
        %3711 = vst [vmem:[%s305 + $0x68] sm:$0xff] %v3679
        %3712 = vst [vmem:[%s305 + $0x70] sm:$0xff] %v3680
        %3713 = vst [vmem:[%s305 + $0x78] sm:$0xff] %v3681
        %3714 = vst [vmem:[%s305 + $0x80] sm:$0xff] %v3682
        %3715 = vst [vmem:[%s305 + $0x88] sm:$0xff] %v3683
        %3716 = vst [vmem:[%s305 + $0x90] sm:$0xff] %v3684
        %3717 = vst [vmem:[%s305 + $0x98] sm:$0xff] %v3685
        %3718 = vst [vmem:[%s305 + $0xa0] sm:$0xff] %v3686
        %3719 = vst [vmem:[%s305 + $0xa8] sm:$0xff] %v3687
        %3720 = vst [vmem:[%s305 + $0xb0] sm:$0xff] %v3688
        %3721 = vst [vmem:[%s305 + $0xb8] sm:$0xff] %v3689
        %3722 = vst [vmem:[%s305 + $0xc0] sm:$0xff] %v3690
        %3723 = vst [vmem:[%s305 + $0xc8] sm:$0xff] %v3691
        %3724 = vst [vmem:[%s305 + $0xd0] sm:$0xff] %v3692
        %3725 = vst [vmem:[%s305 + $0xd8] sm:$0xff] %v3693
        %3726 = vst [vmem:[%s305 + $0xe0] sm:$0xff] %v3694
        %3727 = vst [vmem:[%s305 + $0xe8] sm:$0xff] %v3695
        %3728 = vst [vmem:[%s305 + $0xf0] sm:$0xff] %v3696
        %3729 = vst [vmem:[%s305 + $0xf8] sm:$0xff] %v3697
        %v3730 = vadd.f32 %v3666, %v3667
        %v3731 = vadd.f32 %v3730, %v3668
        %v3732 = vadd.f32 %v3731, %v3669
        %v3733 = vadd.f32 %v3732, %v3670
        %v3734 = vadd.f32 %v3733, %v3671
        %v3735 = vadd.f32 %v3734, %v3672
        %v3736 = vadd.f32 %v3735, %v3673
        %v3737 = vadd.f32 %v3736, %v3674
        %v3738 = vadd.f32 %v3737, %v3675
        %v3739 = vadd.f32 %v3738, %v3676
        %v3740 = vadd.f32 %v3739, %v3677
        %v3741 = vadd.f32 %v3740, %v3678
        %v3742 = vadd.f32 %v3741, %v3679
        %v3743 = vadd.f32 %v3742, %v3680
        %v3744 = vadd.f32 %v3743, %v3681
        %v3745 = vadd.f32 %v3744, %v3682
        %v3746 = vadd.f32 %v3745, %v3683
        %v3747 = vadd.f32 %v3746, %v3684
        %v3748 = vadd.f32 %v3747, %v3685
        %v3749 = vadd.f32 %v3748, %v3686
        %v3750 = vadd.f32 %v3749, %v3687
        %v3751 = vadd.f32 %v3750, %v3688
        %v3752 = vadd.f32 %v3751, %v3689
        %v3753 = vadd.f32 %v3752, %v3690
        %v3754 = vadd.f32 %v3753, %v3691
        %v3755 = vadd.f32 %v3754, %v3692
        %v3756 = vadd.f32 %v3755, %v3693
        %v3757 = vadd.f32 %v3756, %v3694
        %v3758 = vadd.f32 %v3757, %v3695
        %v3759 = vadd.f32 %v3758, %v3696
        %v3760 = vadd.f32 %v3759, %v3697
        %v3761 = vrot.slane %v3760, 4
        %v3762 = vadd.f32 %v3760, %v3761
        %v3763 = vrot.slane %v3762, 2
        %v3764 = vadd.f32 %v3762, %v3763
        %v3765 = vrot.slane %v3764, 1
        %v3766 = vadd.f32 %v3764, %v3765
        %3767 = vst [vmem:[%s319] sm:$0x1] %v3766
        %v3768 = vmul.f32 %v3666, %v3666
        %v3769 = vmul.f32 %v3667, %v3667
        %v3770 = vmul.f32 %v3668, %v3668
        %v3771 = vmul.f32 %v3669, %v3669
        %v3772 = vmul.f32 %v3670, %v3670
        %v3773 = vmul.f32 %v3671, %v3671
        %v3774 = vmul.f32 %v3672, %v3672
        %v3775 = vmul.f32 %v3673, %v3673
        %v3776 = vmul.f32 %v3674, %v3674
        %v3777 = vmul.f32 %v3675, %v3675
        %v3778 = vmul.f32 %v3676, %v3676
        %v3779 = vmul.f32 %v3677, %v3677
        %v3780 = vmul.f32 %v3678, %v3678
        %v3781 = vmul.f32 %v3679, %v3679
        %v3782 = vmul.f32 %v3680, %v3680
        %v3783 = vmul.f32 %v3681, %v3681
        %v3784 = vmul.f32 %v3682, %v3682
        %v3785 = vmul.f32 %v3683, %v3683
        %v3786 = vmul.f32 %v3684, %v3684
        %v3787 = vmul.f32 %v3685, %v3685
        %v3788 = vmul.f32 %v3686, %v3686
        %v3789 = vmul.f32 %v3687, %v3687
        %v3790 = vmul.f32 %v3688, %v3688
        %v3791 = vmul.f32 %v3689, %v3689
        %v3792 = vmul.f32 %v3690, %v3690
        %v3793 = vmul.f32 %v3691, %v3691
        %v3794 = vmul.f32 %v3692, %v3692
        %v3795 = vmul.f32 %v3693, %v3693
        %v3796 = vmul.f32 %v3694, %v3694
        %v3797 = vmul.f32 %v3695, %v3695
        %v3798 = vmul.f32 %v3696, %v3696
        %v3799 = vmul.f32 %v3697, %v3697
        %v3800 = vadd.f32 %v3768, %v3769
        %v3801 = vadd.f32 %v3800, %v3770
        %v3802 = vadd.f32 %v3801, %v3771
        %v3803 = vadd.f32 %v3802, %v3772
        %v3804 = vadd.f32 %v3803, %v3773
        %v3805 = vadd.f32 %v3804, %v3774
        %v3806 = vadd.f32 %v3805, %v3775
        %v3807 = vadd.f32 %v3806, %v3776
        %v3808 = vadd.f32 %v3807, %v3777
        %v3809 = vadd.f32 %v3808, %v3778
        %v3810 = vadd.f32 %v3809, %v3779
        %v3811 = vadd.f32 %v3810, %v3780
        %v3812 = vadd.f32 %v3811, %v3781
        %v3813 = vadd.f32 %v3812, %v3782
        %v3814 = vadd.f32 %v3813, %v3783
        %v3815 = vadd.f32 %v3814, %v3784
        %v3816 = vadd.f32 %v3815, %v3785
        %v3817 = vadd.f32 %v3816, %v3786
        %v3818 = vadd.f32 %v3817, %v3787
        %v3819 = vadd.f32 %v3818, %v3788
        %v3820 = vadd.f32 %v3819, %v3789
        %v3821 = vadd.f32 %v3820, %v3790
        %v3822 = vadd.f32 %v3821, %v3791
        %v3823 = vadd.f32 %v3822, %v3792
        %v3824 = vadd.f32 %v3823, %v3793
        %v3825 = vadd.f32 %v3824, %v3794
        %v3826 = vadd.f32 %v3825, %v3795
        %v3827 = vadd.f32 %v3826, %v3796
        %v3828 = vadd.f32 %v3827, %v3797
        %v3829 = vadd.f32 %v3828, %v3798
        %v3830 = vadd.f32 %v3829, %v3799
        %v3831 = vrot.slane %v3830, 4
        %v3832 = vadd.f32 %v3830, %v3831
        %v3833 = vrot.slane %v3832, 2
        %v3834 = vadd.f32 %v3832, %v3833
        %v3835 = vrot.slane %v3834, 1
        %v3836 = vadd.f32 %v3834, %v3835
        %3837 = vst [vmem:[%s319 + $0x2] sm:$0x1] %v3836
        %v3838 = vld [vmem:[#allocation2] sm:$0xff]
        %v3839 = vld [vmem:[#allocation2 + $0x8] sm:$0xff]
        %v3840 = vld [vmem:[#allocation2 + $0x18] sm:$0xff]
        %v3841 = vld [vmem:[#allocation2 + $0x20] sm:$0xff]
        %v3842 = vld [vmem:[#allocation2 + $0x30] sm:$0xff]
        %v3843 = vld [vmem:[#allocation2 + $0x38] sm:$0xff]
        %v3844 = vld [vmem:[#allocation2 + $0x48] sm:$0xff]
        %v3845 = vld [vmem:[#allocation2 + $0x50] sm:$0xff]
        %v3846 = vld [vmem:[#allocation2 + $0x60] sm:$0xff]
        %v3847 = vld [vmem:[#allocation2 + $0x68] sm:$0xff]
        %v3848 = vld [vmem:[#allocation2 + $0x78] sm:$0xff]
        %v3849 = vld [vmem:[#allocation2 + $0x80] sm:$0xff]
        %v3850 = vld [vmem:[#allocation2 + $0x90] sm:$0xff]
        %v3851 = vld [vmem:[#allocation2 + $0x98] sm:$0xff]
        %v3852 = vld [vmem:[#allocation2 + $0xa8] sm:$0xff]
        %v3853 = vld [vmem:[#allocation2 + $0xb0] sm:$0xff]
        %v3854 = vld [vmem:[#allocation2 + $0xc0] sm:$0xff]
        %v3855 = vld [vmem:[#allocation2 + $0xc8] sm:$0xff]
        %v3856 = vld [vmem:[#allocation2 + $0xd8] sm:$0xff]
        %v3857 = vld [vmem:[#allocation2 + $0xe0] sm:$0xff]
        %v3858 = vld [vmem:[#allocation2 + $0xf0] sm:$0xff]
        %v3859 = vld [vmem:[#allocation2 + $0xf8] sm:$0xff]
        %v3860 = vld [vmem:[#allocation2 + $0x108] sm:$0xff]
        %v3861 = vld [vmem:[#allocation2 + $0x110] sm:$0xff]
        %v3862 = vld [vmem:[#allocation2 + $0x120] sm:$0xff]
        %v3863 = vld [vmem:[#allocation2 + $0x128] sm:$0xff]
        %v3864 = vld [vmem:[#allocation2 + $0x138] sm:$0xff]
        %v3865 = vld [vmem:[#allocation2 + $0x140] sm:$0xff]
        %v3866 = vld [vmem:[#allocation2 + $0x150] sm:$0xff]
        %v3867 = vld [vmem:[#allocation2 + $0x158] sm:$0xff]
        %v3868 = vld [vmem:[#allocation2 + $0x168] sm:$0xff]
        %v3869 = vld [vmem:[#allocation2 + $0x170] sm:$0xff]
        %v3870 = vld [vmem:[#allocation6] sm:$0xff]
        %v3871 = vld [vmem:[#allocation6 + $0x8] sm:$0xff]
        %v3872 = vld [vmem:[#allocation6 + $0x10] sm:$0xff]
        %v3873 = vld [vmem:[#allocation6 + $0x18] sm:$0xff]
        %v3874 = vld [vmem:[#allocation6 + $0x20] sm:$0xff]
        %v3875 = vld [vmem:[#allocation6 + $0x28] sm:$0xff]
        %v3876 = vld [vmem:[#allocation6 + $0x30] sm:$0xff]
        %v3877 = vld [vmem:[#allocation6 + $0x38] sm:$0xff]
        %v3878 = vld [vmem:[#allocation6 + $0x40] sm:$0xff]
        %v3879 = vld [vmem:[#allocation6 + $0x48] sm:$0xff]
        %v3880 = vld [vmem:[#allocation6 + $0x50] sm:$0xff]
        %v3881 = vld [vmem:[#allocation6 + $0x58] sm:$0xff]
        %v3882 = vld [vmem:[#allocation6 + $0x60] sm:$0xff]
        %v3883 = vld [vmem:[#allocation6 + $0x68] sm:$0xff]
        %v3884 = vld [vmem:[#allocation6 + $0x70] sm:$0xff]
        %v3885 = vld [vmem:[#allocation6 + $0x78] sm:$0xff]
        %v3886 = vld [vmem:[#allocation2 + $0x2] sm:$0xff]
        %v3887 = vld [vmem:[#allocation2 + $0xa] sm:$0xff]
        %v3888 = vld [vmem:[#allocation2 + $0x1a] sm:$0xff]
        %v3889 = vld [vmem:[#allocation2 + $0x22] sm:$0xff]
        %v3890 = vld [vmem:[#allocation2 + $0x32] sm:$0xff]
        %v3891 = vld [vmem:[#allocation2 + $0x3a] sm:$0xff]
        %v3892 = vld [vmem:[#allocation2 + $0x4a] sm:$0xff]
        %v3893 = vld [vmem:[#allocation2 + $0x52] sm:$0xff]
        %v3894 = vld [vmem:[#allocation2 + $0x62] sm:$0xff]
        %v3895 = vld [vmem:[#allocation2 + $0x6a] sm:$0xff]
        %v3896 = vld [vmem:[#allocation2 + $0x7a] sm:$0xff]
        %v3897 = vld [vmem:[#allocation2 + $0x82] sm:$0xff]
        %v3898 = vld [vmem:[#allocation2 + $0x92] sm:$0xff]
        %v3899 = vld [vmem:[#allocation2 + $0x9a] sm:$0xff]
        %v3900 = vld [vmem:[#allocation2 + $0xaa] sm:$0xff]
        %v3901 = vld [vmem:[#allocation2 + $0xb2] sm:$0xff]
        %v3902 = vld [vmem:[#allocation2 + $0xc2] sm:$0xff]
        %v3903 = vld [vmem:[#allocation2 + $0xca] sm:$0xff]
        %v3904 = vld [vmem:[#allocation2 + $0xda] sm:$0xff]
        %v3905 = vld [vmem:[#allocation2 + $0xe2] sm:$0xff]
        %v3906 = vld [vmem:[#allocation2 + $0xf2] sm:$0xff]
        %v3907 = vld [vmem:[#allocation2 + $0xfa] sm:$0xff]
        %v3908 = vld [vmem:[#allocation2 + $0x10a] sm:$0xff]
        %v3909 = vld [vmem:[#allocation2 + $0x112] sm:$0xff]
        %v3910 = vld [vmem:[#allocation2 + $0x122] sm:$0xff]
        %v3911 = vld [vmem:[#allocation2 + $0x12a] sm:$0xff]
        %v3912 = vld [vmem:[#allocation2 + $0x13a] sm:$0xff]
        %v3913 = vld [vmem:[#allocation2 + $0x142] sm:$0xff]
        %v3914 = vld [vmem:[#allocation2 + $0x152] sm:$0xff]
        %v3915 = vld [vmem:[#allocation2 + $0x15a] sm:$0xff]
        %v3916 = vld [vmem:[#allocation2 + $0x16a] sm:$0xff]
        %v3917 = vld [vmem:[#allocation2 + $0x172] sm:$0xff]
        %v3918 = vld [vmem:[%s1088] sm:$0xff]
        %v3919 = vld [vmem:[%s1088 + $0x8] sm:$0xff]
        %v3920 = vld [vmem:[%s1088 + $0x10] sm:$0xff]
        %v3921 = vld [vmem:[%s1088 + $0x18] sm:$0xff]
        %v3922 = vld [vmem:[%s1088 + $0x20] sm:$0xff]
        %v3923 = vld [vmem:[%s1088 + $0x28] sm:$0xff]
        %v3924 = vld [vmem:[%s1088 + $0x30] sm:$0xff]
        %v3925 = vld [vmem:[%s1088 + $0x38] sm:$0xff]
        %v3926 = vld [vmem:[%s1088 + $0x40] sm:$0xff]
        %v3927 = vld [vmem:[%s1088 + $0x48] sm:$0xff]
        %v3928 = vld [vmem:[%s1088 + $0x50] sm:$0xff]
        %v3929 = vld [vmem:[%s1088 + $0x58] sm:$0xff]
        %v3930 = vld [vmem:[%s1088 + $0x60] sm:$0xff]
        %v3931 = vld [vmem:[%s1088 + $0x68] sm:$0xff]
        %v3932 = vld [vmem:[%s1088 + $0x70] sm:$0xff]
        %v3933 = vld [vmem:[%s1088 + $0x78] sm:$0xff]
        %3934 = vmatprep.subr.mxu0 0.0
        %3935 = vmatpush1.msra.mxu0 %v3918
        %3936 = vmatprep.subr.mxu0 0.0
        %3937 = vmatpush1.msra.mxu0 %v3919
        %3938 = vmatprep.subr.mxu0 0.0
        %3939 = vmatpush1.msra.mxu0 %v3920
        %3940 = vmatprep.subr.mxu0 0.0
        %3941 = vmatpush1.msra.mxu0 %v3921
        %3942 = vmatprep.subr.mxu0 0.0
        %3943 = vmatpush1.msra.mxu0 %v3922
        %3944 = vmatprep.subr.mxu0 0.0
        %3945 = vmatpush1.msra.mxu0 %v3923
        %3946 = vmatprep.subr.mxu0 0.0
        %3947 = vmatpush1.msra.mxu0 %v3924
        %3948 = vmatprep.subr.mxu0 0.0
        %3949 = vmatpush1.msra.mxu0 %v3925
        %3950 = vmatprep.subr.mxu0 0.0
        %3951 = vmatpush1.msra.mxu0 %v3926
        %3952 = vmatprep.subr.mxu0 0.0
        %3953 = vmatpush1.msra.mxu0 %v3927
        %3954 = vmatprep.subr.mxu0 0.0
        %3955 = vmatpush1.msra.mxu0 %v3928
        %3956 = vmatprep.subr.mxu0 0.0
        %3957 = vmatpush1.msra.mxu0 %v3929
        %3958 = vmatprep.subr.mxu0 0.0
        %3959 = vmatpush1.msra.mxu0 %v3930
        %3960 = vmatprep.subr.mxu0 0.0
        %3961 = vmatpush1.msra.mxu0 %v3931
        %3962 = vmatprep.subr.mxu0 0.0
        %3963 = vmatpush1.msra.mxu0 %v3932
        %3964 = vmatprep.subr.mxu0 0.0
        %3965 = vmatpush1.msra.mxu0 %v3933
        %3966 = vmatprep.subr.mxu0 0.0
        %3967 = vmatpush1.msra.mxu0 0.0
        %3968 = vmatprep.subr.mxu0 0.0
        %3969 = vmatpush1.msra.mxu0 0.0
        %3970 = vmatprep.subr.mxu0 0.0
        %3971 = vmatpush1.msra.mxu0 0.0
        %3972 = vmatprep.subr.mxu0 0.0
        %3973 = vmatpush1.msra.mxu0 0.0
        %3974 = vmatprep.subr.mxu0 0.0
        %3975 = vmatpush1.msra.mxu0 0.0
        %3976 = vmatprep.subr.mxu0 0.0
        %3977 = vmatpush1.msra.mxu0 0.0
        %3978 = vmatprep.subr.mxu0 0.0
        %3979 = vmatpush1.msra.mxu0 0.0
        %3980 = vmatprep.subr.mxu0 0.0
        %3981 = vmatpush1.msra.mxu0 0.0
        %3982 = vmatprep.subr.mxu0 0.0
        %3983 = vmatpush1.msra.mxu0 0.0
        %3984 = vmatprep.subr.mxu0 0.0
        %3985 = vmatpush1.msra.mxu0 0.0
        %3986 = vmatprep.subr.mxu0 0.0
        %3987 = vmatpush1.msra.mxu0 0.0
        %3988 = vmatprep.subr.mxu0 0.0
        %3989 = vmatpush1.msra.mxu0 0.0
        %3990 = vmatprep.subr.mxu0 0.0
        %3991 = vmatpush1.msra.mxu0 0.0
        %3992 = vmatprep.subr.mxu0 0.0
        %3993 = vmatpush1.msra.mxu0 0.0
        %3994 = vmatprep.subr.mxu0 0.0
        %3995 = vmatpush1.msra.mxu0 0.0
        %3996 = vmatprep.subr.mxu0 0.0
        %3997 = vmatpush1.msra.mxu0 0.0
        %3998 = vmatprep.mubr.f32.mxu0 0.0
        %3999 = vmatmul.mubr.f32.gmra.mrb[0].mxu0 %v3886
        %v4000 = vpop.f32.mrb[0].mxu0
        %v4001 = vadd.f32 0.0, %v4000
        %v4002 = vpop.f32.mrb[0].mxu0
        %4003 = vmatprep.mubr.f32.mxu0 0.0
        %4004 = vmatmul.mubr.f32.gmra.mrb[0].mxu0 %v3887
        %v4005 = vpop.f32.mrb[0].mxu0
        %v4006 = vadd.f32 0.0, %v4005
        %v4007 = vpop.f32.mrb[0].mxu0
        %4008 = vmatprep.mubr.f32.mxu0 0.0
        %4009 = vmatmul.mubr.f32.gmra.mrb[0].mxu0 %v3888
        %v4010 = vpop.f32.mrb[0].mxu0
        %v4011 = vadd.f32 0.0, %v4010
        %v4012 = vpop.f32.mrb[0].mxu0
        %4013 = vmatprep.mubr.f32.mxu0 0.0
        %4014 = vmatmul.mubr.f32.gmra.mrb[0].mxu0 %v3889
        %v4015 = vpop.f32.mrb[0].mxu0
        %v4016 = vadd.f32 0.0, %v4015
        %v4017 = vpop.f32.mrb[0].mxu0
        %4018 = vmatprep.mubr.f32.mxu0 0.0
        %4019 = vmatmul.mubr.f32.gmra.mrb[0].mxu0 %v3890
        %v4020 = vpop.f32.mrb[0].mxu0
        %v4021 = vadd.f32 0.0, %v4020
        %v4022 = vpop.f32.mrb[0].mxu0
        %4023 = vmatprep.mubr.f32.mxu0 0.0
        %4024 = vmatmul.mubr.f32.gmra.mrb[0].mxu0 %v3891
        %v4025 = vpop.f32.mrb[0].mxu0
        %v4026 = vadd.f32 0.0, %v4025
        %v4027 = vpop.f32.mrb[0].mxu0
        %4028 = vmatprep.mubr.f32.mxu0 0.0
        %4029 = vmatmul.mubr.f32.gmra.mrb[0].mxu0 %v3892
        %v4030 = vpop.f32.mrb[0].mxu0
        %v4031 = vadd.f32 0.0, %v4030
        %v4032 = vpop.f32.mrb[0].mxu0
        %4033 = vmatprep.mubr.f32.mxu0 0.0
        %4034 = vmatmul.mubr.f32.gmra.mrb[0].mxu0 %v3893
        %v4035 = vpop.f32.mrb[0].mxu0
        %v4036 = vadd.f32 0.0, %v4035
        %v4037 = vpop.f32.mrb[0].mxu0
        %4038 = vmatprep.mubr.f32.mxu0 0.0
        %4039 = vmatmul.mubr.f32.gmra.mrb[0].mxu0 %v3894
        %v4040 = vpop.f32.mrb[0].mxu0
        %v4041 = vadd.f32 0.0, %v4040
        %v4042 = vpop.f32.mrb[0].mxu0
        %4043 = vmatprep.mubr.f32.mxu0 0.0
        %4044 = vmatmul.mubr.f32.gmra.mrb[0].mxu0 %v3895
        %v4045 = vpop.f32.mrb[0].mxu0
        %v4046 = vadd.f32 0.0, %v4045
        %v4047 = vpop.f32.mrb[0].mxu0
        %4048 = vmatprep.mubr.f32.mxu0 0.0
        %4049 = vmatmul.mubr.f32.gmra.mrb[0].mxu0 %v3896
        %v4050 = vpop.f32.mrb[0].mxu0
        %v4051 = vadd.f32 0.0, %v4050
        %v4052 = vpop.f32.mrb[0].mxu0
        %4053 = vmatprep.mubr.f32.mxu0 0.0
        %4054 = vmatmul.mubr.f32.gmra.mrb[0].mxu0 %v3897
        %v4055 = vpop.f32.mrb[0].mxu0
        %v4056 = vadd.f32 0.0, %v4055
        %v4057 = vpop.f32.mrb[0].mxu0
        %4058 = vmatprep.mubr.f32.mxu0 0.0
        %4059 = vmatmul.mubr.f32.gmra.mrb[0].mxu0 %v3898
        %v4060 = vpop.f32.mrb[0].mxu0
        %v4061 = vadd.f32 0.0, %v4060
        %v4062 = vpop.f32.mrb[0].mxu0
        %4063 = vmatprep.mubr.f32.mxu0 0.0
        %4064 = vmatmul.mubr.f32.gmra.mrb[0].mxu0 %v3899
        %v4065 = vpop.f32.mrb[0].mxu0
        %v4066 = vadd.f32 0.0, %v4065
        %v4067 = vpop.f32.mrb[0].mxu0
        %4068 = vmatprep.mubr.f32.mxu0 0.0
        %4069 = vmatmul.mubr.f32.gmra.mrb[0].mxu0 %v3900
        %v4070 = vpop.f32.mrb[0].mxu0
        %v4071 = vadd.f32 0.0, %v4070
        %v4072 = vpop.f32.mrb[0].mxu0
        %4073 = vmatprep.mubr.f32.mxu0 0.0
        %4074 = vmatmul.mubr.f32.gmra.mrb[0].mxu0 %v3901
        %v4075 = vpop.f32.mrb[0].mxu0
        %v4076 = vadd.f32 0.0, %v4075
        %v4077 = vpop.f32.mrb[0].mxu0
        %4078 = vmatprep.mubr.f32.mxu0 0.0
        %4079 = vmatmul.mubr.f32.gmra.mrb[0].mxu0 %v3902
        %v4080 = vpop.f32.mrb[0].mxu0
        %v4081 = vadd.f32 0.0, %v4080
        %v4082 = vpop.f32.mrb[0].mxu0
        %4083 = vmatprep.mubr.f32.mxu0 0.0
        %4084 = vmatmul.mubr.f32.gmra.mrb[0].mxu0 %v3903
        %v4085 = vpop.f32.mrb[0].mxu0
        %v4086 = vadd.f32 0.0, %v4085
        %v4087 = vpop.f32.mrb[0].mxu0
        %4088 = vmatprep.mubr.f32.mxu0 0.0
        %4089 = vmatmul.mubr.f32.gmra.mrb[0].mxu0 %v3904
        %v4090 = vpop.f32.mrb[0].mxu0
        %v4091 = vadd.f32 0.0, %v4090
        %v4092 = vpop.f32.mrb[0].mxu0
        %4093 = vmatprep.mubr.f32.mxu0 0.0
        %4094 = vmatmul.mubr.f32.gmra.mrb[0].mxu0 %v3905
        %v4095 = vpop.f32.mrb[0].mxu0
        %v4096 = vadd.f32 0.0, %v4095
        %v4097 = vpop.f32.mrb[0].mxu0
        %4098 = vmatprep.mubr.f32.mxu0 0.0
        %4099 = vmatmul.mubr.f32.gmra.mrb[0].mxu0 %v3906
        %v4100 = vpop.f32.mrb[0].mxu0
        %v4101 = vadd.f32 0.0, %v4100
        %v4102 = vpop.f32.mrb[0].mxu0
        %4103 = vmatprep.mubr.f32.mxu0 0.0
        %4104 = vmatmul.mubr.f32.gmra.mrb[0].mxu0 %v3907
        %v4105 = vpop.f32.mrb[0].mxu0
        %v4106 = vadd.f32 0.0, %v4105
        %v4107 = vpop.f32.mrb[0].mxu0
        %4108 = vmatprep.mubr.f32.mxu0 0.0
        %4109 = vmatmul.mubr.f32.gmra.mrb[0].mxu0 %v3908
        %v4110 = vpop.f32.mrb[0].mxu0
        %v4111 = vadd.f32 0.0, %v4110
        %v4112 = vpop.f32.mrb[0].mxu0
        %4113 = vmatprep.mubr.f32.mxu0 0.0
        %4114 = vmatmul.mubr.f32.gmra.mrb[0].mxu0 %v3909
        %v4115 = vpop.f32.mrb[0].mxu0
        %v4116 = vadd.f32 0.0, %v4115
        %v4117 = vpop.f32.mrb[0].mxu0
        %4118 = vmatprep.mubr.f32.mxu0 0.0
        %4119 = vmatmul.mubr.f32.gmra.mrb[0].mxu0 %v3910
        %v4120 = vpop.f32.mrb[0].mxu0
        %v4121 = vadd.f32 0.0, %v4120
        %v4122 = vpop.f32.mrb[0].mxu0
        %4123 = vmatprep.mubr.f32.mxu0 0.0
        %4124 = vmatmul.mubr.f32.gmra.mrb[0].mxu0 %v3911
        %v4125 = vpop.f32.mrb[0].mxu0
        %v4126 = vadd.f32 0.0, %v4125
        %v4127 = vpop.f32.mrb[0].mxu0
        %4128 = vmatprep.mubr.f32.mxu0 0.0
        %4129 = vmatmul.mubr.f32.gmra.mrb[0].mxu0 %v3912
        %v4130 = vpop.f32.mrb[0].mxu0
        %v4131 = vadd.f32 0.0, %v4130
        %v4132 = vpop.f32.mrb[0].mxu0
        %4133 = vmatprep.mubr.f32.mxu0 0.0
        %4134 = vmatmul.mubr.f32.gmra.mrb[0].mxu0 %v3913
        %v4135 = vpop.f32.mrb[0].mxu0
        %v4136 = vadd.f32 0.0, %v4135
        %v4137 = vpop.f32.mrb[0].mxu0
        %4138 = vmatprep.mubr.f32.mxu0 0.0
        %4139 = vmatmul.mubr.f32.gmra.mrb[0].mxu0 %v3914
        %v4140 = vpop.f32.mrb[0].mxu0
        %v4141 = vadd.f32 0.0, %v4140
        %v4142 = vpop.f32.mrb[0].mxu0
        %4143 = vmatprep.mubr.f32.mxu0 0.0
        %4144 = vmatmul.mubr.f32.gmra.mrb[0].mxu0 %v3915
        %v4145 = vpop.f32.mrb[0].mxu0
        %v4146 = vadd.f32 0.0, %v4145
        %v4147 = vpop.f32.mrb[0].mxu0
        %4148 = vmatprep.mubr.f32.mxu0 0.0
        %4149 = vmatmul.mubr.f32.gmra.mrb[0].mxu0 %v3916
        %v4150 = vpop.f32.mrb[0].mxu0
        %v4151 = vadd.f32 0.0, %v4150
        %v4152 = vpop.f32.mrb[0].mxu0
        %4153 = vmatprep.mubr.f32.mxu0 0.0
        %4154 = vmatmul.mubr.f32.gmra.mrb[0].mxu0 %v3917
        %v4155 = vpop.f32.mrb[0].mxu0
        %v4156 = vadd.f32 0.0, %v4155
        %v4157 = vpop.f32.mrb[0].mxu0
        %4158 = vdwg.mxu0
        %4159 = vmatprep.subr.mxu0 0.0
        %4160 = vmatpush1.msra.mxu0 %v3870
        %4161 = vmatprep.subr.mxu0 0.0
        %4162 = vmatpush1.msra.mxu0 %v3871
        %4163 = vmatprep.subr.mxu0 0.0
        %4164 = vmatpush1.msra.mxu0 %v3872
        %4165 = vmatprep.subr.mxu0 0.0
        %4166 = vmatpush1.msra.mxu0 %v3873
        %4167 = vmatprep.subr.mxu0 0.0
        %4168 = vmatpush1.msra.mxu0 %v3874
        %4169 = vmatprep.subr.mxu0 0.0
        %4170 = vmatpush1.msra.mxu0 %v3875
        %4171 = vmatprep.subr.mxu0 0.0
        %4172 = vmatpush1.msra.mxu0 %v3876
        %4173 = vmatprep.subr.mxu0 0.0
        %4174 = vmatpush1.msra.mxu0 %v3877
        %4175 = vmatprep.subr.mxu0 0.0
        %4176 = vmatpush1.msra.mxu0 %v3878
        %4177 = vmatprep.subr.mxu0 0.0
        %4178 = vmatpush1.msra.mxu0 %v3879
        %4179 = vmatprep.subr.mxu0 0.0
        %4180 = vmatpush1.msra.mxu0 %v3880
        %4181 = vmatprep.subr.mxu0 0.0
        %4182 = vmatpush1.msra.mxu0 %v3881
        %4183 = vmatprep.subr.mxu0 0.0
        %4184 = vmatpush1.msra.mxu0 %v3882
        %4185 = vmatprep.subr.mxu0 0.0
        %4186 = vmatpush1.msra.mxu0 %v3883
        %4187 = vmatprep.subr.mxu0 0.0
        %4188 = vmatpush1.msra.mxu0 %v3884
        %4189 = vmatprep.subr.mxu0 0.0
        %4190 = vmatpush1.msra.mxu0 %v3885
        %4191 = vmatprep.subr.mxu0 0.0
        %4192 = vmatpush1.msra.mxu0 0.0
        %4193 = vmatprep.subr.mxu0 0.0
        %4194 = vmatpush1.msra.mxu0 0.0
        %4195 = vmatprep.subr.mxu0 0.0
        %4196 = vmatpush1.msra.mxu0 0.0
        %4197 = vmatprep.subr.mxu0 0.0
        %4198 = vmatpush1.msra.mxu0 0.0
        %4199 = vmatprep.subr.mxu0 0.0
        %4200 = vmatpush1.msra.mxu0 0.0
        %4201 = vmatprep.subr.mxu0 0.0
        %4202 = vmatpush1.msra.mxu0 0.0
        %4203 = vmatprep.subr.mxu0 0.0
        %4204 = vmatpush1.msra.mxu0 0.0
        %4205 = vmatprep.subr.mxu0 0.0
        %4206 = vmatpush1.msra.mxu0 0.0
        %4207 = vmatprep.subr.mxu0 0.0
        %4208 = vmatpush1.msra.mxu0 0.0
        %4209 = vmatprep.subr.mxu0 0.0
        %4210 = vmatpush1.msra.mxu0 0.0
        %4211 = vmatprep.subr.mxu0 0.0
        %4212 = vmatpush1.msra.mxu0 0.0
        %4213 = vmatprep.subr.mxu0 0.0
        %4214 = vmatpush1.msra.mxu0 0.0
        %4215 = vmatprep.subr.mxu0 0.0
        %4216 = vmatpush1.msra.mxu0 0.0
        %4217 = vmatprep.subr.mxu0 0.0
        %4218 = vmatpush1.msra.mxu0 0.0
        %4219 = vmatprep.subr.mxu0 0.0
        %4220 = vmatpush1.msra.mxu0 0.0
        %4221 = vmatprep.subr.mxu0 0.0
        %4222 = vmatpush1.msra.mxu0 0.0
        %4223 = vmatprep.mubr.f32.mxu0 0.0
        %4224 = vmatmul.mubr.f32.gmra.mrb[0].mxu0 %v3838
        %v4225 = vpop.f32.mrb[0].mxu0
        %v4226 = vadd.f32 %v4001, %v4225
        %v4227 = vpop.f32.mrb[0].mxu0
        %4228 = vmatprep.mubr.f32.mxu0 0.0
        %4229 = vmatmul.mubr.f32.gmra.mrb[0].mxu0 %v3839
        %v4230 = vpop.f32.mrb[0].mxu0
        %v4231 = vadd.f32 %v4006, %v4230
        %v4232 = vpop.f32.mrb[0].mxu0
        %4233 = vmatprep.mubr.f32.mxu0 0.0
        %4234 = vmatmul.mubr.f32.gmra.mrb[0].mxu0 %v3840
        %v4235 = vpop.f32.mrb[0].mxu0
        %v4236 = vadd.f32 %v4011, %v4235
        %v4237 = vpop.f32.mrb[0].mxu0
        %4238 = vmatprep.mubr.f32.mxu0 0.0
        %4239 = vmatmul.mubr.f32.gmra.mrb[0].mxu0 %v3841
        %v4240 = vpop.f32.mrb[0].mxu0
        %v4241 = vadd.f32 %v4016, %v4240
        %v4242 = vpop.f32.mrb[0].mxu0
        %4243 = vmatprep.mubr.f32.mxu0 0.0
        %4244 = vmatmul.mubr.f32.gmra.mrb[0].mxu0 %v3842
        %v4245 = vpop.f32.mrb[0].mxu0
        %v4246 = vadd.f32 %v4021, %v4245
        %v4247 = vpop.f32.mrb[0].mxu0
        %4248 = vmatprep.mubr.f32.mxu0 0.0
        %4249 = vmatmul.mubr.f32.gmra.mrb[0].mxu0 %v3843
        %v4250 = vpop.f32.mrb[0].mxu0
        %v4251 = vadd.f32 %v4026, %v4250
        %v4252 = vpop.f32.mrb[0].mxu0
        %4253 = vmatprep.mubr.f32.mxu0 0.0
        %4254 = vmatmul.mubr.f32.gmra.mrb[0].mxu0 %v3844
        %v4255 = vpop.f32.mrb[0].mxu0
        %v4256 = vadd.f32 %v4031, %v4255
        %v4257 = vpop.f32.mrb[0].mxu0
        %4258 = vmatprep.mubr.f32.mxu0 0.0
        %4259 = vmatmul.mubr.f32.gmra.mrb[0].mxu0 %v3845
        %v4260 = vpop.f32.mrb[0].mxu0
        %v4261 = vadd.f32 %v4036, %v4260
        %v4262 = vpop.f32.mrb[0].mxu0
        %4263 = vmatprep.mubr.f32.mxu0 0.0
        %4264 = vmatmul.mubr.f32.gmra.mrb[0].mxu0 %v3846
        %v4265 = vpop.f32.mrb[0].mxu0
        %v4266 = vadd.f32 %v4041, %v4265
        %v4267 = vpop.f32.mrb[0].mxu0
        %4268 = vmatprep.mubr.f32.mxu0 0.0
        %4269 = vmatmul.mubr.f32.gmra.mrb[0].mxu0 %v3847
        %v4270 = vpop.f32.mrb[0].mxu0
        %v4271 = vadd.f32 %v4046, %v4270
        %v4272 = vpop.f32.mrb[0].mxu0
        %4273 = vmatprep.mubr.f32.mxu0 0.0
        %4274 = vmatmul.mubr.f32.gmra.mrb[0].mxu0 %v3848
        %v4275 = vpop.f32.mrb[0].mxu0
        %v4276 = vadd.f32 %v4051, %v4275
        %v4277 = vpop.f32.mrb[0].mxu0
        %4278 = vmatprep.mubr.f32.mxu0 0.0
        %4279 = vmatmul.mubr.f32.gmra.mrb[0].mxu0 %v3849
        %v4280 = vpop.f32.mrb[0].mxu0
        %v4281 = vadd.f32 %v4056, %v4280
        %v4282 = vpop.f32.mrb[0].mxu0
        %4283 = vmatprep.mubr.f32.mxu0 0.0
        %4284 = vmatmul.mubr.f32.gmra.mrb[0].mxu0 %v3850
        %v4285 = vpop.f32.mrb[0].mxu0
        %v4286 = vadd.f32 %v4061, %v4285
        %v4287 = vpop.f32.mrb[0].mxu0
        %4288 = vmatprep.mubr.f32.mxu0 0.0
        %4289 = vmatmul.mubr.f32.gmra.mrb[0].mxu0 %v3851
        %v4290 = vpop.f32.mrb[0].mxu0
        %v4291 = vadd.f32 %v4066, %v4290
        %v4292 = vpop.f32.mrb[0].mxu0
        %4293 = vmatprep.mubr.f32.mxu0 0.0
        %4294 = vmatmul.mubr.f32.gmra.mrb[0].mxu0 %v3852
        %v4295 = vpop.f32.mrb[0].mxu0
        %v4296 = vadd.f32 %v4071, %v4295
        %v4297 = vpop.f32.mrb[0].mxu0
        %4298 = vmatprep.mubr.f32.mxu0 0.0
        %4299 = vmatmul.mubr.f32.gmra.mrb[0].mxu0 %v3853
        %v4300 = vpop.f32.mrb[0].mxu0
        %v4301 = vadd.f32 %v4076, %v4300
        %v4302 = vpop.f32.mrb[0].mxu0
        %4303 = vmatprep.mubr.f32.mxu0 0.0
        %4304 = vmatmul.mubr.f32.gmra.mrb[0].mxu0 %v3854
        %v4305 = vpop.f32.mrb[0].mxu0
        %v4306 = vadd.f32 %v4081, %v4305
        %v4307 = vpop.f32.mrb[0].mxu0
        %4308 = vmatprep.mubr.f32.mxu0 0.0
        %4309 = vmatmul.mubr.f32.gmra.mrb[0].mxu0 %v3855
        %v4310 = vpop.f32.mrb[0].mxu0
        %v4311 = vadd.f32 %v4086, %v4310
        %v4312 = vpop.f32.mrb[0].mxu0
        %4313 = vmatprep.mubr.f32.mxu0 0.0
        %4314 = vmatmul.mubr.f32.gmra.mrb[0].mxu0 %v3856
        %v4315 = vpop.f32.mrb[0].mxu0
        %v4316 = vadd.f32 %v4091, %v4315
        %v4317 = vpop.f32.mrb[0].mxu0
        %4318 = vmatprep.mubr.f32.mxu0 0.0
        %4319 = vmatmul.mubr.f32.gmra.mrb[0].mxu0 %v3857
        %v4320 = vpop.f32.mrb[0].mxu0
        %v4321 = vadd.f32 %v4096, %v4320
        %v4322 = vpop.f32.mrb[0].mxu0
        %4323 = vmatprep.mubr.f32.mxu0 0.0
        %4324 = vmatmul.mubr.f32.gmra.mrb[0].mxu0 %v3858
        %v4325 = vpop.f32.mrb[0].mxu0
        %v4326 = vadd.f32 %v4101, %v4325
        %v4327 = vpop.f32.mrb[0].mxu0
        %4328 = vmatprep.mubr.f32.mxu0 0.0
        %4329 = vmatmul.mubr.f32.gmra.mrb[0].mxu0 %v3859
        %v4330 = vpop.f32.mrb[0].mxu0
        %v4331 = vadd.f32 %v4106, %v4330
        %v4332 = vpop.f32.mrb[0].mxu0
        %4333 = vmatprep.mubr.f32.mxu0 0.0
        %4334 = vmatmul.mubr.f32.gmra.mrb[0].mxu0 %v3860
        %v4335 = vpop.f32.mrb[0].mxu0
        %v4336 = vadd.f32 %v4111, %v4335
        %v4337 = vpop.f32.mrb[0].mxu0
        %4338 = vmatprep.mubr.f32.mxu0 0.0
        %4339 = vmatmul.mubr.f32.gmra.mrb[0].mxu0 %v3861
        %v4340 = vpop.f32.mrb[0].mxu0
        %v4341 = vadd.f32 %v4116, %v4340
        %v4342 = vpop.f32.mrb[0].mxu0
        %4343 = vmatprep.mubr.f32.mxu0 0.0
        %4344 = vmatmul.mubr.f32.gmra.mrb[0].mxu0 %v3862
        %v4345 = vpop.f32.mrb[0].mxu0
        %v4346 = vadd.f32 %v4121, %v4345
        %v4347 = vpop.f32.mrb[0].mxu0
        %4348 = vmatprep.mubr.f32.mxu0 0.0
        %4349 = vmatmul.mubr.f32.gmra.mrb[0].mxu0 %v3863
        %v4350 = vpop.f32.mrb[0].mxu0
        %v4351 = vadd.f32 %v4126, %v4350
        %v4352 = vpop.f32.mrb[0].mxu0
        %4353 = vmatprep.mubr.f32.mxu0 0.0
        %4354 = vmatmul.mubr.f32.gmra.mrb[0].mxu0 %v3864
        %v4355 = vpop.f32.mrb[0].mxu0
        %v4356 = vadd.f32 %v4131, %v4355
        %v4357 = vpop.f32.mrb[0].mxu0
        %4358 = vmatprep.mubr.f32.mxu0 0.0
        %4359 = vmatmul.mubr.f32.gmra.mrb[0].mxu0 %v3865
        %v4360 = vpop.f32.mrb[0].mxu0
        %v4361 = vadd.f32 %v4136, %v4360
        %v4362 = vpop.f32.mrb[0].mxu0
        %4363 = vmatprep.mubr.f32.mxu0 0.0
        %4364 = vmatmul.mubr.f32.gmra.mrb[0].mxu0 %v3866
        %v4365 = vpop.f32.mrb[0].mxu0
        %v4366 = vadd.f32 %v4141, %v4365
        %v4367 = vpop.f32.mrb[0].mxu0
        %4368 = vmatprep.mubr.f32.mxu0 0.0
        %4369 = vmatmul.mubr.f32.gmra.mrb[0].mxu0 %v3867
        %v4370 = vpop.f32.mrb[0].mxu0
        %v4371 = vadd.f32 %v4146, %v4370
        %v4372 = vpop.f32.mrb[0].mxu0
        %4373 = vmatprep.mubr.f32.mxu0 0.0
        %4374 = vmatmul.mubr.f32.gmra.mrb[0].mxu0 %v3868
        %v4375 = vpop.f32.mrb[0].mxu0
        %v4376 = vadd.f32 %v4151, %v4375
        %v4377 = vpop.f32.mrb[0].mxu0
        %4378 = vmatprep.mubr.f32.mxu0 0.0
        %4379 = vmatmul.mubr.f32.gmra.mrb[0].mxu0 %v3869
        %v4380 = vpop.f32.mrb[0].mxu0
        %v4381 = vadd.f32 %v4156, %v4380
        %v4382 = vpop.f32.mrb[0].mxu0
        %4383 = vdwg.mxu0
        %v4384 = vld [vmem:[#allocation2 + $0x4] sm:$0xff]
        %v4385 = vld [vmem:[#allocation2 + $0xc] sm:$0xff]
        %v4386 = vld [vmem:[#allocation2 + $0x1c] sm:$0xff]
        %v4387 = vld [vmem:[#allocation2 + $0x24] sm:$0xff]
        %v4388 = vld [vmem:[#allocation2 + $0x34] sm:$0xff]
        %v4389 = vld [vmem:[#allocation2 + $0x3c] sm:$0xff]
        %v4390 = vld [vmem:[#allocation2 + $0x4c] sm:$0xff]
        %v4391 = vld [vmem:[#allocation2 + $0x54] sm:$0xff]
        %v4392 = vld [vmem:[#allocation2 + $0x64] sm:$0xff]
        %v4393 = vld [vmem:[#allocation2 + $0x6c] sm:$0xff]
        %v4394 = vld [vmem:[#allocation2 + $0x7c] sm:$0xff]
        %v4395 = vld [vmem:[#allocation2 + $0x84] sm:$0xff]
        %v4396 = vld [vmem:[#allocation2 + $0x94] sm:$0xff]
        %v4397 = vld [vmem:[#allocation2 + $0x9c] sm:$0xff]
        %v4398 = vld [vmem:[#allocation2 + $0xac] sm:$0xff]
        %v4399 = vld [vmem:[#allocation2 + $0xb4] sm:$0xff]
        %v4400 = vld [vmem:[#allocation2 + $0xc4] sm:$0xff]
        %v4401 = vld [vmem:[#allocation2 + $0xcc] sm:$0xff]
        %v4402 = vld [vmem:[#allocation2 + $0xdc] sm:$0xff]
        %v4403 = vld [vmem:[#allocation2 + $0xe4] sm:$0xff]
        %v4404 = vld [vmem:[#allocation2 + $0xf4] sm:$0xff]
        %v4405 = vld [vmem:[#allocation2 + $0xfc] sm:$0xff]
        %v4406 = vld [vmem:[#allocation2 + $0x10c] sm:$0xff]
        %v4407 = vld [vmem:[#allocation2 + $0x114] sm:$0xff]
        %v4408 = vld [vmem:[#allocation2 + $0x124] sm:$0xff]
        %v4409 = vld [vmem:[#allocation2 + $0x12c] sm:$0xff]
        %v4410 = vld [vmem:[#allocation2 + $0x13c] sm:$0xff]
        %v4411 = vld [vmem:[#allocation2 + $0x144] sm:$0xff]
        %v4412 = vld [vmem:[#allocation2 + $0x154] sm:$0xff]
        %v4413 = vld [vmem:[#allocation2 + $0x15c] sm:$0xff]
        %v4414 = vld [vmem:[#allocation2 + $0x16c] sm:$0xff]
        %v4415 = vld [vmem:[#allocation2 + $0x174] sm:$0xff]
        %v4416 = vld [vmem:[%s1587] sm:$0xff]
        %v4417 = vld [vmem:[%s1587 + $0x8] sm:$0xff]
        %v4418 = vld [vmem:[%s1587 + $0x10] sm:$0xff]
        %v4419 = vld [vmem:[%s1587 + $0x18] sm:$0xff]
        %v4420 = vld [vmem:[%s1587 + $0x20] sm:$0xff]
        %v4421 = vld [vmem:[%s1587 + $0x28] sm:$0xff]
        %v4422 = vld [vmem:[%s1587 + $0x30] sm:$0xff]
        %v4423 = vld [vmem:[%s1587 + $0x38] sm:$0xff]
        %v4424 = vld [vmem:[%s1587 + $0x40] sm:$0xff]
        %v4425 = vld [vmem:[%s1587 + $0x48] sm:$0xff]
        %v4426 = vld [vmem:[%s1587 + $0x50] sm:$0xff]
        %v4427 = vld [vmem:[%s1587 + $0x58] sm:$0xff]
        %v4428 = vld [vmem:[%s1587 + $0x60] sm:$0xff]
        %v4429 = vld [vmem:[%s1587 + $0x68] sm:$0xff]
        %v4430 = vld [vmem:[%s1587 + $0x70] sm:$0xff]
        %v4431 = vld [vmem:[%s1587 + $0x78] sm:$0xff]
        %4432 = vmatprep.subr.mxu0 0.0
        %4433 = vmatpush1.msra.mxu0 %v4416
        %4434 = vmatprep.subr.mxu0 0.0
        %4435 = vmatpush1.msra.mxu0 %v4417
        %4436 = vmatprep.subr.mxu0 0.0
        %4437 = vmatpush1.msra.mxu0 %v4418
        %4438 = vmatprep.subr.mxu0 0.0
        %4439 = vmatpush1.msra.mxu0 %v4419
        %4440 = vmatprep.subr.mxu0 0.0
        %4441 = vmatpush1.msra.mxu0 %v4420
        %4442 = vmatprep.subr.mxu0 0.0
        %4443 = vmatpush1.msra.mxu0 %v4421
        %4444 = vmatprep.subr.mxu0 0.0
        %4445 = vmatpush1.msra.mxu0 %v4422
        %4446 = vmatprep.subr.mxu0 0.0
        %4447 = vmatpush1.msra.mxu0 %v4423
        %4448 = vmatprep.subr.mxu0 0.0
        %4449 = vmatpush1.msra.mxu0 %v4424
        %4450 = vmatprep.subr.mxu0 0.0
        %4451 = vmatpush1.msra.mxu0 %v4425
        %4452 = vmatprep.subr.mxu0 0.0
        %4453 = vmatpush1.msra.mxu0 %v4426
        %4454 = vmatprep.subr.mxu0 0.0
        %4455 = vmatpush1.msra.mxu0 %v4427
        %4456 = vmatprep.subr.mxu0 0.0
        %4457 = vmatpush1.msra.mxu0 %v4428
        %4458 = vmatprep.subr.mxu0 0.0
        %4459 = vmatpush1.msra.mxu0 %v4429
        %4460 = vmatprep.subr.mxu0 0.0
        %4461 = vmatpush1.msra.mxu0 %v4430
        %4462 = vmatprep.subr.mxu0 0.0
        %4463 = vmatpush1.msra.mxu0 %v4431
        %4464 = vmatprep.subr.mxu0 0.0
        %4465 = vmatpush1.msra.mxu0 0.0
        %4466 = vmatprep.subr.mxu0 0.0
        %4467 = vmatpush1.msra.mxu0 0.0
        %4468 = vmatprep.subr.mxu0 0.0
        %4469 = vmatpush1.msra.mxu0 0.0
        %4470 = vmatprep.subr.mxu0 0.0
        %4471 = vmatpush1.msra.mxu0 0.0
        %4472 = vmatprep.subr.mxu0 0.0
        %4473 = vmatpush1.msra.mxu0 0.0
        %4474 = vmatprep.subr.mxu0 0.0
        %4475 = vmatpush1.msra.mxu0 0.0
        %4476 = vmatprep.subr.mxu0 0.0
        %4477 = vmatpush1.msra.mxu0 0.0
        %4478 = vmatprep.subr.mxu0 0.0
        %4479 = vmatpush1.msra.mxu0 0.0
        %4480 = vmatprep.subr.mxu0 0.0
        %4481 = vmatpush1.msra.mxu0 0.0
        %4482 = vmatprep.subr.mxu0 0.0
        %4483 = vmatpush1.msra.mxu0 0.0
        %4484 = vmatprep.subr.mxu0 0.0
        %4485 = vmatpush1.msra.mxu0 0.0
        %4486 = vmatprep.subr.mxu0 0.0
        %4487 = vmatpush1.msra.mxu0 0.0
        %4488 = vmatprep.subr.mxu0 0.0
        %4489 = vmatpush1.msra.mxu0 0.0
        %4490 = vmatprep.subr.mxu0 0.0
        %4491 = vmatpush1.msra.mxu0 0.0
        %4492 = vmatprep.subr.mxu0 0.0
        %4493 = vmatpush1.msra.mxu0 0.0
        %4494 = vmatprep.subr.mxu0 0.0
        %4495 = vmatpush1.msra.mxu0 0.0
        %4496 = vmatprep.mubr.f32.mxu0 0.0
        %4497 = vmatmul.mubr.f32.gmra.mrb[0].mxu0 %v4384
        %v4498 = vpop.f32.mrb[0].mxu0
        %v4499 = vadd.f32 0.0, %v4498
        %v4500 = vpop.f32.mrb[0].mxu0
        %4501 = vmatprep.mubr.f32.mxu0 0.0
        %4502 = vmatmul.mubr.f32.gmra.mrb[0].mxu0 %v4385
        %v4503 = vpop.f32.mrb[0].mxu0
        %v4504 = vadd.f32 0.0, %v4503
        %v4505 = vpop.f32.mrb[0].mxu0
        %4506 = vmatprep.mubr.f32.mxu0 0.0
        %4507 = vmatmul.mubr.f32.gmra.mrb[0].mxu0 %v4386
        %v4508 = vpop.f32.mrb[0].mxu0
        %v4509 = vadd.f32 0.0, %v4508
        %v4510 = vpop.f32.mrb[0].mxu0
        %4511 = vmatprep.mubr.f32.mxu0 0.0
        %4512 = vmatmul.mubr.f32.gmra.mrb[0].mxu0 %v4387
        %v4513 = vpop.f32.mrb[0].mxu0
        %v4514 = vadd.f32 0.0, %v4513
        %v4515 = vpop.f32.mrb[0].mxu0
        %4516 = vmatprep.mubr.f32.mxu0 0.0
        %4517 = vmatmul.mubr.f32.gmra.mrb[0].mxu0 %v4388
        %v4518 = vpop.f32.mrb[0].mxu0
        %v4519 = vadd.f32 0.0, %v4518
        %v4520 = vpop.f32.mrb[0].mxu0
        %4521 = vmatprep.mubr.f32.mxu0 0.0
        %4522 = vmatmul.mubr.f32.gmra.mrb[0].mxu0 %v4389
        %v4523 = vpop.f32.mrb[0].mxu0
        %v4524 = vadd.f32 0.0, %v4523
        %v4525 = vpop.f32.mrb[0].mxu0
        %4526 = vmatprep.mubr.f32.mxu0 0.0
        %4527 = vmatmul.mubr.f32.gmra.mrb[0].mxu0 %v4390
        %v4528 = vpop.f32.mrb[0].mxu0
        %v4529 = vadd.f32 0.0, %v4528
        %v4530 = vpop.f32.mrb[0].mxu0
        %4531 = vmatprep.mubr.f32.mxu0 0.0
        %4532 = vmatmul.mubr.f32.gmra.mrb[0].mxu0 %v4391
        %v4533 = vpop.f32.mrb[0].mxu0
        %v4534 = vadd.f32 0.0, %v4533
        %v4535 = vpop.f32.mrb[0].mxu0
        %4536 = vmatprep.mubr.f32.mxu0 0.0
        %4537 = vmatmul.mubr.f32.gmra.mrb[0].mxu0 %v4392
        %v4538 = vpop.f32.mrb[0].mxu0
        %v4539 = vadd.f32 0.0, %v4538
        %v4540 = vpop.f32.mrb[0].mxu0
        %4541 = vmatprep.mubr.f32.mxu0 0.0
        %4542 = vmatmul.mubr.f32.gmra.mrb[0].mxu0 %v4393
        %v4543 = vpop.f32.mrb[0].mxu0
        %v4544 = vadd.f32 0.0, %v4543
        %v4545 = vpop.f32.mrb[0].mxu0
        %4546 = vmatprep.mubr.f32.mxu0 0.0
        %4547 = vmatmul.mubr.f32.gmra.mrb[0].mxu0 %v4394
        %v4548 = vpop.f32.mrb[0].mxu0
        %v4549 = vadd.f32 0.0, %v4548
        %v4550 = vpop.f32.mrb[0].mxu0
        %4551 = vmatprep.mubr.f32.mxu0 0.0
        %4552 = vmatmul.mubr.f32.gmra.mrb[0].mxu0 %v4395
        %v4553 = vpop.f32.mrb[0].mxu0
        %v4554 = vadd.f32 0.0, %v4553
        %v4555 = vpop.f32.mrb[0].mxu0
        %4556 = vmatprep.mubr.f32.mxu0 0.0
        %4557 = vmatmul.mubr.f32.gmra.mrb[0].mxu0 %v4396
        %v4558 = vpop.f32.mrb[0].mxu0
        %v4559 = vadd.f32 0.0, %v4558
        %v4560 = vpop.f32.mrb[0].mxu0
        %4561 = vmatprep.mubr.f32.mxu0 0.0
        %4562 = vmatmul.mubr.f32.gmra.mrb[0].mxu0 %v4397
        %v4563 = vpop.f32.mrb[0].mxu0
        %v4564 = vadd.f32 0.0, %v4563
        %v4565 = vpop.f32.mrb[0].mxu0
        %4566 = vmatprep.mubr.f32.mxu0 0.0
        %4567 = vmatmul.mubr.f32.gmra.mrb[0].mxu0 %v4398
        %v4568 = vpop.f32.mrb[0].mxu0
        %v4569 = vadd.f32 0.0, %v4568
        %v4570 = vpop.f32.mrb[0].mxu0
        %4571 = vmatprep.mubr.f32.mxu0 0.0
        %4572 = vmatmul.mubr.f32.gmra.mrb[0].mxu0 %v4399
        %v4573 = vpop.f32.mrb[0].mxu0
        %v4574 = vadd.f32 0.0, %v4573
        %v4575 = vpop.f32.mrb[0].mxu0
        %4576 = vmatprep.mubr.f32.mxu0 0.0
        %4577 = vmatmul.mubr.f32.gmra.mrb[0].mxu0 %v4400
        %v4578 = vpop.f32.mrb[0].mxu0
        %v4579 = vadd.f32 0.0, %v4578
        %v4580 = vpop.f32.mrb[0].mxu0
        %4581 = vmatprep.mubr.f32.mxu0 0.0
        %4582 = vmatmul.mubr.f32.gmra.mrb[0].mxu0 %v4401
        %v4583 = vpop.f32.mrb[0].mxu0
        %v4584 = vadd.f32 0.0, %v4583
        %v4585 = vpop.f32.mrb[0].mxu0
        %4586 = vmatprep.mubr.f32.mxu0 0.0
        %4587 = vmatmul.mubr.f32.gmra.mrb[0].mxu0 %v4402
        %v4588 = vpop.f32.mrb[0].mxu0
        %v4589 = vadd.f32 0.0, %v4588
        %v4590 = vpop.f32.mrb[0].mxu0
        %4591 = vmatprep.mubr.f32.mxu0 0.0
        %4592 = vmatmul.mubr.f32.gmra.mrb[0].mxu0 %v4403
        %v4593 = vpop.f32.mrb[0].mxu0
        %v4594 = vadd.f32 0.0, %v4593
        %v4595 = vpop.f32.mrb[0].mxu0
        %4596 = vmatprep.mubr.f32.mxu0 0.0
        %4597 = vmatmul.mubr.f32.gmra.mrb[0].mxu0 %v4404
        %v4598 = vpop.f32.mrb[0].mxu0
        %v4599 = vadd.f32 0.0, %v4598
        %v4600 = vpop.f32.mrb[0].mxu0
        %4601 = vmatprep.mubr.f32.mxu0 0.0
        %4602 = vmatmul.mubr.f32.gmra.mrb[0].mxu0 %v4405
        %v4603 = vpop.f32.mrb[0].mxu0
        %v4604 = vadd.f32 0.0, %v4603
        %v4605 = vpop.f32.mrb[0].mxu0
        %4606 = vmatprep.mubr.f32.mxu0 0.0
        %4607 = vmatmul.mubr.f32.gmra.mrb[0].mxu0 %v4406
        %v4608 = vpop.f32.mrb[0].mxu0
        %v4609 = vadd.f32 0.0, %v4608
        %v4610 = vpop.f32.mrb[0].mxu0
        %4611 = vmatprep.mubr.f32.mxu0 0.0
        %4612 = vmatmul.mubr.f32.gmra.mrb[0].mxu0 %v4407
        %v4613 = vpop.f32.mrb[0].mxu0
        %v4614 = vadd.f32 0.0, %v4613
        %v4615 = vpop.f32.mrb[0].mxu0
        %4616 = vmatprep.mubr.f32.mxu0 0.0
        %4617 = vmatmul.mubr.f32.gmra.mrb[0].mxu0 %v4408
        %v4618 = vpop.f32.mrb[0].mxu0
        %v4619 = vadd.f32 0.0, %v4618
        %v4620 = vpop.f32.mrb[0].mxu0
        %4621 = vmatprep.mubr.f32.mxu0 0.0
        %4622 = vmatmul.mubr.f32.gmra.mrb[0].mxu0 %v4409
        %v4623 = vpop.f32.mrb[0].mxu0
        %v4624 = vadd.f32 0.0, %v4623
        %v4625 = vpop.f32.mrb[0].mxu0
        %4626 = vmatprep.mubr.f32.mxu0 0.0
        %4627 = vmatmul.mubr.f32.gmra.mrb[0].mxu0 %v4410
        %v4628 = vpop.f32.mrb[0].mxu0
        %v4629 = vadd.f32 0.0, %v4628
        %v4630 = vpop.f32.mrb[0].mxu0
        %4631 = vmatprep.mubr.f32.mxu0 0.0
        %4632 = vmatmul.mubr.f32.gmra.mrb[0].mxu0 %v4411
        %v4633 = vpop.f32.mrb[0].mxu0
        %v4634 = vadd.f32 0.0, %v4633
        %v4635 = vpop.f32.mrb[0].mxu0
        %4636 = vmatprep.mubr.f32.mxu0 0.0
        %4637 = vmatmul.mubr.f32.gmra.mrb[0].mxu0 %v4412
        %v4638 = vpop.f32.mrb[0].mxu0
        %v4639 = vadd.f32 0.0, %v4638
        %v4640 = vpop.f32.mrb[0].mxu0
        %4641 = vmatprep.mubr.f32.mxu0 0.0
        %4642 = vmatmul.mubr.f32.gmra.mrb[0].mxu0 %v4413
        %v4643 = vpop.f32.mrb[0].mxu0
        %v4644 = vadd.f32 0.0, %v4643
        %v4645 = vpop.f32.mrb[0].mxu0
        %4646 = vmatprep.mubr.f32.mxu0 0.0
        %4647 = vmatmul.mubr.f32.gmra.mrb[0].mxu0 %v4414
        %v4648 = vpop.f32.mrb[0].mxu0
        %v4649 = vadd.f32 0.0, %v4648
        %v4650 = vpop.f32.mrb[0].mxu0
        %4651 = vmatprep.mubr.f32.mxu0 0.0
        %4652 = vmatmul.mubr.f32.gmra.mrb[0].mxu0 %v4415
        %v4653 = vpop.f32.mrb[0].mxu0
        %v4654 = vadd.f32 0.0, %v4653
        %v4655 = vpop.f32.mrb[0].mxu0
        %4656 = vdwg.mxu0
        %v4657 = vadd.f32 %v4226, %v4499
        %v4658 = vadd.f32 %v4231, %v4504
        %v4659 = vadd.f32 %v4236, %v4509
        %v4660 = vadd.f32 %v4241, %v4514
        %v4661 = vadd.f32 %v4246, %v4519
        %v4662 = vadd.f32 %v4251, %v4524
        %v4663 = vadd.f32 %v4256, %v4529
        %v4664 = vadd.f32 %v4261, %v4534
        %v4665 = vadd.f32 %v4266, %v4539
        %v4666 = vadd.f32 %v4271, %v4544
        %v4667 = vadd.f32 %v4276, %v4549
        %v4668 = vadd.f32 %v4281, %v4554
        %v4669 = vadd.f32 %v4286, %v4559
        %v4670 = vadd.f32 %v4291, %v4564
        %v4671 = vadd.f32 %v4296, %v4569
        %v4672 = vadd.f32 %v4301, %v4574
        %v4673 = vadd.f32 %v4306, %v4579
        %v4674 = vadd.f32 %v4311, %v4584
        %v4675 = vadd.f32 %v4316, %v4589
        %v4676 = vadd.f32 %v4321, %v4594
        %v4677 = vadd.f32 %v4326, %v4599
        %v4678 = vadd.f32 %v4331, %v4604
        %v4679 = vadd.f32 %v4336, %v4609
        %v4680 = vadd.f32 %v4341, %v4614
        %v4681 = vadd.f32 %v4346, %v4619
        %v4682 = vadd.f32 %v4351, %v4624
        %v4683 = vadd.f32 %v4356, %v4629
        %v4684 = vadd.f32 %v4361, %v4634
        %v4685 = vadd.f32 %v4366, %v4639
        %v4686 = vadd.f32 %v4371, %v4644
        %v4687 = vadd.f32 %v4376, %v4649
        %v4688 = vadd.f32 %v4381, %v4654
        %v4689 = vld [vmem:[%s372] sm:$0xff]
        %v4690 = vld [vmem:[%s372 + $0x8] sm:$0xff]
        %v4691 = vld [vmem:[%s372 + $0x18] sm:$0xff]
        %v4692 = vld [vmem:[%s372 + $0x20] sm:$0xff]
        %v4693 = vld [vmem:[%s372 + $0x30] sm:$0xff]
        %v4694 = vld [vmem:[%s372 + $0x38] sm:$0xff]
        %v4695 = vld [vmem:[%s372 + $0x48] sm:$0xff]
        %v4696 = vld [vmem:[%s372 + $0x50] sm:$0xff]
        %v4697 = vld [vmem:[%s372 + $0x60] sm:$0xff]
        %v4698 = vld [vmem:[%s372 + $0x68] sm:$0xff]
        %v4699 = vld [vmem:[%s372 + $0x78] sm:$0xff]
        %v4700 = vld [vmem:[%s372 + $0x80] sm:$0xff]
        %v4701 = vld [vmem:[%s372 + $0x90] sm:$0xff]
        %v4702 = vld [vmem:[%s372 + $0x98] sm:$0xff]
        %v4703 = vld [vmem:[%s372 + $0xa8] sm:$0xff]
        %v4704 = vld [vmem:[%s372 + $0xb0] sm:$0xff]
        %v4705 = vld [vmem:[%s372 + $0xc0] sm:$0xff]
        %v4706 = vld [vmem:[%s372 + $0xc8] sm:$0xff]
        %v4707 = vld [vmem:[%s372 + $0xd8] sm:$0xff]
        %v4708 = vld [vmem:[%s372 + $0xe0] sm:$0xff]
        %v4709 = vld [vmem:[%s372 + $0xf0] sm:$0xff]
        %v4710 = vld [vmem:[%s372 + $0xf8] sm:$0xff]
        %v4711 = vld [vmem:[%s372 + $0x108] sm:$0xff]
        %v4712 = vld [vmem:[%s372 + $0x110] sm:$0xff]
        %v4713 = vld [vmem:[%s372 + $0x120] sm:$0xff]
        %v4714 = vld [vmem:[%s372 + $0x128] sm:$0xff]
        %v4715 = vld [vmem:[%s372 + $0x138] sm:$0xff]
        %v4716 = vld [vmem:[%s372 + $0x140] sm:$0xff]
        %v4717 = vld [vmem:[%s372 + $0x150] sm:$0xff]
        %v4718 = vld [vmem:[%s372 + $0x158] sm:$0xff]
        %v4719 = vld [vmem:[%s372 + $0x168] sm:$0xff]
        %v4720 = vld [vmem:[%s372 + $0x170] sm:$0xff]
        %v4721 = vld [vmem:[%s1893] sm:$0xff]
        %v4722 = vld [vmem:[%s1893 + $0x8] sm:$0xff]
        %v4723 = vld [vmem:[%s1893 + $0x10] sm:$0xff]
        %v4724 = vld [vmem:[%s1893 + $0x18] sm:$0xff]
        %v4725 = vld [vmem:[%s1893 + $0x20] sm:$0xff]
        %v4726 = vld [vmem:[%s1893 + $0x28] sm:$0xff]
        %v4727 = vld [vmem:[%s1893 + $0x30] sm:$0xff]
        %v4728 = vld [vmem:[%s1893 + $0x38] sm:$0xff]
        %v4729 = vld [vmem:[%s1893 + $0x40] sm:$0xff]
        %v4730 = vld [vmem:[%s1893 + $0x48] sm:$0xff]
        %v4731 = vld [vmem:[%s1893 + $0x50] sm:$0xff]
        %v4732 = vld [vmem:[%s1893 + $0x58] sm:$0xff]
        %v4733 = vld [vmem:[%s1893 + $0x60] sm:$0xff]
        %v4734 = vld [vmem:[%s1893 + $0x68] sm:$0xff]
        %v4735 = vld [vmem:[%s1893 + $0x70] sm:$0xff]
        %v4736 = vld [vmem:[%s1893 + $0x78] sm:$0xff]
        %4737 = vmatprep.subr.mxu0 0.0
        %4738 = vmatpush1.msra.mxu0 %v4721
        %4739 = vmatprep.subr.mxu0 0.0
        %4740 = vmatpush1.msra.mxu0 %v4722
        %4741 = vmatprep.subr.mxu0 0.0
        %4742 = vmatpush1.msra.mxu0 %v4723
        %4743 = vmatprep.subr.mxu0 0.0
        %4744 = vmatpush1.msra.mxu0 %v4724
        %4745 = vmatprep.subr.mxu0 0.0
        %4746 = vmatpush1.msra.mxu0 %v4725
        %4747 = vmatprep.subr.mxu0 0.0
        %4748 = vmatpush1.msra.mxu0 %v4726
        %4749 = vmatprep.subr.mxu0 0.0
        %4750 = vmatpush1.msra.mxu0 %v4727
        %4751 = vmatprep.subr.mxu0 0.0
        %4752 = vmatpush1.msra.mxu0 %v4728
        %4753 = vmatprep.subr.mxu0 0.0
        %4754 = vmatpush1.msra.mxu0 %v4729
        %4755 = vmatprep.subr.mxu0 0.0
        %4756 = vmatpush1.msra.mxu0 %v4730
        %4757 = vmatprep.subr.mxu0 0.0
        %4758 = vmatpush1.msra.mxu0 %v4731
        %4759 = vmatprep.subr.mxu0 0.0
        %4760 = vmatpush1.msra.mxu0 %v4732
        %4761 = vmatprep.subr.mxu0 0.0
        %4762 = vmatpush1.msra.mxu0 %v4733
        %4763 = vmatprep.subr.mxu0 0.0
        %4764 = vmatpush1.msra.mxu0 %v4734
        %4765 = vmatprep.subr.mxu0 0.0
        %4766 = vmatpush1.msra.mxu0 %v4735
        %4767 = vmatprep.subr.mxu0 0.0
        %4768 = vmatpush1.msra.mxu0 %v4736
        %4769 = vmatprep.subr.mxu0 0.0
        %4770 = vmatpush1.msra.mxu0 0.0
        %4771 = vmatprep.subr.mxu0 0.0
        %4772 = vmatpush1.msra.mxu0 0.0
        %4773 = vmatprep.subr.mxu0 0.0
        %4774 = vmatpush1.msra.mxu0 0.0
        %4775 = vmatprep.subr.mxu0 0.0
        %4776 = vmatpush1.msra.mxu0 0.0
        %4777 = vmatprep.subr.mxu0 0.0
        %4778 = vmatpush1.msra.mxu0 0.0
        %4779 = vmatprep.subr.mxu0 0.0
        %4780 = vmatpush1.msra.mxu0 0.0
        %4781 = vmatprep.subr.mxu0 0.0
        %4782 = vmatpush1.msra.mxu0 0.0
        %4783 = vmatprep.subr.mxu0 0.0
        %4784 = vmatpush1.msra.mxu0 0.0
        %4785 = vmatprep.subr.mxu0 0.0
        %4786 = vmatpush1.msra.mxu0 0.0
        %4787 = vmatprep.subr.mxu0 0.0
        %4788 = vmatpush1.msra.mxu0 0.0
        %4789 = vmatprep.subr.mxu0 0.0
        %4790 = vmatpush1.msra.mxu0 0.0
        %4791 = vmatprep.subr.mxu0 0.0
        %4792 = vmatpush1.msra.mxu0 0.0
        %4793 = vmatprep.subr.mxu0 0.0
        %4794 = vmatpush1.msra.mxu0 0.0
        %4795 = vmatprep.subr.mxu0 0.0
        %4796 = vmatpush1.msra.mxu0 0.0
        %4797 = vmatprep.subr.mxu0 0.0
        %4798 = vmatpush1.msra.mxu0 0.0
        %4799 = vmatprep.subr.mxu0 0.0
        %4800 = vmatpush1.msra.mxu0 0.0
        %4801 = vmatprep.mubr.f32.mxu0 0.0
        %4802 = vmatmul.mubr.f32.gmra.mrb[0].mxu0 %v4689
        %v4803 = vpop.f32.mrb[0].mxu0
        %v4804 = vadd.f32 0.0, %v4803
        %v4805 = vpop.f32.mrb[0].mxu0
        %4806 = vmatprep.mubr.f32.mxu0 0.0
        %4807 = vmatmul.mubr.f32.gmra.mrb[0].mxu0 %v4690
        %v4808 = vpop.f32.mrb[0].mxu0
        %v4809 = vadd.f32 0.0, %v4808
        %v4810 = vpop.f32.mrb[0].mxu0
        %4811 = vmatprep.mubr.f32.mxu0 0.0
        %4812 = vmatmul.mubr.f32.gmra.mrb[0].mxu0 %v4691
        %v4813 = vpop.f32.mrb[0].mxu0
        %v4814 = vadd.f32 0.0, %v4813
        %v4815 = vpop.f32.mrb[0].mxu0
        %4816 = vmatprep.mubr.f32.mxu0 0.0
        %4817 = vmatmul.mubr.f32.gmra.mrb[0].mxu0 %v4692
        %v4818 = vpop.f32.mrb[0].mxu0
        %v4819 = vadd.f32 0.0, %v4818
        %v4820 = vpop.f32.mrb[0].mxu0
        %4821 = vmatprep.mubr.f32.mxu0 0.0
        %4822 = vmatmul.mubr.f32.gmra.mrb[0].mxu0 %v4693
        %v4823 = vpop.f32.mrb[0].mxu0
        %v4824 = vadd.f32 0.0, %v4823
        %v4825 = vpop.f32.mrb[0].mxu0
        %4826 = vmatprep.mubr.f32.mxu0 0.0
        %4827 = vmatmul.mubr.f32.gmra.mrb[0].mxu0 %v4694
        %v4828 = vpop.f32.mrb[0].mxu0
        %v4829 = vadd.f32 0.0, %v4828
        %v4830 = vpop.f32.mrb[0].mxu0
        %4831 = vmatprep.mubr.f32.mxu0 0.0
        %4832 = vmatmul.mubr.f32.gmra.mrb[0].mxu0 %v4695
        %v4833 = vpop.f32.mrb[0].mxu0
        %v4834 = vadd.f32 0.0, %v4833
        %v4835 = vpop.f32.mrb[0].mxu0
        %4836 = vmatprep.mubr.f32.mxu0 0.0
        %4837 = vmatmul.mubr.f32.gmra.mrb[0].mxu0 %v4696
        %v4838 = vpop.f32.mrb[0].mxu0
        %v4839 = vadd.f32 0.0, %v4838
        %v4840 = vpop.f32.mrb[0].mxu0
        %4841 = vmatprep.mubr.f32.mxu0 0.0
        %4842 = vmatmul.mubr.f32.gmra.mrb[0].mxu0 %v4697
        %v4843 = vpop.f32.mrb[0].mxu0
        %v4844 = vadd.f32 0.0, %v4843
        %v4845 = vpop.f32.mrb[0].mxu0
        %4846 = vmatprep.mubr.f32.mxu0 0.0
        %4847 = vmatmul.mubr.f32.gmra.mrb[0].mxu0 %v4698
        %v4848 = vpop.f32.mrb[0].mxu0
        %v4849 = vadd.f32 0.0, %v4848
        %v4850 = vpop.f32.mrb[0].mxu0
        %4851 = vmatprep.mubr.f32.mxu0 0.0
        %4852 = vmatmul.mubr.f32.gmra.mrb[0].mxu0 %v4699
        %v4853 = vpop.f32.mrb[0].mxu0
        %v4854 = vadd.f32 0.0, %v4853
        %v4855 = vpop.f32.mrb[0].mxu0
        %4856 = vmatprep.mubr.f32.mxu0 0.0
        %4857 = vmatmul.mubr.f32.gmra.mrb[0].mxu0 %v4700
        %v4858 = vpop.f32.mrb[0].mxu0
        %v4859 = vadd.f32 0.0, %v4858
        %v4860 = vpop.f32.mrb[0].mxu0
        %4861 = vmatprep.mubr.f32.mxu0 0.0
        %4862 = vmatmul.mubr.f32.gmra.mrb[0].mxu0 %v4701
        %v4863 = vpop.f32.mrb[0].mxu0
        %v4864 = vadd.f32 0.0, %v4863
        %v4865 = vpop.f32.mrb[0].mxu0
        %4866 = vmatprep.mubr.f32.mxu0 0.0
        %4867 = vmatmul.mubr.f32.gmra.mrb[0].mxu0 %v4702
        %v4868 = vpop.f32.mrb[0].mxu0
        %v4869 = vadd.f32 0.0, %v4868
        %v4870 = vpop.f32.mrb[0].mxu0
        %4871 = vmatprep.mubr.f32.mxu0 0.0
        %4872 = vmatmul.mubr.f32.gmra.mrb[0].mxu0 %v4703
        %v4873 = vpop.f32.mrb[0].mxu0
        %v4874 = vadd.f32 0.0, %v4873
        %v4875 = vpop.f32.mrb[0].mxu0
        %4876 = vmatprep.mubr.f32.mxu0 0.0
        %4877 = vmatmul.mubr.f32.gmra.mrb[0].mxu0 %v4704
        %v4878 = vpop.f32.mrb[0].mxu0
        %v4879 = vadd.f32 0.0, %v4878
        %v4880 = vpop.f32.mrb[0].mxu0
        %4881 = vmatprep.mubr.f32.mxu0 0.0
        %4882 = vmatmul.mubr.f32.gmra.mrb[0].mxu0 %v4705
        %v4883 = vpop.f32.mrb[0].mxu0
        %v4884 = vadd.f32 0.0, %v4883
        %v4885 = vpop.f32.mrb[0].mxu0
        %4886 = vmatprep.mubr.f32.mxu0 0.0
        %4887 = vmatmul.mubr.f32.gmra.mrb[0].mxu0 %v4706
        %v4888 = vpop.f32.mrb[0].mxu0
        %v4889 = vadd.f32 0.0, %v4888
        %v4890 = vpop.f32.mrb[0].mxu0
        %4891 = vmatprep.mubr.f32.mxu0 0.0
        %4892 = vmatmul.mubr.f32.gmra.mrb[0].mxu0 %v4707
        %v4893 = vpop.f32.mrb[0].mxu0
        %v4894 = vadd.f32 0.0, %v4893
        %v4895 = vpop.f32.mrb[0].mxu0
        %4896 = vmatprep.mubr.f32.mxu0 0.0
        %4897 = vmatmul.mubr.f32.gmra.mrb[0].mxu0 %v4708
        %v4898 = vpop.f32.mrb[0].mxu0
        %v4899 = vadd.f32 0.0, %v4898
        %v4900 = vpop.f32.mrb[0].mxu0
        %4901 = vmatprep.mubr.f32.mxu0 0.0
        %4902 = vmatmul.mubr.f32.gmra.mrb[0].mxu0 %v4709
        %v4903 = vpop.f32.mrb[0].mxu0
        %v4904 = vadd.f32 0.0, %v4903
        %v4905 = vpop.f32.mrb[0].mxu0
        %4906 = vmatprep.mubr.f32.mxu0 0.0
        %4907 = vmatmul.mubr.f32.gmra.mrb[0].mxu0 %v4710
        %v4908 = vpop.f32.mrb[0].mxu0
        %v4909 = vadd.f32 0.0, %v4908
        %v4910 = vpop.f32.mrb[0].mxu0
        %4911 = vmatprep.mubr.f32.mxu0 0.0
        %4912 = vmatmul.mubr.f32.gmra.mrb[0].mxu0 %v4711
        %v4913 = vpop.f32.mrb[0].mxu0
        %v4914 = vadd.f32 0.0, %v4913
        %v4915 = vpop.f32.mrb[0].mxu0
        %4916 = vmatprep.mubr.f32.mxu0 0.0
        %4917 = vmatmul.mubr.f32.gmra.mrb[0].mxu0 %v4712
        %v4918 = vpop.f32.mrb[0].mxu0
        %v4919 = vadd.f32 0.0, %v4918
        %v4920 = vpop.f32.mrb[0].mxu0
        %4921 = vmatprep.mubr.f32.mxu0 0.0
        %4922 = vmatmul.mubr.f32.gmra.mrb[0].mxu0 %v4713
        %v4923 = vpop.f32.mrb[0].mxu0
        %v4924 = vadd.f32 0.0, %v4923
        %v4925 = vpop.f32.mrb[0].mxu0
        %4926 = vmatprep.mubr.f32.mxu0 0.0
        %4927 = vmatmul.mubr.f32.gmra.mrb[0].mxu0 %v4714
        %v4928 = vpop.f32.mrb[0].mxu0
        %v4929 = vadd.f32 0.0, %v4928
        %v4930 = vpop.f32.mrb[0].mxu0
        %4931 = vmatprep.mubr.f32.mxu0 0.0
        %4932 = vmatmul.mubr.f32.gmra.mrb[0].mxu0 %v4715
        %v4933 = vpop.f32.mrb[0].mxu0
        %v4934 = vadd.f32 0.0, %v4933
        %v4935 = vpop.f32.mrb[0].mxu0
        %4936 = vmatprep.mubr.f32.mxu0 0.0
        %4937 = vmatmul.mubr.f32.gmra.mrb[0].mxu0 %v4716
        %v4938 = vpop.f32.mrb[0].mxu0
        %v4939 = vadd.f32 0.0, %v4938
        %v4940 = vpop.f32.mrb[0].mxu0
        %4941 = vmatprep.mubr.f32.mxu0 0.0
        %4942 = vmatmul.mubr.f32.gmra.mrb[0].mxu0 %v4717
        %v4943 = vpop.f32.mrb[0].mxu0
        %v4944 = vadd.f32 0.0, %v4943
        %v4945 = vpop.f32.mrb[0].mxu0
        %4946 = vmatprep.mubr.f32.mxu0 0.0
        %4947 = vmatmul.mubr.f32.gmra.mrb[0].mxu0 %v4718
        %v4948 = vpop.f32.mrb[0].mxu0
        %v4949 = vadd.f32 0.0, %v4948
        %v4950 = vpop.f32.mrb[0].mxu0
        %4951 = vmatprep.mubr.f32.mxu0 0.0
        %4952 = vmatmul.mubr.f32.gmra.mrb[0].mxu0 %v4719
        %v4953 = vpop.f32.mrb[0].mxu0
        %v4954 = vadd.f32 0.0, %v4953
        %v4955 = vpop.f32.mrb[0].mxu0
        %4956 = vmatprep.mubr.f32.mxu0 0.0
        %4957 = vmatmul.mubr.f32.gmra.mrb[0].mxu0 %v4720
        %v4958 = vpop.f32.mrb[0].mxu0
        %v4959 = vadd.f32 0.0, %v4958
        %v4960 = vpop.f32.mrb[0].mxu0
        %4961 = vdwg.mxu0
        %v4962 = vadd.f32 %v4657, %v4804
        %v4963 = vadd.f32 %v4658, %v4809
        %v4964 = vadd.f32 %v4659, %v4814
        %v4965 = vadd.f32 %v4660, %v4819
        %v4966 = vadd.f32 %v4661, %v4824
        %v4967 = vadd.f32 %v4662, %v4829
        %v4968 = vadd.f32 %v4663, %v4834
        %v4969 = vadd.f32 %v4664, %v4839
        %v4970 = vadd.f32 %v4665, %v4844
        %v4971 = vadd.f32 %v4666, %v4849
        %v4972 = vadd.f32 %v4667, %v4854
        %v4973 = vadd.f32 %v4668, %v4859
        %v4974 = vadd.f32 %v4669, %v4864
        %v4975 = vadd.f32 %v4670, %v4869
        %v4976 = vadd.f32 %v4671, %v4874
        %v4977 = vadd.f32 %v4672, %v4879
        %v4978 = vadd.f32 %v4673, %v4884
        %v4979 = vadd.f32 %v4674, %v4889
        %v4980 = vadd.f32 %v4675, %v4894
        %v4981 = vadd.f32 %v4676, %v4899
        %v4982 = vadd.f32 %v4677, %v4904
        %v4983 = vadd.f32 %v4678, %v4909
        %v4984 = vadd.f32 %v4679, %v4914
        %v4985 = vadd.f32 %v4680, %v4919
        %v4986 = vadd.f32 %v4681, %v4924
        %v4987 = vadd.f32 %v4682, %v4929
        %v4988 = vadd.f32 %v4683, %v4934
        %v4989 = vadd.f32 %v4684, %v4939
        %v4990 = vadd.f32 %v4685, %v4944
        %v4991 = vadd.f32 %v4686, %v4949
        %v4992 = vadd.f32 %v4687, %v4954
        %v4993 = vadd.f32 %v4688, %v4959
        %v4994 = vld [vmem:[%s372 + $0x2] sm:$0xff]
        %v4995 = vld [vmem:[%s372 + $0xa] sm:$0xff]
        %v4996 = vld [vmem:[%s372 + $0x1a] sm:$0xff]
        %v4997 = vld [vmem:[%s372 + $0x22] sm:$0xff]
        %v4998 = vld [vmem:[%s372 + $0x32] sm:$0xff]
        %v4999 = vld [vmem:[%s372 + $0x3a] sm:$0xff]
        %v5000 = vld [vmem:[%s372 + $0x4a] sm:$0xff]
        %v5001 = vld [vmem:[%s372 + $0x52] sm:$0xff]
        %v5002 = vld [vmem:[%s372 + $0x62] sm:$0xff]
        %v5003 = vld [vmem:[%s372 + $0x6a] sm:$0xff]
        %v5004 = vld [vmem:[%s372 + $0x7a] sm:$0xff]
        %v5005 = vld [vmem:[%s372 + $0x82] sm:$0xff]
        %v5006 = vld [vmem:[%s372 + $0x92] sm:$0xff]
        %v5007 = vld [vmem:[%s372 + $0x9a] sm:$0xff]
        %v5008 = vld [vmem:[%s372 + $0xaa] sm:$0xff]
        %v5009 = vld [vmem:[%s372 + $0xb2] sm:$0xff]
        %v5010 = vld [vmem:[%s372 + $0xc2] sm:$0xff]
        %v5011 = vld [vmem:[%s372 + $0xca] sm:$0xff]
        %v5012 = vld [vmem:[%s372 + $0xda] sm:$0xff]
        %v5013 = vld [vmem:[%s372 + $0xe2] sm:$0xff]
        %v5014 = vld [vmem:[%s372 + $0xf2] sm:$0xff]
        %v5015 = vld [vmem:[%s372 + $0xfa] sm:$0xff]
        %v5016 = vld [vmem:[%s372 + $0x10a] sm:$0xff]
        %v5017 = vld [vmem:[%s372 + $0x112] sm:$0xff]
        %v5018 = vld [vmem:[%s372 + $0x122] sm:$0xff]
        %v5019 = vld [vmem:[%s372 + $0x12a] sm:$0xff]
        %v5020 = vld [vmem:[%s372 + $0x13a] sm:$0xff]
        %v5021 = vld [vmem:[%s372 + $0x142] sm:$0xff]
        %v5022 = vld [vmem:[%s372 + $0x152] sm:$0xff]
        %v5023 = vld [vmem:[%s372 + $0x15a] sm:$0xff]
        %v5024 = vld [vmem:[%s372 + $0x16a] sm:$0xff]
        %v5025 = vld [vmem:[%s372 + $0x172] sm:$0xff]
        %v5026 = vld [vmem:[%s2199] sm:$0xff]
        %v5027 = vld [vmem:[%s2199 + $0x8] sm:$0xff]
        %v5028 = vld [vmem:[%s2199 + $0x10] sm:$0xff]
        %v5029 = vld [vmem:[%s2199 + $0x18] sm:$0xff]
        %v5030 = vld [vmem:[%s2199 + $0x20] sm:$0xff]
        %v5031 = vld [vmem:[%s2199 + $0x28] sm:$0xff]
        %v5032 = vld [vmem:[%s2199 + $0x30] sm:$0xff]
        %v5033 = vld [vmem:[%s2199 + $0x38] sm:$0xff]
        %v5034 = vld [vmem:[%s2199 + $0x40] sm:$0xff]
        %v5035 = vld [vmem:[%s2199 + $0x48] sm:$0xff]
        %v5036 = vld [vmem:[%s2199 + $0x50] sm:$0xff]
        %v5037 = vld [vmem:[%s2199 + $0x58] sm:$0xff]
        %v5038 = vld [vmem:[%s2199 + $0x60] sm:$0xff]
        %v5039 = vld [vmem:[%s2199 + $0x68] sm:$0xff]
        %v5040 = vld [vmem:[%s2199 + $0x70] sm:$0xff]
        %v5041 = vld [vmem:[%s2199 + $0x78] sm:$0xff]
        %5042 = vmatprep.subr.mxu0 0.0
        %5043 = vmatpush1.msra.mxu0 %v5026
        %5044 = vmatprep.subr.mxu0 0.0
        %5045 = vmatpush1.msra.mxu0 %v5027
        %5046 = vmatprep.subr.mxu0 0.0
        %5047 = vmatpush1.msra.mxu0 %v5028
        %5048 = vmatprep.subr.mxu0 0.0
        %5049 = vmatpush1.msra.mxu0 %v5029
        %5050 = vmatprep.subr.mxu0 0.0
        %5051 = vmatpush1.msra.mxu0 %v5030
        %5052 = vmatprep.subr.mxu0 0.0
        %5053 = vmatpush1.msra.mxu0 %v5031
        %5054 = vmatprep.subr.mxu0 0.0
        %5055 = vmatpush1.msra.mxu0 %v5032
        %5056 = vmatprep.subr.mxu0 0.0
        %5057 = vmatpush1.msra.mxu0 %v5033
        %5058 = vmatprep.subr.mxu0 0.0
        %5059 = vmatpush1.msra.mxu0 %v5034
        %5060 = vmatprep.subr.mxu0 0.0
        %5061 = vmatpush1.msra.mxu0 %v5035
        %5062 = vmatprep.subr.mxu0 0.0
        %5063 = vmatpush1.msra.mxu0 %v5036
        %5064 = vmatprep.subr.mxu0 0.0
        %5065 = vmatpush1.msra.mxu0 %v5037
        %5066 = vmatprep.subr.mxu0 0.0
        %5067 = vmatpush1.msra.mxu0 %v5038
        %5068 = vmatprep.subr.mxu0 0.0
        %5069 = vmatpush1.msra.mxu0 %v5039
        %5070 = vmatprep.subr.mxu0 0.0
        %5071 = vmatpush1.msra.mxu0 %v5040
        %5072 = vmatprep.subr.mxu0 0.0
        %5073 = vmatpush1.msra.mxu0 %v5041
        %5074 = vmatprep.subr.mxu0 0.0
        %5075 = vmatpush1.msra.mxu0 0.0
        %5076 = vmatprep.subr.mxu0 0.0
        %5077 = vmatpush1.msra.mxu0 0.0
        %5078 = vmatprep.subr.mxu0 0.0
        %5079 = vmatpush1.msra.mxu0 0.0
        %5080 = vmatprep.subr.mxu0 0.0
        %5081 = vmatpush1.msra.mxu0 0.0
        %5082 = vmatprep.subr.mxu0 0.0
        %5083 = vmatpush1.msra.mxu0 0.0
        %5084 = vmatprep.subr.mxu0 0.0
        %5085 = vmatpush1.msra.mxu0 0.0
        %5086 = vmatprep.subr.mxu0 0.0
        %5087 = vmatpush1.msra.mxu0 0.0
        %5088 = vmatprep.subr.mxu0 0.0
        %5089 = vmatpush1.msra.mxu0 0.0
        %5090 = vmatprep.subr.mxu0 0.0
        %5091 = vmatpush1.msra.mxu0 0.0
        %5092 = vmatprep.subr.mxu0 0.0
        %5093 = vmatpush1.msra.mxu0 0.0
        %5094 = vmatprep.subr.mxu0 0.0
        %5095 = vmatpush1.msra.mxu0 0.0
        %5096 = vmatprep.subr.mxu0 0.0
        %5097 = vmatpush1.msra.mxu0 0.0
        %5098 = vmatprep.subr.mxu0 0.0
        %5099 = vmatpush1.msra.mxu0 0.0
        %5100 = vmatprep.subr.mxu0 0.0
        %5101 = vmatpush1.msra.mxu0 0.0
        %5102 = vmatprep.subr.mxu0 0.0
        %5103 = vmatpush1.msra.mxu0 0.0
        %5104 = vmatprep.subr.mxu0 0.0
        %5105 = vmatpush1.msra.mxu0 0.0
        %5106 = vmatprep.mubr.f32.mxu0 0.0
        %5107 = vmatmul.mubr.f32.gmra.mrb[0].mxu0 %v4994
        %v5108 = vpop.f32.mrb[0].mxu0
        %v5109 = vadd.f32 0.0, %v5108
        %v5110 = vpop.f32.mrb[0].mxu0
        %5111 = vmatprep.mubr.f32.mxu0 0.0
        %5112 = vmatmul.mubr.f32.gmra.mrb[0].mxu0 %v4995
        %v5113 = vpop.f32.mrb[0].mxu0
        %v5114 = vadd.f32 0.0, %v5113
        %v5115 = vpop.f32.mrb[0].mxu0
        %5116 = vmatprep.mubr.f32.mxu0 0.0
        %5117 = vmatmul.mubr.f32.gmra.mrb[0].mxu0 %v4996
        %v5118 = vpop.f32.mrb[0].mxu0
        %v5119 = vadd.f32 0.0, %v5118
        %v5120 = vpop.f32.mrb[0].mxu0
        %5121 = vmatprep.mubr.f32.mxu0 0.0
        %5122 = vmatmul.mubr.f32.gmra.mrb[0].mxu0 %v4997
        %v5123 = vpop.f32.mrb[0].mxu0
        %v5124 = vadd.f32 0.0, %v5123
        %v5125 = vpop.f32.mrb[0].mxu0
        %5126 = vmatprep.mubr.f32.mxu0 0.0
        %5127 = vmatmul.mubr.f32.gmra.mrb[0].mxu0 %v4998
        %v5128 = vpop.f32.mrb[0].mxu0
        %v5129 = vadd.f32 0.0, %v5128
        %v5130 = vpop.f32.mrb[0].mxu0
        %5131 = vmatprep.mubr.f32.mxu0 0.0
        %5132 = vmatmul.mubr.f32.gmra.mrb[0].mxu0 %v4999
        %v5133 = vpop.f32.mrb[0].mxu0
        %v5134 = vadd.f32 0.0, %v5133
        %v5135 = vpop.f32.mrb[0].mxu0
        %5136 = vmatprep.mubr.f32.mxu0 0.0
        %5137 = vmatmul.mubr.f32.gmra.mrb[0].mxu0 %v5000
        %v5138 = vpop.f32.mrb[0].mxu0
        %v5139 = vadd.f32 0.0, %v5138
        %v5140 = vpop.f32.mrb[0].mxu0
        %5141 = vmatprep.mubr.f32.mxu0 0.0
        %5142 = vmatmul.mubr.f32.gmra.mrb[0].mxu0 %v5001
        %v5143 = vpop.f32.mrb[0].mxu0
        %v5144 = vadd.f32 0.0, %v5143
        %v5145 = vpop.f32.mrb[0].mxu0
        %5146 = vmatprep.mubr.f32.mxu0 0.0
        %5147 = vmatmul.mubr.f32.gmra.mrb[0].mxu0 %v5002
        %v5148 = vpop.f32.mrb[0].mxu0
        %v5149 = vadd.f32 0.0, %v5148
        %v5150 = vpop.f32.mrb[0].mxu0
        %5151 = vmatprep.mubr.f32.mxu0 0.0
        %5152 = vmatmul.mubr.f32.gmra.mrb[0].mxu0 %v5003
        %v5153 = vpop.f32.mrb[0].mxu0
        %v5154 = vadd.f32 0.0, %v5153
        %v5155 = vpop.f32.mrb[0].mxu0
        %5156 = vmatprep.mubr.f32.mxu0 0.0
        %5157 = vmatmul.mubr.f32.gmra.mrb[0].mxu0 %v5004
        %v5158 = vpop.f32.mrb[0].mxu0
        %v5159 = vadd.f32 0.0, %v5158
        %v5160 = vpop.f32.mrb[0].mxu0
        %5161 = vmatprep.mubr.f32.mxu0 0.0
        %5162 = vmatmul.mubr.f32.gmra.mrb[0].mxu0 %v5005
        %v5163 = vpop.f32.mrb[0].mxu0
        %v5164 = vadd.f32 0.0, %v5163
        %v5165 = vpop.f32.mrb[0].mxu0
        %5166 = vmatprep.mubr.f32.mxu0 0.0
        %5167 = vmatmul.mubr.f32.gmra.mrb[0].mxu0 %v5006
        %v5168 = vpop.f32.mrb[0].mxu0
        %v5169 = vadd.f32 0.0, %v5168
        %v5170 = vpop.f32.mrb[0].mxu0
        %5171 = vmatprep.mubr.f32.mxu0 0.0
        %5172 = vmatmul.mubr.f32.gmra.mrb[0].mxu0 %v5007
        %v5173 = vpop.f32.mrb[0].mxu0
        %v5174 = vadd.f32 0.0, %v5173
        %v5175 = vpop.f32.mrb[0].mxu0
        %5176 = vmatprep.mubr.f32.mxu0 0.0
        %5177 = vmatmul.mubr.f32.gmra.mrb[0].mxu0 %v5008
        %v5178 = vpop.f32.mrb[0].mxu0
        %v5179 = vadd.f32 0.0, %v5178
        %v5180 = vpop.f32.mrb[0].mxu0
        %5181 = vmatprep.mubr.f32.mxu0 0.0
        %5182 = vmatmul.mubr.f32.gmra.mrb[0].mxu0 %v5009
        %v5183 = vpop.f32.mrb[0].mxu0
        %v5184 = vadd.f32 0.0, %v5183
        %v5185 = vpop.f32.mrb[0].mxu0
        %5186 = vmatprep.mubr.f32.mxu0 0.0
        %5187 = vmatmul.mubr.f32.gmra.mrb[0].mxu0 %v5010
        %v5188 = vpop.f32.mrb[0].mxu0
        %v5189 = vadd.f32 0.0, %v5188
        %v5190 = vpop.f32.mrb[0].mxu0
        %5191 = vmatprep.mubr.f32.mxu0 0.0
        %5192 = vmatmul.mubr.f32.gmra.mrb[0].mxu0 %v5011
        %v5193 = vpop.f32.mrb[0].mxu0
        %v5194 = vadd.f32 0.0, %v5193
        %v5195 = vpop.f32.mrb[0].mxu0
        %5196 = vmatprep.mubr.f32.mxu0 0.0
        %5197 = vmatmul.mubr.f32.gmra.mrb[0].mxu0 %v5012
        %v5198 = vpop.f32.mrb[0].mxu0
        %v5199 = vadd.f32 0.0, %v5198
        %v5200 = vpop.f32.mrb[0].mxu0
        %5201 = vmatprep.mubr.f32.mxu0 0.0
        %5202 = vmatmul.mubr.f32.gmra.mrb[0].mxu0 %v5013
        %v5203 = vpop.f32.mrb[0].mxu0
        %v5204 = vadd.f32 0.0, %v5203
        %v5205 = vpop.f32.mrb[0].mxu0
        %5206 = vmatprep.mubr.f32.mxu0 0.0
        %5207 = vmatmul.mubr.f32.gmra.mrb[0].mxu0 %v5014
        %v5208 = vpop.f32.mrb[0].mxu0
        %v5209 = vadd.f32 0.0, %v5208
        %v5210 = vpop.f32.mrb[0].mxu0
        %5211 = vmatprep.mubr.f32.mxu0 0.0
        %5212 = vmatmul.mubr.f32.gmra.mrb[0].mxu0 %v5015
        %v5213 = vpop.f32.mrb[0].mxu0
        %v5214 = vadd.f32 0.0, %v5213
        %v5215 = vpop.f32.mrb[0].mxu0
        %5216 = vmatprep.mubr.f32.mxu0 0.0
        %5217 = vmatmul.mubr.f32.gmra.mrb[0].mxu0 %v5016
        %v5218 = vpop.f32.mrb[0].mxu0
        %v5219 = vadd.f32 0.0, %v5218
        %v5220 = vpop.f32.mrb[0].mxu0
        %5221 = vmatprep.mubr.f32.mxu0 0.0
        %5222 = vmatmul.mubr.f32.gmra.mrb[0].mxu0 %v5017
        %v5223 = vpop.f32.mrb[0].mxu0
        %v5224 = vadd.f32 0.0, %v5223
        %v5225 = vpop.f32.mrb[0].mxu0
        %5226 = vmatprep.mubr.f32.mxu0 0.0
        %5227 = vmatmul.mubr.f32.gmra.mrb[0].mxu0 %v5018
        %v5228 = vpop.f32.mrb[0].mxu0
        %v5229 = vadd.f32 0.0, %v5228
        %v5230 = vpop.f32.mrb[0].mxu0
        %5231 = vmatprep.mubr.f32.mxu0 0.0
        %5232 = vmatmul.mubr.f32.gmra.mrb[0].mxu0 %v5019
        %v5233 = vpop.f32.mrb[0].mxu0
        %v5234 = vadd.f32 0.0, %v5233
        %v5235 = vpop.f32.mrb[0].mxu0
        %5236 = vmatprep.mubr.f32.mxu0 0.0
        %5237 = vmatmul.mubr.f32.gmra.mrb[0].mxu0 %v5020
        %v5238 = vpop.f32.mrb[0].mxu0
        %v5239 = vadd.f32 0.0, %v5238
        %v5240 = vpop.f32.mrb[0].mxu0
        %5241 = vmatprep.mubr.f32.mxu0 0.0
        %5242 = vmatmul.mubr.f32.gmra.mrb[0].mxu0 %v5021
        %v5243 = vpop.f32.mrb[0].mxu0
        %v5244 = vadd.f32 0.0, %v5243
        %v5245 = vpop.f32.mrb[0].mxu0
        %5246 = vmatprep.mubr.f32.mxu0 0.0
        %5247 = vmatmul.mubr.f32.gmra.mrb[0].mxu0 %v5022
        %v5248 = vpop.f32.mrb[0].mxu0
        %v5249 = vadd.f32 0.0, %v5248
        %v5250 = vpop.f32.mrb[0].mxu0
        %5251 = vmatprep.mubr.f32.mxu0 0.0
        %5252 = vmatmul.mubr.f32.gmra.mrb[0].mxu0 %v5023
        %v5253 = vpop.f32.mrb[0].mxu0
        %v5254 = vadd.f32 0.0, %v5253
        %v5255 = vpop.f32.mrb[0].mxu0
        %5256 = vmatprep.mubr.f32.mxu0 0.0
        %5257 = vmatmul.mubr.f32.gmra.mrb[0].mxu0 %v5024
        %v5258 = vpop.f32.mrb[0].mxu0
        %v5259 = vadd.f32 0.0, %v5258
        %v5260 = vpop.f32.mrb[0].mxu0
        %5261 = vmatprep.mubr.f32.mxu0 0.0
        %5262 = vmatmul.mubr.f32.gmra.mrb[0].mxu0 %v5025
        %v5263 = vpop.f32.mrb[0].mxu0
        %v5264 = vadd.f32 0.0, %v5263
        %v5265 = vpop.f32.mrb[0].mxu0
        %5266 = vdwg.mxu0
        %v5267 = vadd.f32 %v4962, %v5109
        %v5268 = vadd.f32 %v4963, %v5114
        %v5269 = vadd.f32 %v4964, %v5119
        %v5270 = vadd.f32 %v4965, %v5124
        %v5271 = vadd.f32 %v4966, %v5129
        %v5272 = vadd.f32 %v4967, %v5134
        %v5273 = vadd.f32 %v4968, %v5139
        %v5274 = vadd.f32 %v4969, %v5144
        %v5275 = vadd.f32 %v4970, %v5149
        %v5276 = vadd.f32 %v4971, %v5154
        %v5277 = vadd.f32 %v4972, %v5159
        %v5278 = vadd.f32 %v4973, %v5164
        %v5279 = vadd.f32 %v4974, %v5169
        %v5280 = vadd.f32 %v4975, %v5174
        %v5281 = vadd.f32 %v4976, %v5179
        %v5282 = vadd.f32 %v4977, %v5184
        %v5283 = vadd.f32 %v4978, %v5189
        %v5284 = vadd.f32 %v4979, %v5194
        %v5285 = vadd.f32 %v4980, %v5199
        %v5286 = vadd.f32 %v4981, %v5204
        %v5287 = vadd.f32 %v4982, %v5209
        %v5288 = vadd.f32 %v4983, %v5214
        %v5289 = vadd.f32 %v4984, %v5219
        %v5290 = vadd.f32 %v4985, %v5224
        %v5291 = vadd.f32 %v4986, %v5229
        %v5292 = vadd.f32 %v4987, %v5234
        %v5293 = vadd.f32 %v4988, %v5239
        %v5294 = vadd.f32 %v4989, %v5244
        %v5295 = vadd.f32 %v4990, %v5249
        %v5296 = vadd.f32 %v4991, %v5254
        %v5297 = vadd.f32 %v4992, %v5259
        %v5298 = vadd.f32 %v4993, %v5264
        %v5299 = vld [vmem:[%s372 + $0x4] sm:$0xff]
        %v5300 = vld [vmem:[%s372 + $0xc] sm:$0xff]
        %v5301 = vld [vmem:[%s372 + $0x1c] sm:$0xff]
        %v5302 = vld [vmem:[%s372 + $0x24] sm:$0xff]
        %v5303 = vld [vmem:[%s372 + $0x34] sm:$0xff]
        %v5304 = vld [vmem:[%s372 + $0x3c] sm:$0xff]
        %v5305 = vld [vmem:[%s372 + $0x4c] sm:$0xff]
        %v5306 = vld [vmem:[%s372 + $0x54] sm:$0xff]
        %v5307 = vld [vmem:[%s372 + $0x64] sm:$0xff]
        %v5308 = vld [vmem:[%s372 + $0x6c] sm:$0xff]
        %v5309 = vld [vmem:[%s372 + $0x7c] sm:$0xff]
        %v5310 = vld [vmem:[%s372 + $0x84] sm:$0xff]
        %v5311 = vld [vmem:[%s372 + $0x94] sm:$0xff]
        %v5312 = vld [vmem:[%s372 + $0x9c] sm:$0xff]
        %v5313 = vld [vmem:[%s372 + $0xac] sm:$0xff]
        %v5314 = vld [vmem:[%s372 + $0xb4] sm:$0xff]
        %v5315 = vld [vmem:[%s372 + $0xc4] sm:$0xff]
        %v5316 = vld [vmem:[%s372 + $0xcc] sm:$0xff]
        %v5317 = vld [vmem:[%s372 + $0xdc] sm:$0xff]
        %v5318 = vld [vmem:[%s372 + $0xe4] sm:$0xff]
        %v5319 = vld [vmem:[%s372 + $0xf4] sm:$0xff]
        %v5320 = vld [vmem:[%s372 + $0xfc] sm:$0xff]
        %v5321 = vld [vmem:[%s372 + $0x10c] sm:$0xff]
        %v5322 = vld [vmem:[%s372 + $0x114] sm:$0xff]
        %v5323 = vld [vmem:[%s372 + $0x124] sm:$0xff]
        %v5324 = vld [vmem:[%s372 + $0x12c] sm:$0xff]
        %v5325 = vld [vmem:[%s372 + $0x13c] sm:$0xff]
        %v5326 = vld [vmem:[%s372 + $0x144] sm:$0xff]
        %v5327 = vld [vmem:[%s372 + $0x154] sm:$0xff]
        %v5328 = vld [vmem:[%s372 + $0x15c] sm:$0xff]
        %v5329 = vld [vmem:[%s372 + $0x16c] sm:$0xff]
        %v5330 = vld [vmem:[%s372 + $0x174] sm:$0xff]
        %v5331 = vld [vmem:[%s2505] sm:$0xff]
        %v5332 = vld [vmem:[%s2505 + $0x8] sm:$0xff]
        %v5333 = vld [vmem:[%s2505 + $0x10] sm:$0xff]
        %v5334 = vld [vmem:[%s2505 + $0x18] sm:$0xff]
        %v5335 = vld [vmem:[%s2505 + $0x20] sm:$0xff]
        %v5336 = vld [vmem:[%s2505 + $0x28] sm:$0xff]
        %v5337 = vld [vmem:[%s2505 + $0x30] sm:$0xff]
        %v5338 = vld [vmem:[%s2505 + $0x38] sm:$0xff]
        %v5339 = vld [vmem:[%s2505 + $0x40] sm:$0xff]
        %v5340 = vld [vmem:[%s2505 + $0x48] sm:$0xff]
        %v5341 = vld [vmem:[%s2505 + $0x50] sm:$0xff]
        %v5342 = vld [vmem:[%s2505 + $0x58] sm:$0xff]
        %v5343 = vld [vmem:[%s2505 + $0x60] sm:$0xff]
        %v5344 = vld [vmem:[%s2505 + $0x68] sm:$0xff]
        %v5345 = vld [vmem:[%s2505 + $0x70] sm:$0xff]
        %v5346 = vld [vmem:[%s2505 + $0x78] sm:$0xff]
        %5347 = vmatprep.subr.mxu0 0.0
        %5348 = vmatpush1.msra.mxu0 %v5331
        %5349 = vmatprep.subr.mxu0 0.0
        %5350 = vmatpush1.msra.mxu0 %v5332
        %5351 = vmatprep.subr.mxu0 0.0
        %5352 = vmatpush1.msra.mxu0 %v5333
        %5353 = vmatprep.subr.mxu0 0.0
        %5354 = vmatpush1.msra.mxu0 %v5334
        %5355 = vmatprep.subr.mxu0 0.0
        %5356 = vmatpush1.msra.mxu0 %v5335
        %5357 = vmatprep.subr.mxu0 0.0
        %5358 = vmatpush1.msra.mxu0 %v5336
        %5359 = vmatprep.subr.mxu0 0.0
        %5360 = vmatpush1.msra.mxu0 %v5337
        %5361 = vmatprep.subr.mxu0 0.0
        %5362 = vmatpush1.msra.mxu0 %v5338
        %5363 = vmatprep.subr.mxu0 0.0
        %5364 = vmatpush1.msra.mxu0 %v5339
        %5365 = vmatprep.subr.mxu0 0.0
        %5366 = vmatpush1.msra.mxu0 %v5340
        %5367 = vmatprep.subr.mxu0 0.0
        %5368 = vmatpush1.msra.mxu0 %v5341
        %5369 = vmatprep.subr.mxu0 0.0
        %5370 = vmatpush1.msra.mxu0 %v5342
        %5371 = vmatprep.subr.mxu0 0.0
        %5372 = vmatpush1.msra.mxu0 %v5343
        %5373 = vmatprep.subr.mxu0 0.0
        %5374 = vmatpush1.msra.mxu0 %v5344
        %5375 = vmatprep.subr.mxu0 0.0
        %5376 = vmatpush1.msra.mxu0 %v5345
        %5377 = vmatprep.subr.mxu0 0.0
        %5378 = vmatpush1.msra.mxu0 %v5346
        %5379 = vmatprep.subr.mxu0 0.0
        %5380 = vmatpush1.msra.mxu0 0.0
        %5381 = vmatprep.subr.mxu0 0.0
        %5382 = vmatpush1.msra.mxu0 0.0
        %5383 = vmatprep.subr.mxu0 0.0
        %5384 = vmatpush1.msra.mxu0 0.0
        %5385 = vmatprep.subr.mxu0 0.0
        %5386 = vmatpush1.msra.mxu0 0.0
        %5387 = vmatprep.subr.mxu0 0.0
        %5388 = vmatpush1.msra.mxu0 0.0
        %5389 = vmatprep.subr.mxu0 0.0
        %5390 = vmatpush1.msra.mxu0 0.0
        %5391 = vmatprep.subr.mxu0 0.0
        %5392 = vmatpush1.msra.mxu0 0.0
        %5393 = vmatprep.subr.mxu0 0.0
        %5394 = vmatpush1.msra.mxu0 0.0
        %5395 = vmatprep.subr.mxu0 0.0
        %5396 = vmatpush1.msra.mxu0 0.0
        %5397 = vmatprep.subr.mxu0 0.0
        %5398 = vmatpush1.msra.mxu0 0.0
        %5399 = vmatprep.subr.mxu0 0.0
        %5400 = vmatpush1.msra.mxu0 0.0
        %5401 = vmatprep.subr.mxu0 0.0
        %5402 = vmatpush1.msra.mxu0 0.0
        %5403 = vmatprep.subr.mxu0 0.0
        %5404 = vmatpush1.msra.mxu0 0.0
        %5405 = vmatprep.subr.mxu0 0.0
        %5406 = vmatpush1.msra.mxu0 0.0
        %5407 = vmatprep.subr.mxu0 0.0
        %5408 = vmatpush1.msra.mxu0 0.0
        %5409 = vmatprep.subr.mxu0 0.0
        %5410 = vmatpush1.msra.mxu0 0.0
        %5411 = vmatprep.mubr.f32.mxu0 0.0
        %5412 = vmatmul.mubr.f32.gmra.mrb[0].mxu0 %v5299
        %v5413 = vpop.f32.mrb[0].mxu0
        %v5414 = vadd.f32 0.0, %v5413
        %v5415 = vpop.f32.mrb[0].mxu0
        %5416 = vmatprep.mubr.f32.mxu0 0.0
        %5417 = vmatmul.mubr.f32.gmra.mrb[0].mxu0 %v5300
        %v5418 = vpop.f32.mrb[0].mxu0
        %v5419 = vadd.f32 0.0, %v5418
        %v5420 = vpop.f32.mrb[0].mxu0
        %5421 = vmatprep.mubr.f32.mxu0 0.0
        %5422 = vmatmul.mubr.f32.gmra.mrb[0].mxu0 %v5301
        %v5423 = vpop.f32.mrb[0].mxu0
        %v5424 = vadd.f32 0.0, %v5423
        %v5425 = vpop.f32.mrb[0].mxu0
        %5426 = vmatprep.mubr.f32.mxu0 0.0
        %5427 = vmatmul.mubr.f32.gmra.mrb[0].mxu0 %v5302
        %v5428 = vpop.f32.mrb[0].mxu0
        %v5429 = vadd.f32 0.0, %v5428
        %v5430 = vpop.f32.mrb[0].mxu0
        %5431 = vmatprep.mubr.f32.mxu0 0.0
        %5432 = vmatmul.mubr.f32.gmra.mrb[0].mxu0 %v5303
        %v5433 = vpop.f32.mrb[0].mxu0
        %v5434 = vadd.f32 0.0, %v5433
        %v5435 = vpop.f32.mrb[0].mxu0
        %5436 = vmatprep.mubr.f32.mxu0 0.0
        %5437 = vmatmul.mubr.f32.gmra.mrb[0].mxu0 %v5304
        %v5438 = vpop.f32.mrb[0].mxu0
        %v5439 = vadd.f32 0.0, %v5438
        %v5440 = vpop.f32.mrb[0].mxu0
        %5441 = vmatprep.mubr.f32.mxu0 0.0
        %5442 = vmatmul.mubr.f32.gmra.mrb[0].mxu0 %v5305
        %v5443 = vpop.f32.mrb[0].mxu0
        %v5444 = vadd.f32 0.0, %v5443
        %v5445 = vpop.f32.mrb[0].mxu0
        %5446 = vmatprep.mubr.f32.mxu0 0.0
        %5447 = vmatmul.mubr.f32.gmra.mrb[0].mxu0 %v5306
        %v5448 = vpop.f32.mrb[0].mxu0
        %v5449 = vadd.f32 0.0, %v5448
        %v5450 = vpop.f32.mrb[0].mxu0
        %5451 = vmatprep.mubr.f32.mxu0 0.0
        %5452 = vmatmul.mubr.f32.gmra.mrb[0].mxu0 %v5307
        %v5453 = vpop.f32.mrb[0].mxu0
        %v5454 = vadd.f32 0.0, %v5453
        %v5455 = vpop.f32.mrb[0].mxu0
        %5456 = vmatprep.mubr.f32.mxu0 0.0
        %5457 = vmatmul.mubr.f32.gmra.mrb[0].mxu0 %v5308
        %v5458 = vpop.f32.mrb[0].mxu0
        %v5459 = vadd.f32 0.0, %v5458
        %v5460 = vpop.f32.mrb[0].mxu0
        %5461 = vmatprep.mubr.f32.mxu0 0.0
        %5462 = vmatmul.mubr.f32.gmra.mrb[0].mxu0 %v5309
        %v5463 = vpop.f32.mrb[0].mxu0
        %v5464 = vadd.f32 0.0, %v5463
        %v5465 = vpop.f32.mrb[0].mxu0
        %5466 = vmatprep.mubr.f32.mxu0 0.0
        %5467 = vmatmul.mubr.f32.gmra.mrb[0].mxu0 %v5310
        %v5468 = vpop.f32.mrb[0].mxu0
        %v5469 = vadd.f32 0.0, %v5468
        %v5470 = vpop.f32.mrb[0].mxu0
        %5471 = vmatprep.mubr.f32.mxu0 0.0
        %5472 = vmatmul.mubr.f32.gmra.mrb[0].mxu0 %v5311
        %v5473 = vpop.f32.mrb[0].mxu0
        %v5474 = vadd.f32 0.0, %v5473
        %v5475 = vpop.f32.mrb[0].mxu0
        %5476 = vmatprep.mubr.f32.mxu0 0.0
        %5477 = vmatmul.mubr.f32.gmra.mrb[0].mxu0 %v5312
        %v5478 = vpop.f32.mrb[0].mxu0
        %v5479 = vadd.f32 0.0, %v5478
        %v5480 = vpop.f32.mrb[0].mxu0
        %5481 = vmatprep.mubr.f32.mxu0 0.0
        %5482 = vmatmul.mubr.f32.gmra.mrb[0].mxu0 %v5313
        %v5483 = vpop.f32.mrb[0].mxu0
        %v5484 = vadd.f32 0.0, %v5483
        %v5485 = vpop.f32.mrb[0].mxu0
        %5486 = vmatprep.mubr.f32.mxu0 0.0
        %5487 = vmatmul.mubr.f32.gmra.mrb[0].mxu0 %v5314
        %v5488 = vpop.f32.mrb[0].mxu0
        %v5489 = vadd.f32 0.0, %v5488
        %v5490 = vpop.f32.mrb[0].mxu0
        %5491 = vmatprep.mubr.f32.mxu0 0.0
        %5492 = vmatmul.mubr.f32.gmra.mrb[0].mxu0 %v5315
        %v5493 = vpop.f32.mrb[0].mxu0
        %v5494 = vadd.f32 0.0, %v5493
        %v5495 = vpop.f32.mrb[0].mxu0
        %5496 = vmatprep.mubr.f32.mxu0 0.0
        %5497 = vmatmul.mubr.f32.gmra.mrb[0].mxu0 %v5316
        %v5498 = vpop.f32.mrb[0].mxu0
        %v5499 = vadd.f32 0.0, %v5498
        %v5500 = vpop.f32.mrb[0].mxu0
        %5501 = vmatprep.mubr.f32.mxu0 0.0
        %5502 = vmatmul.mubr.f32.gmra.mrb[0].mxu0 %v5317
        %v5503 = vpop.f32.mrb[0].mxu0
        %v5504 = vadd.f32 0.0, %v5503
        %v5505 = vpop.f32.mrb[0].mxu0
        %5506 = vmatprep.mubr.f32.mxu0 0.0
        %5507 = vmatmul.mubr.f32.gmra.mrb[0].mxu0 %v5318
        %v5508 = vpop.f32.mrb[0].mxu0
        %v5509 = vadd.f32 0.0, %v5508
        %v5510 = vpop.f32.mrb[0].mxu0
        %5511 = vmatprep.mubr.f32.mxu0 0.0
        %5512 = vmatmul.mubr.f32.gmra.mrb[0].mxu0 %v5319
        %v5513 = vpop.f32.mrb[0].mxu0
        %v5514 = vadd.f32 0.0, %v5513
        %v5515 = vpop.f32.mrb[0].mxu0
        %5516 = vmatprep.mubr.f32.mxu0 0.0
        %5517 = vmatmul.mubr.f32.gmra.mrb[0].mxu0 %v5320
        %v5518 = vpop.f32.mrb[0].mxu0
        %v5519 = vadd.f32 0.0, %v5518
        %v5520 = vpop.f32.mrb[0].mxu0
        %5521 = vmatprep.mubr.f32.mxu0 0.0
        %5522 = vmatmul.mubr.f32.gmra.mrb[0].mxu0 %v5321
        %v5523 = vpop.f32.mrb[0].mxu0
        %v5524 = vadd.f32 0.0, %v5523
        %v5525 = vpop.f32.mrb[0].mxu0
        %5526 = vmatprep.mubr.f32.mxu0 0.0
        %5527 = vmatmul.mubr.f32.gmra.mrb[0].mxu0 %v5322
        %v5528 = vpop.f32.mrb[0].mxu0
        %v5529 = vadd.f32 0.0, %v5528
        %v5530 = vpop.f32.mrb[0].mxu0
        %5531 = vmatprep.mubr.f32.mxu0 0.0
        %5532 = vmatmul.mubr.f32.gmra.mrb[0].mxu0 %v5323
        %v5533 = vpop.f32.mrb[0].mxu0
        %v5534 = vadd.f32 0.0, %v5533
        %v5535 = vpop.f32.mrb[0].mxu0
        %5536 = vmatprep.mubr.f32.mxu0 0.0
        %5537 = vmatmul.mubr.f32.gmra.mrb[0].mxu0 %v5324
        %v5538 = vpop.f32.mrb[0].mxu0
        %v5539 = vadd.f32 0.0, %v5538
        %v5540 = vpop.f32.mrb[0].mxu0
        %5541 = vmatprep.mubr.f32.mxu0 0.0
        %5542 = vmatmul.mubr.f32.gmra.mrb[0].mxu0 %v5325
        %v5543 = vpop.f32.mrb[0].mxu0
        %v5544 = vadd.f32 0.0, %v5543
        %v5545 = vpop.f32.mrb[0].mxu0
        %5546 = vmatprep.mubr.f32.mxu0 0.0
        %5547 = vmatmul.mubr.f32.gmra.mrb[0].mxu0 %v5326
        %v5548 = vpop.f32.mrb[0].mxu0
        %v5549 = vadd.f32 0.0, %v5548
        %v5550 = vpop.f32.mrb[0].mxu0
        %5551 = vmatprep.mubr.f32.mxu0 0.0
        %5552 = vmatmul.mubr.f32.gmra.mrb[0].mxu0 %v5327
        %v5553 = vpop.f32.mrb[0].mxu0
        %v5554 = vadd.f32 0.0, %v5553
        %v5555 = vpop.f32.mrb[0].mxu0
        %5556 = vmatprep.mubr.f32.mxu0 0.0
        %5557 = vmatmul.mubr.f32.gmra.mrb[0].mxu0 %v5328
        %v5558 = vpop.f32.mrb[0].mxu0
        %v5559 = vadd.f32 0.0, %v5558
        %v5560 = vpop.f32.mrb[0].mxu0
        %5561 = vmatprep.mubr.f32.mxu0 0.0
        %5562 = vmatmul.mubr.f32.gmra.mrb[0].mxu0 %v5329
        %v5563 = vpop.f32.mrb[0].mxu0
        %v5564 = vadd.f32 0.0, %v5563
        %v5565 = vpop.f32.mrb[0].mxu0
        %5566 = vmatprep.mubr.f32.mxu0 0.0
        %5567 = vmatmul.mubr.f32.gmra.mrb[0].mxu0 %v5330
        %v5568 = vpop.f32.mrb[0].mxu0
        %v5569 = vadd.f32 0.0, %v5568
        %v5570 = vpop.f32.mrb[0].mxu0
        %5571 = vdwg.mxu0
        %v5572 = vadd.f32 %v5267, %v5414
        %v5573 = vadd.f32 %v5268, %v5419
        %v5574 = vadd.f32 %v5269, %v5424
        %v5575 = vadd.f32 %v5270, %v5429
        %v5576 = vadd.f32 %v5271, %v5434
        %v5577 = vadd.f32 %v5272, %v5439
        %v5578 = vadd.f32 %v5273, %v5444
        %v5579 = vadd.f32 %v5274, %v5449
        %v5580 = vadd.f32 %v5275, %v5454
        %v5581 = vadd.f32 %v5276, %v5459
        %v5582 = vadd.f32 %v5277, %v5464
        %v5583 = vadd.f32 %v5278, %v5469
        %v5584 = vadd.f32 %v5279, %v5474
        %v5585 = vadd.f32 %v5280, %v5479
        %v5586 = vadd.f32 %v5281, %v5484
        %v5587 = vadd.f32 %v5282, %v5489
        %v5588 = vadd.f32 %v5283, %v5494
        %v5589 = vadd.f32 %v5284, %v5499
        %v5590 = vadd.f32 %v5285, %v5504
        %v5591 = vadd.f32 %v5286, %v5509
        %v5592 = vadd.f32 %v5287, %v5514
        %v5593 = vadd.f32 %v5288, %v5519
        %v5594 = vadd.f32 %v5289, %v5524
        %v5595 = vadd.f32 %v5290, %v5529
        %v5596 = vadd.f32 %v5291, %v5534
        %v5597 = vadd.f32 %v5292, %v5539
        %v5598 = vadd.f32 %v5293, %v5544
        %v5599 = vadd.f32 %v5294, %v5549
        %v5600 = vadd.f32 %v5295, %v5554
        %v5601 = vadd.f32 %v5296, %v5559
        %v5602 = vadd.f32 %v5297, %v5564
        %v5603 = vadd.f32 %v5298, %v5569
        %s5604 = scalar_lea.vmem [#allocation2], 96
        %v5605 = vld [vmem:[%s5604] sm:$0xff]
        %v5606 = vld [vmem:[%s5604 + $0x8] sm:$0xff]
        %v5607 = vld [vmem:[%s5604 + $0x18] sm:$0xff]
        %v5608 = vld [vmem:[%s5604 + $0x20] sm:$0xff]
        %v5609 = vld [vmem:[%s5604 + $0x30] sm:$0xff]
        %v5610 = vld [vmem:[%s5604 + $0x38] sm:$0xff]
        %v5611 = vld [vmem:[%s5604 + $0x48] sm:$0xff]
        %v5612 = vld [vmem:[%s5604 + $0x50] sm:$0xff]
        %v5613 = vld [vmem:[%s5604 + $0x60] sm:$0xff]
        %v5614 = vld [vmem:[%s5604 + $0x68] sm:$0xff]
        %v5615 = vld [vmem:[%s5604 + $0x78] sm:$0xff]
        %v5616 = vld [vmem:[%s5604 + $0x80] sm:$0xff]
        %v5617 = vld [vmem:[%s5604 + $0x90] sm:$0xff]
        %v5618 = vld [vmem:[%s5604 + $0x98] sm:$0xff]
        %v5619 = vld [vmem:[%s5604 + $0xa8] sm:$0xff]
        %v5620 = vld [vmem:[%s5604 + $0xb0] sm:$0xff]
        %v5621 = vld [vmem:[%s5604 + $0xc0] sm:$0xff]
        %v5622 = vld [vmem:[%s5604 + $0xc8] sm:$0xff]
        %v5623 = vld [vmem:[%s5604 + $0xd8] sm:$0xff]
        %v5624 = vld [vmem:[%s5604 + $0xe0] sm:$0xff]
        %v5625 = vld [vmem:[%s5604 + $0xf0] sm:$0xff]
        %v5626 = vld [vmem:[%s5604 + $0xf8] sm:$0xff]
        %v5627 = vld [vmem:[%s5604 + $0x108] sm:$0xff]
        %v5628 = vld [vmem:[%s5604 + $0x110] sm:$0xff]
        %v5629 = vld [vmem:[%s5604 + $0x120] sm:$0xff]
        %v5630 = vld [vmem:[%s5604 + $0x128] sm:$0xff]
        %v5631 = vld [vmem:[%s5604 + $0x138] sm:$0xff]
        %v5632 = vld [vmem:[%s5604 + $0x140] sm:$0xff]
        %v5633 = vld [vmem:[%s5604 + $0x150] sm:$0xff]
        %v5634 = vld [vmem:[%s5604 + $0x158] sm:$0xff]
        %v5635 = vld [vmem:[%s5604 + $0x168] sm:$0xff]
        %v5636 = vld [vmem:[%s5604 + $0x170] sm:$0xff]
        %v5637 = vld [vmem:[%s2812] sm:$0xff]
        %v5638 = vld [vmem:[%s2812 + $0x8] sm:$0xff]
        %v5639 = vld [vmem:[%s2812 + $0x10] sm:$0xff]
        %v5640 = vld [vmem:[%s2812 + $0x18] sm:$0xff]
        %v5641 = vld [vmem:[%s2812 + $0x20] sm:$0xff]
        %v5642 = vld [vmem:[%s2812 + $0x28] sm:$0xff]
        %v5643 = vld [vmem:[%s2812 + $0x30] sm:$0xff]
        %v5644 = vld [vmem:[%s2812 + $0x38] sm:$0xff]
        %v5645 = vld [vmem:[%s2812 + $0x40] sm:$0xff]
        %v5646 = vld [vmem:[%s2812 + $0x48] sm:$0xff]
        %v5647 = vld [vmem:[%s2812 + $0x50] sm:$0xff]
        %v5648 = vld [vmem:[%s2812 + $0x58] sm:$0xff]
        %v5649 = vld [vmem:[%s2812 + $0x60] sm:$0xff]
        %v5650 = vld [vmem:[%s2812 + $0x68] sm:$0xff]
        %v5651 = vld [vmem:[%s2812 + $0x70] sm:$0xff]
        %v5652 = vld [vmem:[%s2812 + $0x78] sm:$0xff]
        %5653 = vmatprep.subr.mxu0 0.0
        %5654 = vmatpush1.msra.mxu0 %v5637
        %5655 = vmatprep.subr.mxu0 0.0
        %5656 = vmatpush1.msra.mxu0 %v5638
        %5657 = vmatprep.subr.mxu0 0.0
        %5658 = vmatpush1.msra.mxu0 %v5639
        %5659 = vmatprep.subr.mxu0 0.0
        %5660 = vmatpush1.msra.mxu0 %v5640
        %5661 = vmatprep.subr.mxu0 0.0
        %5662 = vmatpush1.msra.mxu0 %v5641
        %5663 = vmatprep.subr.mxu0 0.0
        %5664 = vmatpush1.msra.mxu0 %v5642
        %5665 = vmatprep.subr.mxu0 0.0
        %5666 = vmatpush1.msra.mxu0 %v5643
        %5667 = vmatprep.subr.mxu0 0.0
        %5668 = vmatpush1.msra.mxu0 %v5644
        %5669 = vmatprep.subr.mxu0 0.0
        %5670 = vmatpush1.msra.mxu0 %v5645
        %5671 = vmatprep.subr.mxu0 0.0
        %5672 = vmatpush1.msra.mxu0 %v5646
        %5673 = vmatprep.subr.mxu0 0.0
        %5674 = vmatpush1.msra.mxu0 %v5647
        %5675 = vmatprep.subr.mxu0 0.0
        %5676 = vmatpush1.msra.mxu0 %v5648
        %5677 = vmatprep.subr.mxu0 0.0
        %5678 = vmatpush1.msra.mxu0 %v5649
        %5679 = vmatprep.subr.mxu0 0.0
        %5680 = vmatpush1.msra.mxu0 %v5650
        %5681 = vmatprep.subr.mxu0 0.0
        %5682 = vmatpush1.msra.mxu0 %v5651
        %5683 = vmatprep.subr.mxu0 0.0
        %5684 = vmatpush1.msra.mxu0 %v5652
        %5685 = vmatprep.subr.mxu0 0.0
        %5686 = vmatpush1.msra.mxu0 0.0
        %5687 = vmatprep.subr.mxu0 0.0
        %5688 = vmatpush1.msra.mxu0 0.0
        %5689 = vmatprep.subr.mxu0 0.0
        %5690 = vmatpush1.msra.mxu0 0.0
        %5691 = vmatprep.subr.mxu0 0.0
        %5692 = vmatpush1.msra.mxu0 0.0
        %5693 = vmatprep.subr.mxu0 0.0
        %5694 = vmatpush1.msra.mxu0 0.0
        %5695 = vmatprep.subr.mxu0 0.0
        %5696 = vmatpush1.msra.mxu0 0.0
        %5697 = vmatprep.subr.mxu0 0.0
        %5698 = vmatpush1.msra.mxu0 0.0
        %5699 = vmatprep.subr.mxu0 0.0
        %5700 = vmatpush1.msra.mxu0 0.0
        %5701 = vmatprep.subr.mxu0 0.0
        %5702 = vmatpush1.msra.mxu0 0.0
        %5703 = vmatprep.subr.mxu0 0.0
        %5704 = vmatpush1.msra.mxu0 0.0
        %5705 = vmatprep.subr.mxu0 0.0
        %5706 = vmatpush1.msra.mxu0 0.0
        %5707 = vmatprep.subr.mxu0 0.0
        %5708 = vmatpush1.msra.mxu0 0.0
        %5709 = vmatprep.subr.mxu0 0.0
        %5710 = vmatpush1.msra.mxu0 0.0
        %5711 = vmatprep.subr.mxu0 0.0
        %5712 = vmatpush1.msra.mxu0 0.0
        %5713 = vmatprep.subr.mxu0 0.0
        %5714 = vmatpush1.msra.mxu0 0.0
        %5715 = vmatprep.subr.mxu0 0.0
        %5716 = vmatpush1.msra.mxu0 0.0
        %5717 = vmatprep.mubr.f32.mxu0 0.0
        %5718 = vmatmul.mubr.f32.gmra.mrb[0].mxu0 %v5605
        %v5719 = vpop.f32.mrb[0].mxu0
        %v5720 = vadd.f32 0.0, %v5719
        %v5721 = vpop.f32.mrb[0].mxu0
        %5722 = vmatprep.mubr.f32.mxu0 0.0
        %5723 = vmatmul.mubr.f32.gmra.mrb[0].mxu0 %v5606
        %v5724 = vpop.f32.mrb[0].mxu0
        %v5725 = vadd.f32 0.0, %v5724
        %v5726 = vpop.f32.mrb[0].mxu0
        %5727 = vmatprep.mubr.f32.mxu0 0.0
        %5728 = vmatmul.mubr.f32.gmra.mrb[0].mxu0 %v5607
        %v5729 = vpop.f32.mrb[0].mxu0
        %v5730 = vadd.f32 0.0, %v5729
        %v5731 = vpop.f32.mrb[0].mxu0
        %5732 = vmatprep.mubr.f32.mxu0 0.0
        %5733 = vmatmul.mubr.f32.gmra.mrb[0].mxu0 %v5608
        %v5734 = vpop.f32.mrb[0].mxu0
        %v5735 = vadd.f32 0.0, %v5734
        %v5736 = vpop.f32.mrb[0].mxu0
        %5737 = vmatprep.mubr.f32.mxu0 0.0
        %5738 = vmatmul.mubr.f32.gmra.mrb[0].mxu0 %v5609
        %v5739 = vpop.f32.mrb[0].mxu0
        %v5740 = vadd.f32 0.0, %v5739
        %v5741 = vpop.f32.mrb[0].mxu0
        %5742 = vmatprep.mubr.f32.mxu0 0.0
        %5743 = vmatmul.mubr.f32.gmra.mrb[0].mxu0 %v5610
        %v5744 = vpop.f32.mrb[0].mxu0
        %v5745 = vadd.f32 0.0, %v5744
        %v5746 = vpop.f32.mrb[0].mxu0
        %5747 = vmatprep.mubr.f32.mxu0 0.0
        %5748 = vmatmul.mubr.f32.gmra.mrb[0].mxu0 %v5611
        %v5749 = vpop.f32.mrb[0].mxu0
        %v5750 = vadd.f32 0.0, %v5749
        %v5751 = vpop.f32.mrb[0].mxu0
        %5752 = vmatprep.mubr.f32.mxu0 0.0
        %5753 = vmatmul.mubr.f32.gmra.mrb[0].mxu0 %v5612
        %v5754 = vpop.f32.mrb[0].mxu0
        %v5755 = vadd.f32 0.0, %v5754
        %v5756 = vpop.f32.mrb[0].mxu0
        %5757 = vmatprep.mubr.f32.mxu0 0.0
        %5758 = vmatmul.mubr.f32.gmra.mrb[0].mxu0 %v5613
        %v5759 = vpop.f32.mrb[0].mxu0
        %v5760 = vadd.f32 0.0, %v5759
        %v5761 = vpop.f32.mrb[0].mxu0
        %5762 = vmatprep.mubr.f32.mxu0 0.0
        %5763 = vmatmul.mubr.f32.gmra.mrb[0].mxu0 %v5614
        %v5764 = vpop.f32.mrb[0].mxu0
        %v5765 = vadd.f32 0.0, %v5764
        %v5766 = vpop.f32.mrb[0].mxu0
        %5767 = vmatprep.mubr.f32.mxu0 0.0
        %5768 = vmatmul.mubr.f32.gmra.mrb[0].mxu0 %v5615
        %v5769 = vpop.f32.mrb[0].mxu0
        %v5770 = vadd.f32 0.0, %v5769
        %v5771 = vpop.f32.mrb[0].mxu0
        %5772 = vmatprep.mubr.f32.mxu0 0.0
        %5773 = vmatmul.mubr.f32.gmra.mrb[0].mxu0 %v5616
        %v5774 = vpop.f32.mrb[0].mxu0
        %v5775 = vadd.f32 0.0, %v5774
        %v5776 = vpop.f32.mrb[0].mxu0
        %5777 = vmatprep.mubr.f32.mxu0 0.0
        %5778 = vmatmul.mubr.f32.gmra.mrb[0].mxu0 %v5617
        %v5779 = vpop.f32.mrb[0].mxu0
        %v5780 = vadd.f32 0.0, %v5779
        %v5781 = vpop.f32.mrb[0].mxu0
        %5782 = vmatprep.mubr.f32.mxu0 0.0
        %5783 = vmatmul.mubr.f32.gmra.mrb[0].mxu0 %v5618
        %v5784 = vpop.f32.mrb[0].mxu0
        %v5785 = vadd.f32 0.0, %v5784
        %v5786 = vpop.f32.mrb[0].mxu0
        %5787 = vmatprep.mubr.f32.mxu0 0.0
        %5788 = vmatmul.mubr.f32.gmra.mrb[0].mxu0 %v5619
        %v5789 = vpop.f32.mrb[0].mxu0
        %v5790 = vadd.f32 0.0, %v5789
        %v5791 = vpop.f32.mrb[0].mxu0
        %5792 = vmatprep.mubr.f32.mxu0 0.0
        %5793 = vmatmul.mubr.f32.gmra.mrb[0].mxu0 %v5620
        %v5794 = vpop.f32.mrb[0].mxu0
        %v5795 = vadd.f32 0.0, %v5794
        %v5796 = vpop.f32.mrb[0].mxu0
        %5797 = vmatprep.mubr.f32.mxu0 0.0
        %5798 = vmatmul.mubr.f32.gmra.mrb[0].mxu0 %v5621
        %v5799 = vpop.f32.mrb[0].mxu0
        %v5800 = vadd.f32 0.0, %v5799
        %v5801 = vpop.f32.mrb[0].mxu0
        %5802 = vmatprep.mubr.f32.mxu0 0.0
        %5803 = vmatmul.mubr.f32.gmra.mrb[0].mxu0 %v5622
        %v5804 = vpop.f32.mrb[0].mxu0
        %v5805 = vadd.f32 0.0, %v5804
        %v5806 = vpop.f32.mrb[0].mxu0
        %5807 = vmatprep.mubr.f32.mxu0 0.0
        %5808 = vmatmul.mubr.f32.gmra.mrb[0].mxu0 %v5623
        %v5809 = vpop.f32.mrb[0].mxu0
        %v5810 = vadd.f32 0.0, %v5809
        %v5811 = vpop.f32.mrb[0].mxu0
        %5812 = vmatprep.mubr.f32.mxu0 0.0
        %5813 = vmatmul.mubr.f32.gmra.mrb[0].mxu0 %v5624
        %v5814 = vpop.f32.mrb[0].mxu0
        %v5815 = vadd.f32 0.0, %v5814
        %v5816 = vpop.f32.mrb[0].mxu0
        %5817 = vmatprep.mubr.f32.mxu0 0.0
        %5818 = vmatmul.mubr.f32.gmra.mrb[0].mxu0 %v5625
        %v5819 = vpop.f32.mrb[0].mxu0
        %v5820 = vadd.f32 0.0, %v5819
        %v5821 = vpop.f32.mrb[0].mxu0
        %5822 = vmatprep.mubr.f32.mxu0 0.0
        %5823 = vmatmul.mubr.f32.gmra.mrb[0].mxu0 %v5626
        %v5824 = vpop.f32.mrb[0].mxu0
        %v5825 = vadd.f32 0.0, %v5824
        %v5826 = vpop.f32.mrb[0].mxu0
        %5827 = vmatprep.mubr.f32.mxu0 0.0
        %5828 = vmatmul.mubr.f32.gmra.mrb[0].mxu0 %v5627
        %v5829 = vpop.f32.mrb[0].mxu0
        %v5830 = vadd.f32 0.0, %v5829
        %v5831 = vpop.f32.mrb[0].mxu0
        %5832 = vmatprep.mubr.f32.mxu0 0.0
        %5833 = vmatmul.mubr.f32.gmra.mrb[0].mxu0 %v5628
        %v5834 = vpop.f32.mrb[0].mxu0
        %v5835 = vadd.f32 0.0, %v5834
        %v5836 = vpop.f32.mrb[0].mxu0
        %5837 = vmatprep.mubr.f32.mxu0 0.0
        %5838 = vmatmul.mubr.f32.gmra.mrb[0].mxu0 %v5629
        %v5839 = vpop.f32.mrb[0].mxu0
        %v5840 = vadd.f32 0.0, %v5839
        %v5841 = vpop.f32.mrb[0].mxu0
        %5842 = vmatprep.mubr.f32.mxu0 0.0
        %5843 = vmatmul.mubr.f32.gmra.mrb[0].mxu0 %v5630
        %v5844 = vpop.f32.mrb[0].mxu0
        %v5845 = vadd.f32 0.0, %v5844
        %v5846 = vpop.f32.mrb[0].mxu0
        %5847 = vmatprep.mubr.f32.mxu0 0.0
        %5848 = vmatmul.mubr.f32.gmra.mrb[0].mxu0 %v5631
        %v5849 = vpop.f32.mrb[0].mxu0
        %v5850 = vadd.f32 0.0, %v5849
        %v5851 = vpop.f32.mrb[0].mxu0
        %5852 = vmatprep.mubr.f32.mxu0 0.0
        %5853 = vmatmul.mubr.f32.gmra.mrb[0].mxu0 %v5632
        %v5854 = vpop.f32.mrb[0].mxu0
        %v5855 = vadd.f32 0.0, %v5854
        %v5856 = vpop.f32.mrb[0].mxu0
        %5857 = vmatprep.mubr.f32.mxu0 0.0
        %5858 = vmatmul.mubr.f32.gmra.mrb[0].mxu0 %v5633
        %v5859 = vpop.f32.mrb[0].mxu0
        %v5860 = vadd.f32 0.0, %v5859
        %v5861 = vpop.f32.mrb[0].mxu0
        %5862 = vmatprep.mubr.f32.mxu0 0.0
        %5863 = vmatmul.mubr.f32.gmra.mrb[0].mxu0 %v5634
        %v5864 = vpop.f32.mrb[0].mxu0
        %v5865 = vadd.f32 0.0, %v5864
        %v5866 = vpop.f32.mrb[0].mxu0
        %5867 = vmatprep.mubr.f32.mxu0 0.0
        %5868 = vmatmul.mubr.f32.gmra.mrb[0].mxu0 %v5635
        %v5869 = vpop.f32.mrb[0].mxu0
        %v5870 = vadd.f32 0.0, %v5869
        %v5871 = vpop.f32.mrb[0].mxu0
        %5872 = vmatprep.mubr.f32.mxu0 0.0
        %5873 = vmatmul.mubr.f32.gmra.mrb[0].mxu0 %v5636
        %v5874 = vpop.f32.mrb[0].mxu0
        %v5875 = vadd.f32 0.0, %v5874
        %v5876 = vpop.f32.mrb[0].mxu0
        %5877 = vdwg.mxu0
        %v5878 = vadd.f32 %v5572, %v5720
        %v5879 = vadd.f32 %v5573, %v5725
        %v5880 = vadd.f32 %v5574, %v5730
        %v5881 = vadd.f32 %v5575, %v5735
        %v5882 = vadd.f32 %v5576, %v5740
        %v5883 = vadd.f32 %v5577, %v5745
        %v5884 = vadd.f32 %v5578, %v5750
        %v5885 = vadd.f32 %v5579, %v5755
        %v5886 = vadd.f32 %v5580, %v5760
        %v5887 = vadd.f32 %v5581, %v5765
        %v5888 = vadd.f32 %v5582, %v5770
        %v5889 = vadd.f32 %v5583, %v5775
        %v5890 = vadd.f32 %v5584, %v5780
        %v5891 = vadd.f32 %v5585, %v5785
        %v5892 = vadd.f32 %v5586, %v5790
        %v5893 = vadd.f32 %v5587, %v5795
        %v5894 = vadd.f32 %v5588, %v5800
        %v5895 = vadd.f32 %v5589, %v5805
        %v5896 = vadd.f32 %v5590, %v5810
        %v5897 = vadd.f32 %v5591, %v5815
        %v5898 = vadd.f32 %v5592, %v5820
        %v5899 = vadd.f32 %v5593, %v5825
        %v5900 = vadd.f32 %v5594, %v5830
        %v5901 = vadd.f32 %v5595, %v5835
        %v5902 = vadd.f32 %v5596, %v5840
        %v5903 = vadd.f32 %v5597, %v5845
        %v5904 = vadd.f32 %v5598, %v5850
        %v5905 = vadd.f32 %v5599, %v5855
        %v5906 = vadd.f32 %v5600, %v5860
        %v5907 = vadd.f32 %v5601, %v5865
        %v5908 = vadd.f32 %v5602, %v5870
        %v5909 = vadd.f32 %v5603, %v5875
        %v5910 = vld [vmem:[%s5604 + $0x2] sm:$0xff]
        %v5911 = vld [vmem:[%s5604 + $0xa] sm:$0xff]
        %v5912 = vld [vmem:[%s5604 + $0x1a] sm:$0xff]
        %v5913 = vld [vmem:[%s5604 + $0x22] sm:$0xff]
        %v5914 = vld [vmem:[%s5604 + $0x32] sm:$0xff]
        %v5915 = vld [vmem:[%s5604 + $0x3a] sm:$0xff]
        %v5916 = vld [vmem:[%s5604 + $0x4a] sm:$0xff]
        %v5917 = vld [vmem:[%s5604 + $0x52] sm:$0xff]
        %v5918 = vld [vmem:[%s5604 + $0x62] sm:$0xff]
        %v5919 = vld [vmem:[%s5604 + $0x6a] sm:$0xff]
        %v5920 = vld [vmem:[%s5604 + $0x7a] sm:$0xff]
        %v5921 = vld [vmem:[%s5604 + $0x82] sm:$0xff]
        %v5922 = vld [vmem:[%s5604 + $0x92] sm:$0xff]
        %v5923 = vld [vmem:[%s5604 + $0x9a] sm:$0xff]
        %v5924 = vld [vmem:[%s5604 + $0xaa] sm:$0xff]
        %v5925 = vld [vmem:[%s5604 + $0xb2] sm:$0xff]
        %v5926 = vld [vmem:[%s5604 + $0xc2] sm:$0xff]
        %v5927 = vld [vmem:[%s5604 + $0xca] sm:$0xff]
        %v5928 = vld [vmem:[%s5604 + $0xda] sm:$0xff]
        %v5929 = vld [vmem:[%s5604 + $0xe2] sm:$0xff]
        %v5930 = vld [vmem:[%s5604 + $0xf2] sm:$0xff]
        %v5931 = vld [vmem:[%s5604 + $0xfa] sm:$0xff]
        %v5932 = vld [vmem:[%s5604 + $0x10a] sm:$0xff]
        %v5933 = vld [vmem:[%s5604 + $0x112] sm:$0xff]
        %v5934 = vld [vmem:[%s5604 + $0x122] sm:$0xff]
        %v5935 = vld [vmem:[%s5604 + $0x12a] sm:$0xff]
        %v5936 = vld [vmem:[%s5604 + $0x13a] sm:$0xff]
        %v5937 = vld [vmem:[%s5604 + $0x142] sm:$0xff]
        %v5938 = vld [vmem:[%s5604 + $0x152] sm:$0xff]
        %v5939 = vld [vmem:[%s5604 + $0x15a] sm:$0xff]
        %v5940 = vld [vmem:[%s5604 + $0x16a] sm:$0xff]
        %v5941 = vld [vmem:[%s5604 + $0x172] sm:$0xff]
        %v5942 = vld [vmem:[%s3118] sm:$0xff]
        %v5943 = vld [vmem:[%s3118 + $0x8] sm:$0xff]
        %v5944 = vld [vmem:[%s3118 + $0x10] sm:$0xff]
        %v5945 = vld [vmem:[%s3118 + $0x18] sm:$0xff]
        %v5946 = vld [vmem:[%s3118 + $0x20] sm:$0xff]
        %v5947 = vld [vmem:[%s3118 + $0x28] sm:$0xff]
        %v5948 = vld [vmem:[%s3118 + $0x30] sm:$0xff]
        %v5949 = vld [vmem:[%s3118 + $0x38] sm:$0xff]
        %v5950 = vld [vmem:[%s3118 + $0x40] sm:$0xff]
        %v5951 = vld [vmem:[%s3118 + $0x48] sm:$0xff]
        %v5952 = vld [vmem:[%s3118 + $0x50] sm:$0xff]
        %v5953 = vld [vmem:[%s3118 + $0x58] sm:$0xff]
        %v5954 = vld [vmem:[%s3118 + $0x60] sm:$0xff]
        %v5955 = vld [vmem:[%s3118 + $0x68] sm:$0xff]
        %v5956 = vld [vmem:[%s3118 + $0x70] sm:$0xff]
        %v5957 = vld [vmem:[%s3118 + $0x78] sm:$0xff]
        %5958 = vmatprep.subr.mxu0 0.0
        %5959 = vmatpush1.msra.mxu0 %v5942
        %5960 = vmatprep.subr.mxu0 0.0
        %5961 = vmatpush1.msra.mxu0 %v5943
        %5962 = vmatprep.subr.mxu0 0.0
        %5963 = vmatpush1.msra.mxu0 %v5944
        %5964 = vmatprep.subr.mxu0 0.0
        %5965 = vmatpush1.msra.mxu0 %v5945
        %5966 = vmatprep.subr.mxu0 0.0
        %5967 = vmatpush1.msra.mxu0 %v5946
        %5968 = vmatprep.subr.mxu0 0.0
        %5969 = vmatpush1.msra.mxu0 %v5947
        %5970 = vmatprep.subr.mxu0 0.0
        %5971 = vmatpush1.msra.mxu0 %v5948
        %5972 = vmatprep.subr.mxu0 0.0
        %5973 = vmatpush1.msra.mxu0 %v5949
        %5974 = vmatprep.subr.mxu0 0.0
        %5975 = vmatpush1.msra.mxu0 %v5950
        %5976 = vmatprep.subr.mxu0 0.0
        %5977 = vmatpush1.msra.mxu0 %v5951
        %5978 = vmatprep.subr.mxu0 0.0
        %5979 = vmatpush1.msra.mxu0 %v5952
        %5980 = vmatprep.subr.mxu0 0.0
        %5981 = vmatpush1.msra.mxu0 %v5953
        %5982 = vmatprep.subr.mxu0 0.0
        %5983 = vmatpush1.msra.mxu0 %v5954
        %5984 = vmatprep.subr.mxu0 0.0
        %5985 = vmatpush1.msra.mxu0 %v5955
        %5986 = vmatprep.subr.mxu0 0.0
        %5987 = vmatpush1.msra.mxu0 %v5956
        %5988 = vmatprep.subr.mxu0 0.0
        %5989 = vmatpush1.msra.mxu0 %v5957
        %5990 = vmatprep.subr.mxu0 0.0
        %5991 = vmatpush1.msra.mxu0 0.0
        %5992 = vmatprep.subr.mxu0 0.0
        %5993 = vmatpush1.msra.mxu0 0.0
        %5994 = vmatprep.subr.mxu0 0.0
        %5995 = vmatpush1.msra.mxu0 0.0
        %5996 = vmatprep.subr.mxu0 0.0
        %5997 = vmatpush1.msra.mxu0 0.0
        %5998 = vmatprep.subr.mxu0 0.0
        %5999 = vmatpush1.msra.mxu0 0.0
        %6000 = vmatprep.subr.mxu0 0.0
        %6001 = vmatpush1.msra.mxu0 0.0
        %6002 = vmatprep.subr.mxu0 0.0
        %6003 = vmatpush1.msra.mxu0 0.0
        %6004 = vmatprep.subr.mxu0 0.0
        %6005 = vmatpush1.msra.mxu0 0.0
        %6006 = vmatprep.subr.mxu0 0.0
        %6007 = vmatpush1.msra.mxu0 0.0
        %6008 = vmatprep.subr.mxu0 0.0
        %6009 = vmatpush1.msra.mxu0 0.0
        %6010 = vmatprep.subr.mxu0 0.0
        %6011 = vmatpush1.msra.mxu0 0.0
        %6012 = vmatprep.subr.mxu0 0.0
        %6013 = vmatpush1.msra.mxu0 0.0
        %6014 = vmatprep.subr.mxu0 0.0
        %6015 = vmatpush1.msra.mxu0 0.0
        %6016 = vmatprep.subr.mxu0 0.0
        %6017 = vmatpush1.msra.mxu0 0.0
        %6018 = vmatprep.subr.mxu0 0.0
        %6019 = vmatpush1.msra.mxu0 0.0
        %6020 = vmatprep.subr.mxu0 0.0
        %6021 = vmatpush1.msra.mxu0 0.0
        %6022 = vmatprep.mubr.f32.mxu0 0.0
        %6023 = vmatmul.mubr.f32.gmra.mrb[0].mxu0 %v5910
        %v6024 = vpop.f32.mrb[0].mxu0
        %v6025 = vadd.f32 0.0, %v6024
        %v6026 = vpop.f32.mrb[0].mxu0
        %6027 = vmatprep.mubr.f32.mxu0 0.0
        %6028 = vmatmul.mubr.f32.gmra.mrb[0].mxu0 %v5911
        %v6029 = vpop.f32.mrb[0].mxu0
        %v6030 = vadd.f32 0.0, %v6029
        %v6031 = vpop.f32.mrb[0].mxu0
        %6032 = vmatprep.mubr.f32.mxu0 0.0
        %6033 = vmatmul.mubr.f32.gmra.mrb[0].mxu0 %v5912
        %v6034 = vpop.f32.mrb[0].mxu0
        %v6035 = vadd.f32 0.0, %v6034
        %v6036 = vpop.f32.mrb[0].mxu0
        %6037 = vmatprep.mubr.f32.mxu0 0.0
        %6038 = vmatmul.mubr.f32.gmra.mrb[0].mxu0 %v5913
        %v6039 = vpop.f32.mrb[0].mxu0
        %v6040 = vadd.f32 0.0, %v6039
        %v6041 = vpop.f32.mrb[0].mxu0
        %6042 = vmatprep.mubr.f32.mxu0 0.0
        %6043 = vmatmul.mubr.f32.gmra.mrb[0].mxu0 %v5914
        %v6044 = vpop.f32.mrb[0].mxu0
        %v6045 = vadd.f32 0.0, %v6044
        %v6046 = vpop.f32.mrb[0].mxu0
        %6047 = vmatprep.mubr.f32.mxu0 0.0
        %6048 = vmatmul.mubr.f32.gmra.mrb[0].mxu0 %v5915
        %v6049 = vpop.f32.mrb[0].mxu0
        %v6050 = vadd.f32 0.0, %v6049
        %v6051 = vpop.f32.mrb[0].mxu0
        %6052 = vmatprep.mubr.f32.mxu0 0.0
        %6053 = vmatmul.mubr.f32.gmra.mrb[0].mxu0 %v5916
        %v6054 = vpop.f32.mrb[0].mxu0
        %v6055 = vadd.f32 0.0, %v6054
        %v6056 = vpop.f32.mrb[0].mxu0
        %6057 = vmatprep.mubr.f32.mxu0 0.0
        %6058 = vmatmul.mubr.f32.gmra.mrb[0].mxu0 %v5917
        %v6059 = vpop.f32.mrb[0].mxu0
        %v6060 = vadd.f32 0.0, %v6059
        %v6061 = vpop.f32.mrb[0].mxu0
        %6062 = vmatprep.mubr.f32.mxu0 0.0
        %6063 = vmatmul.mubr.f32.gmra.mrb[0].mxu0 %v5918
        %v6064 = vpop.f32.mrb[0].mxu0
        %v6065 = vadd.f32 0.0, %v6064
        %v6066 = vpop.f32.mrb[0].mxu0
        %6067 = vmatprep.mubr.f32.mxu0 0.0
        %6068 = vmatmul.mubr.f32.gmra.mrb[0].mxu0 %v5919
        %v6069 = vpop.f32.mrb[0].mxu0
        %v6070 = vadd.f32 0.0, %v6069
        %v6071 = vpop.f32.mrb[0].mxu0
        %6072 = vmatprep.mubr.f32.mxu0 0.0
        %6073 = vmatmul.mubr.f32.gmra.mrb[0].mxu0 %v5920
        %v6074 = vpop.f32.mrb[0].mxu0
        %v6075 = vadd.f32 0.0, %v6074
        %v6076 = vpop.f32.mrb[0].mxu0
        %6077 = vmatprep.mubr.f32.mxu0 0.0
        %6078 = vmatmul.mubr.f32.gmra.mrb[0].mxu0 %v5921
        %v6079 = vpop.f32.mrb[0].mxu0
        %v6080 = vadd.f32 0.0, %v6079
        %v6081 = vpop.f32.mrb[0].mxu0
        %6082 = vmatprep.mubr.f32.mxu0 0.0
        %6083 = vmatmul.mubr.f32.gmra.mrb[0].mxu0 %v5922
        %v6084 = vpop.f32.mrb[0].mxu0
        %v6085 = vadd.f32 0.0, %v6084
        %v6086 = vpop.f32.mrb[0].mxu0
        %6087 = vmatprep.mubr.f32.mxu0 0.0
        %6088 = vmatmul.mubr.f32.gmra.mrb[0].mxu0 %v5923
        %v6089 = vpop.f32.mrb[0].mxu0
        %v6090 = vadd.f32 0.0, %v6089
        %v6091 = vpop.f32.mrb[0].mxu0
        %6092 = vmatprep.mubr.f32.mxu0 0.0
        %6093 = vmatmul.mubr.f32.gmra.mrb[0].mxu0 %v5924
        %v6094 = vpop.f32.mrb[0].mxu0
        %v6095 = vadd.f32 0.0, %v6094
        %v6096 = vpop.f32.mrb[0].mxu0
        %6097 = vmatprep.mubr.f32.mxu0 0.0
        %6098 = vmatmul.mubr.f32.gmra.mrb[0].mxu0 %v5925
        %v6099 = vpop.f32.mrb[0].mxu0
        %v6100 = vadd.f32 0.0, %v6099
        %v6101 = vpop.f32.mrb[0].mxu0
        %6102 = vmatprep.mubr.f32.mxu0 0.0
        %6103 = vmatmul.mubr.f32.gmra.mrb[0].mxu0 %v5926
        %v6104 = vpop.f32.mrb[0].mxu0
        %v6105 = vadd.f32 0.0, %v6104
        %v6106 = vpop.f32.mrb[0].mxu0
        %6107 = vmatprep.mubr.f32.mxu0 0.0
        %6108 = vmatmul.mubr.f32.gmra.mrb[0].mxu0 %v5927
        %v6109 = vpop.f32.mrb[0].mxu0
        %v6110 = vadd.f32 0.0, %v6109
        %v6111 = vpop.f32.mrb[0].mxu0
        %6112 = vmatprep.mubr.f32.mxu0 0.0
        %6113 = vmatmul.mubr.f32.gmra.mrb[0].mxu0 %v5928
        %v6114 = vpop.f32.mrb[0].mxu0
        %v6115 = vadd.f32 0.0, %v6114
        %v6116 = vpop.f32.mrb[0].mxu0
        %6117 = vmatprep.mubr.f32.mxu0 0.0
        %6118 = vmatmul.mubr.f32.gmra.mrb[0].mxu0 %v5929
        %v6119 = vpop.f32.mrb[0].mxu0
        %v6120 = vadd.f32 0.0, %v6119
        %v6121 = vpop.f32.mrb[0].mxu0
        %6122 = vmatprep.mubr.f32.mxu0 0.0
        %6123 = vmatmul.mubr.f32.gmra.mrb[0].mxu0 %v5930
        %v6124 = vpop.f32.mrb[0].mxu0
        %v6125 = vadd.f32 0.0, %v6124
        %v6126 = vpop.f32.mrb[0].mxu0
        %6127 = vmatprep.mubr.f32.mxu0 0.0
        %6128 = vmatmul.mubr.f32.gmra.mrb[0].mxu0 %v5931
        %v6129 = vpop.f32.mrb[0].mxu0
        %v6130 = vadd.f32 0.0, %v6129
        %v6131 = vpop.f32.mrb[0].mxu0
        %6132 = vmatprep.mubr.f32.mxu0 0.0
        %6133 = vmatmul.mubr.f32.gmra.mrb[0].mxu0 %v5932
        %v6134 = vpop.f32.mrb[0].mxu0
        %v6135 = vadd.f32 0.0, %v6134
        %v6136 = vpop.f32.mrb[0].mxu0
        %6137 = vmatprep.mubr.f32.mxu0 0.0
        %6138 = vmatmul.mubr.f32.gmra.mrb[0].mxu0 %v5933
        %v6139 = vpop.f32.mrb[0].mxu0
        %v6140 = vadd.f32 0.0, %v6139
        %v6141 = vpop.f32.mrb[0].mxu0
        %6142 = vmatprep.mubr.f32.mxu0 0.0
        %6143 = vmatmul.mubr.f32.gmra.mrb[0].mxu0 %v5934
        %v6144 = vpop.f32.mrb[0].mxu0
        %v6145 = vadd.f32 0.0, %v6144
        %v6146 = vpop.f32.mrb[0].mxu0
        %6147 = vmatprep.mubr.f32.mxu0 0.0
        %6148 = vmatmul.mubr.f32.gmra.mrb[0].mxu0 %v5935
        %v6149 = vpop.f32.mrb[0].mxu0
        %v6150 = vadd.f32 0.0, %v6149
        %v6151 = vpop.f32.mrb[0].mxu0
        %6152 = vmatprep.mubr.f32.mxu0 0.0
        %6153 = vmatmul.mubr.f32.gmra.mrb[0].mxu0 %v5936
        %v6154 = vpop.f32.mrb[0].mxu0
        %v6155 = vadd.f32 0.0, %v6154
        %v6156 = vpop.f32.mrb[0].mxu0
        %6157 = vmatprep.mubr.f32.mxu0 0.0
        %6158 = vmatmul.mubr.f32.gmra.mrb[0].mxu0 %v5937
        %v6159 = vpop.f32.mrb[0].mxu0
        %v6160 = vadd.f32 0.0, %v6159
        %v6161 = vpop.f32.mrb[0].mxu0
        %6162 = vmatprep.mubr.f32.mxu0 0.0
        %6163 = vmatmul.mubr.f32.gmra.mrb[0].mxu0 %v5938
        %v6164 = vpop.f32.mrb[0].mxu0
        %v6165 = vadd.f32 0.0, %v6164
        %v6166 = vpop.f32.mrb[0].mxu0
        %6167 = vmatprep.mubr.f32.mxu0 0.0
        %6168 = vmatmul.mubr.f32.gmra.mrb[0].mxu0 %v5939
        %v6169 = vpop.f32.mrb[0].mxu0
        %v6170 = vadd.f32 0.0, %v6169
        %v6171 = vpop.f32.mrb[0].mxu0
        %6172 = vmatprep.mubr.f32.mxu0 0.0
        %6173 = vmatmul.mubr.f32.gmra.mrb[0].mxu0 %v5940
        %v6174 = vpop.f32.mrb[0].mxu0
        %v6175 = vadd.f32 0.0, %v6174
        %v6176 = vpop.f32.mrb[0].mxu0
        %6177 = vmatprep.mubr.f32.mxu0 0.0
        %6178 = vmatmul.mubr.f32.gmra.mrb[0].mxu0 %v5941
        %v6179 = vpop.f32.mrb[0].mxu0
        %v6180 = vadd.f32 0.0, %v6179
        %v6181 = vpop.f32.mrb[0].mxu0
        %6182 = vdwg.mxu0
        %v6183 = vadd.f32 %v5878, %v6025
        %v6184 = vadd.f32 %v5879, %v6030
        %v6185 = vadd.f32 %v5880, %v6035
        %v6186 = vadd.f32 %v5881, %v6040
        %v6187 = vadd.f32 %v5882, %v6045
        %v6188 = vadd.f32 %v5883, %v6050
        %v6189 = vadd.f32 %v5884, %v6055
        %v6190 = vadd.f32 %v5885, %v6060
        %v6191 = vadd.f32 %v5886, %v6065
        %v6192 = vadd.f32 %v5887, %v6070
        %v6193 = vadd.f32 %v5888, %v6075
        %v6194 = vadd.f32 %v5889, %v6080
        %v6195 = vadd.f32 %v5890, %v6085
        %v6196 = vadd.f32 %v5891, %v6090
        %v6197 = vadd.f32 %v5892, %v6095
        %v6198 = vadd.f32 %v5893, %v6100
        %v6199 = vadd.f32 %v5894, %v6105
        %v6200 = vadd.f32 %v5895, %v6110
        %v6201 = vadd.f32 %v5896, %v6115
        %v6202 = vadd.f32 %v5897, %v6120
        %v6203 = vadd.f32 %v5898, %v6125
        %v6204 = vadd.f32 %v5899, %v6130
        %v6205 = vadd.f32 %v5900, %v6135
        %v6206 = vadd.f32 %v5901, %v6140
        %v6207 = vadd.f32 %v5902, %v6145
        %v6208 = vadd.f32 %v5903, %v6150
        %v6209 = vadd.f32 %v5904, %v6155
        %v6210 = vadd.f32 %v5905, %v6160
        %v6211 = vadd.f32 %v5906, %v6165
        %v6212 = vadd.f32 %v5907, %v6170
        %v6213 = vadd.f32 %v5908, %v6175
        %v6214 = vadd.f32 %v5909, %v6180
        %v6215 = vld [vmem:[%s5604 + $0x4] sm:$0xff]
        %v6216 = vld [vmem:[%s5604 + $0xc] sm:$0xff]
        %v6217 = vld [vmem:[%s5604 + $0x1c] sm:$0xff]
        %v6218 = vld [vmem:[%s5604 + $0x24] sm:$0xff]
        %v6219 = vld [vmem:[%s5604 + $0x34] sm:$0xff]
        %v6220 = vld [vmem:[%s5604 + $0x3c] sm:$0xff]
        %v6221 = vld [vmem:[%s5604 + $0x4c] sm:$0xff]
        %v6222 = vld [vmem:[%s5604 + $0x54] sm:$0xff]
        %v6223 = vld [vmem:[%s5604 + $0x64] sm:$0xff]
        %v6224 = vld [vmem:[%s5604 + $0x6c] sm:$0xff]
        %v6225 = vld [vmem:[%s5604 + $0x7c] sm:$0xff]
        %v6226 = vld [vmem:[%s5604 + $0x84] sm:$0xff]
        %v6227 = vld [vmem:[%s5604 + $0x94] sm:$0xff]
        %v6228 = vld [vmem:[%s5604 + $0x9c] sm:$0xff]
        %v6229 = vld [vmem:[%s5604 + $0xac] sm:$0xff]
        %v6230 = vld [vmem:[%s5604 + $0xb4] sm:$0xff]
        %v6231 = vld [vmem:[%s5604 + $0xc4] sm:$0xff]
        %v6232 = vld [vmem:[%s5604 + $0xcc] sm:$0xff]
        %v6233 = vld [vmem:[%s5604 + $0xdc] sm:$0xff]
        %v6234 = vld [vmem:[%s5604 + $0xe4] sm:$0xff]
        %v6235 = vld [vmem:[%s5604 + $0xf4] sm:$0xff]
        %v6236 = vld [vmem:[%s5604 + $0xfc] sm:$0xff]
        %v6237 = vld [vmem:[%s5604 + $0x10c] sm:$0xff]
        %v6238 = vld [vmem:[%s5604 + $0x114] sm:$0xff]
        %v6239 = vld [vmem:[%s5604 + $0x124] sm:$0xff]
        %v6240 = vld [vmem:[%s5604 + $0x12c] sm:$0xff]
        %v6241 = vld [vmem:[%s5604 + $0x13c] sm:$0xff]
        %v6242 = vld [vmem:[%s5604 + $0x144] sm:$0xff]
        %v6243 = vld [vmem:[%s5604 + $0x154] sm:$0xff]
        %v6244 = vld [vmem:[%s5604 + $0x15c] sm:$0xff]
        %v6245 = vld [vmem:[%s5604 + $0x16c] sm:$0xff]
        %v6246 = vld [vmem:[%s5604 + $0x174] sm:$0xff]
        %v6247 = vld [vmem:[%s3424] sm:$0xff]
        %v6248 = vld [vmem:[%s3424 + $0x8] sm:$0xff]
        %v6249 = vld [vmem:[%s3424 + $0x10] sm:$0xff]
        %v6250 = vld [vmem:[%s3424 + $0x18] sm:$0xff]
        %v6251 = vld [vmem:[%s3424 + $0x20] sm:$0xff]
        %v6252 = vld [vmem:[%s3424 + $0x28] sm:$0xff]
        %v6253 = vld [vmem:[%s3424 + $0x30] sm:$0xff]
        %v6254 = vld [vmem:[%s3424 + $0x38] sm:$0xff]
        %v6255 = vld [vmem:[%s3424 + $0x40] sm:$0xff]
        %v6256 = vld [vmem:[%s3424 + $0x48] sm:$0xff]
        %v6257 = vld [vmem:[%s3424 + $0x50] sm:$0xff]
        %v6258 = vld [vmem:[%s3424 + $0x58] sm:$0xff]
        %v6259 = vld [vmem:[%s3424 + $0x60] sm:$0xff]
        %v6260 = vld [vmem:[%s3424 + $0x68] sm:$0xff]
        %v6261 = vld [vmem:[%s3424 + $0x70] sm:$0xff]
        %v6262 = vld [vmem:[%s3424 + $0x78] sm:$0xff]
        %6263 = vmatprep.subr.mxu0 0.0
        %6264 = vmatpush1.msra.mxu0 %v6247
        %6265 = vmatprep.subr.mxu0 0.0
        %6266 = vmatpush1.msra.mxu0 %v6248
        %6267 = vmatprep.subr.mxu0 0.0
        %6268 = vmatpush1.msra.mxu0 %v6249
        %6269 = vmatprep.subr.mxu0 0.0
        %6270 = vmatpush1.msra.mxu0 %v6250
        %6271 = vmatprep.subr.mxu0 0.0
        %6272 = vmatpush1.msra.mxu0 %v6251
        %6273 = vmatprep.subr.mxu0 0.0
        %6274 = vmatpush1.msra.mxu0 %v6252
        %6275 = vmatprep.subr.mxu0 0.0
        %6276 = vmatpush1.msra.mxu0 %v6253
        %6277 = vmatprep.subr.mxu0 0.0
        %6278 = vmatpush1.msra.mxu0 %v6254
        %6279 = vmatprep.subr.mxu0 0.0
        %6280 = vmatpush1.msra.mxu0 %v6255
        %6281 = vmatprep.subr.mxu0 0.0
        %6282 = vmatpush1.msra.mxu0 %v6256
        %6283 = vmatprep.subr.mxu0 0.0
        %6284 = vmatpush1.msra.mxu0 %v6257
        %6285 = vmatprep.subr.mxu0 0.0
        %6286 = vmatpush1.msra.mxu0 %v6258
        %6287 = vmatprep.subr.mxu0 0.0
        %6288 = vmatpush1.msra.mxu0 %v6259
        %6289 = vmatprep.subr.mxu0 0.0
        %6290 = vmatpush1.msra.mxu0 %v6260
        %6291 = vmatprep.subr.mxu0 0.0
        %6292 = vmatpush1.msra.mxu0 %v6261
        %6293 = vmatprep.subr.mxu0 0.0
        %6294 = vmatpush1.msra.mxu0 %v6262
        %6295 = vmatprep.subr.mxu0 0.0
        %6296 = vmatpush1.msra.mxu0 0.0
        %6297 = vmatprep.subr.mxu0 0.0
        %6298 = vmatpush1.msra.mxu0 0.0
        %6299 = vmatprep.subr.mxu0 0.0
        %6300 = vmatpush1.msra.mxu0 0.0
        %6301 = vmatprep.subr.mxu0 0.0
        %6302 = vmatpush1.msra.mxu0 0.0
        %6303 = vmatprep.subr.mxu0 0.0
        %6304 = vmatpush1.msra.mxu0 0.0
        %6305 = vmatprep.subr.mxu0 0.0
        %6306 = vmatpush1.msra.mxu0 0.0
        %6307 = vmatprep.subr.mxu0 0.0
        %6308 = vmatpush1.msra.mxu0 0.0
        %6309 = vmatprep.subr.mxu0 0.0
        %6310 = vmatpush1.msra.mxu0 0.0
        %6311 = vmatprep.subr.mxu0 0.0
        %6312 = vmatpush1.msra.mxu0 0.0
        %6313 = vmatprep.subr.mxu0 0.0
        %6314 = vmatpush1.msra.mxu0 0.0
        %6315 = vmatprep.subr.mxu0 0.0
        %6316 = vmatpush1.msra.mxu0 0.0
        %6317 = vmatprep.subr.mxu0 0.0
        %6318 = vmatpush1.msra.mxu0 0.0
        %6319 = vmatprep.subr.mxu0 0.0
        %6320 = vmatpush1.msra.mxu0 0.0
        %6321 = vmatprep.subr.mxu0 0.0
        %6322 = vmatpush1.msra.mxu0 0.0
        %6323 = vmatprep.subr.mxu0 0.0
        %6324 = vmatpush1.msra.mxu0 0.0
        %6325 = vmatprep.subr.mxu0 0.0
        %6326 = vmatpush1.msra.mxu0 0.0
        %6327 = vmatprep.mubr.f32.mxu0 0.0
        %6328 = vmatmul.mubr.f32.gmra.mrb[0].mxu0 %v6215
        %v6329 = vpop.f32.mrb[0].mxu0
        %v6330 = vadd.f32 0.0, %v6329
        %v6331 = vpop.f32.mrb[0].mxu0
        %6332 = vmatprep.mubr.f32.mxu0 0.0
        %6333 = vmatmul.mubr.f32.gmra.mrb[0].mxu0 %v6216
        %v6334 = vpop.f32.mrb[0].mxu0
        %v6335 = vadd.f32 0.0, %v6334
        %v6336 = vpop.f32.mrb[0].mxu0
        %6337 = vmatprep.mubr.f32.mxu0 0.0
        %6338 = vmatmul.mubr.f32.gmra.mrb[0].mxu0 %v6217
        %v6339 = vpop.f32.mrb[0].mxu0
        %v6340 = vadd.f32 0.0, %v6339
        %v6341 = vpop.f32.mrb[0].mxu0
        %6342 = vmatprep.mubr.f32.mxu0 0.0
        %6343 = vmatmul.mubr.f32.gmra.mrb[0].mxu0 %v6218
        %v6344 = vpop.f32.mrb[0].mxu0
        %v6345 = vadd.f32 0.0, %v6344
        %v6346 = vpop.f32.mrb[0].mxu0
        %6347 = vmatprep.mubr.f32.mxu0 0.0
        %6348 = vmatmul.mubr.f32.gmra.mrb[0].mxu0 %v6219
        %v6349 = vpop.f32.mrb[0].mxu0
        %v6350 = vadd.f32 0.0, %v6349
        %v6351 = vpop.f32.mrb[0].mxu0
        %6352 = vmatprep.mubr.f32.mxu0 0.0
        %6353 = vmatmul.mubr.f32.gmra.mrb[0].mxu0 %v6220
        %v6354 = vpop.f32.mrb[0].mxu0
        %v6355 = vadd.f32 0.0, %v6354
        %v6356 = vpop.f32.mrb[0].mxu0
        %6357 = vmatprep.mubr.f32.mxu0 0.0
        %6358 = vmatmul.mubr.f32.gmra.mrb[0].mxu0 %v6221
        %v6359 = vpop.f32.mrb[0].mxu0
        %v6360 = vadd.f32 0.0, %v6359
        %v6361 = vpop.f32.mrb[0].mxu0
        %6362 = vmatprep.mubr.f32.mxu0 0.0
        %6363 = vmatmul.mubr.f32.gmra.mrb[0].mxu0 %v6222
        %v6364 = vpop.f32.mrb[0].mxu0
        %v6365 = vadd.f32 0.0, %v6364
        %v6366 = vpop.f32.mrb[0].mxu0
        %6367 = vmatprep.mubr.f32.mxu0 0.0
        %6368 = vmatmul.mubr.f32.gmra.mrb[0].mxu0 %v6223
        %v6369 = vpop.f32.mrb[0].mxu0
        %v6370 = vadd.f32 0.0, %v6369
        %v6371 = vpop.f32.mrb[0].mxu0
        %6372 = vmatprep.mubr.f32.mxu0 0.0
        %6373 = vmatmul.mubr.f32.gmra.mrb[0].mxu0 %v6224
        %v6374 = vpop.f32.mrb[0].mxu0
        %v6375 = vadd.f32 0.0, %v6374
        %v6376 = vpop.f32.mrb[0].mxu0
        %6377 = vmatprep.mubr.f32.mxu0 0.0
        %6378 = vmatmul.mubr.f32.gmra.mrb[0].mxu0 %v6225
        %v6379 = vpop.f32.mrb[0].mxu0
        %v6380 = vadd.f32 0.0, %v6379
        %v6381 = vpop.f32.mrb[0].mxu0
        %6382 = vmatprep.mubr.f32.mxu0 0.0
        %6383 = vmatmul.mubr.f32.gmra.mrb[0].mxu0 %v6226
        %v6384 = vpop.f32.mrb[0].mxu0
        %v6385 = vadd.f32 0.0, %v6384
        %v6386 = vpop.f32.mrb[0].mxu0
        %6387 = vmatprep.mubr.f32.mxu0 0.0
        %6388 = vmatmul.mubr.f32.gmra.mrb[0].mxu0 %v6227
        %v6389 = vpop.f32.mrb[0].mxu0
        %v6390 = vadd.f32 0.0, %v6389
        %v6391 = vpop.f32.mrb[0].mxu0
        %6392 = vmatprep.mubr.f32.mxu0 0.0
        %6393 = vmatmul.mubr.f32.gmra.mrb[0].mxu0 %v6228
        %v6394 = vpop.f32.mrb[0].mxu0
        %v6395 = vadd.f32 0.0, %v6394
        %v6396 = vpop.f32.mrb[0].mxu0
        %6397 = vmatprep.mubr.f32.mxu0 0.0
        %6398 = vmatmul.mubr.f32.gmra.mrb[0].mxu0 %v6229
        %v6399 = vpop.f32.mrb[0].mxu0
        %v6400 = vadd.f32 0.0, %v6399
        %v6401 = vpop.f32.mrb[0].mxu0
        %6402 = vmatprep.mubr.f32.mxu0 0.0
        %6403 = vmatmul.mubr.f32.gmra.mrb[0].mxu0 %v6230
        %v6404 = vpop.f32.mrb[0].mxu0
        %v6405 = vadd.f32 0.0, %v6404
        %v6406 = vpop.f32.mrb[0].mxu0
        %6407 = vmatprep.mubr.f32.mxu0 0.0
        %6408 = vmatmul.mubr.f32.gmra.mrb[0].mxu0 %v6231
        %v6409 = vpop.f32.mrb[0].mxu0
        %v6410 = vadd.f32 0.0, %v6409
        %v6411 = vpop.f32.mrb[0].mxu0
        %6412 = vmatprep.mubr.f32.mxu0 0.0
        %6413 = vmatmul.mubr.f32.gmra.mrb[0].mxu0 %v6232
        %v6414 = vpop.f32.mrb[0].mxu0
        %v6415 = vadd.f32 0.0, %v6414
        %v6416 = vpop.f32.mrb[0].mxu0
        %6417 = vmatprep.mubr.f32.mxu0 0.0
        %6418 = vmatmul.mubr.f32.gmra.mrb[0].mxu0 %v6233
        %v6419 = vpop.f32.mrb[0].mxu0
        %v6420 = vadd.f32 0.0, %v6419
        %v6421 = vpop.f32.mrb[0].mxu0
        %6422 = vmatprep.mubr.f32.mxu0 0.0
        %6423 = vmatmul.mubr.f32.gmra.mrb[0].mxu0 %v6234
        %v6424 = vpop.f32.mrb[0].mxu0
        %v6425 = vadd.f32 0.0, %v6424
        %v6426 = vpop.f32.mrb[0].mxu0
        %6427 = vmatprep.mubr.f32.mxu0 0.0
        %6428 = vmatmul.mubr.f32.gmra.mrb[0].mxu0 %v6235
        %v6429 = vpop.f32.mrb[0].mxu0
        %v6430 = vadd.f32 0.0, %v6429
        %v6431 = vpop.f32.mrb[0].mxu0
        %6432 = vmatprep.mubr.f32.mxu0 0.0
        %6433 = vmatmul.mubr.f32.gmra.mrb[0].mxu0 %v6236
        %v6434 = vpop.f32.mrb[0].mxu0
        %v6435 = vadd.f32 0.0, %v6434
        %v6436 = vpop.f32.mrb[0].mxu0
        %6437 = vmatprep.mubr.f32.mxu0 0.0
        %6438 = vmatmul.mubr.f32.gmra.mrb[0].mxu0 %v6237
        %v6439 = vpop.f32.mrb[0].mxu0
        %v6440 = vadd.f32 0.0, %v6439
        %v6441 = vpop.f32.mrb[0].mxu0
        %6442 = vmatprep.mubr.f32.mxu0 0.0
        %6443 = vmatmul.mubr.f32.gmra.mrb[0].mxu0 %v6238
        %v6444 = vpop.f32.mrb[0].mxu0
        %v6445 = vadd.f32 0.0, %v6444
        %v6446 = vpop.f32.mrb[0].mxu0
        %6447 = vmatprep.mubr.f32.mxu0 0.0
        %6448 = vmatmul.mubr.f32.gmra.mrb[0].mxu0 %v6239
        %v6449 = vpop.f32.mrb[0].mxu0
        %v6450 = vadd.f32 0.0, %v6449
        %v6451 = vpop.f32.mrb[0].mxu0
        %6452 = vmatprep.mubr.f32.mxu0 0.0
        %6453 = vmatmul.mubr.f32.gmra.mrb[0].mxu0 %v6240
        %v6454 = vpop.f32.mrb[0].mxu0
        %v6455 = vadd.f32 0.0, %v6454
        %v6456 = vpop.f32.mrb[0].mxu0
        %6457 = vmatprep.mubr.f32.mxu0 0.0
        %6458 = vmatmul.mubr.f32.gmra.mrb[0].mxu0 %v6241
        %v6459 = vpop.f32.mrb[0].mxu0
        %v6460 = vadd.f32 0.0, %v6459
        %v6461 = vpop.f32.mrb[0].mxu0
        %6462 = vmatprep.mubr.f32.mxu0 0.0
        %6463 = vmatmul.mubr.f32.gmra.mrb[0].mxu0 %v6242
        %v6464 = vpop.f32.mrb[0].mxu0
        %v6465 = vadd.f32 0.0, %v6464
        %v6466 = vpop.f32.mrb[0].mxu0
        %6467 = vmatprep.mubr.f32.mxu0 0.0
        %6468 = vmatmul.mubr.f32.gmra.mrb[0].mxu0 %v6243
        %v6469 = vpop.f32.mrb[0].mxu0
        %v6470 = vadd.f32 0.0, %v6469
        %v6471 = vpop.f32.mrb[0].mxu0
        %6472 = vmatprep.mubr.f32.mxu0 0.0
        %6473 = vmatmul.mubr.f32.gmra.mrb[0].mxu0 %v6244
        %v6474 = vpop.f32.mrb[0].mxu0
        %v6475 = vadd.f32 0.0, %v6474
        %v6476 = vpop.f32.mrb[0].mxu0
        %6477 = vmatprep.mubr.f32.mxu0 0.0
        %6478 = vmatmul.mubr.f32.gmra.mrb[0].mxu0 %v6245
        %v6479 = vpop.f32.mrb[0].mxu0
        %v6480 = vadd.f32 0.0, %v6479
        %v6481 = vpop.f32.mrb[0].mxu0
        %6482 = vmatprep.mubr.f32.mxu0 0.0
        %6483 = vmatmul.mubr.f32.gmra.mrb[0].mxu0 %v6246
        %v6484 = vpop.f32.mrb[0].mxu0
        %v6485 = vadd.f32 0.0, %v6484
        %v6486 = vpop.f32.mrb[0].mxu0
        %6487 = vdwg.mxu0
        %v6488 = vadd.f32 %v6183, %v6330
        %v6489 = vadd.f32 %v6184, %v6335
        %v6490 = vadd.f32 %v6185, %v6340
        %v6491 = vadd.f32 %v6186, %v6345
        %v6492 = vadd.f32 %v6187, %v6350
        %v6493 = vadd.f32 %v6188, %v6355
        %v6494 = vadd.f32 %v6189, %v6360
        %v6495 = vadd.f32 %v6190, %v6365
        %v6496 = vadd.f32 %v6191, %v6370
        %v6497 = vadd.f32 %v6192, %v6375
        %v6498 = vadd.f32 %v6193, %v6380
        %v6499 = vadd.f32 %v6194, %v6385
        %v6500 = vadd.f32 %v6195, %v6390
        %v6501 = vadd.f32 %v6196, %v6395
        %v6502 = vadd.f32 %v6197, %v6400
        %v6503 = vadd.f32 %v6198, %v6405
        %v6504 = vadd.f32 %v6199, %v6410
        %v6505 = vadd.f32 %v6200, %v6415
        %v6506 = vadd.f32 %v6201, %v6420
        %v6507 = vadd.f32 %v6202, %v6425
        %v6508 = vadd.f32 %v6203, %v6430
        %v6509 = vadd.f32 %v6204, %v6435
        %v6510 = vadd.f32 %v6205, %v6440
        %v6511 = vadd.f32 %v6206, %v6445
        %v6512 = vadd.f32 %v6207, %v6450
        %v6513 = vadd.f32 %v6208, %v6455
        %v6514 = vadd.f32 %v6209, %v6460
        %v6515 = vadd.f32 %v6210, %v6465
        %v6516 = vadd.f32 %v6211, %v6470
        %v6517 = vadd.f32 %v6212, %v6475
        %v6518 = vadd.f32 %v6213, %v6480
        %v6519 = vadd.f32 %v6214, %v6485
        %s6520 = scalar_lea.vmem %s305, 256 [#allocation9]
        %6521 = vst [vmem:[%s6520] sm:$0xff] %v6488
        %6522 = vst [vmem:[%s6520 + $0x8] sm:$0xff] %v6489
        %6523 = vst [vmem:[%s6520 + $0x10] sm:$0xff] %v6490
        %6524 = vst [vmem:[%s6520 + $0x18] sm:$0xff] %v6491
        %6525 = vst [vmem:[%s6520 + $0x20] sm:$0xff] %v6492
        %6526 = vst [vmem:[%s6520 + $0x28] sm:$0xff] %v6493
        %6527 = vst [vmem:[%s6520 + $0x30] sm:$0xff] %v6494
        %6528 = vst [vmem:[%s6520 + $0x38] sm:$0xff] %v6495
        %6529 = vst [vmem:[%s6520 + $0x40] sm:$0xff] %v6496
        %6530 = vst [vmem:[%s6520 + $0x48] sm:$0xff] %v6497
        %6531 = vst [vmem:[%s6520 + $0x50] sm:$0xff] %v6498
        %6532 = vst [vmem:[%s6520 + $0x58] sm:$0xff] %v6499
        %6533 = vst [vmem:[%s6520 + $0x60] sm:$0xff] %v6500
        %6534 = vst [vmem:[%s6520 + $0x68] sm:$0xff] %v6501
        %6535 = vst [vmem:[%s6520 + $0x70] sm:$0xff] %v6502
        %6536 = vst [vmem:[%s6520 + $0x78] sm:$0xff] %v6503
        %6537 = vst [vmem:[%s6520 + $0x80] sm:$0xff] %v6504
        %6538 = vst [vmem:[%s6520 + $0x88] sm:$0xff] %v6505
        %6539 = vst [vmem:[%s6520 + $0x90] sm:$0xff] %v6506
        %6540 = vst [vmem:[%s6520 + $0x98] sm:$0xff] %v6507
        %6541 = vst [vmem:[%s6520 + $0xa0] sm:$0xff] %v6508
        %6542 = vst [vmem:[%s6520 + $0xa8] sm:$0xff] %v6509
        %6543 = vst [vmem:[%s6520 + $0xb0] sm:$0xff] %v6510
        %6544 = vst [vmem:[%s6520 + $0xb8] sm:$0xff] %v6511
        %6545 = vst [vmem:[%s6520 + $0xc0] sm:$0xff] %v6512
        %6546 = vst [vmem:[%s6520 + $0xc8] sm:$0xff] %v6513
        %6547 = vst [vmem:[%s6520 + $0xd0] sm:$0xff] %v6514
        %6548 = vst [vmem:[%s6520 + $0xd8] sm:$0xff] %v6515
        %6549 = vst [vmem:[%s6520 + $0xe0] sm:$0xff] %v6516
        %6550 = vst [vmem:[%s6520 + $0xe8] sm:$0xff] %v6517
        %6551 = vst [vmem:[%s6520 + $0xf0] sm:$0xff] %v6518
        %6552 = vst [vmem:[%s6520 + $0xf8] sm:$0xff] %v6519
        %v6553 = vadd.f32 %v6488, %v6489
        %v6554 = vadd.f32 %v6553, %v6490
        %v6555 = vadd.f32 %v6554, %v6491
        %v6556 = vadd.f32 %v6555, %v6492
        %v6557 = vadd.f32 %v6556, %v6493
        %v6558 = vadd.f32 %v6557, %v6494
        %v6559 = vadd.f32 %v6558, %v6495
        %v6560 = vadd.f32 %v6559, %v6496
        %v6561 = vadd.f32 %v6560, %v6497
        %v6562 = vadd.f32 %v6561, %v6498
        %v6563 = vadd.f32 %v6562, %v6499
        %v6564 = vadd.f32 %v6563, %v6500
        %v6565 = vadd.f32 %v6564, %v6501
        %v6566 = vadd.f32 %v6565, %v6502
        %v6567 = vadd.f32 %v6566, %v6503
        %v6568 = vadd.f32 %v6567, %v6504
        %v6569 = vadd.f32 %v6568, %v6505
        %v6570 = vadd.f32 %v6569, %v6506
        %v6571 = vadd.f32 %v6570, %v6507
        %v6572 = vadd.f32 %v6571, %v6508
        %v6573 = vadd.f32 %v6572, %v6509
        %v6574 = vadd.f32 %v6573, %v6510
        %v6575 = vadd.f32 %v6574, %v6511
        %v6576 = vadd.f32 %v6575, %v6512
        %v6577 = vadd.f32 %v6576, %v6513
        %v6578 = vadd.f32 %v6577, %v6514
        %v6579 = vadd.f32 %v6578, %v6515
        %v6580 = vadd.f32 %v6579, %v6516
        %v6581 = vadd.f32 %v6580, %v6517
        %v6582 = vadd.f32 %v6581, %v6518
        %v6583 = vadd.f32 %v6582, %v6519
        %v6584 = vrot.slane %v6583, 4
        %v6585 = vadd.f32 %v6583, %v6584
        %v6586 = vrot.slane %v6585, 2
        %v6587 = vadd.f32 %v6585, %v6586
        %v6588 = vrot.slane %v6587, 1
        %v6589 = vadd.f32 %v6587, %v6588
        %6590 = vst [vmem:[%s319 + $0x1] sm:$0x1] %v6589
        %v6591 = vmul.f32 %v6488, %v6488
        %v6592 = vmul.f32 %v6489, %v6489
        %v6593 = vmul.f32 %v6490, %v6490
        %v6594 = vmul.f32 %v6491, %v6491
        %v6595 = vmul.f32 %v6492, %v6492
        %v6596 = vmul.f32 %v6493, %v6493
        %v6597 = vmul.f32 %v6494, %v6494
        %v6598 = vmul.f32 %v6495, %v6495
        %v6599 = vmul.f32 %v6496, %v6496
        %v6600 = vmul.f32 %v6497, %v6497
        %v6601 = vmul.f32 %v6498, %v6498
        %v6602 = vmul.f32 %v6499, %v6499
        %v6603 = vmul.f32 %v6500, %v6500
        %v6604 = vmul.f32 %v6501, %v6501
        %v6605 = vmul.f32 %v6502, %v6502
        %v6606 = vmul.f32 %v6503, %v6503
        %v6607 = vmul.f32 %v6504, %v6504
        %v6608 = vmul.f32 %v6505, %v6505
        %v6609 = vmul.f32 %v6506, %v6506
        %v6610 = vmul.f32 %v6507, %v6507
        %v6611 = vmul.f32 %v6508, %v6508
        %v6612 = vmul.f32 %v6509, %v6509
        %v6613 = vmul.f32 %v6510, %v6510
        %v6614 = vmul.f32 %v6511, %v6511
        %v6615 = vmul.f32 %v6512, %v6512
        %v6616 = vmul.f32 %v6513, %v6513
        %v6617 = vmul.f32 %v6514, %v6514
        %v6618 = vmul.f32 %v6515, %v6515
        %v6619 = vmul.f32 %v6516, %v6516
        %v6620 = vmul.f32 %v6517, %v6517
        %v6621 = vmul.f32 %v6518, %v6518
        %v6622 = vmul.f32 %v6519, %v6519
        %v6623 = vadd.f32 %v6591, %v6592
        %v6624 = vadd.f32 %v6623, %v6593
        %v6625 = vadd.f32 %v6624, %v6594
        %v6626 = vadd.f32 %v6625, %v6595
        %v6627 = vadd.f32 %v6626, %v6596
        %v6628 = vadd.f32 %v6627, %v6597
        %v6629 = vadd.f32 %v6628, %v6598
        %v6630 = vadd.f32 %v6629, %v6599
        %v6631 = vadd.f32 %v6630, %v6600
        %v6632 = vadd.f32 %v6631, %v6601
        %v6633 = vadd.f32 %v6632, %v6602
        %v6634 = vadd.f32 %v6633, %v6603
        %v6635 = vadd.f32 %v6634, %v6604
        %v6636 = vadd.f32 %v6635, %v6605
        %v6637 = vadd.f32 %v6636, %v6606
        %v6638 = vadd.f32 %v6637, %v6607
        %v6639 = vadd.f32 %v6638, %v6608
        %v6640 = vadd.f32 %v6639, %v6609
        %v6641 = vadd.f32 %v6640, %v6610
        %v6642 = vadd.f32 %v6641, %v6611
        %v6643 = vadd.f32 %v6642, %v6612
        %v6644 = vadd.f32 %v6643, %v6613
        %v6645 = vadd.f32 %v6644, %v6614
        %v6646 = vadd.f32 %v6645, %v6615
        %v6647 = vadd.f32 %v6646, %v6616
        %v6648 = vadd.f32 %v6647, %v6617
        %v6649 = vadd.f32 %v6648, %v6618
        %v6650 = vadd.f32 %v6649, %v6619
        %v6651 = vadd.f32 %v6650, %v6620
        %v6652 = vadd.f32 %v6651, %v6621
        %v6653 = vadd.f32 %v6652, %v6622
        %v6654 = vrot.slane %v6653, 4
        %v6655 = vadd.f32 %v6653, %v6654
        %v6656 = vrot.slane %v6655, 2
        %v6657 = vadd.f32 %v6655, %v6656
        %v6658 = vrot.slane %v6657, 1
        %v6659 = vadd.f32 %v6657, %v6658
        %6660 = vst [vmem:[%s319 + $0x3] sm:$0x1] %v6659
        %s6661 = sand.u32 %s107, 1
        %s6662 = scalar_lea.sflag [#allocation5], %s6661
        %s6663 = sand.u32 %s107, 1
        %s6664 = smul.addr %s6663, 512
        %s6665 = scalar_lea.vmem [#allocation9], %s6664
        %s6666 = sand.u32 %s31, 1
        %s6667 = scalar_lea.sflag [#allocation11], %s6666
        %s6668 = sand.u32 %s133, 1
        %s6669 = smul.addr %s6668, 512
        %s6670 = scalar_lea.vmem [#allocation10], %s6669
        %s6671 = sand.u32 %s31, 1
        %s6672 = scalar_lea.sflag [#allocation11], %s6671
        %s6673 = sand.u32 %s159, 1
        %s6674 = smul.addr %s6673, 4
        %s6675 = scalar_lea.vmem [#allocation12], %s6674
        %s6676 = sand.u32 %s185, 1
        %s6677 = scalar_lea.sflag [#allocation14], %s6676
        %s6678 = sand.u32 %s185, 1
        %s6679 = smul.addr %s6678, 4
        %s6680 = scalar_lea.vmem [#allocation13], %s6679
        // Predicated region
        $region45: #{tpu_custom_call.1} parent=31 // pred_check
          %p6681 = pneg %p117
        $region46: #{tpu_custom_call.1} parent=31 // pred_check_branch
          %6683 = sbr.rel (%p6681) target = $region48
        $region47: #{tpu_custom_call.1} parent=31 // pred_region
          #allocation16 [shape = 'u32[6]{0}', space=smem, size = 0x18, scoped, tag = 'DMA stride descriptor']
          %s6685 = ssub.s32 8192, 8192
          %6686 = vsyncadd %s6662, %s6685
          %s6687 = smul.addr %s31, 32
          %s6688 = smul.addr %s6687, 128
          %s6689 = scalar_lea.hbm %s3, %s6688
          %s6691 = sshll.u32 1, 14
          %s6692 = sxor.u32 4294967295, %s6691
          %s6695 = sshll.u32 7, 18
          %s6696 = sxor.u32 4294967295, %s6695
          %s6697 = sand.u32 0, %s6696
          %s6699 = sor.u32 %s6697, 0
          %s6701 = sshll.u32 3, 24
          %s6702 = sxor.u32 4294967295, %s6701
          %s6703 = sand.u32 %s6699, %s6702
          %s6705 = sor.u32 %s6703, 0
          %s6706 = sshll.u32 %s6665, 4
          %s6707 = int_to_ptr.vmem [resolvable:$true] %s6706
          %6713 = sst [smem:[#allocation16]] 4096
          %s6714 = scalar_lea.smem [#allocation16], 1
          %6715 = sst [smem:[%s6714]] 8192
          %s6716 = scalar_lea.smem [#allocation16], 2
          %6717 = sst [smem:[%s6716]] 32
          %s6718 = scalar_lea.smem [#allocation16], 3
          %6719 = sst [smem:[%s6718]] 128
          %s6720 = scalar_lea.smem [#allocation16], 4
          %6721 = sst [smem:[%s6720]] 128
          %s6722 = scalar_lea.smem [#allocation16], 5
          %6723 = sst [smem:[%s6722]] 8
          %6725 = dma.general %s6707, 8192, %s6689, %s6662, [#allocation15], [#allocation16], %s6705, 0
        $region48: #{tpu_custom_call.1} parent=31 // pred_fallthru
          _
        // Predicated region
        $region49: #{tpu_custom_call.1} parent=31 // pred_check
          %p6726 = pneg %p143
        $region50: #{tpu_custom_call.1} parent=31 // pred_check_branch
          %6728 = sbr.rel (%p6726) target = $region52
        $region51: #{tpu_custom_call.1} parent=31 // pred_region
          #allocation18 [shape = 'u32[6]{0}', space=smem, size = 0x18, scoped, tag = 'DMA stride descriptor']
          %s6730 = ssub.s32 8192, 8192
          %6731 = vsyncadd %s6667, %s6730
          %s6732 = smul.addr %s31, 32
          %s6733 = smul.addr %s6732, 128
          %s6734 = scalar_lea.hbm %s4, %s6733
          %s6736 = sshll.u32 1, 14
          %s6737 = sxor.u32 4294967295, %s6736
          %s6740 = sshll.u32 7, 18
          %s6741 = sxor.u32 4294967295, %s6740
          %s6742 = sand.u32 0, %s6741
          %s6744 = sor.u32 %s6742, 0
          %s6746 = sshll.u32 3, 24
          %s6747 = sxor.u32 4294967295, %s6746
          %s6748 = sand.u32 %s6744, %s6747
          %s6750 = sor.u32 %s6748, 0
          %s6751 = sshll.u32 %s6670, 4
          %s6752 = int_to_ptr.vmem [resolvable:$true] %s6751
          %6758 = sst [smem:[#allocation18]] 4096
          %s6759 = scalar_lea.smem [#allocation18], 1
          %6760 = sst [smem:[%s6759]] 8192
          %s6761 = scalar_lea.smem [#allocation18], 2
          %6762 = sst [smem:[%s6761]] 32
          %s6763 = scalar_lea.smem [#allocation18], 3
          %6764 = sst [smem:[%s6763]] 128
          %s6765 = scalar_lea.smem [#allocation18], 4
          %6766 = sst [smem:[%s6765]] 128
          %s6767 = scalar_lea.smem [#allocation18], 5
          %6768 = sst [smem:[%s6767]] 8
          %6770 = dma.general %s6752, 8192, %s6734, %s6667, [#allocation17], [#allocation18], %s6750, 0
        $region52: #{tpu_custom_call.1} parent=31 // pred_fallthru
          _
        // Predicated region
        $region53: #{tpu_custom_call.1} parent=31 // pred_check
          %p6771 = pneg %p169
        $region54: #{tpu_custom_call.1} parent=31 // pred_check_branch
          %6773 = sbr.rel (%p6771) target = $region56
        $region55: #{tpu_custom_call.1} parent=31 // pred_region
          %s6775 = ssub.s32 64, 64
          %6776 = vsyncadd %s6672, %s6775
          %s6777 = smul.addr %s31, 64
          %s6778 = scalar_lea.hbm %s5, %s6777
          %s6780 = sshll.u32 %s6675, 4
          %s6781 = int_to_ptr.vmem [resolvable:$true] %s6780
          %6783 = dma.vmem_to_hbm [thread:$0]  %s6781, 64, %s6778, %s6672
        $region56: #{tpu_custom_call.1} parent=31 // pred_fallthru
          _
        // Predicated region
        $region57: #{tpu_custom_call.1} parent=31 // pred_check
          %p6784 = pneg %p195
        $region58: #{tpu_custom_call.1} parent=31 // pred_check_branch
          %6786 = sbr.rel (%p6784) target = $region60
        $region59: #{tpu_custom_call.1} parent=31 // pred_region
          %s6788 = ssub.s32 64, 64
          %6789 = vsyncadd %s6677, %s6788
          %s6790 = smul.addr %s31, 64
          %s6791 = scalar_lea.hbm %s6, %s6790
          %s6793 = sshll.u32 %s6680, 4
          %s6794 = int_to_ptr.vmem [resolvable:$true] %s6793
          %6796 = dma.vmem_to_hbm [thread:$0]  %s6794, 64, %s6791, %s6677
        $region60: #{tpu_custom_call.1} parent=31 // pred_fallthru
          _
      $region32: #{tpu_custom_call.1} parent=5 // pred_fallthru
        _
      %p6797 = scmp.le.s32.totalorder 2, %s26
      // Predicated region
      $region61: #{tpu_custom_call.1} parent=5 // pred_check
        %p6798 = pneg %p6797
      $region62: #{tpu_custom_call.1} parent=5 // pred_check_branch
        %6800 = sbr.rel (%p6798) target = $region64
      $region63: #{tpu_custom_call.1} parent=5 // pred_region
        %s6801 = ssub.s32 %s26, 2
        // Predicated region
        $region65: #{tpu_custom_call.1} parent=63 // pred_check
          %p6802 = pneg %p123
        $region66: #{tpu_custom_call.1} parent=63 // pred_check_branch
          %6804 = sbr.rel (%p6802) target = $region68
        $region67: #{tpu_custom_call.1} parent=63 // pred_region
          %s6805 = sand.u32 %s108, 1
          %s6806 = scalar_lea.sflag [#allocation5], %s6805
          %s6807 = sand.u32 %s108, 1
          %s6808 = smul.addr %s6807, 512
          %s6809 = scalar_lea.vmem [#allocation9], %s6808
          %6810 = dma.done %s6806, 8192
        $region68: #{tpu_custom_call.1} parent=63 // pred_fallthru
          _
        // Predicated region
        $region69: #{tpu_custom_call.1} parent=63 // pred_check
          %p6811 = pneg %p149
        $region70: #{tpu_custom_call.1} parent=63 // pred_check_branch
          %6813 = sbr.rel (%p6811) target = $region72
        $region71: #{tpu_custom_call.1} parent=63 // pred_region
          %s6814 = sand.u32 %s32, 1
          %s6815 = scalar_lea.sflag [#allocation11], %s6814
          %s6816 = sand.u32 %s134, 1
          %s6817 = smul.addr %s6816, 512
          %s6818 = scalar_lea.vmem [#allocation10], %s6817
          %6819 = dma.done %s6815, 8192
        $region72: #{tpu_custom_call.1} parent=63 // pred_fallthru
          _
        // Predicated region
        $region73: #{tpu_custom_call.1} parent=63 // pred_check
          %p6820 = pneg %p175
        $region74: #{tpu_custom_call.1} parent=63 // pred_check_branch
          %6822 = sbr.rel (%p6820) target = $region76
        $region75: #{tpu_custom_call.1} parent=63 // pred_region
          %s6823 = sand.u32 %s32, 1
          %s6824 = scalar_lea.sflag [#allocation11], %s6823
          %s6825 = sand.u32 %s160, 1
          %s6826 = smul.addr %s6825, 4
          %s6827 = scalar_lea.vmem [#allocation12], %s6826
          %6828 = dma.done %s6824, 64
        $region76: #{tpu_custom_call.1} parent=63 // pred_fallthru
          _
        // Predicated region
        $region77: #{tpu_custom_call.1} parent=63 // pred_check
          %p6829 = pneg %p201
        $region78: #{tpu_custom_call.1} parent=63 // pred_check_branch
          %6831 = sbr.rel (%p6829) target = $region80
        $region79: #{tpu_custom_call.1} parent=63 // pred_region
          %s6832 = sand.u32 %s186, 1
          %s6833 = scalar_lea.sflag [#allocation14], %s6832
          %s6834 = sand.u32 %s186, 1
          %s6835 = smul.addr %s6834, 4
          %s6836 = scalar_lea.vmem [#allocation13], %s6835
          %6837 = dma.done %s6833, 64
        $region80: #{tpu_custom_call.1} parent=63 // pred_fallthru
          _
      $region64: #{tpu_custom_call.1} parent=5 // pred_fallthru
        _
    $region6: #{tpu_custom_call.1} parent=1 // loop_footer
      %s30 = sadd.s32 1, %s26
    $region7: #{tpu_custom_call.1} parent=1 // loop_footer_branch
      %25 = sbr.rel target = $region3
    $region8: #{tpu_custom_call.1} parent=1 // loop_exit
      _
    %6838 = vsyncpa [#allocation4], 1
    %s6839 = scalar_lea.sflag [#allocation4], 1
    %6840 = vsyncpa %s6839, 1
    %6841 = vsyncpa [#allocation7], 1
    %6842 = vsyncpa [#allocation5], 1
    %s6843 = scalar_lea.sflag [#allocation5], 1
    %6844 = vsyncpa %s6843, 1
    %6845 = vsyncpa [#allocation11], 1
    %s6846 = scalar_lea.sflag [#allocation11], 1
    %6847 = vsyncpa %s6846, 1
    %6848 = vsyncpa [#allocation14], 1
    %s6849 = scalar_lea.sflag [#allocation14], 1
    %6850 = vsyncpa %s6849, 1

</llo_original>
